<compile_context>
chip_gen: v7x
topology: tpu7x:2x2x1
jax: 0.10.0
libtpu: 0.0.40
codegen_flags: <defaults>
</compile_context>

<pallas_src>
import functools
import itertools

import jax
import jax.numpy as jnp
from jax import lax
from jax.experimental import pallas as pl
from jax.experimental.pallas import tpu as pltpu


def _round_up(v, m):
    return (v + m - 1) // m * m


# ------------------------------ fused kernel -------------------------------


def _fused_kernel(x_ref, wc_ref, shiftc_ref, sel_ref, wq_ref, shiftq_ref,
                  ab_ref, wpp_ref, shiftp_ref, o_ref, *,
                  block_b, n_pad, num_heads, head_w):
    # x_ref:      (block_b*Np, C)                      bf16
    # wc_ref:     (C, H*head_w)                        bf16  [k|v|0] per head
    # shiftc_ref: (1, H*head_w)                        f32
    # sel_ref:    (N_, Np)                             bf16  0/1 row selection
    # wq_ref:     (C, H*head_w)                        bf16  [q|0|0] per head
    # shiftq_ref: (1, H*head_w)                        f32   (scale folded in)
    # ab_ref:     (H, N_, Np)                          f32   -1e9 on pad keys
    # wpp_ref:    (block_b*H, head_w, block_b*out_dim) bf16  placed proj blocks
    # shiftp_ref: (1, block_b*out_dim)                 f32
    # o_ref:      (1, N_, block_b*out_dim)             f32   lane-dense output
    x = x_ref[...]                                            # (Bb*Np, C)

    # Combined kv projection for all block_b images at once (BN folded).
    y = jnp.dot(x, wc_ref[...], preferred_element_type=jnp.float32)
    y = (y + shiftc_ref[...]).astype(jnp.bfloat16)            # (Bb*Np, H*64)

    sel = sel_ref[...]                                        # (N_, Np)
    wq = wq_ref[...]
    shift_q = shiftq_ref[...]

    acc = jnp.zeros(o_ref.shape[1:], jnp.float32)             # (N_, Bb*out)

    for b in range(block_b):                                  # static unroll
        x_b = x[b * n_pad:(b + 1) * n_pad, :]                 # (Np, C)
        y_b = y[b * n_pad:(b + 1) * n_pad, :]                 # (Np, H*64)

        # q from subsampled tokens; BN scale + softmax scale folded into wq.
        xs_b = jnp.dot(sel, x_b, preferred_element_type=jnp.float32)
        q_b = jnp.dot(xs_b.astype(jnp.bfloat16), wq,
                      preferred_element_type=jnp.float32)
        q_b = (q_b + shift_q).astype(jnp.bfloat16)            # (N_, H*64)

        for h in range(num_heads):                            # static unroll
            lo = h * head_w
            kv_h = y_b[:, lo:lo + head_w]                     # (Np,64) [k|v|0]
            q_h = q_b[:, lo:lo + head_w]                      # (N_,64) [q|0|0]

            # q.k^T over the whole 64-lane head block: q's zero columns null
            # the v / pad contributions.  Contract on last axes (no k.T).
            s = lax.dot_general(q_h, kv_h, (((1,), (1,)), ((), ())),
                                preferred_element_type=jnp.float32)
            s = s + ab_ref[h]                                 # (N_, Np)

            m = jnp.max(s, axis=-1, keepdims=True)
            p = jnp.exp(s - m)
            l = jnp.sum(p, axis=-1, keepdims=True)
            attn = p * pl.reciprocal(l, approx=True)

            # attn @ [k|v|0]: only the v columns survive the projection below
            # (wpp rows outside the v block are zero); hardswish is
            # elementwise so applying it to the whole block is harmless.
            o_h = jnp.dot(attn.astype(jnp.bfloat16), kv_h,
                          preferred_element_type=jnp.float32)  # (N_, 64)
            o_h = o_h * jnp.clip(o_h + 3.0, 0.0, 6.0) * (1.0 / 6.0)

            # Pre-placed projection block writes this head/batch output
            # straight into its lane slot of the packed result (no concat).
            acc = acc + jnp.dot(o_h.astype(jnp.bfloat16),
                                wpp_ref[b * num_heads + h],
                                preferred_element_type=jnp.float32)

    o_ref[0] = acc + shiftp_ref[...]


def attention_subsample_forward(fused, cfg, x):
    B, N, C = x.shape
    N_ = cfg["resolution_"] ** 2
    out_dim = cfg["out_dim"]
    H = cfg["num_heads"]
    block_b = fused["block_b"]
    head_w = fused["head_w"]
    n_pad = fused["n_pad"]
    assert B % block_b == 0, (B, block_b)
    nb = B // block_b

    # Wrapper-side layout plumbing only: pad tokens to an aligned count,
    # flatten batch into rows, cast the MXU operand to bf16.
    xp = jnp.pad(x, ((0, 0), (0, n_pad - N), (0, 0)))
    x_flat = xp.reshape(B * n_pad, C).astype(jnp.bfloat16)

    kernel = functools.partial(_fused_kernel, block_b=block_b, n_pad=n_pad,
                               num_heads=H, head_w=head_w)

    out_packed = pl.pallas_call(
        kernel,
        out_shape=jax.ShapeDtypeStruct((nb, N_, block_b * out_dim),
                                       jnp.float32),
        grid=(nb,),
        in_specs=[
            pl.BlockSpec((block_b * n_pad, C), lambda g: (g, 0)),    # x block
            pl.BlockSpec((C, H * head_w), lambda g: (0, 0)),         # wc
            pl.BlockSpec((1, H * head_w), lambda g: (0, 0)),         # shift_c
            pl.BlockSpec((N_, n_pad), lambda g: (0, 0)),             # sel
            pl.BlockSpec((C, H * head_w), lambda g: (0, 0)),         # wq
            pl.BlockSpec((1, H * head_w), lambda g: (0, 0)),         # shift_q
            pl.BlockSpec((H, N_, n_pad), lambda g: (0, 0, 0)),       # ab
            pl.BlockSpec((block_b * H, head_w, block_b * out_dim),
                         lambda g: (0, 0, 0)),                       # wpp
            pl.BlockSpec((1, block_b * out_dim), lambda g: (0, 0)),  # shift_p
        ],
        out_specs=pl.BlockSpec((1, N_, block_b * out_dim),
                               lambda g: (g, 0, 0)),
        compiler_params=pltpu.CompilerParams(
            dimension_semantics=("parallel",)),
    )(x_flat, fused["wc"], fused["shift_c"], fused["sel"], fused["wq"],
      fused["shift_q"], fused["ab"], fused["wpp"], fused["shift_p"])

    # Undo the lane-dense batch packing: (nb, N_, Bb*out) -> (B, N_, out).
    out = out_packed.reshape(nb, N_, block_b, out_dim)
    return jnp.transpose(out, (0, 2, 1, 3)).reshape(B, N_, out_dim)


# --------------------------- module construction ---------------------------


def _fuse_bn(gamma, beta, rmean, rvar, eps=1e-5):
    scale = gamma / jnp.sqrt(rvar + eps)
    shift = beta - rmean * scale
    return scale, shift


def make_attention_subsample(key, *, in_dim, out_dim, key_dim, num_heads,
                             attn_ratio, stride, resolution, resolution_):
    nh_kd = key_dim * num_heads
    d = int(attn_ratio * key_dim)
    dh = d * num_heads
    h = dh + nh_kd

    keys = jax.random.split(key, 12)

    def bn_stats(k1, k2, n):
        rmean = 0.05 * jax.random.normal(k1, (n,), jnp.float32)
        rvar = jax.random.uniform(k2, (n,), jnp.float32, 0.5, 1.5)
        return rmean, rvar

    # kv = Linear_BN(in_dim, h)
    w_kv = 0.02 * jax.random.normal(keys[0], (h, in_dim), jnp.float32)
    kv_scale, kv_shift = _fuse_bn(jnp.ones((h,)), jnp.zeros((h,)),
                                  *bn_stats(keys[1], keys[2], h))
    # q = Subsample -> Linear_BN(in_dim, nh_kd)
    w_q = 0.02 * jax.random.normal(keys[3], (nh_kd, in_dim), jnp.float32)
    q_scale, q_shift = _fuse_bn(jnp.ones((nh_kd,)), jnp.zeros((nh_kd,)),
                                *bn_stats(keys[4], keys[5], nh_kd))
    # proj = Hardswish -> Linear_BN(dh, out_dim)
    w_p = 0.02 * jax.random.normal(keys[6], (out_dim, dh), jnp.float32)
    p_scale, p_shift = _fuse_bn(jnp.ones((out_dim,)), jnp.zeros((out_dim,)),
                                *bn_stats(keys[7], keys[8], out_dim))

    # relative attention-bias table + index map (same construction as PyTorch)
    points = list(itertools.product(range(resolution), range(resolution)))
    points_ = list(itertools.product(range(resolution_), range(resolution_)))
    N, N_ = len(points), len(points_)
    attention_offsets, idxs = {}, []
    for p1 in points_:
        for p2 in points:
            size = 1
            offset = (abs(p1[0] * stride - p2[0] + (size - 1) / 2),
                      abs(p1[1] * stride - p2[1] + (size - 1) / 2))
            if offset not in attention_offsets:
                attention_offsets[offset] = len(attention_offsets)
            idxs.append(attention_offsets[offset])
    bias_idxs = jnp.array(idxs, dtype=jnp.int32).reshape(N_, N)
    attention_biases = 0.02 * jax.random.normal(
        keys[9], (num_heads, len(attention_offsets)), jnp.float32)

    params = dict(
        kv_wt=w_kv.T, kv_scale=kv_scale, kv_shift=kv_shift,
        q_wt=w_q.T, q_scale=q_scale, q_shift=q_shift,
        proj_wt=w_p.T, proj_scale=p_scale, proj_shift=p_shift,
        attention_biases=attention_biases, attention_bias_idxs=bias_idxs,
    )
    cfg = dict(num_heads=num_heads, key_dim=key_dim, d=d, dh=dh,
               scale=key_dim ** -0.5, stride=stride,
               resolution=resolution, resolution_=resolution_,
               out_dim=out_dim)
    return params, cfg


def prepare_fused(params, cfg, block_b=4):
    """One-time precompute: fold BN scales (and the softmax scale) into the
    weights, lay kv/q out with a 64-lane per-head stride, hoist the
    attention-bias gather, build the subsample selection matrix, and place the
    per-(batch, head) projection blocks for a lane-dense packed output."""
    H, kd, d = cfg["num_heads"], cfg["key_dim"], cfg["d"]
    out_dim = cfg["out_dim"]
    res, res_, stride = cfg["resolution"], cfg["resolution_"], cfg["stride"]
    N, N_ = res * res, res_ * res_
    C = params["kv_wt"].shape[0]
    head_w = _round_up(kd + d, 64)       # 48 -> 64 lane stride per head
    n_pad = _round_up(N, 16)             # 196 -> 208 (bf16 sublane packing)
    scale = cfg["scale"]

    # kv Linear_BN: scale folded, per-head [k | v | 0] layout.
    kv_w = params["kv_wt"] * params["kv_scale"][None, :]        # (C, H*(kd+d))
    kv_b = params["kv_shift"]
    wc = jnp.zeros((C, H * head_w), jnp.float32)
    shift_c = jnp.zeros((H * head_w,), jnp.float32)
    # q Linear_BN: BN scale AND softmax scale folded; per-head [q | 0] layout.
    q_w = params["q_wt"] * (params["q_scale"] * scale)[None, :]  # (C, H*kd)
    q_b = params["q_shift"] * scale
    wq = jnp.zeros((C, H * head_w), jnp.float32)
    shift_q = jnp.zeros((H * head_w,), jnp.float32)
    for h in range(H):
        src = h * (kd + d)
        dst = h * head_w
        wc = wc.at[:, dst:dst + kd + d].set(kv_w[:, src:src + kd + d])
        shift_c = shift_c.at[dst:dst + kd + d].set(kv_b[src:src + kd + d])
        wq = wq.at[:, dst:dst + kd].set(q_w[:, h * kd:(h + 1) * kd])
        shift_q = shift_q.at[dst:dst + kd].set(q_b[h * kd:(h + 1) * kd])

    # proj Linear_BN: per-(batch, head) blocks placed so each head's output
    # accumulates straight into its batch's lane slot of the packed output.
    wp = params["proj_wt"] * params["proj_scale"][None, :]       # (dh, out)
    wpp = jnp.zeros((block_b * H, head_w, block_b * out_dim), jnp.float32)
    for b in range(block_b):
        for h in range(H):
            wpp = wpp.at[b * H + h, kd:kd + d,
                         b * out_dim:(b + 1) * out_dim].set(
                             wp[h * d:(h + 1) * d, :])
    shift_p = jnp.tile(params["proj_shift"], block_b)[None, :]

    # attention-bias gather hoisted; padded key columns masked with -1e9.
    ab = params["attention_biases"][:, params["attention_bias_idxs"]]
    ab_p = jnp.full((H, N_, n_pad), -1e9, jnp.float32)
    ab_p = ab_p.at[:, :, :N].set(ab)

    # 0/1 row-selection matrix implementing Subsample(stride, resolution).
    rows = jnp.arange(N_)
    cols = (rows // res_) * stride * res + (rows % res_) * stride
    sel = jnp.zeros((N_, n_pad), jnp.float32).at[rows, cols].set(1.0)

    bf = jnp.bfloat16
    return dict(wc=wc.astype(bf), shift_c=shift_c[None, :],
                wq=wq.astype(bf), shift_q=shift_q[None, :],
                sel=sel.astype(bf), ab=ab_p,
                wpp=wpp.astype(bf), shift_p=shift_p,
                block_b=block_b, head_w=head_w, n_pad=n_pad)


# ------------------------------ plain-JAX ref -------------------------------


def _reference(params, cfg, x):
    B, N, C = x.shape
    H, kd, d, dh = cfg["num_heads"], cfg["key_dim"], cfg["d"], cfg["dh"]
    res, res_, stride = cfg["resolution"], cfg["resolution_"], cfg["stride"]
    kv = x @ params["kv_wt"] * params["kv_scale"] + params["kv_shift"]
    kv = kv.reshape(B, N, H, kd + d)
    k = jnp.transpose(kv[..., :kd], (0, 2, 1, 3))
    v = jnp.transpose(kv[..., kd:], (0, 2, 1, 3))
    xs = x.reshape(B, res, res, C)[:, ::stride, ::stride].reshape(B, -1, C)
    q = xs @ params["q_wt"] * params["q_scale"] + params["q_shift"]
    q = jnp.transpose(q.reshape(B, -1, H, kd), (0, 2, 1, 3))
    ab = params["attention_biases"][:, params["attention_bias_idxs"]]
    attn = jnp.einsum("bhqc,bhkc->bhqk", q, k) * cfg["scale"] + ab[None]
    attn = jax.nn.softmax(attn, axis=-1)
    o = jnp.einsum("bhqk,bhkd->bhqd", attn, v)
    o = jnp.transpose(o, (0, 2, 1, 3)).reshape(B, -1, dh)
    o = o * jnp.clip(o + 3.0, 0.0, 6.0) / 6.0
    return o @ params["proj_wt"] * params["proj_scale"] + params["proj_shift"]


# ---------------------------------- main ------------------------------------


if __name__ == "__main__":
    key = jax.random.PRNGKey(0)
    k_param, k_x = jax.random.split(key)

    B = 8                       # 2 grid steps of block_b=4 images each
    in_dim, out_dim = 32, 32
    key_dim, num_heads, attn_ratio = 16, 4, 2
    stride, resolution, resolution_ = 2, 14, 7

    params, cfg = make_attention_subsample(
        k_param, in_dim=in_dim, out_dim=out_dim, key_dim=key_dim,
        num_heads=num_heads, attn_ratio=attn_ratio, stride=stride,
        resolution=resolution, resolution_=resolution_)
    fused = prepare_fused(params, cfg, block_b=4)

    x = jax.random.normal(k_x, (B, resolution ** 2, in_dim), jnp.float32)

    y = attention_subsample_forward(fused, cfg, x)
    y = jax.block_until_ready(y)
    assert y.shape == (B, resolution_ ** 2, out_dim), y.shape

    y_ref = jax.block_until_ready(_reference(params, cfg, x))
    max_err = float(jnp.max(jnp.abs(y - y_ref)))
    assert jnp.allclose(y, y_ref, rtol=3e-2, atol=3e-2), max_err

    print("KERNEL_OK")
</pallas_src>

<mosaic_0001>
module attributes {stable_mosaic.version = 11 : i64} {
  func.func @_fused_kernel(%arg0: i32, %arg1: memref<832x32xbf16, #tpu.memory_space<vmem>>, %arg2: memref<32x256xbf16, #tpu.memory_space<vmem>>, %arg3: memref<1x256xf32, #tpu.memory_space<vmem>>, %arg4: memref<49x208xbf16, #tpu.memory_space<vmem>>, %arg5: memref<32x256xbf16, #tpu.memory_space<vmem>>, %arg6: memref<1x256xf32, #tpu.memory_space<vmem>>, %arg7: memref<4x49x208xf32, #tpu.memory_space<vmem>>, %arg8: memref<16x64x128xbf16, #tpu.memory_space<vmem>>, %arg9: memref<1x128xf32, #tpu.memory_space<vmem>>, %arg10: memref<1x49x128xf32, #tpu.memory_space<vmem>>) attributes {dimension_semantics = [#tpu.dimension_semantics<parallel>], iteration_bounds = array<i64: 2>, scalar_prefetch = 0 : i64, scratch_operands = 0 : i64, tpu.core_type = #tpu.core_type<tc>, window_params = [{transform_indices = @transform_0, window_bounds = array<i64: 832, 32>}, {pipeline_mode = #tpu.pipeline_mode<synchronous>, transform_indices = @transform_1, window_bounds = array<i64: 32, 256>}, {pipeline_mode = #tpu.pipeline_mode<synchronous>, transform_indices = @transform_2, window_bounds = array<i64: 1, 256>}, {pipeline_mode = #tpu.pipeline_mode<synchronous>, transform_indices = @transform_3, window_bounds = array<i64: 49, 208>}, {pipeline_mode = #tpu.pipeline_mode<synchronous>, transform_indices = @transform_4, window_bounds = array<i64: 32, 256>}, {pipeline_mode = #tpu.pipeline_mode<synchronous>, transform_indices = @transform_5, window_bounds = array<i64: 1, 256>}, {pipeline_mode = #tpu.pipeline_mode<synchronous>, transform_indices = @transform_6, window_bounds = array<i64: 4, 49, 208>}, {pipeline_mode = #tpu.pipeline_mode<synchronous>, transform_indices = @transform_7, window_bounds = array<i64: 16, 64, 128>}, {pipeline_mode = #tpu.pipeline_mode<synchronous>, transform_indices = @transform_8, window_bounds = array<i64: 1, 128>}, {transform_indices = @transform_9, window_bounds = array<i64: 1, 49, 128>}]} {
    %c0 = arith.constant 0 : index
    %c0_0 = arith.constant 0 : index
    %0 = vector.load %arg1[%c0, %c0_0] : memref<832x32xbf16, #tpu.memory_space<vmem>>, vector<832x32xbf16>
    %c0_1 = arith.constant 0 : index
    %c0_2 = arith.constant 0 : index
    %1 = vector.load %arg2[%c0_1, %c0_2] : memref<32x256xbf16, #tpu.memory_space<vmem>>, vector<32x256xbf16>
    %cst = arith.constant dense<0.000000e+00> : vector<832x256xf32>
    %2 = tpu.matmul %0, %1, %cst {dimension_numbers = #tpu.dot_dimension_numbers<[1], [0], [0], [1], [0, 0, 1, 1], [], []>} : vector<832x32xbf16>, vector<32x256xbf16>, vector<832x256xf32> -> vector<832x256xf32>
    %c0_3 = arith.constant 0 : index
    %c0_4 = arith.constant 0 : index
    %3 = vector.load %arg3[%c0_3, %c0_4] : memref<1x256xf32, #tpu.memory_space<vmem>>, vector<1x256xf32>
    %4 = vector.broadcast %3 : vector<1x256xf32> to vector<832x256xf32>
    %5 = arith.addf %2, %4 : vector<832x256xf32>
    %6 = arith.truncf %5 : vector<832x256xf32> to vector<832x256xbf16>
    %c0_5 = arith.constant 0 : index
    %c0_6 = arith.constant 0 : index
    %7 = vector.load %arg4[%c0_5, %c0_6] : memref<49x208xbf16, #tpu.memory_space<vmem>>, vector<49x208xbf16>
    %c0_7 = arith.constant 0 : index
    %c0_8 = arith.constant 0 : index
    %8 = vector.load %arg5[%c0_7, %c0_8] : memref<32x256xbf16, #tpu.memory_space<vmem>>, vector<32x256xbf16>
    %c0_9 = arith.constant 0 : index
    %c0_10 = arith.constant 0 : index
    %9 = vector.load %arg6[%c0_9, %c0_10] : memref<1x256xf32, #tpu.memory_space<vmem>>, vector<1x256xf32>
    %cst_11 = arith.constant 0.000000e+00 : f32
    %10 = vector.broadcast %cst_11 : f32 to vector<49x128xf32>
    %11 = vector.extract_strided_slice %0 {offsets = [0, 0], sizes = [208, 32], strides = [1, 1]} : vector<832x32xbf16> to vector<208x32xbf16>
    %12 = vector.extract_strided_slice %6 {offsets = [0, 0], sizes = [208, 256], strides = [1, 1]} : vector<832x256xbf16> to vector<208x256xbf16>
    %cst_12 = arith.constant dense<0.000000e+00> : vector<49x32xf32>
    %13 = tpu.matmul %7, %11, %cst_12 {dimension_numbers = #tpu.dot_dimension_numbers<[1], [0], [0], [1], [0, 0, 1, 1], [], []>} : vector<49x208xbf16>, vector<208x32xbf16>, vector<49x32xf32> -> vector<49x32xf32>
    %14 = arith.truncf %13 : vector<49x32xf32> to vector<49x32xbf16>
    %cst_13 = arith.constant dense<0.000000e+00> : vector<49x256xf32>
    %15 = tpu.matmul %14, %8, %cst_13 {dimension_numbers = #tpu.dot_dimension_numbers<[1], [0], [0], [1], [0, 0, 1, 1], [], []>} : vector<49x32xbf16>, vector<32x256xbf16>, vector<49x256xf32> -> vector<49x256xf32>
    %16 = vector.broadcast %9 : vector<1x256xf32> to vector<49x256xf32>
    %17 = arith.addf %15, %16 : vector<49x256xf32>
    %18 = arith.truncf %17 : vector<49x256xf32> to vector<49x256xbf16>
    %19 = vector.extract_strided_slice %12 {offsets = [0, 0], sizes = [208, 64], strides = [1, 1]} : vector<208x256xbf16> to vector<208x64xbf16>
    %20 = vector.extract_strided_slice %18 {offsets = [0, 0], sizes = [49, 64], strides = [1, 1]} : vector<49x256xbf16> to vector<49x64xbf16>
    %cst_14 = arith.constant dense<0.000000e+00> : vector<49x208xf32>
    %21 = tpu.matmul %20, %19, %cst_14 {dimension_numbers = #tpu.dot_dimension_numbers<[1], [1], [0], [0], [0, 0, 1, 0], [], []>} : vector<49x64xbf16>, vector<208x64xbf16>, vector<49x208xf32> -> vector<49x208xf32>
    %c0_15 = arith.constant 0 : index
    %c0_16 = arith.constant 0 : index
    %c0_17 = arith.constant 0 : index
    %22 = vector.load %arg7[%c0_15, %c0_16, %c0_17] : memref<4x49x208xf32, #tpu.memory_space<vmem>>, vector<1x49x208xf32>
    %23 = vector.shape_cast %22 : vector<1x49x208xf32> to vector<49x208xf32>
    %24 = arith.addf %21, %23 : vector<49x208xf32>
    %cst_18 = arith.constant dense<0xFF800000> : vector<49xf32>
    %25 = vector.multi_reduction <maximumf>, %24, %cst_18 [1] : vector<49x208xf32> to vector<49xf32>
    %26 = vector.shape_cast %25 : vector<49xf32> to vector<49x1xf32>
    %27 = vector.broadcast %26 : vector<49x1xf32> to vector<49x208xf32>
    %28 = arith.subf %24, %27 : vector<49x208xf32>
    %29 = math.exp %28 : vector<49x208xf32>
    %cst_19 = arith.constant dense<0.000000e+00> : vector<49xf32>
    %30 = vector.multi_reduction <add>, %29, %cst_19 [1] : vector<49x208xf32> to vector<49xf32>
    %31 = vector.shape_cast %30 : vector<49xf32> to vector<49x1xf32>
    %32 = tpu.reciprocal %31 {approx = true} : vector<49x1xf32> -> vector<49x1xf32>
    %33 = vector.broadcast %32 : vector<49x1xf32> to vector<49x208xf32>
    %34 = arith.mulf %29, %33 : vector<49x208xf32>
    %35 = arith.truncf %34 : vector<49x208xf32> to vector<49x208xbf16>
    %cst_20 = arith.constant dense<0.000000e+00> : vector<49x64xf32>
    %36 = tpu.matmul %35, %19, %cst_20 {dimension_numbers = #tpu.dot_dimension_numbers<[1], [0], [0], [1], [0, 0, 1, 1], [], []>} : vector<49x208xbf16>, vector<208x64xbf16>, vector<49x64xf32> -> vector<49x64xf32>
    %cst_21 = arith.constant 3.000000e+00 : f32
    %37 = vector.broadcast %cst_21 : f32 to vector<49x64xf32>
    %38 = arith.addf %36, %37 : vector<49x64xf32>
    %cst_22 = arith.constant 0.000000e+00 : f32
    %cst_23 = arith.constant 6.000000e+00 : f32
    %39 = vector.broadcast %cst_22 : f32 to vector<49x64xf32>
    %40 = arith.maximumf %39, %38 : vector<49x64xf32>
    %41 = vector.broadcast %cst_23 : f32 to vector<49x64xf32>
    %42 = arith.minimumf %41, %40 : vector<49x64xf32>
    %43 = arith.mulf %36, %42 : vector<49x64xf32>
    %cst_24 = arith.constant 0.166666672 : f32
    %44 = vector.broadcast %cst_24 : f32 to vector<49x64xf32>
    %45 = arith.mulf %43, %44 : vector<49x64xf32>
    %46 = arith.truncf %45 : vector<49x64xf32> to vector<49x64xbf16>
    %c0_25 = arith.constant 0 : index
    %c0_26 = arith.constant 0 : index
    %c0_27 = arith.constant 0 : index
    %47 = vector.load %arg8[%c0_25, %c0_26, %c0_27] : memref<16x64x128xbf16, #tpu.memory_space<vmem>>, vector<1x64x128xbf16>
    %48 = vector.shape_cast %47 : vector<1x64x128xbf16> to vector<64x128xbf16>
    %cst_28 = arith.constant dense<0.000000e+00> : vector<49x128xf32>
    %49 = tpu.matmul %46, %48, %cst_28 {dimension_numbers = #tpu.dot_dimension_numbers<[1], [0], [0], [1], [0, 0, 1, 1], [], []>} : vector<49x64xbf16>, vector<64x128xbf16>, vector<49x128xf32> -> vector<49x128xf32>
    %50 = arith.addf %10, %49 : vector<49x128xf32>
    %51 = vector.extract_strided_slice %12 {offsets = [0, 64], sizes = [208, 64], strides = [1, 1]} : vector<208x256xbf16> to vector<208x64xbf16>
    %52 = vector.extract_strided_slice %18 {offsets = [0, 64], sizes = [49, 64], strides = [1, 1]} : vector<49x256xbf16> to vector<49x64xbf16>
    %cst_29 = arith.constant dense<0.000000e+00> : vector<49x208xf32>
    %53 = tpu.matmul %52, %51, %cst_29 {dimension_numbers = #tpu.dot_dimension_numbers<[1], [1], [0], [0], [0, 0, 1, 0], [], []>} : vector<49x64xbf16>, vector<208x64xbf16>, vector<49x208xf32> -> vector<49x208xf32>
    %c1 = arith.constant 1 : index
    %c0_30 = arith.constant 0 : index
    %c0_31 = arith.constant 0 : index
    %54 = vector.load %arg7[%c1, %c0_30, %c0_31] : memref<4x49x208xf32, #tpu.memory_space<vmem>>, vector<1x49x208xf32>
    %55 = vector.shape_cast %54 : vector<1x49x208xf32> to vector<49x208xf32>
    %56 = arith.addf %53, %55 : vector<49x208xf32>
    %cst_32 = arith.constant dense<0xFF800000> : vector<49xf32>
    %57 = vector.multi_reduction <maximumf>, %56, %cst_32 [1] : vector<49x208xf32> to vector<49xf32>
    %58 = vector.shape_cast %57 : vector<49xf32> to vector<49x1xf32>
    %59 = vector.broadcast %58 : vector<49x1xf32> to vector<49x208xf32>
    %60 = arith.subf %56, %59 : vector<49x208xf32>
    %61 = math.exp %60 : vector<49x208xf32>
    %cst_33 = arith.constant dense<0.000000e+00> : vector<49xf32>
    %62 = vector.multi_reduction <add>, %61, %cst_33 [1] : vector<49x208xf32> to vector<49xf32>
    %63 = vector.shape_cast %62 : vector<49xf32> to vector<49x1xf32>
    %64 = tpu.reciprocal %63 {approx = true} : vector<49x1xf32> -> vector<49x1xf32>
    %65 = vector.broadcast %64 : vector<49x1xf32> to vector<49x208xf32>
    %66 = arith.mulf %61, %65 : vector<49x208xf32>
    %67 = arith.truncf %66 : vector<49x208xf32> to vector<49x208xbf16>
    %cst_34 = arith.constant dense<0.000000e+00> : vector<49x64xf32>
    %68 = tpu.matmul %67, %51, %cst_34 {dimension_numbers = #tpu.dot_dimension_numbers<[1], [0], [0], [1], [0, 0, 1, 1], [], []>} : vector<49x208xbf16>, vector<208x64xbf16>, vector<49x64xf32> -> vector<49x64xf32>
    %cst_35 = arith.constant 3.000000e+00 : f32
    %69 = vector.broadcast %cst_35 : f32 to vector<49x64xf32>
    %70 = arith.addf %68, %69 : vector<49x64xf32>
    %cst_36 = arith.constant 0.000000e+00 : f32
    %cst_37 = arith.constant 6.000000e+00 : f32
    %71 = vector.broadcast %cst_36 : f32 to vector<49x64xf32>
    %72 = arith.maximumf %71, %70 : vector<49x64xf32>
    %73 = vector.broadcast %cst_37 : f32 to vector<49x64xf32>
    %74 = arith.minimumf %73, %72 : vector<49x64xf32>
    %75 = arith.mulf %68, %74 : vector<49x64xf32>
    %cst_38 = arith.constant 0.166666672 : f32
    %76 = vector.broadcast %cst_38 : f32 to vector<49x64xf32>
    %77 = arith.mulf %75, %76 : vector<49x64xf32>
    %78 = arith.truncf %77 : vector<49x64xf32> to vector<49x64xbf16>
    %c1_39 = arith.constant 1 : index
    %c0_40 = arith.constant 0 : index
    %c0_41 = arith.constant 0 : index
    %79 = vector.load %arg8[%c1_39, %c0_40, %c0_41] : memref<16x64x128xbf16, #tpu.memory_space<vmem>>, vector<1x64x128xbf16>
    %80 = vector.shape_cast %79 : vector<1x64x128xbf16> to vector<64x128xbf16>
    %cst_42 = arith.constant dense<0.000000e+00> : vector<49x128xf32>
    %81 = tpu.matmul %78, %80, %cst_42 {dimension_numbers = #tpu.dot_dimension_numbers<[1], [0], [0], [1], [0, 0, 1, 1], [], []>} : vector<49x64xbf16>, vector<64x128xbf16>, vector<49x128xf32> -> vector<49x128xf32>
    %82 = arith.addf %50, %81 : vector<49x128xf32>
    %83 = vector.extract_strided_slice %12 {offsets = [0, 128], sizes = [208, 64], strides = [1, 1]} : vector<208x256xbf16> to vector<208x64xbf16>
    %84 = vector.extract_strided_slice %18 {offsets = [0, 128], sizes = [49, 64], strides = [1, 1]} : vector<49x256xbf16> to vector<49x64xbf16>
    %cst_43 = arith.constant dense<0.000000e+00> : vector<49x208xf32>
    %85 = tpu.matmul %84, %83, %cst_43 {dimension_numbers = #tpu.dot_dimension_numbers<[1], [1], [0], [0], [0, 0, 1, 0], [], []>} : vector<49x64xbf16>, vector<208x64xbf16>, vector<49x208xf32> -> vector<49x208xf32>
    %c2 = arith.constant 2 : index
    %c0_44 = arith.constant 0 : index
    %c0_45 = arith.constant 0 : index
    %86 = vector.load %arg7[%c2, %c0_44, %c0_45] : memref<4x49x208xf32, #tpu.memory_space<vmem>>, vector<1x49x208xf32>
    %87 = vector.shape_cast %86 : vector<1x49x208xf32> to vector<49x208xf32>
    %88 = arith.addf %85, %87 : vector<49x208xf32>
    %cst_46 = arith.constant dense<0xFF800000> : vector<49xf32>
    %89 = vector.multi_reduction <maximumf>, %88, %cst_46 [1] : vector<49x208xf32> to vector<49xf32>
    %90 = vector.shape_cast %89 : vector<49xf32> to vector<49x1xf32>
    %91 = vector.broadcast %90 : vector<49x1xf32> to vector<49x208xf32>
    %92 = arith.subf %88, %91 : vector<49x208xf32>
    %93 = math.exp %92 : vector<49x208xf32>
    %cst_47 = arith.constant dense<0.000000e+00> : vector<49xf32>
    %94 = vector.multi_reduction <add>, %93, %cst_47 [1] : vector<49x208xf32> to vector<49xf32>
    %95 = vector.shape_cast %94 : vector<49xf32> to vector<49x1xf32>
    %96 = tpu.reciprocal %95 {approx = true} : vector<49x1xf32> -> vector<49x1xf32>
    %97 = vector.broadcast %96 : vector<49x1xf32> to vector<49x208xf32>
    %98 = arith.mulf %93, %97 : vector<49x208xf32>
    %99 = arith.truncf %98 : vector<49x208xf32> to vector<49x208xbf16>
    %cst_48 = arith.constant dense<0.000000e+00> : vector<49x64xf32>
    %100 = tpu.matmul %99, %83, %cst_48 {dimension_numbers = #tpu.dot_dimension_numbers<[1], [0], [0], [1], [0, 0, 1, 1], [], []>} : vector<49x208xbf16>, vector<208x64xbf16>, vector<49x64xf32> -> vector<49x64xf32>
    %cst_49 = arith.constant 3.000000e+00 : f32
    %101 = vector.broadcast %cst_49 : f32 to vector<49x64xf32>
    %102 = arith.addf %100, %101 : vector<49x64xf32>
    %cst_50 = arith.constant 0.000000e+00 : f32
    %cst_51 = arith.constant 6.000000e+00 : f32
    %103 = vector.broadcast %cst_50 : f32 to vector<49x64xf32>
    %104 = arith.maximumf %103, %102 : vector<49x64xf32>
    %105 = vector.broadcast %cst_51 : f32 to vector<49x64xf32>
    %106 = arith.minimumf %105, %104 : vector<49x64xf32>
    %107 = arith.mulf %100, %106 : vector<49x64xf32>
    %cst_52 = arith.constant 0.166666672 : f32
    %108 = vector.broadcast %cst_52 : f32 to vector<49x64xf32>
    %109 = arith.mulf %107, %108 : vector<49x64xf32>
    %110 = arith.truncf %109 : vector<49x64xf32> to vector<49x64xbf16>
    %c2_53 = arith.constant 2 : index
    %c0_54 = arith.constant 0 : index
    %c0_55 = arith.constant 0 : index
    %111 = vector.load %arg8[%c2_53, %c0_54, %c0_55] : memref<16x64x128xbf16, #tpu.memory_space<vmem>>, vector<1x64x128xbf16>
    %112 = vector.shape_cast %111 : vector<1x64x128xbf16> to vector<64x128xbf16>
    %cst_56 = arith.constant dense<0.000000e+00> : vector<49x128xf32>
    %113 = tpu.matmul %110, %112, %cst_56 {dimension_numbers = #tpu.dot_dimension_numbers<[1], [0], [0], [1], [0, 0, 1, 1], [], []>} : vector<49x64xbf16>, vector<64x128xbf16>, vector<49x128xf32> -> vector<49x128xf32>
    %114 = arith.addf %82, %113 : vector<49x128xf32>
    %115 = vector.extract_strided_slice %12 {offsets = [0, 192], sizes = [208, 64], strides = [1, 1]} : vector<208x256xbf16> to vector<208x64xbf16>
    %116 = vector.extract_strided_slice %18 {offsets = [0, 192], sizes = [49, 64], strides = [1, 1]} : vector<49x256xbf16> to vector<49x64xbf16>
    %cst_57 = arith.constant dense<0.000000e+00> : vector<49x208xf32>
    %117 = tpu.matmul %116, %115, %cst_57 {dimension_numbers = #tpu.dot_dimension_numbers<[1], [1], [0], [0], [0, 0, 1, 0], [], []>} : vector<49x64xbf16>, vector<208x64xbf16>, vector<49x208xf32> -> vector<49x208xf32>
    %c3 = arith.constant 3 : index
    %c0_58 = arith.constant 0 : index
    %c0_59 = arith.constant 0 : index
    %118 = vector.load %arg7[%c3, %c0_58, %c0_59] : memref<4x49x208xf32, #tpu.memory_space<vmem>>, vector<1x49x208xf32>
    %119 = vector.shape_cast %118 : vector<1x49x208xf32> to vector<49x208xf32>
    %120 = arith.addf %117, %119 : vector<49x208xf32>
    %cst_60 = arith.constant dense<0xFF800000> : vector<49xf32>
    %121 = vector.multi_reduction <maximumf>, %120, %cst_60 [1] : vector<49x208xf32> to vector<49xf32>
    %122 = vector.shape_cast %121 : vector<49xf32> to vector<49x1xf32>
    %123 = vector.broadcast %122 : vector<49x1xf32> to vector<49x208xf32>
    %124 = arith.subf %120, %123 : vector<49x208xf32>
    %125 = math.exp %124 : vector<49x208xf32>
    %cst_61 = arith.constant dense<0.000000e+00> : vector<49xf32>
    %126 = vector.multi_reduction <add>, %125, %cst_61 [1] : vector<49x208xf32> to vector<49xf32>
    %127 = vector.shape_cast %126 : vector<49xf32> to vector<49x1xf32>
    %128 = tpu.reciprocal %127 {approx = true} : vector<49x1xf32> -> vector<49x1xf32>
    %129 = vector.broadcast %128 : vector<49x1xf32> to vector<49x208xf32>
    %130 = arith.mulf %125, %129 : vector<49x208xf32>
    %131 = arith.truncf %130 : vector<49x208xf32> to vector<49x208xbf16>
    %cst_62 = arith.constant dense<0.000000e+00> : vector<49x64xf32>
    %132 = tpu.matmul %131, %115, %cst_62 {dimension_numbers = #tpu.dot_dimension_numbers<[1], [0], [0], [1], [0, 0, 1, 1], [], []>} : vector<49x208xbf16>, vector<208x64xbf16>, vector<49x64xf32> -> vector<49x64xf32>
    %cst_63 = arith.constant 3.000000e+00 : f32
    %133 = vector.broadcast %cst_63 : f32 to vector<49x64xf32>
    %134 = arith.addf %132, %133 : vector<49x64xf32>
    %cst_64 = arith.constant 0.000000e+00 : f32
    %cst_65 = arith.constant 6.000000e+00 : f32
    %135 = vector.broadcast %cst_64 : f32 to vector<49x64xf32>
    %136 = arith.maximumf %135, %134 : vector<49x64xf32>
    %137 = vector.broadcast %cst_65 : f32 to vector<49x64xf32>
    %138 = arith.minimumf %137, %136 : vector<49x64xf32>
    %139 = arith.mulf %132, %138 : vector<49x64xf32>
    %cst_66 = arith.constant 0.166666672 : f32
    %140 = vector.broadcast %cst_66 : f32 to vector<49x64xf32>
    %141 = arith.mulf %139, %140 : vector<49x64xf32>
    %142 = arith.truncf %141 : vector<49x64xf32> to vector<49x64xbf16>
    %c3_67 = arith.constant 3 : index
    %c0_68 = arith.constant 0 : index
    %c0_69 = arith.constant 0 : index
    %143 = vector.load %arg8[%c3_67, %c0_68, %c0_69] : memref<16x64x128xbf16, #tpu.memory_space<vmem>>, vector<1x64x128xbf16>
    %144 = vector.shape_cast %143 : vector<1x64x128xbf16> to vector<64x128xbf16>
    %cst_70 = arith.constant dense<0.000000e+00> : vector<49x128xf32>
    %145 = tpu.matmul %142, %144, %cst_70 {dimension_numbers = #tpu.dot_dimension_numbers<[1], [0], [0], [1], [0, 0, 1, 1], [], []>} : vector<49x64xbf16>, vector<64x128xbf16>, vector<49x128xf32> -> vector<49x128xf32>
    %146 = arith.addf %114, %145 : vector<49x128xf32>
    %147 = vector.extract_strided_slice %0 {offsets = [208, 0], sizes = [208, 32], strides = [1, 1]} : vector<832x32xbf16> to vector<208x32xbf16>
    %148 = vector.extract_strided_slice %6 {offsets = [208, 0], sizes = [208, 256], strides = [1, 1]} : vector<832x256xbf16> to vector<208x256xbf16>
    %cst_71 = arith.constant dense<0.000000e+00> : vector<49x32xf32>
    %149 = tpu.matmul %7, %147, %cst_71 {dimension_numbers = #tpu.dot_dimension_numbers<[1], [0], [0], [1], [0, 0, 1, 1], [], []>} : vector<49x208xbf16>, vector<208x32xbf16>, vector<49x32xf32> -> vector<49x32xf32>
    %150 = arith.truncf %149 : vector<49x32xf32> to vector<49x32xbf16>
    %cst_72 = arith.constant dense<0.000000e+00> : vector<49x256xf32>
    %151 = tpu.matmul %150, %8, %cst_72 {dimension_numbers = #tpu.dot_dimension_numbers<[1], [0], [0], [1], [0, 0, 1, 1], [], []>} : vector<49x32xbf16>, vector<32x256xbf16>, vector<49x256xf32> -> vector<49x256xf32>
    %152 = vector.broadcast %9 : vector<1x256xf32> to vector<49x256xf32>
    %153 = arith.addf %151, %152 : vector<49x256xf32>
    %154 = arith.truncf %153 : vector<49x256xf32> to vector<49x256xbf16>
    %155 = vector.extract_strided_slice %148 {offsets = [0, 0], sizes = [208, 64], strides = [1, 1]} : vector<208x256xbf16> to vector<208x64xbf16>
    %156 = vector.extract_strided_slice %154 {offsets = [0, 0], sizes = [49, 64], strides = [1, 1]} : vector<49x256xbf16> to vector<49x64xbf16>
    %cst_73 = arith.constant dense<0.000000e+00> : vector<49x208xf32>
    %157 = tpu.matmul %156, %155, %cst_73 {dimension_numbers = #tpu.dot_dimension_numbers<[1], [1], [0], [0], [0, 0, 1, 0], [], []>} : vector<49x64xbf16>, vector<208x64xbf16>, vector<49x208xf32> -> vector<49x208xf32>
    %c0_74 = arith.constant 0 : index
    %c0_75 = arith.constant 0 : index
    %c0_76 = arith.constant 0 : index
    %158 = vector.load %arg7[%c0_74, %c0_75, %c0_76] : memref<4x49x208xf32, #tpu.memory_space<vmem>>, vector<1x49x208xf32>
    %159 = vector.shape_cast %158 : vector<1x49x208xf32> to vector<49x208xf32>
    %160 = arith.addf %157, %159 : vector<49x208xf32>
    %cst_77 = arith.constant dense<0xFF800000> : vector<49xf32>
    %161 = vector.multi_reduction <maximumf>, %160, %cst_77 [1] : vector<49x208xf32> to vector<49xf32>
    %162 = vector.shape_cast %161 : vector<49xf32> to vector<49x1xf32>
    %163 = vector.broadcast %162 : vector<49x1xf32> to vector<49x208xf32>
    %164 = arith.subf %160, %163 : vector<49x208xf32>
    %165 = math.exp %164 : vector<49x208xf32>
    %cst_78 = arith.constant dense<0.000000e+00> : vector<49xf32>
    %166 = vector.multi_reduction <add>, %165, %cst_78 [1] : vector<49x208xf32> to vector<49xf32>
    %167 = vector.shape_cast %166 : vector<49xf32> to vector<49x1xf32>
    %168 = tpu.reciprocal %167 {approx = true} : vector<49x1xf32> -> vector<49x1xf32>
    %169 = vector.broadcast %168 : vector<49x1xf32> to vector<49x208xf32>
    %170 = arith.mulf %165, %169 : vector<49x208xf32>
    %171 = arith.truncf %170 : vector<49x208xf32> to vector<49x208xbf16>
    %cst_79 = arith.constant dense<0.000000e+00> : vector<49x64xf32>
    %172 = tpu.matmul %171, %155, %cst_79 {dimension_numbers = #tpu.dot_dimension_numbers<[1], [0], [0], [1], [0, 0, 1, 1], [], []>} : vector<49x208xbf16>, vector<208x64xbf16>, vector<49x64xf32> -> vector<49x64xf32>
    %cst_80 = arith.constant 3.000000e+00 : f32
    %173 = vector.broadcast %cst_80 : f32 to vector<49x64xf32>
    %174 = arith.addf %172, %173 : vector<49x64xf32>
    %cst_81 = arith.constant 0.000000e+00 : f32
    %cst_82 = arith.constant 6.000000e+00 : f32
    %175 = vector.broadcast %cst_81 : f32 to vector<49x64xf32>
    %176 = arith.maximumf %175, %174 : vector<49x64xf32>
    %177 = vector.broadcast %cst_82 : f32 to vector<49x64xf32>
    %178 = arith.minimumf %177, %176 : vector<49x64xf32>
    %179 = arith.mulf %172, %178 : vector<49x64xf32>
    %cst_83 = arith.constant 0.166666672 : f32
    %180 = vector.broadcast %cst_83 : f32 to vector<49x64xf32>
    %181 = arith.mulf %179, %180 : vector<49x64xf32>
    %182 = arith.truncf %181 : vector<49x64xf32> to vector<49x64xbf16>
    %c4 = arith.constant 4 : index
    %c0_84 = arith.constant 0 : index
    %c0_85 = arith.constant 0 : index
    %183 = vector.load %arg8[%c4, %c0_84, %c0_85] : memref<16x64x128xbf16, #tpu.memory_space<vmem>>, vector<1x64x128xbf16>
    %184 = vector.shape_cast %183 : vector<1x64x128xbf16> to vector<64x128xbf16>
    %cst_86 = arith.constant dense<0.000000e+00> : vector<49x128xf32>
    %185 = tpu.matmul %182, %184, %cst_86 {dimension_numbers = #tpu.dot_dimension_numbers<[1], [0], [0], [1], [0, 0, 1, 1], [], []>} : vector<49x64xbf16>, vector<64x128xbf16>, vector<49x128xf32> -> vector<49x128xf32>
    %186 = arith.addf %146, %185 : vector<49x128xf32>
    %187 = vector.extract_strided_slice %148 {offsets = [0, 64], sizes = [208, 64], strides = [1, 1]} : vector<208x256xbf16> to vector<208x64xbf16>
    %188 = vector.extract_strided_slice %154 {offsets = [0, 64], sizes = [49, 64], strides = [1, 1]} : vector<49x256xbf16> to vector<49x64xbf16>
    %cst_87 = arith.constant dense<0.000000e+00> : vector<49x208xf32>
    %189 = tpu.matmul %188, %187, %cst_87 {dimension_numbers = #tpu.dot_dimension_numbers<[1], [1], [0], [0], [0, 0, 1, 0], [], []>} : vector<49x64xbf16>, vector<208x64xbf16>, vector<49x208xf32> -> vector<49x208xf32>
    %c1_88 = arith.constant 1 : index
    %c0_89 = arith.constant 0 : index
    %c0_90 = arith.constant 0 : index
    %190 = vector.load %arg7[%c1_88, %c0_89, %c0_90] : memref<4x49x208xf32, #tpu.memory_space<vmem>>, vector<1x49x208xf32>
    %191 = vector.shape_cast %190 : vector<1x49x208xf32> to vector<49x208xf32>
    %192 = arith.addf %189, %191 : vector<49x208xf32>
    %cst_91 = arith.constant dense<0xFF800000> : vector<49xf32>
    %193 = vector.multi_reduction <maximumf>, %192, %cst_91 [1] : vector<49x208xf32> to vector<49xf32>
    %194 = vector.shape_cast %193 : vector<49xf32> to vector<49x1xf32>
    %195 = vector.broadcast %194 : vector<49x1xf32> to vector<49x208xf32>
    %196 = arith.subf %192, %195 : vector<49x208xf32>
    %197 = math.exp %196 : vector<49x208xf32>
    %cst_92 = arith.constant dense<0.000000e+00> : vector<49xf32>
    %198 = vector.multi_reduction <add>, %197, %cst_92 [1] : vector<49x208xf32> to vector<49xf32>
    %199 = vector.shape_cast %198 : vector<49xf32> to vector<49x1xf32>
    %200 = tpu.reciprocal %199 {approx = true} : vector<49x1xf32> -> vector<49x1xf32>
    %201 = vector.broadcast %200 : vector<49x1xf32> to vector<49x208xf32>
    %202 = arith.mulf %197, %201 : vector<49x208xf32>
    %203 = arith.truncf %202 : vector<49x208xf32> to vector<49x208xbf16>
    %cst_93 = arith.constant dense<0.000000e+00> : vector<49x64xf32>
    %204 = tpu.matmul %203, %187, %cst_93 {dimension_numbers = #tpu.dot_dimension_numbers<[1], [0], [0], [1], [0, 0, 1, 1], [], []>} : vector<49x208xbf16>, vector<208x64xbf16>, vector<49x64xf32> -> vector<49x64xf32>
    %cst_94 = arith.constant 3.000000e+00 : f32
    %205 = vector.broadcast %cst_94 : f32 to vector<49x64xf32>
    %206 = arith.addf %204, %205 : vector<49x64xf32>
    %cst_95 = arith.constant 0.000000e+00 : f32
    %cst_96 = arith.constant 6.000000e+00 : f32
    %207 = vector.broadcast %cst_95 : f32 to vector<49x64xf32>
    %208 = arith.maximumf %207, %206 : vector<49x64xf32>
    %209 = vector.broadcast %cst_96 : f32 to vector<49x64xf32>
    %210 = arith.minimumf %209, %208 : vector<49x64xf32>
    %211 = arith.mulf %204, %210 : vector<49x64xf32>
    %cst_97 = arith.constant 0.166666672 : f32
    %212 = vector.broadcast %cst_97 : f32 to vector<49x64xf32>
    %213 = arith.mulf %211, %212 : vector<49x64xf32>
    %214 = arith.truncf %213 : vector<49x64xf32> to vector<49x64xbf16>
    %c5 = arith.constant 5 : index
    %c0_98 = arith.constant 0 : index
    %c0_99 = arith.constant 0 : index
    %215 = vector.load %arg8[%c5, %c0_98, %c0_99] : memref<16x64x128xbf16, #tpu.memory_space<vmem>>, vector<1x64x128xbf16>
    %216 = vector.shape_cast %215 : vector<1x64x128xbf16> to vector<64x128xbf16>
    %cst_100 = arith.constant dense<0.000000e+00> : vector<49x128xf32>
    %217 = tpu.matmul %214, %216, %cst_100 {dimension_numbers = #tpu.dot_dimension_numbers<[1], [0], [0], [1], [0, 0, 1, 1], [], []>} : vector<49x64xbf16>, vector<64x128xbf16>, vector<49x128xf32> -> vector<49x128xf32>
    %218 = arith.addf %186, %217 : vector<49x128xf32>
    %219 = vector.extract_strided_slice %148 {offsets = [0, 128], sizes = [208, 64], strides = [1, 1]} : vector<208x256xbf16> to vector<208x64xbf16>
    %220 = vector.extract_strided_slice %154 {offsets = [0, 128], sizes = [49, 64], strides = [1, 1]} : vector<49x256xbf16> to vector<49x64xbf16>
    %cst_101 = arith.constant dense<0.000000e+00> : vector<49x208xf32>
    %221 = tpu.matmul %220, %219, %cst_101 {dimension_numbers = #tpu.dot_dimension_numbers<[1], [1], [0], [0], [0, 0, 1, 0], [], []>} : vector<49x64xbf16>, vector<208x64xbf16>, vector<49x208xf32> -> vector<49x208xf32>
    %c2_102 = arith.constant 2 : index
    %c0_103 = arith.constant 0 : index
    %c0_104 = arith.constant 0 : index
    %222 = vector.load %arg7[%c2_102, %c0_103, %c0_104] : memref<4x49x208xf32, #tpu.memory_space<vmem>>, vector<1x49x208xf32>
    %223 = vector.shape_cast %222 : vector<1x49x208xf32> to vector<49x208xf32>
    %224 = arith.addf %221, %223 : vector<49x208xf32>
    %cst_105 = arith.constant dense<0xFF800000> : vector<49xf32>
    %225 = vector.multi_reduction <maximumf>, %224, %cst_105 [1] : vector<49x208xf32> to vector<49xf32>
    %226 = vector.shape_cast %225 : vector<49xf32> to vector<49x1xf32>
    %227 = vector.broadcast %226 : vector<49x1xf32> to vector<49x208xf32>
    %228 = arith.subf %224, %227 : vector<49x208xf32>
    %229 = math.exp %228 : vector<49x208xf32>
    %cst_106 = arith.constant dense<0.000000e+00> : vector<49xf32>
    %230 = vector.multi_reduction <add>, %229, %cst_106 [1] : vector<49x208xf32> to vector<49xf32>
    %231 = vector.shape_cast %230 : vector<49xf32> to vector<49x1xf32>
    %232 = tpu.reciprocal %231 {approx = true} : vector<49x1xf32> -> vector<49x1xf32>
    %233 = vector.broadcast %232 : vector<49x1xf32> to vector<49x208xf32>
    %234 = arith.mulf %229, %233 : vector<49x208xf32>
    %235 = arith.truncf %234 : vector<49x208xf32> to vector<49x208xbf16>
    %cst_107 = arith.constant dense<0.000000e+00> : vector<49x64xf32>
    %236 = tpu.matmul %235, %219, %cst_107 {dimension_numbers = #tpu.dot_dimension_numbers<[1], [0], [0], [1], [0, 0, 1, 1], [], []>} : vector<49x208xbf16>, vector<208x64xbf16>, vector<49x64xf32> -> vector<49x64xf32>
    %cst_108 = arith.constant 3.000000e+00 : f32
    %237 = vector.broadcast %cst_108 : f32 to vector<49x64xf32>
    %238 = arith.addf %236, %237 : vector<49x64xf32>
    %cst_109 = arith.constant 0.000000e+00 : f32
    %cst_110 = arith.constant 6.000000e+00 : f32
    %239 = vector.broadcast %cst_109 : f32 to vector<49x64xf32>
    %240 = arith.maximumf %239, %238 : vector<49x64xf32>
    %241 = vector.broadcast %cst_110 : f32 to vector<49x64xf32>
    %242 = arith.minimumf %241, %240 : vector<49x64xf32>
    %243 = arith.mulf %236, %242 : vector<49x64xf32>
    %cst_111 = arith.constant 0.166666672 : f32
    %244 = vector.broadcast %cst_111 : f32 to vector<49x64xf32>
    %245 = arith.mulf %243, %244 : vector<49x64xf32>
    %246 = arith.truncf %245 : vector<49x64xf32> to vector<49x64xbf16>
    %c6 = arith.constant 6 : index
    %c0_112 = arith.constant 0 : index
    %c0_113 = arith.constant 0 : index
    %247 = vector.load %arg8[%c6, %c0_112, %c0_113] : memref<16x64x128xbf16, #tpu.memory_space<vmem>>, vector<1x64x128xbf16>
    %248 = vector.shape_cast %247 : vector<1x64x128xbf16> to vector<64x128xbf16>
    %cst_114 = arith.constant dense<0.000000e+00> : vector<49x128xf32>
    %249 = tpu.matmul %246, %248, %cst_114 {dimension_numbers = #tpu.dot_dimension_numbers<[1], [0], [0], [1], [0, 0, 1, 1], [], []>} : vector<49x64xbf16>, vector<64x128xbf16>, vector<49x128xf32> -> vector<49x128xf32>
    %250 = arith.addf %218, %249 : vector<49x128xf32>
    %251 = vector.extract_strided_slice %148 {offsets = [0, 192], sizes = [208, 64], strides = [1, 1]} : vector<208x256xbf16> to vector<208x64xbf16>
    %252 = vector.extract_strided_slice %154 {offsets = [0, 192], sizes = [49, 64], strides = [1, 1]} : vector<49x256xbf16> to vector<49x64xbf16>
    %cst_115 = arith.constant dense<0.000000e+00> : vector<49x208xf32>
    %253 = tpu.matmul %252, %251, %cst_115 {dimension_numbers = #tpu.dot_dimension_numbers<[1], [1], [0], [0], [0, 0, 1, 0], [], []>} : vector<49x64xbf16>, vector<208x64xbf16>, vector<49x208xf32> -> vector<49x208xf32>
    %c3_116 = arith.constant 3 : index
    %c0_117 = arith.constant 0 : index
    %c0_118 = arith.constant 0 : index
    %254 = vector.load %arg7[%c3_116, %c0_117, %c0_118] : memref<4x49x208xf32, #tpu.memory_space<vmem>>, vector<1x49x208xf32>
    %255 = vector.shape_cast %254 : vector<1x49x208xf32> to vector<49x208xf32>
    %256 = arith.addf %253, %255 : vector<49x208xf32>
    %cst_119 = arith.constant dense<0xFF800000> : vector<49xf32>
    %257 = vector.multi_reduction <maximumf>, %256, %cst_119 [1] : vector<49x208xf32> to vector<49xf32>
    %258 = vector.shape_cast %257 : vector<49xf32> to vector<49x1xf32>
    %259 = vector.broadcast %258 : vector<49x1xf32> to vector<49x208xf32>
    %260 = arith.subf %256, %259 : vector<49x208xf32>
    %261 = math.exp %260 : vector<49x208xf32>
    %cst_120 = arith.constant dense<0.000000e+00> : vector<49xf32>
    %262 = vector.multi_reduction <add>, %261, %cst_120 [1] : vector<49x208xf32> to vector<49xf32>
    %263 = vector.shape_cast %262 : vector<49xf32> to vector<49x1xf32>
    %264 = tpu.reciprocal %263 {approx = true} : vector<49x1xf32> -> vector<49x1xf32>
    %265 = vector.broadcast %264 : vector<49x1xf32> to vector<49x208xf32>
    %266 = arith.mulf %261, %265 : vector<49x208xf32>
    %267 = arith.truncf %266 : vector<49x208xf32> to vector<49x208xbf16>
    %cst_121 = arith.constant dense<0.000000e+00> : vector<49x64xf32>
    %268 = tpu.matmul %267, %251, %cst_121 {dimension_numbers = #tpu.dot_dimension_numbers<[1], [0], [0], [1], [0, 0, 1, 1], [], []>} : vector<49x208xbf16>, vector<208x64xbf16>, vector<49x64xf32> -> vector<49x64xf32>
    %cst_122 = arith.constant 3.000000e+00 : f32
    %269 = vector.broadcast %cst_122 : f32 to vector<49x64xf32>
    %270 = arith.addf %268, %269 : vector<49x64xf32>
    %cst_123 = arith.constant 0.000000e+00 : f32
    %cst_124 = arith.constant 6.000000e+00 : f32
    %271 = vector.broadcast %cst_123 : f32 to vector<49x64xf32>
    %272 = arith.maximumf %271, %270 : vector<49x64xf32>
    %273 = vector.broadcast %cst_124 : f32 to vector<49x64xf32>
    %274 = arith.minimumf %273, %272 : vector<49x64xf32>
    %275 = arith.mulf %268, %274 : vector<49x64xf32>
    %cst_125 = arith.constant 0.166666672 : f32
    %276 = vector.broadcast %cst_125 : f32 to vector<49x64xf32>
    %277 = arith.mulf %275, %276 : vector<49x64xf32>
    %278 = arith.truncf %277 : vector<49x64xf32> to vector<49x64xbf16>
    %c7 = arith.constant 7 : index
    %c0_126 = arith.constant 0 : index
    %c0_127 = arith.constant 0 : index
    %279 = vector.load %arg8[%c7, %c0_126, %c0_127] : memref<16x64x128xbf16, #tpu.memory_space<vmem>>, vector<1x64x128xbf16>
    %280 = vector.shape_cast %279 : vector<1x64x128xbf16> to vector<64x128xbf16>
    %cst_128 = arith.constant dense<0.000000e+00> : vector<49x128xf32>
    %281 = tpu.matmul %278, %280, %cst_128 {dimension_numbers = #tpu.dot_dimension_numbers<[1], [0], [0], [1], [0, 0, 1, 1], [], []>} : vector<49x64xbf16>, vector<64x128xbf16>, vector<49x128xf32> -> vector<49x128xf32>
    %282 = arith.addf %250, %281 : vector<49x128xf32>
    %283 = vector.extract_strided_slice %0 {offsets = [416, 0], sizes = [208, 32], strides = [1, 1]} : vector<832x32xbf16> to vector<208x32xbf16>
    %284 = vector.extract_strided_slice %6 {offsets = [416, 0], sizes = [208, 256], strides = [1, 1]} : vector<832x256xbf16> to vector<208x256xbf16>
    %cst_129 = arith.constant dense<0.000000e+00> : vector<49x32xf32>
    %285 = tpu.matmul %7, %283, %cst_129 {dimension_numbers = #tpu.dot_dimension_numbers<[1], [0], [0], [1], [0, 0, 1, 1], [], []>} : vector<49x208xbf16>, vector<208x32xbf16>, vector<49x32xf32> -> vector<49x32xf32>
    %286 = arith.truncf %285 : vector<49x32xf32> to vector<49x32xbf16>
    %cst_130 = arith.constant dense<0.000000e+00> : vector<49x256xf32>
    %287 = tpu.matmul %286, %8, %cst_130 {dimension_numbers = #tpu.dot_dimension_numbers<[1], [0], [0], [1], [0, 0, 1, 1], [], []>} : vector<49x32xbf16>, vector<32x256xbf16>, vector<49x256xf32> -> vector<49x256xf32>
    %288 = vector.broadcast %9 : vector<1x256xf32> to vector<49x256xf32>
    %289 = arith.addf %287, %288 : vector<49x256xf32>
    %290 = arith.truncf %289 : vector<49x256xf32> to vector<49x256xbf16>
    %291 = vector.extract_strided_slice %284 {offsets = [0, 0], sizes = [208, 64], strides = [1, 1]} : vector<208x256xbf16> to vector<208x64xbf16>
    %292 = vector.extract_strided_slice %290 {offsets = [0, 0], sizes = [49, 64], strides = [1, 1]} : vector<49x256xbf16> to vector<49x64xbf16>
    %cst_131 = arith.constant dense<0.000000e+00> : vector<49x208xf32>
    %293 = tpu.matmul %292, %291, %cst_131 {dimension_numbers = #tpu.dot_dimension_numbers<[1], [1], [0], [0], [0, 0, 1, 0], [], []>} : vector<49x64xbf16>, vector<208x64xbf16>, vector<49x208xf32> -> vector<49x208xf32>
    %c0_132 = arith.constant 0 : index
    %c0_133 = arith.constant 0 : index
    %c0_134 = arith.constant 0 : index
    %294 = vector.load %arg7[%c0_132, %c0_133, %c0_134] : memref<4x49x208xf32, #tpu.memory_space<vmem>>, vector<1x49x208xf32>
    %295 = vector.shape_cast %294 : vector<1x49x208xf32> to vector<49x208xf32>
    %296 = arith.addf %293, %295 : vector<49x208xf32>
    %cst_135 = arith.constant dense<0xFF800000> : vector<49xf32>
    %297 = vector.multi_reduction <maximumf>, %296, %cst_135 [1] : vector<49x208xf32> to vector<49xf32>
    %298 = vector.shape_cast %297 : vector<49xf32> to vector<49x1xf32>
    %299 = vector.broadcast %298 : vector<49x1xf32> to vector<49x208xf32>
    %300 = arith.subf %296, %299 : vector<49x208xf32>
    %301 = math.exp %300 : vector<49x208xf32>
    %cst_136 = arith.constant dense<0.000000e+00> : vector<49xf32>
    %302 = vector.multi_reduction <add>, %301, %cst_136 [1] : vector<49x208xf32> to vector<49xf32>
    %303 = vector.shape_cast %302 : vector<49xf32> to vector<49x1xf32>
    %304 = tpu.reciprocal %303 {approx = true} : vector<49x1xf32> -> vector<49x1xf32>
    %305 = vector.broadcast %304 : vector<49x1xf32> to vector<49x208xf32>
    %306 = arith.mulf %301, %305 : vector<49x208xf32>
    %307 = arith.truncf %306 : vector<49x208xf32> to vector<49x208xbf16>
    %cst_137 = arith.constant dense<0.000000e+00> : vector<49x64xf32>
    %308 = tpu.matmul %307, %291, %cst_137 {dimension_numbers = #tpu.dot_dimension_numbers<[1], [0], [0], [1], [0, 0, 1, 1], [], []>} : vector<49x208xbf16>, vector<208x64xbf16>, vector<49x64xf32> -> vector<49x64xf32>
    %cst_138 = arith.constant 3.000000e+00 : f32
    %309 = vector.broadcast %cst_138 : f32 to vector<49x64xf32>
    %310 = arith.addf %308, %309 : vector<49x64xf32>
    %cst_139 = arith.constant 0.000000e+00 : f32
    %cst_140 = arith.constant 6.000000e+00 : f32
    %311 = vector.broadcast %cst_139 : f32 to vector<49x64xf32>
    %312 = arith.maximumf %311, %310 : vector<49x64xf32>
    %313 = vector.broadcast %cst_140 : f32 to vector<49x64xf32>
    %314 = arith.minimumf %313, %312 : vector<49x64xf32>
    %315 = arith.mulf %308, %314 : vector<49x64xf32>
    %cst_141 = arith.constant 0.166666672 : f32
    %316 = vector.broadcast %cst_141 : f32 to vector<49x64xf32>
    %317 = arith.mulf %315, %316 : vector<49x64xf32>
    %318 = arith.truncf %317 : vector<49x64xf32> to vector<49x64xbf16>
    %c8 = arith.constant 8 : index
    %c0_142 = arith.constant 0 : index
    %c0_143 = arith.constant 0 : index
    %319 = vector.load %arg8[%c8, %c0_142, %c0_143] : memref<16x64x128xbf16, #tpu.memory_space<vmem>>, vector<1x64x128xbf16>
    %320 = vector.shape_cast %319 : vector<1x64x128xbf16> to vector<64x128xbf16>
    %cst_144 = arith.constant dense<0.000000e+00> : vector<49x128xf32>
    %321 = tpu.matmul %318, %320, %cst_144 {dimension_numbers = #tpu.dot_dimension_numbers<[1], [0], [0], [1], [0, 0, 1, 1], [], []>} : vector<49x64xbf16>, vector<64x128xbf16>, vector<49x128xf32> -> vector<49x128xf32>
    %322 = arith.addf %282, %321 : vector<49x128xf32>
    %323 = vector.extract_strided_slice %284 {offsets = [0, 64], sizes = [208, 64], strides = [1, 1]} : vector<208x256xbf16> to vector<208x64xbf16>
    %324 = vector.extract_strided_slice %290 {offsets = [0, 64], sizes = [49, 64], strides = [1, 1]} : vector<49x256xbf16> to vector<49x64xbf16>
    %cst_145 = arith.constant dense<0.000000e+00> : vector<49x208xf32>
    %325 = tpu.matmul %324, %323, %cst_145 {dimension_numbers = #tpu.dot_dimension_numbers<[1], [1], [0], [0], [0, 0, 1, 0], [], []>} : vector<49x64xbf16>, vector<208x64xbf16>, vector<49x208xf32> -> vector<49x208xf32>
    %c1_146 = arith.constant 1 : index
    %c0_147 = arith.constant 0 : index
    %c0_148 = arith.constant 0 : index
    %326 = vector.load %arg7[%c1_146, %c0_147, %c0_148] : memref<4x49x208xf32, #tpu.memory_space<vmem>>, vector<1x49x208xf32>
    %327 = vector.shape_cast %326 : vector<1x49x208xf32> to vector<49x208xf32>
    %328 = arith.addf %325, %327 : vector<49x208xf32>
    %cst_149 = arith.constant dense<0xFF800000> : vector<49xf32>
    %329 = vector.multi_reduction <maximumf>, %328, %cst_149 [1] : vector<49x208xf32> to vector<49xf32>
    %330 = vector.shape_cast %329 : vector<49xf32> to vector<49x1xf32>
    %331 = vector.broadcast %330 : vector<49x1xf32> to vector<49x208xf32>
    %332 = arith.subf %328, %331 : vector<49x208xf32>
    %333 = math.exp %332 : vector<49x208xf32>
    %cst_150 = arith.constant dense<0.000000e+00> : vector<49xf32>
    %334 = vector.multi_reduction <add>, %333, %cst_150 [1] : vector<49x208xf32> to vector<49xf32>
    %335 = vector.shape_cast %334 : vector<49xf32> to vector<49x1xf32>
    %336 = tpu.reciprocal %335 {approx = true} : vector<49x1xf32> -> vector<49x1xf32>
    %337 = vector.broadcast %336 : vector<49x1xf32> to vector<49x208xf32>
    %338 = arith.mulf %333, %337 : vector<49x208xf32>
    %339 = arith.truncf %338 : vector<49x208xf32> to vector<49x208xbf16>
    %cst_151 = arith.constant dense<0.000000e+00> : vector<49x64xf32>
    %340 = tpu.matmul %339, %323, %cst_151 {dimension_numbers = #tpu.dot_dimension_numbers<[1], [0], [0], [1], [0, 0, 1, 1], [], []>} : vector<49x208xbf16>, vector<208x64xbf16>, vector<49x64xf32> -> vector<49x64xf32>
    %cst_152 = arith.constant 3.000000e+00 : f32
    %341 = vector.broadcast %cst_152 : f32 to vector<49x64xf32>
    %342 = arith.addf %340, %341 : vector<49x64xf32>
    %cst_153 = arith.constant 0.000000e+00 : f32
    %cst_154 = arith.constant 6.000000e+00 : f32
    %343 = vector.broadcast %cst_153 : f32 to vector<49x64xf32>
    %344 = arith.maximumf %343, %342 : vector<49x64xf32>
    %345 = vector.broadcast %cst_154 : f32 to vector<49x64xf32>
    %346 = arith.minimumf %345, %344 : vector<49x64xf32>
    %347 = arith.mulf %340, %346 : vector<49x64xf32>
    %cst_155 = arith.constant 0.166666672 : f32
    %348 = vector.broadcast %cst_155 : f32 to vector<49x64xf32>
    %349 = arith.mulf %347, %348 : vector<49x64xf32>
    %350 = arith.truncf %349 : vector<49x64xf32> to vector<49x64xbf16>
    %c9 = arith.constant 9 : index
    %c0_156 = arith.constant 0 : index
    %c0_157 = arith.constant 0 : index
    %351 = vector.load %arg8[%c9, %c0_156, %c0_157] : memref<16x64x128xbf16, #tpu.memory_space<vmem>>, vector<1x64x128xbf16>
    %352 = vector.shape_cast %351 : vector<1x64x128xbf16> to vector<64x128xbf16>
    %cst_158 = arith.constant dense<0.000000e+00> : vector<49x128xf32>
    %353 = tpu.matmul %350, %352, %cst_158 {dimension_numbers = #tpu.dot_dimension_numbers<[1], [0], [0], [1], [0, 0, 1, 1], [], []>} : vector<49x64xbf16>, vector<64x128xbf16>, vector<49x128xf32> -> vector<49x128xf32>
    %354 = arith.addf %322, %353 : vector<49x128xf32>
    %355 = vector.extract_strided_slice %284 {offsets = [0, 128], sizes = [208, 64], strides = [1, 1]} : vector<208x256xbf16> to vector<208x64xbf16>
    %356 = vector.extract_strided_slice %290 {offsets = [0, 128], sizes = [49, 64], strides = [1, 1]} : vector<49x256xbf16> to vector<49x64xbf16>
    %cst_159 = arith.constant dense<0.000000e+00> : vector<49x208xf32>
    %357 = tpu.matmul %356, %355, %cst_159 {dimension_numbers = #tpu.dot_dimension_numbers<[1], [1], [0], [0], [0, 0, 1, 0], [], []>} : vector<49x64xbf16>, vector<208x64xbf16>, vector<49x208xf32> -> vector<49x208xf32>
    %c2_160 = arith.constant 2 : index
    %c0_161 = arith.constant 0 : index
    %c0_162 = arith.constant 0 : index
    %358 = vector.load %arg7[%c2_160, %c0_161, %c0_162] : memref<4x49x208xf32, #tpu.memory_space<vmem>>, vector<1x49x208xf32>
    %359 = vector.shape_cast %358 : vector<1x49x208xf32> to vector<49x208xf32>
    %360 = arith.addf %357, %359 : vector<49x208xf32>
    %cst_163 = arith.constant dense<0xFF800000> : vector<49xf32>
    %361 = vector.multi_reduction <maximumf>, %360, %cst_163 [1] : vector<49x208xf32> to vector<49xf32>
    %362 = vector.shape_cast %361 : vector<49xf32> to vector<49x1xf32>
    %363 = vector.broadcast %362 : vector<49x1xf32> to vector<49x208xf32>
    %364 = arith.subf %360, %363 : vector<49x208xf32>
    %365 = math.exp %364 : vector<49x208xf32>
    %cst_164 = arith.constant dense<0.000000e+00> : vector<49xf32>
    %366 = vector.multi_reduction <add>, %365, %cst_164 [1] : vector<49x208xf32> to vector<49xf32>
    %367 = vector.shape_cast %366 : vector<49xf32> to vector<49x1xf32>
    %368 = tpu.reciprocal %367 {approx = true} : vector<49x1xf32> -> vector<49x1xf32>
    %369 = vector.broadcast %368 : vector<49x1xf32> to vector<49x208xf32>
    %370 = arith.mulf %365, %369 : vector<49x208xf32>
    %371 = arith.truncf %370 : vector<49x208xf32> to vector<49x208xbf16>
    %cst_165 = arith.constant dense<0.000000e+00> : vector<49x64xf32>
    %372 = tpu.matmul %371, %355, %cst_165 {dimension_numbers = #tpu.dot_dimension_numbers<[1], [0], [0], [1], [0, 0, 1, 1], [], []>} : vector<49x208xbf16>, vector<208x64xbf16>, vector<49x64xf32> -> vector<49x64xf32>
    %cst_166 = arith.constant 3.000000e+00 : f32
    %373 = vector.broadcast %cst_166 : f32 to vector<49x64xf32>
    %374 = arith.addf %372, %373 : vector<49x64xf32>
    %cst_167 = arith.constant 0.000000e+00 : f32
    %cst_168 = arith.constant 6.000000e+00 : f32
    %375 = vector.broadcast %cst_167 : f32 to vector<49x64xf32>
    %376 = arith.maximumf %375, %374 : vector<49x64xf32>
    %377 = vector.broadcast %cst_168 : f32 to vector<49x64xf32>
    %378 = arith.minimumf %377, %376 : vector<49x64xf32>
    %379 = arith.mulf %372, %378 : vector<49x64xf32>
    %cst_169 = arith.constant 0.166666672 : f32
    %380 = vector.broadcast %cst_169 : f32 to vector<49x64xf32>
    %381 = arith.mulf %379, %380 : vector<49x64xf32>
    %382 = arith.truncf %381 : vector<49x64xf32> to vector<49x64xbf16>
    %c10 = arith.constant 10 : index
    %c0_170 = arith.constant 0 : index
    %c0_171 = arith.constant 0 : index
    %383 = vector.load %arg8[%c10, %c0_170, %c0_171] : memref<16x64x128xbf16, #tpu.memory_space<vmem>>, vector<1x64x128xbf16>
    %384 = vector.shape_cast %383 : vector<1x64x128xbf16> to vector<64x128xbf16>
    %cst_172 = arith.constant dense<0.000000e+00> : vector<49x128xf32>
    %385 = tpu.matmul %382, %384, %cst_172 {dimension_numbers = #tpu.dot_dimension_numbers<[1], [0], [0], [1], [0, 0, 1, 1], [], []>} : vector<49x64xbf16>, vector<64x128xbf16>, vector<49x128xf32> -> vector<49x128xf32>
    %386 = arith.addf %354, %385 : vector<49x128xf32>
    %387 = vector.extract_strided_slice %284 {offsets = [0, 192], sizes = [208, 64], strides = [1, 1]} : vector<208x256xbf16> to vector<208x64xbf16>
    %388 = vector.extract_strided_slice %290 {offsets = [0, 192], sizes = [49, 64], strides = [1, 1]} : vector<49x256xbf16> to vector<49x64xbf16>
    %cst_173 = arith.constant dense<0.000000e+00> : vector<49x208xf32>
    %389 = tpu.matmul %388, %387, %cst_173 {dimension_numbers = #tpu.dot_dimension_numbers<[1], [1], [0], [0], [0, 0, 1, 0], [], []>} : vector<49x64xbf16>, vector<208x64xbf16>, vector<49x208xf32> -> vector<49x208xf32>
    %c3_174 = arith.constant 3 : index
    %c0_175 = arith.constant 0 : index
    %c0_176 = arith.constant 0 : index
    %390 = vector.load %arg7[%c3_174, %c0_175, %c0_176] : memref<4x49x208xf32, #tpu.memory_space<vmem>>, vector<1x49x208xf32>
    %391 = vector.shape_cast %390 : vector<1x49x208xf32> to vector<49x208xf32>
    %392 = arith.addf %389, %391 : vector<49x208xf32>
    %cst_177 = arith.constant dense<0xFF800000> : vector<49xf32>
    %393 = vector.multi_reduction <maximumf>, %392, %cst_177 [1] : vector<49x208xf32> to vector<49xf32>
    %394 = vector.shape_cast %393 : vector<49xf32> to vector<49x1xf32>
    %395 = vector.broadcast %394 : vector<49x1xf32> to vector<49x208xf32>
    %396 = arith.subf %392, %395 : vector<49x208xf32>
    %397 = math.exp %396 : vector<49x208xf32>
    %cst_178 = arith.constant dense<0.000000e+00> : vector<49xf32>
    %398 = vector.multi_reduction <add>, %397, %cst_178 [1] : vector<49x208xf32> to vector<49xf32>
    %399 = vector.shape_cast %398 : vector<49xf32> to vector<49x1xf32>
    %400 = tpu.reciprocal %399 {approx = true} : vector<49x1xf32> -> vector<49x1xf32>
    %401 = vector.broadcast %400 : vector<49x1xf32> to vector<49x208xf32>
    %402 = arith.mulf %397, %401 : vector<49x208xf32>
    %403 = arith.truncf %402 : vector<49x208xf32> to vector<49x208xbf16>
    %cst_179 = arith.constant dense<0.000000e+00> : vector<49x64xf32>
    %404 = tpu.matmul %403, %387, %cst_179 {dimension_numbers = #tpu.dot_dimension_numbers<[1], [0], [0], [1], [0, 0, 1, 1], [], []>} : vector<49x208xbf16>, vector<208x64xbf16>, vector<49x64xf32> -> vector<49x64xf32>
    %cst_180 = arith.constant 3.000000e+00 : f32
    %405 = vector.broadcast %cst_180 : f32 to vector<49x64xf32>
    %406 = arith.addf %404, %405 : vector<49x64xf32>
    %cst_181 = arith.constant 0.000000e+00 : f32
    %cst_182 = arith.constant 6.000000e+00 : f32
    %407 = vector.broadcast %cst_181 : f32 to vector<49x64xf32>
    %408 = arith.maximumf %407, %406 : vector<49x64xf32>
    %409 = vector.broadcast %cst_182 : f32 to vector<49x64xf32>
    %410 = arith.minimumf %409, %408 : vector<49x64xf32>
    %411 = arith.mulf %404, %410 : vector<49x64xf32>
    %cst_183 = arith.constant 0.166666672 : f32
    %412 = vector.broadcast %cst_183 : f32 to vector<49x64xf32>
    %413 = arith.mulf %411, %412 : vector<49x64xf32>
    %414 = arith.truncf %413 : vector<49x64xf32> to vector<49x64xbf16>
    %c11 = arith.constant 11 : index
    %c0_184 = arith.constant 0 : index
    %c0_185 = arith.constant 0 : index
    %415 = vector.load %arg8[%c11, %c0_184, %c0_185] : memref<16x64x128xbf16, #tpu.memory_space<vmem>>, vector<1x64x128xbf16>
    %416 = vector.shape_cast %415 : vector<1x64x128xbf16> to vector<64x128xbf16>
    %cst_186 = arith.constant dense<0.000000e+00> : vector<49x128xf32>
    %417 = tpu.matmul %414, %416, %cst_186 {dimension_numbers = #tpu.dot_dimension_numbers<[1], [0], [0], [1], [0, 0, 1, 1], [], []>} : vector<49x64xbf16>, vector<64x128xbf16>, vector<49x128xf32> -> vector<49x128xf32>
    %418 = arith.addf %386, %417 : vector<49x128xf32>
    %419 = vector.extract_strided_slice %0 {offsets = [624, 0], sizes = [208, 32], strides = [1, 1]} : vector<832x32xbf16> to vector<208x32xbf16>
    %420 = vector.extract_strided_slice %6 {offsets = [624, 0], sizes = [208, 256], strides = [1, 1]} : vector<832x256xbf16> to vector<208x256xbf16>
    %cst_187 = arith.constant dense<0.000000e+00> : vector<49x32xf32>
    %421 = tpu.matmul %7, %419, %cst_187 {dimension_numbers = #tpu.dot_dimension_numbers<[1], [0], [0], [1], [0, 0, 1, 1], [], []>} : vector<49x208xbf16>, vector<208x32xbf16>, vector<49x32xf32> -> vector<49x32xf32>
    %422 = arith.truncf %421 : vector<49x32xf32> to vector<49x32xbf16>
    %cst_188 = arith.constant dense<0.000000e+00> : vector<49x256xf32>
    %423 = tpu.matmul %422, %8, %cst_188 {dimension_numbers = #tpu.dot_dimension_numbers<[1], [0], [0], [1], [0, 0, 1, 1], [], []>} : vector<49x32xbf16>, vector<32x256xbf16>, vector<49x256xf32> -> vector<49x256xf32>
    %424 = vector.broadcast %9 : vector<1x256xf32> to vector<49x256xf32>
    %425 = arith.addf %423, %424 : vector<49x256xf32>
    %426 = arith.truncf %425 : vector<49x256xf32> to vector<49x256xbf16>
    %427 = vector.extract_strided_slice %420 {offsets = [0, 0], sizes = [208, 64], strides = [1, 1]} : vector<208x256xbf16> to vector<208x64xbf16>
    %428 = vector.extract_strided_slice %426 {offsets = [0, 0], sizes = [49, 64], strides = [1, 1]} : vector<49x256xbf16> to vector<49x64xbf16>
    %cst_189 = arith.constant dense<0.000000e+00> : vector<49x208xf32>
    %429 = tpu.matmul %428, %427, %cst_189 {dimension_numbers = #tpu.dot_dimension_numbers<[1], [1], [0], [0], [0, 0, 1, 0], [], []>} : vector<49x64xbf16>, vector<208x64xbf16>, vector<49x208xf32> -> vector<49x208xf32>
    %c0_190 = arith.constant 0 : index
    %c0_191 = arith.constant 0 : index
    %c0_192 = arith.constant 0 : index
    %430 = vector.load %arg7[%c0_190, %c0_191, %c0_192] : memref<4x49x208xf32, #tpu.memory_space<vmem>>, vector<1x49x208xf32>
    %431 = vector.shape_cast %430 : vector<1x49x208xf32> to vector<49x208xf32>
    %432 = arith.addf %429, %431 : vector<49x208xf32>
    %cst_193 = arith.constant dense<0xFF800000> : vector<49xf32>
    %433 = vector.multi_reduction <maximumf>, %432, %cst_193 [1] : vector<49x208xf32> to vector<49xf32>
    %434 = vector.shape_cast %433 : vector<49xf32> to vector<49x1xf32>
    %435 = vector.broadcast %434 : vector<49x1xf32> to vector<49x208xf32>
    %436 = arith.subf %432, %435 : vector<49x208xf32>
    %437 = math.exp %436 : vector<49x208xf32>
    %cst_194 = arith.constant dense<0.000000e+00> : vector<49xf32>
    %438 = vector.multi_reduction <add>, %437, %cst_194 [1] : vector<49x208xf32> to vector<49xf32>
    %439 = vector.shape_cast %438 : vector<49xf32> to vector<49x1xf32>
    %440 = tpu.reciprocal %439 {approx = true} : vector<49x1xf32> -> vector<49x1xf32>
    %441 = vector.broadcast %440 : vector<49x1xf32> to vector<49x208xf32>
    %442 = arith.mulf %437, %441 : vector<49x208xf32>
    %443 = arith.truncf %442 : vector<49x208xf32> to vector<49x208xbf16>
    %cst_195 = arith.constant dense<0.000000e+00> : vector<49x64xf32>
    %444 = tpu.matmul %443, %427, %cst_195 {dimension_numbers = #tpu.dot_dimension_numbers<[1], [0], [0], [1], [0, 0, 1, 1], [], []>} : vector<49x208xbf16>, vector<208x64xbf16>, vector<49x64xf32> -> vector<49x64xf32>
    %cst_196 = arith.constant 3.000000e+00 : f32
    %445 = vector.broadcast %cst_196 : f32 to vector<49x64xf32>
    %446 = arith.addf %444, %445 : vector<49x64xf32>
    %cst_197 = arith.constant 0.000000e+00 : f32
    %cst_198 = arith.constant 6.000000e+00 : f32
    %447 = vector.broadcast %cst_197 : f32 to vector<49x64xf32>
    %448 = arith.maximumf %447, %446 : vector<49x64xf32>
    %449 = vector.broadcast %cst_198 : f32 to vector<49x64xf32>
    %450 = arith.minimumf %449, %448 : vector<49x64xf32>
    %451 = arith.mulf %444, %450 : vector<49x64xf32>
    %cst_199 = arith.constant 0.166666672 : f32
    %452 = vector.broadcast %cst_199 : f32 to vector<49x64xf32>
    %453 = arith.mulf %451, %452 : vector<49x64xf32>
    %454 = arith.truncf %453 : vector<49x64xf32> to vector<49x64xbf16>
    %c12 = arith.constant 12 : index
    %c0_200 = arith.constant 0 : index
    %c0_201 = arith.constant 0 : index
    %455 = vector.load %arg8[%c12, %c0_200, %c0_201] : memref<16x64x128xbf16, #tpu.memory_space<vmem>>, vector<1x64x128xbf16>
    %456 = vector.shape_cast %455 : vector<1x64x128xbf16> to vector<64x128xbf16>
    %cst_202 = arith.constant dense<0.000000e+00> : vector<49x128xf32>
    %457 = tpu.matmul %454, %456, %cst_202 {dimension_numbers = #tpu.dot_dimension_numbers<[1], [0], [0], [1], [0, 0, 1, 1], [], []>} : vector<49x64xbf16>, vector<64x128xbf16>, vector<49x128xf32> -> vector<49x128xf32>
    %458 = arith.addf %418, %457 : vector<49x128xf32>
    %459 = vector.extract_strided_slice %420 {offsets = [0, 64], sizes = [208, 64], strides = [1, 1]} : vector<208x256xbf16> to vector<208x64xbf16>
    %460 = vector.extract_strided_slice %426 {offsets = [0, 64], sizes = [49, 64], strides = [1, 1]} : vector<49x256xbf16> to vector<49x64xbf16>
    %cst_203 = arith.constant dense<0.000000e+00> : vector<49x208xf32>
    %461 = tpu.matmul %460, %459, %cst_203 {dimension_numbers = #tpu.dot_dimension_numbers<[1], [1], [0], [0], [0, 0, 1, 0], [], []>} : vector<49x64xbf16>, vector<208x64xbf16>, vector<49x208xf32> -> vector<49x208xf32>
    %c1_204 = arith.constant 1 : index
    %c0_205 = arith.constant 0 : index
    %c0_206 = arith.constant 0 : index
    %462 = vector.load %arg7[%c1_204, %c0_205, %c0_206] : memref<4x49x208xf32, #tpu.memory_space<vmem>>, vector<1x49x208xf32>
    %463 = vector.shape_cast %462 : vector<1x49x208xf32> to vector<49x208xf32>
    %464 = arith.addf %461, %463 : vector<49x208xf32>
    %cst_207 = arith.constant dense<0xFF800000> : vector<49xf32>
    %465 = vector.multi_reduction <maximumf>, %464, %cst_207 [1] : vector<49x208xf32> to vector<49xf32>
    %466 = vector.shape_cast %465 : vector<49xf32> to vector<49x1xf32>
    %467 = vector.broadcast %466 : vector<49x1xf32> to vector<49x208xf32>
    %468 = arith.subf %464, %467 : vector<49x208xf32>
    %469 = math.exp %468 : vector<49x208xf32>
    %cst_208 = arith.constant dense<0.000000e+00> : vector<49xf32>
    %470 = vector.multi_reduction <add>, %469, %cst_208 [1] : vector<49x208xf32> to vector<49xf32>
    %471 = vector.shape_cast %470 : vector<49xf32> to vector<49x1xf32>
    %472 = tpu.reciprocal %471 {approx = true} : vector<49x1xf32> -> vector<49x1xf32>
    %473 = vector.broadcast %472 : vector<49x1xf32> to vector<49x208xf32>
    %474 = arith.mulf %469, %473 : vector<49x208xf32>
    %475 = arith.truncf %474 : vector<49x208xf32> to vector<49x208xbf16>
    %cst_209 = arith.constant dense<0.000000e+00> : vector<49x64xf32>
    %476 = tpu.matmul %475, %459, %cst_209 {dimension_numbers = #tpu.dot_dimension_numbers<[1], [0], [0], [1], [0, 0, 1, 1], [], []>} : vector<49x208xbf16>, vector<208x64xbf16>, vector<49x64xf32> -> vector<49x64xf32>
    %cst_210 = arith.constant 3.000000e+00 : f32
    %477 = vector.broadcast %cst_210 : f32 to vector<49x64xf32>
    %478 = arith.addf %476, %477 : vector<49x64xf32>
    %cst_211 = arith.constant 0.000000e+00 : f32
    %cst_212 = arith.constant 6.000000e+00 : f32
    %479 = vector.broadcast %cst_211 : f32 to vector<49x64xf32>
    %480 = arith.maximumf %479, %478 : vector<49x64xf32>
    %481 = vector.broadcast %cst_212 : f32 to vector<49x64xf32>
    %482 = arith.minimumf %481, %480 : vector<49x64xf32>
    %483 = arith.mulf %476, %482 : vector<49x64xf32>
    %cst_213 = arith.constant 0.166666672 : f32
    %484 = vector.broadcast %cst_213 : f32 to vector<49x64xf32>
    %485 = arith.mulf %483, %484 : vector<49x64xf32>
    %486 = arith.truncf %485 : vector<49x64xf32> to vector<49x64xbf16>
    %c13 = arith.constant 13 : index
    %c0_214 = arith.constant 0 : index
    %c0_215 = arith.constant 0 : index
    %487 = vector.load %arg8[%c13, %c0_214, %c0_215] : memref<16x64x128xbf16, #tpu.memory_space<vmem>>, vector<1x64x128xbf16>
    %488 = vector.shape_cast %487 : vector<1x64x128xbf16> to vector<64x128xbf16>
    %cst_216 = arith.constant dense<0.000000e+00> : vector<49x128xf32>
    %489 = tpu.matmul %486, %488, %cst_216 {dimension_numbers = #tpu.dot_dimension_numbers<[1], [0], [0], [1], [0, 0, 1, 1], [], []>} : vector<49x64xbf16>, vector<64x128xbf16>, vector<49x128xf32> -> vector<49x128xf32>
    %490 = arith.addf %458, %489 : vector<49x128xf32>
    %491 = vector.extract_strided_slice %420 {offsets = [0, 128], sizes = [208, 64], strides = [1, 1]} : vector<208x256xbf16> to vector<208x64xbf16>
    %492 = vector.extract_strided_slice %426 {offsets = [0, 128], sizes = [49, 64], strides = [1, 1]} : vector<49x256xbf16> to vector<49x64xbf16>
    %cst_217 = arith.constant dense<0.000000e+00> : vector<49x208xf32>
    %493 = tpu.matmul %492, %491, %cst_217 {dimension_numbers = #tpu.dot_dimension_numbers<[1], [1], [0], [0], [0, 0, 1, 0], [], []>} : vector<49x64xbf16>, vector<208x64xbf16>, vector<49x208xf32> -> vector<49x208xf32>
    %c2_218 = arith.constant 2 : index
    %c0_219 = arith.constant 0 : index
    %c0_220 = arith.constant 0 : index
    %494 = vector.load %arg7[%c2_218, %c0_219, %c0_220] : memref<4x49x208xf32, #tpu.memory_space<vmem>>, vector<1x49x208xf32>
    %495 = vector.shape_cast %494 : vector<1x49x208xf32> to vector<49x208xf32>
    %496 = arith.addf %493, %495 : vector<49x208xf32>
    %cst_221 = arith.constant dense<0xFF800000> : vector<49xf32>
    %497 = vector.multi_reduction <maximumf>, %496, %cst_221 [1] : vector<49x208xf32> to vector<49xf32>
    %498 = vector.shape_cast %497 : vector<49xf32> to vector<49x1xf32>
    %499 = vector.broadcast %498 : vector<49x1xf32> to vector<49x208xf32>
    %500 = arith.subf %496, %499 : vector<49x208xf32>
    %501 = math.exp %500 : vector<49x208xf32>
    %cst_222 = arith.constant dense<0.000000e+00> : vector<49xf32>
    %502 = vector.multi_reduction <add>, %501, %cst_222 [1] : vector<49x208xf32> to vector<49xf32>
    %503 = vector.shape_cast %502 : vector<49xf32> to vector<49x1xf32>
    %504 = tpu.reciprocal %503 {approx = true} : vector<49x1xf32> -> vector<49x1xf32>
    %505 = vector.broadcast %504 : vector<49x1xf32> to vector<49x208xf32>
    %506 = arith.mulf %501, %505 : vector<49x208xf32>
    %507 = arith.truncf %506 : vector<49x208xf32> to vector<49x208xbf16>
    %cst_223 = arith.constant dense<0.000000e+00> : vector<49x64xf32>
    %508 = tpu.matmul %507, %491, %cst_223 {dimension_numbers = #tpu.dot_dimension_numbers<[1], [0], [0], [1], [0, 0, 1, 1], [], []>} : vector<49x208xbf16>, vector<208x64xbf16>, vector<49x64xf32> -> vector<49x64xf32>
    %cst_224 = arith.constant 3.000000e+00 : f32
    %509 = vector.broadcast %cst_224 : f32 to vector<49x64xf32>
    %510 = arith.addf %508, %509 : vector<49x64xf32>
    %cst_225 = arith.constant 0.000000e+00 : f32
    %cst_226 = arith.constant 6.000000e+00 : f32
    %511 = vector.broadcast %cst_225 : f32 to vector<49x64xf32>
    %512 = arith.maximumf %511, %510 : vector<49x64xf32>
    %513 = vector.broadcast %cst_226 : f32 to vector<49x64xf32>
    %514 = arith.minimumf %513, %512 : vector<49x64xf32>
    %515 = arith.mulf %508, %514 : vector<49x64xf32>
    %cst_227 = arith.constant 0.166666672 : f32
    %516 = vector.broadcast %cst_227 : f32 to vector<49x64xf32>
    %517 = arith.mulf %515, %516 : vector<49x64xf32>
    %518 = arith.truncf %517 : vector<49x64xf32> to vector<49x64xbf16>
    %c14 = arith.constant 14 : index
    %c0_228 = arith.constant 0 : index
    %c0_229 = arith.constant 0 : index
    %519 = vector.load %arg8[%c14, %c0_228, %c0_229] : memref<16x64x128xbf16, #tpu.memory_space<vmem>>, vector<1x64x128xbf16>
    %520 = vector.shape_cast %519 : vector<1x64x128xbf16> to vector<64x128xbf16>
    %cst_230 = arith.constant dense<0.000000e+00> : vector<49x128xf32>
    %521 = tpu.matmul %518, %520, %cst_230 {dimension_numbers = #tpu.dot_dimension_numbers<[1], [0], [0], [1], [0, 0, 1, 1], [], []>} : vector<49x64xbf16>, vector<64x128xbf16>, vector<49x128xf32> -> vector<49x128xf32>
    %522 = arith.addf %490, %521 : vector<49x128xf32>
    %523 = vector.extract_strided_slice %420 {offsets = [0, 192], sizes = [208, 64], strides = [1, 1]} : vector<208x256xbf16> to vector<208x64xbf16>
    %524 = vector.extract_strided_slice %426 {offsets = [0, 192], sizes = [49, 64], strides = [1, 1]} : vector<49x256xbf16> to vector<49x64xbf16>
    %cst_231 = arith.constant dense<0.000000e+00> : vector<49x208xf32>
    %525 = tpu.matmul %524, %523, %cst_231 {dimension_numbers = #tpu.dot_dimension_numbers<[1], [1], [0], [0], [0, 0, 1, 0], [], []>} : vector<49x64xbf16>, vector<208x64xbf16>, vector<49x208xf32> -> vector<49x208xf32>
    %c3_232 = arith.constant 3 : index
    %c0_233 = arith.constant 0 : index
    %c0_234 = arith.constant 0 : index
    %526 = vector.load %arg7[%c3_232, %c0_233, %c0_234] : memref<4x49x208xf32, #tpu.memory_space<vmem>>, vector<1x49x208xf32>
    %527 = vector.shape_cast %526 : vector<1x49x208xf32> to vector<49x208xf32>
    %528 = arith.addf %525, %527 : vector<49x208xf32>
    %cst_235 = arith.constant dense<0xFF800000> : vector<49xf32>
    %529 = vector.multi_reduction <maximumf>, %528, %cst_235 [1] : vector<49x208xf32> to vector<49xf32>
    %530 = vector.shape_cast %529 : vector<49xf32> to vector<49x1xf32>
    %531 = vector.broadcast %530 : vector<49x1xf32> to vector<49x208xf32>
    %532 = arith.subf %528, %531 : vector<49x208xf32>
    %533 = math.exp %532 : vector<49x208xf32>
    %cst_236 = arith.constant dense<0.000000e+00> : vector<49xf32>
    %534 = vector.multi_reduction <add>, %533, %cst_236 [1] : vector<49x208xf32> to vector<49xf32>
    %535 = vector.shape_cast %534 : vector<49xf32> to vector<49x1xf32>
    %536 = tpu.reciprocal %535 {approx = true} : vector<49x1xf32> -> vector<49x1xf32>
    %537 = vector.broadcast %536 : vector<49x1xf32> to vector<49x208xf32>
    %538 = arith.mulf %533, %537 : vector<49x208xf32>
    %539 = arith.truncf %538 : vector<49x208xf32> to vector<49x208xbf16>
    %cst_237 = arith.constant dense<0.000000e+00> : vector<49x64xf32>
    %540 = tpu.matmul %539, %523, %cst_237 {dimension_numbers = #tpu.dot_dimension_numbers<[1], [0], [0], [1], [0, 0, 1, 1], [], []>} : vector<49x208xbf16>, vector<208x64xbf16>, vector<49x64xf32> -> vector<49x64xf32>
    %cst_238 = arith.constant 3.000000e+00 : f32
    %541 = vector.broadcast %cst_238 : f32 to vector<49x64xf32>
    %542 = arith.addf %540, %541 : vector<49x64xf32>
    %cst_239 = arith.constant 0.000000e+00 : f32
    %cst_240 = arith.constant 6.000000e+00 : f32
    %543 = vector.broadcast %cst_239 : f32 to vector<49x64xf32>
    %544 = arith.maximumf %543, %542 : vector<49x64xf32>
    %545 = vector.broadcast %cst_240 : f32 to vector<49x64xf32>
    %546 = arith.minimumf %545, %544 : vector<49x64xf32>
    %547 = arith.mulf %540, %546 : vector<49x64xf32>
    %cst_241 = arith.constant 0.166666672 : f32
    %548 = vector.broadcast %cst_241 : f32 to vector<49x64xf32>
    %549 = arith.mulf %547, %548 : vector<49x64xf32>
    %550 = arith.truncf %549 : vector<49x64xf32> to vector<49x64xbf16>
    %c15 = arith.constant 15 : index
    %c0_242 = arith.constant 0 : index
    %c0_243 = arith.constant 0 : index
    %551 = vector.load %arg8[%c15, %c0_242, %c0_243] : memref<16x64x128xbf16, #tpu.memory_space<vmem>>, vector<1x64x128xbf16>
    %552 = vector.shape_cast %551 : vector<1x64x128xbf16> to vector<64x128xbf16>
    %cst_244 = arith.constant dense<0.000000e+00> : vector<49x128xf32>
    %553 = tpu.matmul %550, %552, %cst_244 {dimension_numbers = #tpu.dot_dimension_numbers<[1], [0], [0], [1], [0, 0, 1, 1], [], []>} : vector<49x64xbf16>, vector<64x128xbf16>, vector<49x128xf32> -> vector<49x128xf32>
    %554 = arith.addf %522, %553 : vector<49x128xf32>
    %c0_245 = arith.constant 0 : index
    %c0_246 = arith.constant 0 : index
    %555 = vector.load %arg9[%c0_245, %c0_246] : memref<1x128xf32, #tpu.memory_space<vmem>>, vector<1x128xf32>
    %556 = vector.broadcast %555 : vector<1x128xf32> to vector<49x128xf32>
    %557 = arith.addf %554, %556 : vector<49x128xf32>
    %c0_247 = arith.constant 0 : index
    %c0_248 = arith.constant 0 : index
    %c0_249 = arith.constant 0 : index
    %558 = vector.load %arg10[%c0_247, %c0_248, %c0_249] : memref<1x49x128xf32, #tpu.memory_space<vmem>>, vector<1x49x128xf32>
    %559 = vector.shape_cast %558 : vector<1x49x128xf32> to vector<49x128xf32>
    %560 = vector.shape_cast %557 : vector<49x128xf32> to vector<1x49x128xf32>
    tpu.vector_store %arg10[%c0_247, %c0_248, %c0_249], %560 {strides = array<i32>} : memref<1x49x128xf32, #tpu.memory_space<vmem>>, vector<1x49x128xf32>,
    return
  }
  func.func @transform_0(%arg0: i32) -> (i32, i32) {
    %c0_i32 = arith.constant 0 : i32
    %c0_i32_0 = arith.constant 0 : i32
    return %arg0, %c0_i32 : i32, i32
  }
  func.func @transform_1(%arg0: i32) -> (i32, i32) {
    %c0_i32 = arith.constant 0 : i32
    %c0_i32_0 = arith.constant 0 : i32
    %c0_i32_1 = arith.constant 0 : i32
    return %c0_i32, %c0_i32_0 : i32, i32
  }
  func.func @transform_2(%arg0: i32) -> (i32, i32) {
    %c0_i32 = arith.constant 0 : i32
    %c0_i32_0 = arith.constant 0 : i32
    %c0_i32_1 = arith.constant 0 : i32
    return %c0_i32, %c0_i32_0 : i32, i32
  }
  func.func @transform_3(%arg0: i32) -> (i32, i32) {
    %c0_i32 = arith.constant 0 : i32
    %c0_i32_0 = arith.constant 0 : i32
    %c0_i32_1 = arith.constant 0 : i32
    return %c0_i32, %c0_i32_0 : i32, i32
  }
  func.func @transform_4(%arg0: i32) -> (i32, i32) {
    %c0_i32 = arith.constant 0 : i32
    %c0_i32_0 = arith.constant 0 : i32
    %c0_i32_1 = arith.constant 0 : i32
    return %c0_i32, %c0_i32_0 : i32, i32
  }
  func.func @transform_5(%arg0: i32) -> (i32, i32) {
    %c0_i32 = arith.constant 0 : i32
    %c0_i32_0 = arith.constant 0 : i32
    %c0_i32_1 = arith.constant 0 : i32
    return %c0_i32, %c0_i32_0 : i32, i32
  }
  func.func @transform_6(%arg0: i32) -> (i32, i32, i32) {
    %c0_i32 = arith.constant 0 : i32
    %c0_i32_0 = arith.constant 0 : i32
    %c0_i32_1 = arith.constant 0 : i32
    %c0_i32_2 = arith.constant 0 : i32
    return %c0_i32, %c0_i32_0, %c0_i32_1 : i32, i32, i32
  }
  func.func @transform_7(%arg0: i32) -> (i32, i32, i32) {
    %c0_i32 = arith.constant 0 : i32
    %c0_i32_0 = arith.constant 0 : i32
    %c0_i32_1 = arith.constant 0 : i32
    %c0_i32_2 = arith.constant 0 : i32
    return %c0_i32, %c0_i32_0, %c0_i32_1 : i32, i32, i32
  }
  func.func @transform_8(%arg0: i32) -> (i32, i32) {
    %c0_i32 = arith.constant 0 : i32
    %c0_i32_0 = arith.constant 0 : i32
    %c0_i32_1 = arith.constant 0 : i32
    return %c0_i32, %c0_i32_0 : i32, i32
  }
  func.func @transform_9(%arg0: i32) -> (i32, i32, i32) {
    %c0_i32 = arith.constant 0 : i32
    %c0_i32_0 = arith.constant 0 : i32
    %c0_i32_1 = arith.constant 0 : i32
    return %arg0, %c0_i32, %c0_i32_0 : i32, i32, i32
  }
}

</mosaic_0001>

<llo_original>
// kernel: tpu_custom_call.1
$region0: #{tpu_custom_call.1}
  #allocation0 [shape = 'u32[]', space=smem, size = 0x4, offset = 0x4, fixed_abs, tag = 'smem constant byte address 0x4 - core index']
  #allocation1 [shape = 'u32[144,128]{1,0:T(1,128)}', space=vmem, size = 0x12000, scoped, tag = 'internal scratch']
  %s0 = inlined_call_operand.vmem [shape: bf16[1664,32], index: 0, kind: input, shape index: {}]
  %s1 = inlined_call_operand.vmem [shape: bf16[32,256], index: 1, kind: input, shape index: {}]
  %s2 = inlined_call_operand.vmem [shape: f32[1,256], index: 2, kind: input, shape index: {}]
  %s3 = inlined_call_operand.vmem [shape: bf16[49,208], index: 3, kind: input, shape index: {}]
  %s4 = inlined_call_operand.vmem [shape: bf16[32,256], index: 4, kind: input, shape index: {}]
  %s5 = inlined_call_operand.vmem [shape: f32[1,256], index: 5, kind: input, shape index: {}]
  %s6 = inlined_call_operand.vmem [shape: f32[4,49,208], index: 6, kind: input, shape index: {}]
  %s7 = inlined_call_operand.vmem [shape: bf16[16,64,128], index: 7, kind: input, shape index: {}]
  %s8 = inlined_call_operand.vmem [shape: f32[1,128], index: 8, kind: input, shape index: {}]
  %s9 = inlined_call_operand.vmem [shape: f32[2,49,128], index: 9, kind: output, shape index: {}]
  %s10 = sld [smem:[#allocation0]]
  $region69: #{tpu_custom_call.1} parent=0
    _
  %s12 = ssub.s32 1, %s10
  %s13 = scalar_select 0, %s12, %s10
  loop: start=0, step=1, limit=4
  $region2: #{tpu_custom_call.1} parent=0 // loop_pre_header
    _
  $region3: #{tpu_custom_call.1} parent=0 // loop_header
    %s15 = sphi 0, %s19
    %p16 = scmp.ge.s32.totalorder %s15, 4
    %s25 = sphi 0, %s27
    %s28 = sphi 0, %s25
    %s29 = sphi 0, %s28
    %s45 = sphi 0, %s29
    %s49 = sphi 0, %s49
    %s51 = sphi 0, %s49
    %s52 = sphi 0, %s51
    %s66 = sphi 0, %s52
    %s70 = sphi 0, %s70
    %s72 = sphi 0, %s70
    %s73 = sphi 0, %s72
    %s87 = sphi 0, %s73
    %s91 = sphi 0, %s91
    %s93 = sphi 0, %s91
    %s94 = sphi 0, %s93
    %s108 = sphi 0, %s94
    %s112 = sphi 0, %s112
    %s114 = sphi 0, %s112
    %s115 = sphi 0, %s114
    %s129 = sphi 0, %s115
    %s133 = sphi 0, %s133
    %s135 = sphi 0, %s133
    %s136 = sphi 0, %s135
    %s150 = sphi 0, %s136
    %s154 = sphi 0, %s154
    %s156 = sphi 0, %s154
    %s157 = sphi 0, %s156
    %s171 = sphi 0, %s157
    %s175 = sphi 0, %s175
    %s177 = sphi 0, %s175
    %s178 = sphi 0, %s177
    %s192 = sphi 0, %s178
    %s196 = sphi 0, %s196
    %s198 = sphi 0, %s196
    %s199 = sphi 0, %s198
    %s213 = sphi 0, %s199
    %s219 = sphi 0, %s221
    %s222 = sphi 0, %s219
    %s223 = sphi 0, %s222
    %s239 = sphi 0, %s223
  $region4: #{tpu_custom_call.1} parent=0 // loop_header_branch
    %18 = sbr.rel (%p16) target = $region8
  $region5: #{tpu_custom_call.1} parent=0 // loop_body
    %s20 = ssub.s32 %s15, 1
    %s21 = ssub.s32 %s15, 2
    %s22 = sadd.s32 %s15, 1
    %s23 = ssub.s32 %s15, %s22
    %p24 = scmp.eq.s32.totalorder %s23, 0
    %s26 = sadd.s32 %s25, 1
    %s27 = scalar_select %p24, %s25, %s26
    %p30 = pneg %p24
    %p31 = scmp.eq.s32.totalorder %s15, 1
    %p32 = por %p30, %p31
    %p33 = scmp.ne.s32.totalorder %s25, %s28
    %p34 = scmp.eq.s32.totalorder %s15, 0
    %p35 = por %p33, %p34
    %p36 = scmp.ne.s32.totalorder %s25, %s28
    %p37 = scmp.eq.s32.totalorder %s20, 1
    %p38 = por %p36, %p37
    %p39 = scmp.ne.s32.totalorder %s28, %s29
    %p40 = scmp.eq.s32.totalorder %s20, 0
    %p41 = por %p39, %p40
    %p42 = scmp.ne.s32.totalorder %s28, %s29
    %p43 = scmp.eq.s32.totalorder %s21, 1
    %p44 = por %p42, %p43
    %p46 = scmp.ne.s32.totalorder %s29, %s45
    %p47 = scmp.eq.s32.totalorder %s21, 0
    %p48 = por %p46, %p47
    %s50 = sadd.s32 %s49, 1
    %p53 = scmp.eq.s32.totalorder %s15, 1
    %p54 = scmp.ne.s32.totalorder %s49, %s51
    %p55 = scmp.eq.s32.totalorder %s15, 0
    %p56 = por %p54, %p55
    %p57 = scmp.ne.s32.totalorder %s49, %s51
    %p58 = scmp.eq.s32.totalorder %s20, 1
    %p59 = por %p57, %p58
    %p60 = scmp.ne.s32.totalorder %s51, %s52
    %p61 = scmp.eq.s32.totalorder %s20, 0
    %p62 = por %p60, %p61
    %p63 = scmp.ne.s32.totalorder %s51, %s52
    %p64 = scmp.eq.s32.totalorder %s21, 1
    %p65 = por %p63, %p64
    %p67 = scmp.ne.s32.totalorder %s52, %s66
    %p68 = scmp.eq.s32.totalorder %s21, 0
    %p69 = por %p67, %p68
    %s71 = sadd.s32 %s70, 1
    %p74 = scmp.eq.s32.totalorder %s15, 1
    %p75 = scmp.ne.s32.totalorder %s70, %s72
    %p76 = scmp.eq.s32.totalorder %s15, 0
    %p77 = por %p75, %p76
    %p78 = scmp.ne.s32.totalorder %s70, %s72
    %p79 = scmp.eq.s32.totalorder %s20, 1
    %p80 = por %p78, %p79
    %p81 = scmp.ne.s32.totalorder %s72, %s73
    %p82 = scmp.eq.s32.totalorder %s20, 0
    %p83 = por %p81, %p82
    %p84 = scmp.ne.s32.totalorder %s72, %s73
    %p85 = scmp.eq.s32.totalorder %s21, 1
    %p86 = por %p84, %p85
    %p88 = scmp.ne.s32.totalorder %s73, %s87
    %p89 = scmp.eq.s32.totalorder %s21, 0
    %p90 = por %p88, %p89
    %s92 = sadd.s32 %s91, 1
    %p95 = scmp.eq.s32.totalorder %s15, 1
    %p96 = scmp.ne.s32.totalorder %s91, %s93
    %p97 = scmp.eq.s32.totalorder %s15, 0
    %p98 = por %p96, %p97
    %p99 = scmp.ne.s32.totalorder %s91, %s93
    %p100 = scmp.eq.s32.totalorder %s20, 1
    %p101 = por %p99, %p100
    %p102 = scmp.ne.s32.totalorder %s93, %s94
    %p103 = scmp.eq.s32.totalorder %s20, 0
    %p104 = por %p102, %p103
    %p105 = scmp.ne.s32.totalorder %s93, %s94
    %p106 = scmp.eq.s32.totalorder %s21, 1
    %p107 = por %p105, %p106
    %p109 = scmp.ne.s32.totalorder %s94, %s108
    %p110 = scmp.eq.s32.totalorder %s21, 0
    %p111 = por %p109, %p110
    %s113 = sadd.s32 %s112, 1
    %p116 = scmp.eq.s32.totalorder %s15, 1
    %p117 = scmp.ne.s32.totalorder %s112, %s114
    %p118 = scmp.eq.s32.totalorder %s15, 0
    %p119 = por %p117, %p118
    %p120 = scmp.ne.s32.totalorder %s112, %s114
    %p121 = scmp.eq.s32.totalorder %s20, 1
    %p122 = por %p120, %p121
    %p123 = scmp.ne.s32.totalorder %s114, %s115
    %p124 = scmp.eq.s32.totalorder %s20, 0
    %p125 = por %p123, %p124
    %p126 = scmp.ne.s32.totalorder %s114, %s115
    %p127 = scmp.eq.s32.totalorder %s21, 1
    %p128 = por %p126, %p127
    %p130 = scmp.ne.s32.totalorder %s115, %s129
    %p131 = scmp.eq.s32.totalorder %s21, 0
    %p132 = por %p130, %p131
    %s134 = sadd.s32 %s133, 1
    %p137 = scmp.eq.s32.totalorder %s15, 1
    %p138 = scmp.ne.s32.totalorder %s133, %s135
    %p139 = scmp.eq.s32.totalorder %s15, 0
    %p140 = por %p138, %p139
    %p141 = scmp.ne.s32.totalorder %s133, %s135
    %p142 = scmp.eq.s32.totalorder %s20, 1
    %p143 = por %p141, %p142
    %p144 = scmp.ne.s32.totalorder %s135, %s136
    %p145 = scmp.eq.s32.totalorder %s20, 0
    %p146 = por %p144, %p145
    %p147 = scmp.ne.s32.totalorder %s135, %s136
    %p148 = scmp.eq.s32.totalorder %s21, 1
    %p149 = por %p147, %p148
    %p151 = scmp.ne.s32.totalorder %s136, %s150
    %p152 = scmp.eq.s32.totalorder %s21, 0
    %p153 = por %p151, %p152
    %s155 = sadd.s32 %s154, 1
    %p158 = scmp.eq.s32.totalorder %s15, 1
    %p159 = scmp.ne.s32.totalorder %s154, %s156
    %p160 = scmp.eq.s32.totalorder %s15, 0
    %p161 = por %p159, %p160
    %p162 = scmp.ne.s32.totalorder %s154, %s156
    %p163 = scmp.eq.s32.totalorder %s20, 1
    %p164 = por %p162, %p163
    %p165 = scmp.ne.s32.totalorder %s156, %s157
    %p166 = scmp.eq.s32.totalorder %s20, 0
    %p167 = por %p165, %p166
    %p168 = scmp.ne.s32.totalorder %s156, %s157
    %p169 = scmp.eq.s32.totalorder %s21, 1
    %p170 = por %p168, %p169
    %p172 = scmp.ne.s32.totalorder %s157, %s171
    %p173 = scmp.eq.s32.totalorder %s21, 0
    %p174 = por %p172, %p173
    %s176 = sadd.s32 %s175, 1
    %p179 = scmp.eq.s32.totalorder %s15, 1
    %p180 = scmp.ne.s32.totalorder %s175, %s177
    %p181 = scmp.eq.s32.totalorder %s15, 0
    %p182 = por %p180, %p181
    %p183 = scmp.ne.s32.totalorder %s175, %s177
    %p184 = scmp.eq.s32.totalorder %s20, 1
    %p185 = por %p183, %p184
    %p186 = scmp.ne.s32.totalorder %s177, %s178
    %p187 = scmp.eq.s32.totalorder %s20, 0
    %p188 = por %p186, %p187
    %p189 = scmp.ne.s32.totalorder %s177, %s178
    %p190 = scmp.eq.s32.totalorder %s21, 1
    %p191 = por %p189, %p190
    %p193 = scmp.ne.s32.totalorder %s178, %s192
    %p194 = scmp.eq.s32.totalorder %s21, 0
    %p195 = por %p193, %p194
    %s197 = sadd.s32 %s196, 1
    %p200 = scmp.eq.s32.totalorder %s15, 1
    %p201 = scmp.ne.s32.totalorder %s196, %s198
    %p202 = scmp.eq.s32.totalorder %s15, 0
    %p203 = por %p201, %p202
    %p204 = scmp.ne.s32.totalorder %s196, %s198
    %p205 = scmp.eq.s32.totalorder %s20, 1
    %p206 = por %p204, %p205
    %p207 = scmp.ne.s32.totalorder %s198, %s199
    %p208 = scmp.eq.s32.totalorder %s20, 0
    %p209 = por %p207, %p208
    %p210 = scmp.ne.s32.totalorder %s198, %s199
    %p211 = scmp.eq.s32.totalorder %s21, 1
    %p212 = por %p210, %p211
    %p214 = scmp.ne.s32.totalorder %s199, %s213
    %p215 = scmp.eq.s32.totalorder %s21, 0
    %p216 = por %p214, %p215
    %s217 = ssub.s32 %s15, %s22
    %p218 = scmp.eq.s32.totalorder %s217, 0
    %s220 = sadd.s32 %s219, 1
    %s221 = scalar_select %p218, %s219, %s220
    %p224 = pneg %p218
    %p225 = scmp.eq.s32.totalorder %s15, 1
    %p226 = por %p224, %p225
    %p227 = scmp.ne.s32.totalorder %s219, %s222
    %p228 = scmp.eq.s32.totalorder %s15, 0
    %p229 = por %p227, %p228
    %p230 = scmp.ne.s32.totalorder %s219, %s222
    %p231 = scmp.eq.s32.totalorder %s20, 1
    %p232 = por %p230, %p231
    %p233 = scmp.ne.s32.totalorder %s222, %s223
    %p234 = scmp.eq.s32.totalorder %s20, 0
    %p235 = por %p233, %p234
    %p236 = scmp.ne.s32.totalorder %s222, %s223
    %p237 = scmp.eq.s32.totalorder %s21, 1
    %p238 = por %p236, %p237
    %p240 = scmp.ne.s32.totalorder %s223, %s239
    %p241 = scmp.eq.s32.totalorder %s21, 0
    %p242 = por %p240, %p241
    %p243 = scmp.le.s32.totalorder 1, %s15
    %p244 = scmp.lt.s32.totalorder %s15, 3
    %p245 = pnand %p243, %p244
    %p246 = pneg %p245
    // Predicated region
    $region9: #{tpu_custom_call.1} parent=5 // pred_check
      _
    $region10: #{tpu_custom_call.1} parent=5 // pred_check_branch
      %248 = sbr.rel (%p245) target = $region12
    $region11: #{tpu_custom_call.1} parent=5 // pred_region
      %s249 = ssub.s32 %s15, 1
      // Predicated region
      $region13: #{tpu_custom_call.1} parent=11 // pred_check
        %p250 = pneg %p62
      $region14: #{tpu_custom_call.1} parent=11 // pred_check_branch
        %252 = sbr.rel (%p250) target = $region16
      $region15: #{tpu_custom_call.1} parent=11 // pred_region
        _
      $region16: #{tpu_custom_call.1} parent=11 // pred_fallthru
        _
      // Predicated region
      $region17: #{tpu_custom_call.1} parent=11 // pred_check
        %p253 = pneg %p83
      $region18: #{tpu_custom_call.1} parent=11 // pred_check_branch
        %255 = sbr.rel (%p253) target = $region20
      $region19: #{tpu_custom_call.1} parent=11 // pred_region
        _
      $region20: #{tpu_custom_call.1} parent=11 // pred_fallthru
        _
      // Predicated region
      $region21: #{tpu_custom_call.1} parent=11 // pred_check
        %p256 = pneg %p104
      $region22: #{tpu_custom_call.1} parent=11 // pred_check_branch
        %258 = sbr.rel (%p256) target = $region24
      $region23: #{tpu_custom_call.1} parent=11 // pred_region
        _
      $region24: #{tpu_custom_call.1} parent=11 // pred_fallthru
        _
      // Predicated region
      $region25: #{tpu_custom_call.1} parent=11 // pred_check
        %p259 = pneg %p125
      $region26: #{tpu_custom_call.1} parent=11 // pred_check_branch
        %261 = sbr.rel (%p259) target = $region28
      $region27: #{tpu_custom_call.1} parent=11 // pred_region
        _
      $region28: #{tpu_custom_call.1} parent=11 // pred_fallthru
        _
      // Predicated region
      $region29: #{tpu_custom_call.1} parent=11 // pred_check
        %p262 = pneg %p146
      $region30: #{tpu_custom_call.1} parent=11 // pred_check_branch
        %264 = sbr.rel (%p262) target = $region32
      $region31: #{tpu_custom_call.1} parent=11 // pred_region
        _
      $region32: #{tpu_custom_call.1} parent=11 // pred_fallthru
        _
      // Predicated region
      $region33: #{tpu_custom_call.1} parent=11 // pred_check
        %p265 = pneg %p167
      $region34: #{tpu_custom_call.1} parent=11 // pred_check_branch
        %267 = sbr.rel (%p265) target = $region36
      $region35: #{tpu_custom_call.1} parent=11 // pred_region
        _
      $region36: #{tpu_custom_call.1} parent=11 // pred_fallthru
        _
      // Predicated region
      $region37: #{tpu_custom_call.1} parent=11 // pred_check
        %p268 = pneg %p188
      $region38: #{tpu_custom_call.1} parent=11 // pred_check_branch
        %270 = sbr.rel (%p268) target = $region40
      $region39: #{tpu_custom_call.1} parent=11 // pred_region
        _
      $region40: #{tpu_custom_call.1} parent=11 // pred_fallthru
        _
      // Predicated region
      $region41: #{tpu_custom_call.1} parent=11 // pred_check
        %p271 = pneg %p209
      $region42: #{tpu_custom_call.1} parent=11 // pred_check_branch
        %273 = sbr.rel (%p271) target = $region44
      $region43: #{tpu_custom_call.1} parent=11 // pred_region
        _
      $region44: #{tpu_custom_call.1} parent=11 // pred_fallthru
        _
    $region12: #{tpu_custom_call.1} parent=5 // pred_fallthru
      _
    %p274 = scmp.lt.s32.totalorder %s15, 2
    // Predicated region
    $region45: #{tpu_custom_call.1} parent=5 // pred_check
      %p275 = pneg %p274
    $region46: #{tpu_custom_call.1} parent=5 // pred_check_branch
      %277 = sbr.rel (%p275) target = $region48
    $region47: #{tpu_custom_call.1} parent=5 // pred_region
      // Predicated region
      $region49: #{tpu_custom_call.1} parent=47 // pred_check
        %p278 = pneg %p35
      $region50: #{tpu_custom_call.1} parent=47 // pred_check_branch
        %280 = sbr.rel (%p278) target = $region52
      $region51: #{tpu_custom_call.1} parent=47 // pred_region
        %s281 = smul.u32 104, %s15
        %p282 = scmp.lt.s32.totalorder %s281, 207
        %s283 = scalar_select %p282, %s281, 207
        %s284 = smul.addr %s283, 4
        %s285 = scalar_lea.vmem %s0, %s284
        %s286 = smul.u32 104, %s15
      $region52: #{tpu_custom_call.1} parent=47 // pred_fallthru
        _
    $region48: #{tpu_custom_call.1} parent=5 // pred_fallthru
      _
    %p287 = scmp.le.s32.totalorder 1, %s15
    %p288 = scmp.lt.s32.totalorder %s15, 3
    %p289 = pnand %p287, %p288
    %p290 = pneg %p289
    // Predicated region
    $region53: #{tpu_custom_call.1} parent=5 // pred_check
      _
    $region54: #{tpu_custom_call.1} parent=5 // pred_check_branch
      %292 = sbr.rel (%p289) target = $region56
    $region55: #{tpu_custom_call.1} parent=5 // pred_region
      %s293 = ssub.s32 %s15, 1
      %s294 = smul.u32 104, %s20
      %p295 = scmp.lt.s32.totalorder %s294, 207
      %s296 = scalar_select %p295, %s294, 207
      %s297 = smul.addr %s296, 4
      %s298 = scalar_lea.vmem %s0, %s297
      %p299 = pneg %p41
      %p300 = pneg %p38
      %p301 = pneg %p62
      %p302 = pneg %p59
      %p303 = pneg %p83
      %p304 = pneg %p80
      %p305 = pneg %p104
      %p306 = pneg %p101
      %p307 = pneg %p125
      %p308 = pneg %p122
      %p309 = pneg %p146
      %p310 = pneg %p143
      %p311 = pneg %p167
      %p312 = pneg %p164
      %p313 = pneg %p188
      %p314 = pneg %p185
      %p315 = pneg %p209
      %p316 = pneg %p206
      %p317 = pneg %p235
      %p318 = pneg %p232
      %p319 = scmp.lt.s32.totalorder %s20, 1
      %s320 = scalar_select %p319, %s20, 1
      %s321 = smul.addr %s320, 7
      %s322 = smul.addr %s321, 8
      %s323 = scalar_lea.vmem %s9, %s322
      %s324 = smul.u32 104, %s20
      %p325 = scmp.lt.s32.totalorder %s324, 207
      %s326 = scalar_select %p325, %s324, 207
      %s327 = smul.addr %s326, 4
      %s328 = scalar_lea.vmem %s0, %s327
      %s329 = smul.u32 104, %s20
      %p330 = scmp.lt.s32.totalorder %s20, 1
      %s331 = scalar_select %p330, %s20, 1
      %s332 = smul.addr %s331, 7
      %s333 = smul.addr %s332, 8
      %s334 = scalar_lea.vmem %s9, %s333
      %v336 = vld [vmem:[%s328] sm:$0xf]
      %v337 = vld [vmem:[%s328 + $0x4] sm:$0xf]
      %v338 = vld [vmem:[%s328 + $0x8] sm:$0xf]
      %v339 = vld [vmem:[%s328 + $0xc] sm:$0xf]
      %v340 = vld [vmem:[%s328 + $0x10] sm:$0xf]
      %v341 = vld [vmem:[%s328 + $0x14] sm:$0xf]
      %v342 = vld [vmem:[%s328 + $0x18] sm:$0xf]
      %v343 = vld [vmem:[%s328 + $0x1c] sm:$0xf]
      %v344 = vld [vmem:[%s328 + $0x20] sm:$0xf]
      %v345 = vld [vmem:[%s328 + $0x24] sm:$0xf]
      %v346 = vld [vmem:[%s328 + $0x28] sm:$0xf]
      %v347 = vld [vmem:[%s328 + $0x2c] sm:$0xf]
      %v348 = vld [vmem:[%s328 + $0x30] sm:$0xf]
      %v349 = vld [vmem:[%s328 + $0x34] sm:$0xf]
      %v350 = vld [vmem:[%s328 + $0x38] sm:$0xf]
      %v351 = vld [vmem:[%s328 + $0x3c] sm:$0xf]
      %v352 = vld [vmem:[%s328 + $0x40] sm:$0xf]
      %v353 = vld [vmem:[%s328 + $0x44] sm:$0xf]
      %v354 = vld [vmem:[%s328 + $0x48] sm:$0xf]
      %v355 = vld [vmem:[%s328 + $0x4c] sm:$0xf]
      %v356 = vld [vmem:[%s328 + $0x50] sm:$0xf]
      %v357 = vld [vmem:[%s328 + $0x54] sm:$0xf]
      %v358 = vld [vmem:[%s328 + $0x58] sm:$0xf]
      %v359 = vld [vmem:[%s328 + $0x5c] sm:$0xf]
      %v360 = vld [vmem:[%s328 + $0x60] sm:$0xf]
      %v361 = vld [vmem:[%s328 + $0x64] sm:$0xf]
      %v362 = vld [vmem:[%s328 + $0x68] sm:$0xf]
      %v363 = vld [vmem:[%s328 + $0x6c] sm:$0xf]
      %v364 = vld [vmem:[%s328 + $0x70] sm:$0xf]
      %v365 = vld [vmem:[%s328 + $0x74] sm:$0xf]
      %v366 = vld [vmem:[%s328 + $0x78] sm:$0xf]
      %v367 = vld [vmem:[%s328 + $0x7c] sm:$0xf]
      %v368 = vld [vmem:[%s328 + $0x80] sm:$0xf]
      %v369 = vld [vmem:[%s328 + $0x84] sm:$0xf]
      %v370 = vld [vmem:[%s328 + $0x88] sm:$0xf]
      %v371 = vld [vmem:[%s328 + $0x8c] sm:$0xf]
      %v372 = vld [vmem:[%s328 + $0x90] sm:$0xf]
      %v373 = vld [vmem:[%s328 + $0x94] sm:$0xf]
      %v374 = vld [vmem:[%s328 + $0x98] sm:$0xf]
      %v375 = vld [vmem:[%s328 + $0x9c] sm:$0xf]
      %v376 = vld [vmem:[%s328 + $0xa0] sm:$0xf]
      %v377 = vld [vmem:[%s328 + $0xa4] sm:$0xf]
      %v378 = vld [vmem:[%s328 + $0xa8] sm:$0xf]
      %v379 = vld [vmem:[%s328 + $0xac] sm:$0xf]
      %v380 = vld [vmem:[%s328 + $0xb0] sm:$0xf]
      %v381 = vld [vmem:[%s328 + $0xb4] sm:$0xf]
      %v382 = vld [vmem:[%s328 + $0xb8] sm:$0xf]
      %v383 = vld [vmem:[%s328 + $0xbc] sm:$0xf]
      %v384 = vld [vmem:[%s328 + $0xc0] sm:$0xf]
      %v385 = vld [vmem:[%s328 + $0xc4] sm:$0xf]
      %v386 = vld [vmem:[%s328 + $0xc8] sm:$0xf]
      %v387 = vld [vmem:[%s328 + $0xcc] sm:$0xf]
      %v388 = vld [vmem:[%s328 + $0xd0] sm:$0xf]
      %v389 = vld [vmem:[%s328 + $0xd4] sm:$0xf]
      %v390 = vld [vmem:[%s328 + $0xd8] sm:$0xf]
      %v391 = vld [vmem:[%s328 + $0xdc] sm:$0xf]
      %v392 = vld [vmem:[%s328 + $0xe0] sm:$0xf]
      %v393 = vld [vmem:[%s328 + $0xe4] sm:$0xf]
      %v394 = vld [vmem:[%s328 + $0xe8] sm:$0xf]
      %v395 = vld [vmem:[%s328 + $0xec] sm:$0xf]
      %v396 = vld [vmem:[%s328 + $0xf0] sm:$0xf]
      %v397 = vld [vmem:[%s328 + $0xf4] sm:$0xf]
      %v398 = vld [vmem:[%s328 + $0xf8] sm:$0xf]
      %v399 = vld [vmem:[%s328 + $0xfc] sm:$0xf]
      %v400 = vld [vmem:[%s328 + $0x100] sm:$0xf]
      %v401 = vld [vmem:[%s328 + $0x104] sm:$0xf]
      %v402 = vld [vmem:[%s328 + $0x108] sm:$0xf]
      %v403 = vld [vmem:[%s328 + $0x10c] sm:$0xf]
      %v404 = vld [vmem:[%s328 + $0x110] sm:$0xf]
      %v405 = vld [vmem:[%s328 + $0x114] sm:$0xf]
      %v406 = vld [vmem:[%s328 + $0x118] sm:$0xf]
      %v407 = vld [vmem:[%s328 + $0x11c] sm:$0xf]
      %v408 = vld [vmem:[%s328 + $0x120] sm:$0xf]
      %v409 = vld [vmem:[%s328 + $0x124] sm:$0xf]
      %v410 = vld [vmem:[%s328 + $0x128] sm:$0xf]
      %v411 = vld [vmem:[%s328 + $0x12c] sm:$0xf]
      %v412 = vld [vmem:[%s328 + $0x130] sm:$0xf]
      %v413 = vld [vmem:[%s328 + $0x134] sm:$0xf]
      %v414 = vld [vmem:[%s328 + $0x138] sm:$0xf]
      %v415 = vld [vmem:[%s328 + $0x13c] sm:$0xf]
      %v416 = vld [vmem:[%s328 + $0x140] sm:$0xf]
      %v417 = vld [vmem:[%s328 + $0x144] sm:$0xf]
      %v418 = vld [vmem:[%s328 + $0x148] sm:$0xf]
      %v419 = vld [vmem:[%s328 + $0x14c] sm:$0xf]
      %v420 = vld [vmem:[%s328 + $0x150] sm:$0xf]
      %v421 = vld [vmem:[%s328 + $0x154] sm:$0xf]
      %v422 = vld [vmem:[%s328 + $0x158] sm:$0xf]
      %v423 = vld [vmem:[%s328 + $0x15c] sm:$0xf]
      %v424 = vld [vmem:[%s328 + $0x160] sm:$0xf]
      %v425 = vld [vmem:[%s328 + $0x164] sm:$0xf]
      %v426 = vld [vmem:[%s328 + $0x168] sm:$0xf]
      %v427 = vld [vmem:[%s328 + $0x16c] sm:$0xf]
      %v428 = vld [vmem:[%s328 + $0x170] sm:$0xf]
      %v429 = vld [vmem:[%s328 + $0x174] sm:$0xf]
      %v430 = vld [vmem:[%s328 + $0x178] sm:$0xf]
      %v431 = vld [vmem:[%s328 + $0x17c] sm:$0xf]
      %v432 = vld [vmem:[%s328 + $0x180] sm:$0xf]
      %v433 = vld [vmem:[%s328 + $0x184] sm:$0xf]
      %v434 = vld [vmem:[%s328 + $0x188] sm:$0xf]
      %v435 = vld [vmem:[%s328 + $0x18c] sm:$0xf]
      %v436 = vld [vmem:[%s328 + $0x190] sm:$0xf]
      %v437 = vld [vmem:[%s328 + $0x194] sm:$0xf]
      %v438 = vld [vmem:[%s328 + $0x198] sm:$0xf]
      %v439 = vld [vmem:[%s328 + $0x19c] sm:$0xf]
      %v440 = vld [vmem:[%s1] sm:$0xff]
      %v441 = vld [vmem:[%s1 + $0x8] sm:$0xff]
      %v442 = vld [vmem:[%s1 + $0x10] sm:$0xff]
      %v443 = vld [vmem:[%s1 + $0x18] sm:$0xff]
      %v444 = vld [vmem:[%s2] sm:$0x3]
      %v446 = vlaneseq
      %v447 = vshrl.u32 %v446, 7
      %v448 = vsub.s32 0, %v447
      %v449 = vrot.slane %v444, %v448
      %v450 = vlaneseq
      %v451 = vshrl.u32 %v450, 7
      %v452 = vsub.s32 1, %v451
      %v453 = vrot.slane %v444, %v452
      %v560 = vunpack.c.l.b16 %v336
      %v561 = vunpack.c.l.b16 %v337
      %v562 = vunpack.c.l.b16 %v338
      %v563 = vunpack.c.l.b16 %v339
      %v564 = vunpack.c.l.b16 %v340
      %v565 = vunpack.c.l.b16 %v341
      %v566 = vunpack.c.l.b16 %v342
      %v567 = vunpack.c.l.b16 %v343
      %v568 = vunpack.c.l.b16 %v344
      %v569 = vunpack.c.l.b16 %v345
      %v570 = vunpack.c.l.b16 %v346
      %v571 = vunpack.c.l.b16 %v347
      %v572 = vunpack.c.l.b16 %v348
      %v573 = vunpack.c.l.b16 %v349
      %v574 = vunpack.c.l.b16 %v350
      %v575 = vunpack.c.l.b16 %v351
      %v576 = vunpack.c.l.b16 %v352
      %v577 = vunpack.c.l.b16 %v353
      %v578 = vunpack.c.l.b16 %v354
      %v579 = vunpack.c.l.b16 %v355
      %v580 = vunpack.c.l.b16 %v356
      %v581 = vunpack.c.l.b16 %v357
      %v582 = vunpack.c.l.b16 %v358
      %v583 = vunpack.c.l.b16 %v359
      %v584 = vunpack.c.l.b16 %v360
      %v585 = vunpack.c.l.b16 %v361
      %v586 = vunpack.c.l.b16 %v362
      %v587 = vunpack.c.l.b16 %v363
      %v588 = vunpack.c.l.b16 %v364
      %v589 = vunpack.c.l.b16 %v365
      %v590 = vunpack.c.l.b16 %v366
      %v591 = vunpack.c.l.b16 %v367
      %v592 = vunpack.c.l.b16 %v368
      %v593 = vunpack.c.l.b16 %v369
      %v594 = vunpack.c.l.b16 %v370
      %v595 = vunpack.c.l.b16 %v371
      %v596 = vunpack.c.l.b16 %v372
      %v597 = vunpack.c.l.b16 %v373
      %v598 = vunpack.c.l.b16 %v374
      %v599 = vunpack.c.l.b16 %v375
      %v600 = vunpack.c.l.b16 %v376
      %v601 = vunpack.c.l.b16 %v377
      %v602 = vunpack.c.l.b16 %v378
      %v603 = vunpack.c.l.b16 %v379
      %v604 = vunpack.c.l.b16 %v380
      %v605 = vunpack.c.l.b16 %v381
      %v606 = vunpack.c.l.b16 %v382
      %v607 = vunpack.c.l.b16 %v383
      %v608 = vunpack.c.l.b16 %v384
      %v609 = vunpack.c.l.b16 %v385
      %v610 = vunpack.c.l.b16 %v386
      %v611 = vunpack.c.l.b16 %v387
      %v612 = vunpack.c.l.b16 %v388
      %v613 = vunpack.c.l.b16 %v389
      %v614 = vunpack.c.l.b16 %v390
      %v615 = vunpack.c.l.b16 %v391
      %v616 = vunpack.c.l.b16 %v392
      %v617 = vunpack.c.l.b16 %v393
      %v618 = vunpack.c.l.b16 %v394
      %v619 = vunpack.c.l.b16 %v395
      %v620 = vunpack.c.l.b16 %v396
      %v621 = vunpack.c.l.b16 %v397
      %v622 = vunpack.c.l.b16 %v398
      %v623 = vunpack.c.l.b16 %v399
      %v624 = vunpack.c.l.b16 %v400
      %v625 = vunpack.c.l.b16 %v401
      %v626 = vunpack.c.l.b16 %v402
      %v627 = vunpack.c.l.b16 %v403
      %v628 = vunpack.c.l.b16 %v404
      %v629 = vunpack.c.l.b16 %v405
      %v630 = vunpack.c.l.b16 %v406
      %v631 = vunpack.c.l.b16 %v407
      %v632 = vunpack.c.l.b16 %v408
      %v633 = vunpack.c.l.b16 %v409
      %v634 = vunpack.c.l.b16 %v410
      %v635 = vunpack.c.l.b16 %v411
      %v636 = vunpack.c.l.b16 %v412
      %v637 = vunpack.c.l.b16 %v413
      %v638 = vunpack.c.l.b16 %v414
      %v639 = vunpack.c.l.b16 %v415
      %v640 = vunpack.c.l.b16 %v416
      %v641 = vunpack.c.l.b16 %v417
      %v642 = vunpack.c.l.b16 %v418
      %v643 = vunpack.c.l.b16 %v419
      %v644 = vunpack.c.l.b16 %v420
      %v645 = vunpack.c.l.b16 %v421
      %v646 = vunpack.c.l.b16 %v422
      %v647 = vunpack.c.l.b16 %v423
      %v648 = vunpack.c.l.b16 %v424
      %v649 = vunpack.c.l.b16 %v425
      %v650 = vunpack.c.l.b16 %v426
      %v651 = vunpack.c.l.b16 %v427
      %v652 = vunpack.c.l.b16 %v428
      %v653 = vunpack.c.l.b16 %v429
      %v654 = vunpack.c.l.b16 %v430
      %v655 = vunpack.c.l.b16 %v431
      %v656 = vunpack.c.l.b16 %v432
      %v657 = vunpack.c.l.b16 %v433
      %v658 = vunpack.c.l.b16 %v434
      %v659 = vunpack.c.l.b16 %v435
      %v660 = vunpack.c.l.b16 %v436
      %v661 = vunpack.c.l.b16 %v437
      %v662 = vunpack.c.l.b16 %v438
      %v663 = vunpack.c.l.b16 %v439
      %v664 = vpack.c.b16 %v561, %v560
      %v665 = vpack.c.b16 %v563, %v562
      %v666 = vpack.c.b16 %v565, %v564
      %v667 = vpack.c.b16 %v567, %v566
      %v668 = vpack.c.b16 %v569, %v568
      %v669 = vpack.c.b16 %v571, %v570
      %v670 = vpack.c.b16 %v573, %v572
      %v671 = vpack.c.b16 %v575, %v574
      %v672 = vpack.c.b16 %v577, %v576
      %v673 = vpack.c.b16 %v579, %v578
      %v674 = vpack.c.b16 %v581, %v580
      %v675 = vpack.c.b16 %v583, %v582
      %v676 = vpack.c.b16 %v585, %v584
      %v677 = vpack.c.b16 %v587, %v586
      %v678 = vpack.c.b16 %v589, %v588
      %v679 = vpack.c.b16 %v591, %v590
      %v680 = vpack.c.b16 %v593, %v592
      %v681 = vpack.c.b16 %v595, %v594
      %v682 = vpack.c.b16 %v597, %v596
      %v683 = vpack.c.b16 %v599, %v598
      %v684 = vpack.c.b16 %v601, %v600
      %v685 = vpack.c.b16 %v603, %v602
      %v686 = vpack.c.b16 %v605, %v604
      %v687 = vpack.c.b16 %v607, %v606
      %v688 = vpack.c.b16 %v609, %v608
      %v689 = vpack.c.b16 %v611, %v610
      %v690 = vpack.c.b16 %v613, %v612
      %v691 = vpack.c.b16 %v615, %v614
      %v692 = vpack.c.b16 %v617, %v616
      %v693 = vpack.c.b16 %v619, %v618
      %v694 = vpack.c.b16 %v621, %v620
      %v695 = vpack.c.b16 %v623, %v622
      %v696 = vpack.c.b16 %v625, %v624
      %v697 = vpack.c.b16 %v627, %v626
      %v698 = vpack.c.b16 %v629, %v628
      %v699 = vpack.c.b16 %v631, %v630
      %v700 = vpack.c.b16 %v633, %v632
      %v701 = vpack.c.b16 %v635, %v634
      %v702 = vpack.c.b16 %v637, %v636
      %v703 = vpack.c.b16 %v639, %v638
      %v704 = vpack.c.b16 %v641, %v640
      %v705 = vpack.c.b16 %v643, %v642
      %v706 = vpack.c.b16 %v645, %v644
      %v707 = vpack.c.b16 %v647, %v646
      %v708 = vpack.c.b16 %v649, %v648
      %v709 = vpack.c.b16 %v651, %v650
      %v710 = vpack.c.b16 %v653, %v652
      %v711 = vpack.c.b16 %v655, %v654
      %v712 = vpack.c.b16 %v657, %v656
      %v713 = vpack.c.b16 %v659, %v658
      %v714 = vpack.c.b16 %v661, %v660
      %v715 = vpack.c.b16 %v663, %v662
      %v720 = vunpack.c.l.b16 %v440
      %v721 = vunpack.c.h.b16 %v440
      %v722 = vunpack.c.l.b16 %v441
      %v723 = vunpack.c.h.b16 %v441
      %v724 = vunpack.c.l.b16 %v442
      %v725 = vunpack.c.h.b16 %v442
      %v726 = vunpack.c.l.b16 %v443
      %v727 = vunpack.c.h.b16 %v443
      %v728 = vpack.c.b16 %v722, %v720
      %v729 = vpack.c.b16 %v723, %v721
      %v730 = vpack.c.b16 %v726, %v724
      %v731 = vpack.c.b16 %v727, %v725
      %vm736 = vcmask 261120
      %v738 = vsel %vm736, %v664, 0
      %v741 = vsel %vm736, %v665, 0
      %v744 = vsel %vm736, %v666, 0
      %v747 = vsel %vm736, %v667, 0
      %v750 = vsel %vm736, %v668, 0
      %v753 = vsel %vm736, %v669, 0
      %v756 = vsel %vm736, %v670, 0
      %v759 = vsel %vm736, %v671, 0
      %v762 = vsel %vm736, %v672, 0
      %v765 = vsel %vm736, %v673, 0
      %v768 = vsel %vm736, %v674, 0
      %v771 = vsel %vm736, %v675, 0
      %v774 = vsel %vm736, %v676, 0
      %v777 = vsel %vm736, %v677, 0
      %v780 = vsel %vm736, %v678, 0
      %v783 = vsel %vm736, %v679, 0
      %v786 = vsel %vm736, %v680, 0
      %v789 = vsel %vm736, %v681, 0
      %v792 = vsel %vm736, %v682, 0
      %v795 = vsel %vm736, %v683, 0
      %v798 = vsel %vm736, %v684, 0
      %v801 = vsel %vm736, %v685, 0
      %v804 = vsel %vm736, %v686, 0
      %v807 = vsel %vm736, %v687, 0
      %v810 = vsel %vm736, %v688, 0
      %v813 = vsel %vm736, %v689, 0
      %v816 = vsel %vm736, %v690, 0
      %v819 = vsel %vm736, %v691, 0
      %v822 = vsel %vm736, %v692, 0
      %v825 = vsel %vm736, %v693, 0
      %v828 = vsel %vm736, %v694, 0
      %v831 = vsel %vm736, %v695, 0
      %v834 = vsel %vm736, %v696, 0
      %v837 = vsel %vm736, %v697, 0
      %v840 = vsel %vm736, %v698, 0
      %v843 = vsel %vm736, %v699, 0
      %v846 = vsel %vm736, %v700, 0
      %v849 = vsel %vm736, %v701, 0
      %v852 = vsel %vm736, %v702, 0
      %v855 = vsel %vm736, %v703, 0
      %v858 = vsel %vm736, %v704, 0
      %v861 = vsel %vm736, %v705, 0
      %v864 = vsel %vm736, %v706, 0
      %v867 = vsel %vm736, %v707, 0
      %v870 = vsel %vm736, %v708, 0
      %v873 = vsel %vm736, %v709, 0
      %v876 = vsel %vm736, %v710, 0
      %v879 = vsel %vm736, %v711, 0
      %v882 = vsel %vm736, %v712, 0
      %v885 = vsel %vm736, %v713, 0
      %v888 = vsel %vm736, %v714, 0
      %v891 = vsel %vm736, %v715, 0
      %893 = vmatprep.subr.bf16.mxu0 %v729
      %894 = vmatpush1.bf16.msra.mxu0 %v728
      %895 = vmatprep.subr.bf16.mxu0 %v731
      %896 = vmatpush1.bf16.msra.mxu0 %v730
      %897 = vmatprep.subr.bf16.mxu0 0
      %898 = vmatpush1.bf16.msra.mxu0 0
      %899 = vmatprep.subr.bf16.mxu0 0
      %900 = vmatpush1.bf16.msra.mxu0 0
      %901 = vmatprep.subr.bf16.mxu0 0
      %902 = vmatpush1.bf16.msra.mxu0 0
      %903 = vmatprep.subr.bf16.mxu0 0
      %904 = vmatpush1.bf16.msra.mxu0 0
      %905 = vmatprep.subr.bf16.mxu0 0
      %906 = vmatpush1.bf16.msra.mxu0 0
      %907 = vmatprep.subr.bf16.mxu0 0
      %908 = vmatpush1.bf16.msra.mxu0 0
      %909 = vmatprep.subr.bf16.mxu0 0
      %910 = vmatpush1.bf16.msra.mxu0 0
      %911 = vmatprep.subr.bf16.mxu0 0
      %912 = vmatpush1.bf16.msra.mxu0 0
      %913 = vmatprep.subr.bf16.mxu0 0
      %914 = vmatpush1.bf16.msra.mxu0 0
      %915 = vmatprep.subr.bf16.mxu0 0
      %916 = vmatpush1.bf16.msra.mxu0 0
      %917 = vmatprep.subr.bf16.mxu0 0
      %918 = vmatpush1.bf16.msra.mxu0 0
      %919 = vmatprep.subr.bf16.mxu0 0
      %920 = vmatpush1.bf16.msra.mxu0 0
      %921 = vmatprep.subr.bf16.mxu0 0
      %922 = vmatpush1.bf16.msra.mxu0 0
      %923 = vmatprep.subr.bf16.mxu0 0
      %924 = vmatpush1.bf16.msra.mxu0 0
      %925 = vmatprep.mubr.bf16.mxu0 0
      %926 = vmatmul.mubr.bf16.gmra.mrb[0].mxu0 %v738
      %v927 = vpop.f32.mrb[0].mxu0
      %v928 = vadd.f32 %v449, %v927
      %v929 = vpop.f32.mrb[0].mxu0
      %v930 = vadd.f32 %v453, %v929
      %v931 = vpop.f32.mrb[0].mxu0
      %v932 = vadd.f32 %v449, %v931
      %v933 = vpop.f32.mrb[0].mxu0
      %v934 = vadd.f32 %v453, %v933
      %935 = vmatprep.mubr.bf16.mxu0 0
      %936 = vmatmul.mubr.bf16.gmra.mrb[0].mxu0 %v741
      %v937 = vpop.f32.mrb[0].mxu0
      %v938 = vadd.f32 %v449, %v937
      %v939 = vpop.f32.mrb[0].mxu0
      %v940 = vadd.f32 %v453, %v939
      %v941 = vpop.f32.mrb[0].mxu0
      %v942 = vadd.f32 %v449, %v941
      %v943 = vpop.f32.mrb[0].mxu0
      %v944 = vadd.f32 %v453, %v943
      %945 = vmatprep.mubr.bf16.mxu0 0
      %946 = vmatmul.mubr.bf16.gmra.mrb[0].mxu0 %v744
      %v947 = vpop.f32.mrb[0].mxu0
      %v948 = vadd.f32 %v449, %v947
      %v949 = vpop.f32.mrb[0].mxu0
      %v950 = vadd.f32 %v453, %v949
      %v951 = vpop.f32.mrb[0].mxu0
      %v952 = vadd.f32 %v449, %v951
      %v953 = vpop.f32.mrb[0].mxu0
      %v954 = vadd.f32 %v453, %v953
      %955 = vmatprep.mubr.bf16.mxu0 0
      %956 = vmatmul.mubr.bf16.gmra.mrb[0].mxu0 %v747
      %v957 = vpop.f32.mrb[0].mxu0
      %v958 = vadd.f32 %v449, %v957
      %v959 = vpop.f32.mrb[0].mxu0
      %v960 = vadd.f32 %v453, %v959
      %v961 = vpop.f32.mrb[0].mxu0
      %v962 = vadd.f32 %v449, %v961
      %v963 = vpop.f32.mrb[0].mxu0
      %v964 = vadd.f32 %v453, %v963
      %965 = vmatprep.mubr.bf16.mxu0 0
      %966 = vmatmul.mubr.bf16.gmra.mrb[0].mxu0 %v750
      %v967 = vpop.f32.mrb[0].mxu0
      %v968 = vadd.f32 %v449, %v967
      %v969 = vpop.f32.mrb[0].mxu0
      %v970 = vadd.f32 %v453, %v969
      %v971 = vpop.f32.mrb[0].mxu0
      %v972 = vadd.f32 %v449, %v971
      %v973 = vpop.f32.mrb[0].mxu0
      %v974 = vadd.f32 %v453, %v973
      %975 = vmatprep.mubr.bf16.mxu0 0
      %976 = vmatmul.mubr.bf16.gmra.mrb[0].mxu0 %v753
      %v977 = vpop.f32.mrb[0].mxu0
      %v978 = vadd.f32 %v449, %v977
      %v979 = vpop.f32.mrb[0].mxu0
      %v980 = vadd.f32 %v453, %v979
      %v981 = vpop.f32.mrb[0].mxu0
      %v982 = vadd.f32 %v449, %v981
      %v983 = vpop.f32.mrb[0].mxu0
      %v984 = vadd.f32 %v453, %v983
      %985 = vmatprep.mubr.bf16.mxu0 0
      %986 = vmatmul.mubr.bf16.gmra.mrb[0].mxu0 %v756
      %v987 = vpop.f32.mrb[0].mxu0
      %v988 = vadd.f32 %v449, %v987
      %v989 = vpop.f32.mrb[0].mxu0
      %v990 = vadd.f32 %v453, %v989
      %v991 = vpop.f32.mrb[0].mxu0
      %v992 = vadd.f32 %v449, %v991
      %v993 = vpop.f32.mrb[0].mxu0
      %v994 = vadd.f32 %v453, %v993
      %995 = vmatprep.mubr.bf16.mxu0 0
      %996 = vmatmul.mubr.bf16.gmra.mrb[0].mxu0 %v759
      %v997 = vpop.f32.mrb[0].mxu0
      %v998 = vadd.f32 %v449, %v997
      %v999 = vpop.f32.mrb[0].mxu0
      %v1000 = vadd.f32 %v453, %v999
      %v1001 = vpop.f32.mrb[0].mxu0
      %v1002 = vadd.f32 %v449, %v1001
      %v1003 = vpop.f32.mrb[0].mxu0
      %v1004 = vadd.f32 %v453, %v1003
      %1005 = vmatprep.mubr.bf16.mxu0 0
      %1006 = vmatmul.mubr.bf16.gmra.mrb[0].mxu0 %v762
      %v1007 = vpop.f32.mrb[0].mxu0
      %v1008 = vadd.f32 %v449, %v1007
      %v1009 = vpop.f32.mrb[0].mxu0
      %v1010 = vadd.f32 %v453, %v1009
      %v1011 = vpop.f32.mrb[0].mxu0
      %v1012 = vadd.f32 %v449, %v1011
      %v1013 = vpop.f32.mrb[0].mxu0
      %v1014 = vadd.f32 %v453, %v1013
      %1015 = vmatprep.mubr.bf16.mxu0 0
      %1016 = vmatmul.mubr.bf16.gmra.mrb[0].mxu0 %v765
      %v1017 = vpop.f32.mrb[0].mxu0
      %v1018 = vadd.f32 %v449, %v1017
      %v1019 = vpop.f32.mrb[0].mxu0
      %v1020 = vadd.f32 %v453, %v1019
      %v1021 = vpop.f32.mrb[0].mxu0
      %v1022 = vadd.f32 %v449, %v1021
      %v1023 = vpop.f32.mrb[0].mxu0
      %v1024 = vadd.f32 %v453, %v1023
      %1025 = vmatprep.mubr.bf16.mxu0 0
      %1026 = vmatmul.mubr.bf16.gmra.mrb[0].mxu0 %v768
      %v1027 = vpop.f32.mrb[0].mxu0
      %v1028 = vadd.f32 %v449, %v1027
      %v1029 = vpop.f32.mrb[0].mxu0
      %v1030 = vadd.f32 %v453, %v1029
      %v1031 = vpop.f32.mrb[0].mxu0
      %v1032 = vadd.f32 %v449, %v1031
      %v1033 = vpop.f32.mrb[0].mxu0
      %v1034 = vadd.f32 %v453, %v1033
      %1035 = vmatprep.mubr.bf16.mxu0 0
      %1036 = vmatmul.mubr.bf16.gmra.mrb[0].mxu0 %v771
      %v1037 = vpop.f32.mrb[0].mxu0
      %v1038 = vadd.f32 %v449, %v1037
      %v1039 = vpop.f32.mrb[0].mxu0
      %v1040 = vadd.f32 %v453, %v1039
      %v1041 = vpop.f32.mrb[0].mxu0
      %v1042 = vadd.f32 %v449, %v1041
      %v1043 = vpop.f32.mrb[0].mxu0
      %v1044 = vadd.f32 %v453, %v1043
      %1045 = vmatprep.mubr.bf16.mxu0 0
      %1046 = vmatmul.mubr.bf16.gmra.mrb[0].mxu0 %v774
      %v1047 = vpop.f32.mrb[0].mxu0
      %v1048 = vadd.f32 %v449, %v1047
      %v1049 = vpop.f32.mrb[0].mxu0
      %v1050 = vadd.f32 %v453, %v1049
      %v1051 = vpop.f32.mrb[0].mxu0
      %v1052 = vadd.f32 %v449, %v1051
      %v1053 = vpop.f32.mrb[0].mxu0
      %v1054 = vadd.f32 %v453, %v1053
      %1055 = vmatprep.mubr.bf16.mxu0 0
      %1056 = vmatmul.mubr.bf16.gmra.mrb[0].mxu0 %v777
      %v1057 = vpop.f32.mrb[0].mxu0
      %v1058 = vadd.f32 %v449, %v1057
      %v1059 = vpop.f32.mrb[0].mxu0
      %v1060 = vadd.f32 %v453, %v1059
      %v1061 = vpop.f32.mrb[0].mxu0
      %v1062 = vadd.f32 %v449, %v1061
      %v1063 = vpop.f32.mrb[0].mxu0
      %v1064 = vadd.f32 %v453, %v1063
      %1065 = vmatprep.mubr.bf16.mxu0 0
      %1066 = vmatmul.mubr.bf16.gmra.mrb[0].mxu0 %v780
      %v1067 = vpop.f32.mrb[0].mxu0
      %v1068 = vadd.f32 %v449, %v1067
      %v1069 = vpop.f32.mrb[0].mxu0
      %v1070 = vadd.f32 %v453, %v1069
      %v1071 = vpop.f32.mrb[0].mxu0
      %v1072 = vadd.f32 %v449, %v1071
      %v1073 = vpop.f32.mrb[0].mxu0
      %v1074 = vadd.f32 %v453, %v1073
      %1075 = vmatprep.mubr.bf16.mxu0 0
      %1076 = vmatmul.mubr.bf16.gmra.mrb[0].mxu0 %v783
      %v1077 = vpop.f32.mrb[0].mxu0
      %v1078 = vadd.f32 %v449, %v1077
      %v1079 = vpop.f32.mrb[0].mxu0
      %v1080 = vadd.f32 %v453, %v1079
      %v1081 = vpop.f32.mrb[0].mxu0
      %v1082 = vadd.f32 %v449, %v1081
      %v1083 = vpop.f32.mrb[0].mxu0
      %v1084 = vadd.f32 %v453, %v1083
      %1085 = vmatprep.mubr.bf16.mxu0 0
      %1086 = vmatmul.mubr.bf16.gmra.mrb[0].mxu0 %v786
      %v1087 = vpop.f32.mrb[0].mxu0
      %v1088 = vadd.f32 %v449, %v1087
      %v1089 = vpop.f32.mrb[0].mxu0
      %v1090 = vadd.f32 %v453, %v1089
      %v1091 = vpop.f32.mrb[0].mxu0
      %v1092 = vadd.f32 %v449, %v1091
      %v1093 = vpop.f32.mrb[0].mxu0
      %v1094 = vadd.f32 %v453, %v1093
      %1095 = vmatprep.mubr.bf16.mxu0 0
      %1096 = vmatmul.mubr.bf16.gmra.mrb[0].mxu0 %v789
      %v1097 = vpop.f32.mrb[0].mxu0
      %v1098 = vadd.f32 %v449, %v1097
      %v1099 = vpop.f32.mrb[0].mxu0
      %v1100 = vadd.f32 %v453, %v1099
      %v1101 = vpop.f32.mrb[0].mxu0
      %v1102 = vadd.f32 %v449, %v1101
      %v1103 = vpop.f32.mrb[0].mxu0
      %v1104 = vadd.f32 %v453, %v1103
      %1105 = vmatprep.mubr.bf16.mxu0 0
      %1106 = vmatmul.mubr.bf16.gmra.mrb[0].mxu0 %v792
      %v1107 = vpop.f32.mrb[0].mxu0
      %v1108 = vadd.f32 %v449, %v1107
      %v1109 = vpop.f32.mrb[0].mxu0
      %v1110 = vadd.f32 %v453, %v1109
      %v1111 = vpop.f32.mrb[0].mxu0
      %v1112 = vadd.f32 %v449, %v1111
      %v1113 = vpop.f32.mrb[0].mxu0
      %v1114 = vadd.f32 %v453, %v1113
      %1115 = vmatprep.mubr.bf16.mxu0 0
      %1116 = vmatmul.mubr.bf16.gmra.mrb[0].mxu0 %v795
      %v1117 = vpop.f32.mrb[0].mxu0
      %v1118 = vadd.f32 %v449, %v1117
      %v1119 = vpop.f32.mrb[0].mxu0
      %v1120 = vadd.f32 %v453, %v1119
      %v1121 = vpop.f32.mrb[0].mxu0
      %v1122 = vadd.f32 %v449, %v1121
      %v1123 = vpop.f32.mrb[0].mxu0
      %v1124 = vadd.f32 %v453, %v1123
      %1125 = vmatprep.mubr.bf16.mxu0 0
      %1126 = vmatmul.mubr.bf16.gmra.mrb[0].mxu0 %v798
      %v1127 = vpop.f32.mrb[0].mxu0
      %v1128 = vadd.f32 %v449, %v1127
      %v1129 = vpop.f32.mrb[0].mxu0
      %v1130 = vadd.f32 %v453, %v1129
      %v1131 = vpop.f32.mrb[0].mxu0
      %v1132 = vadd.f32 %v449, %v1131
      %v1133 = vpop.f32.mrb[0].mxu0
      %v1134 = vadd.f32 %v453, %v1133
      %1135 = vmatprep.mubr.bf16.mxu0 0
      %1136 = vmatmul.mubr.bf16.gmra.mrb[0].mxu0 %v801
      %v1137 = vpop.f32.mrb[0].mxu0
      %v1138 = vadd.f32 %v449, %v1137
      %v1139 = vpop.f32.mrb[0].mxu0
      %v1140 = vadd.f32 %v453, %v1139
      %v1141 = vpop.f32.mrb[0].mxu0
      %v1142 = vadd.f32 %v449, %v1141
      %v1143 = vpop.f32.mrb[0].mxu0
      %v1144 = vadd.f32 %v453, %v1143
      %1145 = vmatprep.mubr.bf16.mxu0 0
      %1146 = vmatmul.mubr.bf16.gmra.mrb[0].mxu0 %v804
      %v1147 = vpop.f32.mrb[0].mxu0
      %v1148 = vadd.f32 %v449, %v1147
      %v1149 = vpop.f32.mrb[0].mxu0
      %v1150 = vadd.f32 %v453, %v1149
      %v1151 = vpop.f32.mrb[0].mxu0
      %v1152 = vadd.f32 %v449, %v1151
      %v1153 = vpop.f32.mrb[0].mxu0
      %v1154 = vadd.f32 %v453, %v1153
      %1155 = vmatprep.mubr.bf16.mxu0 0
      %1156 = vmatmul.mubr.bf16.gmra.mrb[0].mxu0 %v807
      %v1157 = vpop.f32.mrb[0].mxu0
      %v1158 = vadd.f32 %v449, %v1157
      %v1159 = vpop.f32.mrb[0].mxu0
      %v1160 = vadd.f32 %v453, %v1159
      %v1161 = vpop.f32.mrb[0].mxu0
      %v1162 = vadd.f32 %v449, %v1161
      %v1163 = vpop.f32.mrb[0].mxu0
      %v1164 = vadd.f32 %v453, %v1163
      %1165 = vmatprep.mubr.bf16.mxu0 0
      %1166 = vmatmul.mubr.bf16.gmra.mrb[0].mxu0 %v810
      %v1167 = vpop.f32.mrb[0].mxu0
      %v1168 = vadd.f32 %v449, %v1167
      %v1169 = vpop.f32.mrb[0].mxu0
      %v1170 = vadd.f32 %v453, %v1169
      %v1171 = vpop.f32.mrb[0].mxu0
      %v1172 = vadd.f32 %v449, %v1171
      %v1173 = vpop.f32.mrb[0].mxu0
      %v1174 = vadd.f32 %v453, %v1173
      %1175 = vmatprep.mubr.bf16.mxu0 0
      %1176 = vmatmul.mubr.bf16.gmra.mrb[0].mxu0 %v813
      %v1177 = vpop.f32.mrb[0].mxu0
      %v1178 = vadd.f32 %v449, %v1177
      %v1179 = vpop.f32.mrb[0].mxu0
      %v1180 = vadd.f32 %v453, %v1179
      %v1181 = vpop.f32.mrb[0].mxu0
      %v1182 = vadd.f32 %v449, %v1181
      %v1183 = vpop.f32.mrb[0].mxu0
      %v1184 = vadd.f32 %v453, %v1183
      %1185 = vmatprep.mubr.bf16.mxu0 0
      %1186 = vmatmul.mubr.bf16.gmra.mrb[0].mxu0 %v816
      %v1187 = vpop.f32.mrb[0].mxu0
      %v1188 = vadd.f32 %v449, %v1187
      %v1189 = vpop.f32.mrb[0].mxu0
      %v1190 = vadd.f32 %v453, %v1189
      %v1191 = vpop.f32.mrb[0].mxu0
      %v1192 = vadd.f32 %v449, %v1191
      %v1193 = vpop.f32.mrb[0].mxu0
      %v1194 = vadd.f32 %v453, %v1193
      %1195 = vmatprep.mubr.bf16.mxu0 0
      %1196 = vmatmul.mubr.bf16.gmra.mrb[0].mxu0 %v819
      %v1197 = vpop.f32.mrb[0].mxu0
      %v1198 = vadd.f32 %v449, %v1197
      %v1199 = vpop.f32.mrb[0].mxu0
      %v1200 = vadd.f32 %v453, %v1199
      %v1201 = vpop.f32.mrb[0].mxu0
      %v1202 = vadd.f32 %v449, %v1201
      %v1203 = vpop.f32.mrb[0].mxu0
      %v1204 = vadd.f32 %v453, %v1203
      %1205 = vmatprep.mubr.bf16.mxu0 0
      %1206 = vmatmul.mubr.bf16.gmra.mrb[0].mxu0 %v822
      %v1207 = vpop.f32.mrb[0].mxu0
      %v1208 = vadd.f32 %v449, %v1207
      %v1209 = vpop.f32.mrb[0].mxu0
      %v1210 = vadd.f32 %v453, %v1209
      %v1211 = vpop.f32.mrb[0].mxu0
      %v1212 = vadd.f32 %v449, %v1211
      %v1213 = vpop.f32.mrb[0].mxu0
      %v1214 = vadd.f32 %v453, %v1213
      %1215 = vmatprep.mubr.bf16.mxu0 0
      %1216 = vmatmul.mubr.bf16.gmra.mrb[0].mxu0 %v825
      %v1217 = vpop.f32.mrb[0].mxu0
      %v1218 = vadd.f32 %v449, %v1217
      %v1219 = vpop.f32.mrb[0].mxu0
      %v1220 = vadd.f32 %v453, %v1219
      %v1221 = vpop.f32.mrb[0].mxu0
      %v1222 = vadd.f32 %v449, %v1221
      %v1223 = vpop.f32.mrb[0].mxu0
      %v1224 = vadd.f32 %v453, %v1223
      %1225 = vmatprep.mubr.bf16.mxu0 0
      %1226 = vmatmul.mubr.bf16.gmra.mrb[0].mxu0 %v828
      %v1227 = vpop.f32.mrb[0].mxu0
      %v1228 = vadd.f32 %v449, %v1227
      %v1229 = vpop.f32.mrb[0].mxu0
      %v1230 = vadd.f32 %v453, %v1229
      %v1231 = vpop.f32.mrb[0].mxu0
      %v1232 = vadd.f32 %v449, %v1231
      %v1233 = vpop.f32.mrb[0].mxu0
      %v1234 = vadd.f32 %v453, %v1233
      %1235 = vmatprep.mubr.bf16.mxu0 0
      %1236 = vmatmul.mubr.bf16.gmra.mrb[0].mxu0 %v831
      %v1237 = vpop.f32.mrb[0].mxu0
      %v1238 = vadd.f32 %v449, %v1237
      %v1239 = vpop.f32.mrb[0].mxu0
      %v1240 = vadd.f32 %v453, %v1239
      %v1241 = vpop.f32.mrb[0].mxu0
      %v1242 = vadd.f32 %v449, %v1241
      %v1243 = vpop.f32.mrb[0].mxu0
      %v1244 = vadd.f32 %v453, %v1243
      %1245 = vmatprep.mubr.bf16.mxu0 0
      %1246 = vmatmul.mubr.bf16.gmra.mrb[0].mxu0 %v834
      %v1247 = vpop.f32.mrb[0].mxu0
      %v1248 = vadd.f32 %v449, %v1247
      %v1249 = vpop.f32.mrb[0].mxu0
      %v1250 = vadd.f32 %v453, %v1249
      %v1251 = vpop.f32.mrb[0].mxu0
      %v1252 = vadd.f32 %v449, %v1251
      %v1253 = vpop.f32.mrb[0].mxu0
      %v1254 = vadd.f32 %v453, %v1253
      %1255 = vmatprep.mubr.bf16.mxu0 0
      %1256 = vmatmul.mubr.bf16.gmra.mrb[0].mxu0 %v837
      %v1257 = vpop.f32.mrb[0].mxu0
      %v1258 = vadd.f32 %v449, %v1257
      %v1259 = vpop.f32.mrb[0].mxu0
      %v1260 = vadd.f32 %v453, %v1259
      %v1261 = vpop.f32.mrb[0].mxu0
      %v1262 = vadd.f32 %v449, %v1261
      %v1263 = vpop.f32.mrb[0].mxu0
      %v1264 = vadd.f32 %v453, %v1263
      %1265 = vmatprep.mubr.bf16.mxu0 0
      %1266 = vmatmul.mubr.bf16.gmra.mrb[0].mxu0 %v840
      %v1267 = vpop.f32.mrb[0].mxu0
      %v1268 = vadd.f32 %v449, %v1267
      %v1269 = vpop.f32.mrb[0].mxu0
      %v1270 = vadd.f32 %v453, %v1269
      %v1271 = vpop.f32.mrb[0].mxu0
      %v1272 = vadd.f32 %v449, %v1271
      %v1273 = vpop.f32.mrb[0].mxu0
      %v1274 = vadd.f32 %v453, %v1273
      %1275 = vmatprep.mubr.bf16.mxu0 0
      %1276 = vmatmul.mubr.bf16.gmra.mrb[0].mxu0 %v843
      %v1277 = vpop.f32.mrb[0].mxu0
      %v1278 = vadd.f32 %v449, %v1277
      %v1279 = vpop.f32.mrb[0].mxu0
      %v1280 = vadd.f32 %v453, %v1279
      %v1281 = vpop.f32.mrb[0].mxu0
      %v1282 = vadd.f32 %v449, %v1281
      %v1283 = vpop.f32.mrb[0].mxu0
      %v1284 = vadd.f32 %v453, %v1283
      %1285 = vmatprep.mubr.bf16.mxu0 0
      %1286 = vmatmul.mubr.bf16.gmra.mrb[0].mxu0 %v846
      %v1287 = vpop.f32.mrb[0].mxu0
      %v1288 = vadd.f32 %v449, %v1287
      %v1289 = vpop.f32.mrb[0].mxu0
      %v1290 = vadd.f32 %v453, %v1289
      %v1291 = vpop.f32.mrb[0].mxu0
      %v1292 = vadd.f32 %v449, %v1291
      %v1293 = vpop.f32.mrb[0].mxu0
      %v1294 = vadd.f32 %v453, %v1293
      %1295 = vmatprep.mubr.bf16.mxu0 0
      %1296 = vmatmul.mubr.bf16.gmra.mrb[0].mxu0 %v849
      %v1297 = vpop.f32.mrb[0].mxu0
      %v1298 = vadd.f32 %v449, %v1297
      %v1299 = vpop.f32.mrb[0].mxu0
      %v1300 = vadd.f32 %v453, %v1299
      %v1301 = vpop.f32.mrb[0].mxu0
      %v1302 = vadd.f32 %v449, %v1301
      %v1303 = vpop.f32.mrb[0].mxu0
      %v1304 = vadd.f32 %v453, %v1303
      %1305 = vmatprep.mubr.bf16.mxu0 0
      %1306 = vmatmul.mubr.bf16.gmra.mrb[0].mxu0 %v852
      %v1307 = vpop.f32.mrb[0].mxu0
      %v1308 = vadd.f32 %v449, %v1307
      %v1309 = vpop.f32.mrb[0].mxu0
      %v1310 = vadd.f32 %v453, %v1309
      %v1311 = vpop.f32.mrb[0].mxu0
      %v1312 = vadd.f32 %v449, %v1311
      %v1313 = vpop.f32.mrb[0].mxu0
      %v1314 = vadd.f32 %v453, %v1313
      %1315 = vmatprep.mubr.bf16.mxu0 0
      %1316 = vmatmul.mubr.bf16.gmra.mrb[0].mxu0 %v855
      %v1317 = vpop.f32.mrb[0].mxu0
      %v1318 = vadd.f32 %v449, %v1317
      %v1319 = vpop.f32.mrb[0].mxu0
      %v1320 = vadd.f32 %v453, %v1319
      %v1321 = vpop.f32.mrb[0].mxu0
      %v1322 = vadd.f32 %v449, %v1321
      %v1323 = vpop.f32.mrb[0].mxu0
      %v1324 = vadd.f32 %v453, %v1323
      %1325 = vmatprep.mubr.bf16.mxu0 0
      %1326 = vmatmul.mubr.bf16.gmra.mrb[0].mxu0 %v858
      %v1327 = vpop.f32.mrb[0].mxu0
      %v1328 = vadd.f32 %v449, %v1327
      %v1329 = vpop.f32.mrb[0].mxu0
      %v1330 = vadd.f32 %v453, %v1329
      %v1331 = vpop.f32.mrb[0].mxu0
      %v1332 = vadd.f32 %v449, %v1331
      %v1333 = vpop.f32.mrb[0].mxu0
      %v1334 = vadd.f32 %v453, %v1333
      %1335 = vmatprep.mubr.bf16.mxu0 0
      %1336 = vmatmul.mubr.bf16.gmra.mrb[0].mxu0 %v861
      %v1337 = vpop.f32.mrb[0].mxu0
      %v1338 = vadd.f32 %v449, %v1337
      %v1339 = vpop.f32.mrb[0].mxu0
      %v1340 = vadd.f32 %v453, %v1339
      %v1341 = vpop.f32.mrb[0].mxu0
      %v1342 = vadd.f32 %v449, %v1341
      %v1343 = vpop.f32.mrb[0].mxu0
      %v1344 = vadd.f32 %v453, %v1343
      %1345 = vmatprep.mubr.bf16.mxu0 0
      %1346 = vmatmul.mubr.bf16.gmra.mrb[0].mxu0 %v864
      %v1347 = vpop.f32.mrb[0].mxu0
      %v1348 = vadd.f32 %v449, %v1347
      %v1349 = vpop.f32.mrb[0].mxu0
      %v1350 = vadd.f32 %v453, %v1349
      %v1351 = vpop.f32.mrb[0].mxu0
      %v1352 = vadd.f32 %v449, %v1351
      %v1353 = vpop.f32.mrb[0].mxu0
      %v1354 = vadd.f32 %v453, %v1353
      %1355 = vmatprep.mubr.bf16.mxu0 0
      %1356 = vmatmul.mubr.bf16.gmra.mrb[0].mxu0 %v867
      %v1357 = vpop.f32.mrb[0].mxu0
      %v1358 = vadd.f32 %v449, %v1357
      %v1359 = vpop.f32.mrb[0].mxu0
      %v1360 = vadd.f32 %v453, %v1359
      %v1361 = vpop.f32.mrb[0].mxu0
      %v1362 = vadd.f32 %v449, %v1361
      %v1363 = vpop.f32.mrb[0].mxu0
      %v1364 = vadd.f32 %v453, %v1363
      %1365 = vmatprep.mubr.bf16.mxu0 0
      %1366 = vmatmul.mubr.bf16.gmra.mrb[0].mxu0 %v870
      %v1367 = vpop.f32.mrb[0].mxu0
      %v1368 = vadd.f32 %v449, %v1367
      %v1369 = vpop.f32.mrb[0].mxu0
      %v1370 = vadd.f32 %v453, %v1369
      %v1371 = vpop.f32.mrb[0].mxu0
      %v1372 = vadd.f32 %v449, %v1371
      %v1373 = vpop.f32.mrb[0].mxu0
      %v1374 = vadd.f32 %v453, %v1373
      %1375 = vmatprep.mubr.bf16.mxu0 0
      %1376 = vmatmul.mubr.bf16.gmra.mrb[0].mxu0 %v873
      %v1377 = vpop.f32.mrb[0].mxu0
      %v1378 = vadd.f32 %v449, %v1377
      %v1379 = vpop.f32.mrb[0].mxu0
      %v1380 = vadd.f32 %v453, %v1379
      %v1381 = vpop.f32.mrb[0].mxu0
      %v1382 = vadd.f32 %v449, %v1381
      %v1383 = vpop.f32.mrb[0].mxu0
      %v1384 = vadd.f32 %v453, %v1383
      %1385 = vmatprep.mubr.bf16.mxu0 0
      %1386 = vmatmul.mubr.bf16.gmra.mrb[0].mxu0 %v876
      %v1387 = vpop.f32.mrb[0].mxu0
      %v1388 = vadd.f32 %v449, %v1387
      %v1389 = vpop.f32.mrb[0].mxu0
      %v1390 = vadd.f32 %v453, %v1389
      %v1391 = vpop.f32.mrb[0].mxu0
      %v1392 = vadd.f32 %v449, %v1391
      %v1393 = vpop.f32.mrb[0].mxu0
      %v1394 = vadd.f32 %v453, %v1393
      %1395 = vmatprep.mubr.bf16.mxu0 0
      %1396 = vmatmul.mubr.bf16.gmra.mrb[0].mxu0 %v879
      %v1397 = vpop.f32.mrb[0].mxu0
      %v1398 = vadd.f32 %v449, %v1397
      %v1399 = vpop.f32.mrb[0].mxu0
      %v1400 = vadd.f32 %v453, %v1399
      %v1401 = vpop.f32.mrb[0].mxu0
      %v1402 = vadd.f32 %v449, %v1401
      %v1403 = vpop.f32.mrb[0].mxu0
      %v1404 = vadd.f32 %v453, %v1403
      %1405 = vmatprep.mubr.bf16.mxu0 0
      %1406 = vmatmul.mubr.bf16.gmra.mrb[0].mxu0 %v882
      %v1407 = vpop.f32.mrb[0].mxu0
      %v1408 = vadd.f32 %v449, %v1407
      %v1409 = vpop.f32.mrb[0].mxu0
      %v1410 = vadd.f32 %v453, %v1409
      %v1411 = vpop.f32.mrb[0].mxu0
      %v1412 = vadd.f32 %v449, %v1411
      %v1413 = vpop.f32.mrb[0].mxu0
      %v1414 = vadd.f32 %v453, %v1413
      %1415 = vmatprep.mubr.bf16.mxu0 0
      %1416 = vmatmul.mubr.bf16.gmra.mrb[0].mxu0 %v885
      %v1417 = vpop.f32.mrb[0].mxu0
      %v1418 = vadd.f32 %v449, %v1417
      %v1419 = vpop.f32.mrb[0].mxu0
      %v1420 = vadd.f32 %v453, %v1419
      %v1421 = vpop.f32.mrb[0].mxu0
      %v1422 = vadd.f32 %v449, %v1421
      %v1423 = vpop.f32.mrb[0].mxu0
      %v1424 = vadd.f32 %v453, %v1423
      %1425 = vmatprep.mubr.bf16.mxu0 0
      %1426 = vmatmul.mubr.bf16.gmra.mrb[0].mxu0 %v888
      %v1427 = vpop.f32.mrb[0].mxu0
      %v1428 = vadd.f32 %v449, %v1427
      %v1429 = vpop.f32.mrb[0].mxu0
      %v1430 = vadd.f32 %v453, %v1429
      %v1431 = vpop.f32.mrb[0].mxu0
      %v1432 = vadd.f32 %v449, %v1431
      %v1433 = vpop.f32.mrb[0].mxu0
      %v1434 = vadd.f32 %v453, %v1433
      %1435 = vmatprep.mubr.bf16.mxu0 0
      %1436 = vmatmul.mubr.bf16.gmra.mrb[0].mxu0 %v891
      %v1437 = vpop.f32.mrb[0].mxu0
      %v1438 = vadd.f32 %v449, %v1437
      %v1439 = vpop.f32.mrb[0].mxu0
      %v1440 = vadd.f32 %v453, %v1439
      %v1441 = vpop.f32.mrb[0].mxu0
      %v1442 = vadd.f32 %v449, %v1441
      %v1443 = vpop.f32.mrb[0].mxu0
      %v1444 = vadd.f32 %v453, %v1443
      %1445 = vdwg.mxu0
      %v1446 = vpack.c.bf16 %v932, %v928
      %v1447 = vpack.c.bf16 %v934, %v930
      %v1448 = vpack.c.bf16 %v942, %v938
      %v1449 = vpack.c.bf16 %v944, %v940
      %v1450 = vpack.c.bf16 %v952, %v948
      %v1451 = vpack.c.bf16 %v954, %v950
      %v1452 = vpack.c.bf16 %v962, %v958
      %v1453 = vpack.c.bf16 %v964, %v960
      %v1454 = vpack.c.bf16 %v972, %v968
      %v1455 = vpack.c.bf16 %v974, %v970
      %v1456 = vpack.c.bf16 %v982, %v978
      %v1457 = vpack.c.bf16 %v984, %v980
      %v1458 = vpack.c.bf16 %v992, %v988
      %v1459 = vpack.c.bf16 %v994, %v990
      %v1460 = vpack.c.bf16 %v1002, %v998
      %v1461 = vpack.c.bf16 %v1004, %v1000
      %v1462 = vpack.c.bf16 %v1012, %v1008
      %v1463 = vpack.c.bf16 %v1014, %v1010
      %v1464 = vpack.c.bf16 %v1022, %v1018
      %v1465 = vpack.c.bf16 %v1024, %v1020
      %v1466 = vpack.c.bf16 %v1032, %v1028
      %v1467 = vpack.c.bf16 %v1034, %v1030
      %v1468 = vpack.c.bf16 %v1042, %v1038
      %v1469 = vpack.c.bf16 %v1044, %v1040
      %v1470 = vpack.c.bf16 %v1052, %v1048
      %v1471 = vpack.c.bf16 %v1054, %v1050
      %v1472 = vpack.c.bf16 %v1062, %v1058
      %v1473 = vpack.c.bf16 %v1064, %v1060
      %v1474 = vpack.c.bf16 %v1072, %v1068
      %v1475 = vpack.c.bf16 %v1074, %v1070
      %v1476 = vpack.c.bf16 %v1082, %v1078
      %v1477 = vpack.c.bf16 %v1084, %v1080
      %v1478 = vpack.c.bf16 %v1092, %v1088
      %v1479 = vpack.c.bf16 %v1094, %v1090
      %v1480 = vpack.c.bf16 %v1102, %v1098
      %v1481 = vpack.c.bf16 %v1104, %v1100
      %v1482 = vpack.c.bf16 %v1112, %v1108
      %v1483 = vpack.c.bf16 %v1114, %v1110
      %v1484 = vpack.c.bf16 %v1122, %v1118
      %v1485 = vpack.c.bf16 %v1124, %v1120
      %v1486 = vpack.c.bf16 %v1132, %v1128
      %v1487 = vpack.c.bf16 %v1134, %v1130
      %v1488 = vpack.c.bf16 %v1142, %v1138
      %v1489 = vpack.c.bf16 %v1144, %v1140
      %v1490 = vpack.c.bf16 %v1152, %v1148
      %v1491 = vpack.c.bf16 %v1154, %v1150
      %v1492 = vpack.c.bf16 %v1162, %v1158
      %v1493 = vpack.c.bf16 %v1164, %v1160
      %v1494 = vpack.c.bf16 %v1172, %v1168
      %v1495 = vpack.c.bf16 %v1174, %v1170
      %v1496 = vpack.c.bf16 %v1182, %v1178
      %v1497 = vpack.c.bf16 %v1184, %v1180
      %v1498 = vpack.c.bf16 %v1192, %v1188
      %v1499 = vpack.c.bf16 %v1194, %v1190
      %v1500 = vpack.c.bf16 %v1202, %v1198
      %v1501 = vpack.c.bf16 %v1204, %v1200
      %v1502 = vpack.c.bf16 %v1212, %v1208
      %v1503 = vpack.c.bf16 %v1214, %v1210
      %v1504 = vpack.c.bf16 %v1222, %v1218
      %v1505 = vpack.c.bf16 %v1224, %v1220
      %v1506 = vpack.c.bf16 %v1232, %v1228
      %v1507 = vpack.c.bf16 %v1234, %v1230
      %v1508 = vpack.c.bf16 %v1242, %v1238
      %v1509 = vpack.c.bf16 %v1244, %v1240
      %v1510 = vpack.c.bf16 %v1252, %v1248
      %v1511 = vpack.c.bf16 %v1254, %v1250
      %v1512 = vpack.c.bf16 %v1262, %v1258
      %v1513 = vpack.c.bf16 %v1264, %v1260
      %v1514 = vpack.c.bf16 %v1272, %v1268
      %v1515 = vpack.c.bf16 %v1274, %v1270
      %v1516 = vpack.c.bf16 %v1282, %v1278
      %v1517 = vpack.c.bf16 %v1284, %v1280
      %v1518 = vpack.c.bf16 %v1292, %v1288
      %v1519 = vpack.c.bf16 %v1294, %v1290
      %v1520 = vpack.c.bf16 %v1302, %v1298
      %v1521 = vpack.c.bf16 %v1304, %v1300
      %v1522 = vpack.c.bf16 %v1312, %v1308
      %v1523 = vpack.c.bf16 %v1314, %v1310
      %v1524 = vpack.c.bf16 %v1322, %v1318
      %v1525 = vpack.c.bf16 %v1324, %v1320
      %v1526 = vpack.c.bf16 %v1332, %v1328
      %v1527 = vpack.c.bf16 %v1334, %v1330
      %v1528 = vpack.c.bf16 %v1342, %v1338
      %v1529 = vpack.c.bf16 %v1344, %v1340
      %v1530 = vpack.c.bf16 %v1352, %v1348
      %v1531 = vpack.c.bf16 %v1354, %v1350
      %v1532 = vpack.c.bf16 %v1362, %v1358
      %v1533 = vpack.c.bf16 %v1364, %v1360
      %v1534 = vpack.c.bf16 %v1372, %v1368
      %v1535 = vpack.c.bf16 %v1374, %v1370
      %v1536 = vpack.c.bf16 %v1382, %v1378
      %v1537 = vpack.c.bf16 %v1384, %v1380
      %v1538 = vpack.c.bf16 %v1392, %v1388
      %v1539 = vpack.c.bf16 %v1394, %v1390
      %v1540 = vpack.c.bf16 %v1402, %v1398
      %v1541 = vpack.c.bf16 %v1404, %v1400
      %v1542 = vpack.c.bf16 %v1412, %v1408
      %v1543 = vpack.c.bf16 %v1414, %v1410
      %v1544 = vpack.c.bf16 %v1422, %v1418
      %v1545 = vpack.c.bf16 %v1424, %v1420
      %v1546 = vpack.c.bf16 %v1432, %v1428
      %v1547 = vpack.c.bf16 %v1434, %v1430
      %v1548 = vpack.c.bf16 %v1442, %v1438
      %v1549 = vpack.c.bf16 %v1444, %v1440
      %v1550 = vld [vmem:[%s3] sm:$0xff]
      %v1551 = vld [vmem:[%s3 + $0x8] sm:$0xff]
      %v1552 = vld [vmem:[%s3 + $0x10] sm:$0xff]
      %v1553 = vld [vmem:[%s3 + $0x18] sm:$0xff]
      %v1554 = vld [vmem:[%s3 + $0x20] sm:$0xff]
      %v1555 = vld [vmem:[%s3 + $0x28] sm:$0xff]
      %v1556 = vld [vmem:[%s3 + $0x30] sm:$0x11]
      %v1557 = vld [vmem:[%s4] sm:$0xff]
      %v1558 = vld [vmem:[%s4 + $0x8] sm:$0xff]
      %v1559 = vld [vmem:[%s4 + $0x10] sm:$0xff]
      %v1560 = vld [vmem:[%s4 + $0x18] sm:$0xff]
      %v1561 = vld [vmem:[%s5] sm:$0x3]
      %v1569 = vunpack.c.l.b16 %v1550
      %v1570 = vunpack.c.h.b16 %v1550
      %v1571 = vunpack.c.l.b16 %v1551
      %v1572 = vunpack.c.h.b16 %v1551
      %v1573 = vunpack.c.l.b16 %v1552
      %v1574 = vunpack.c.h.b16 %v1552
      %v1575 = vunpack.c.l.b16 %v1553
      %v1576 = vunpack.c.h.b16 %v1553
      %v1577 = vunpack.c.l.b16 %v1554
      %v1578 = vunpack.c.h.b16 %v1554
      %v1579 = vunpack.c.l.b16 %v1555
      %v1580 = vunpack.c.h.b16 %v1555
      %v1581 = vunpack.c.l.b16 %v1556
      %v1582 = vunpack.c.h.b16 %v1556
      %v1583 = vpack.c.b16 %v1571, %v1569
      %v1584 = vpack.c.b16 %v1572, %v1570
      %v1585 = vpack.c.b16 %v1575, %v1573
      %v1586 = vpack.c.b16 %v1576, %v1574
      %v1587 = vpack.c.b16 %v1579, %v1577
      %v1588 = vpack.c.b16 %v1580, %v1578
      %v1589 = vpack.c.b16 %v1581, %v1581
      %v1590 = vpack.c.b16 %v1582, %v1582
      %vm1608 = vcmask 654336
      %v1610 = vsel %vm1608, %v1584, 0
      %v1613 = vsel %vm1608, %v1586, 0
      %v1616 = vsel %vm1608, %v1588, 0
      %v1619 = vsel %vm1608, %v1590, 0
      %1621 = vmatprep.subr.bf16.mxu0 0
      %1622 = vmatpush1.bf16.msra.mxu0 %v664
      %1623 = vmatprep.subr.bf16.mxu0 0
      %1624 = vmatpush1.bf16.msra.mxu0 %v665
      %1625 = vmatprep.subr.bf16.mxu0 0
      %1626 = vmatpush1.bf16.msra.mxu0 %v666
      %1627 = vmatprep.subr.bf16.mxu0 0
      %1628 = vmatpush1.bf16.msra.mxu0 %v667
      %1629 = vmatprep.subr.bf16.mxu0 0
      %1630 = vmatpush1.bf16.msra.mxu0 %v668
      %1631 = vmatprep.subr.bf16.mxu0 0
      %1632 = vmatpush1.bf16.msra.mxu0 %v669
      %1633 = vmatprep.subr.bf16.mxu0 0
      %1634 = vmatpush1.bf16.msra.mxu0 %v670
      %1635 = vmatprep.subr.bf16.mxu0 0
      %1636 = vmatpush1.bf16.msra.mxu0 %v671
      %1637 = vmatprep.subr.bf16.mxu0 0
      %1638 = vmatpush1.bf16.msra.mxu0 %v672
      %1639 = vmatprep.subr.bf16.mxu0 0
      %1640 = vmatpush1.bf16.msra.mxu0 %v673
      %1641 = vmatprep.subr.bf16.mxu0 0
      %1642 = vmatpush1.bf16.msra.mxu0 %v674
      %1643 = vmatprep.subr.bf16.mxu0 0
      %1644 = vmatpush1.bf16.msra.mxu0 %v675
      %1645 = vmatprep.subr.bf16.mxu0 0
      %1646 = vmatpush1.bf16.msra.mxu0 %v676
      %1647 = vmatprep.subr.bf16.mxu0 0
      %1648 = vmatpush1.bf16.msra.mxu0 0
      %1649 = vmatprep.subr.bf16.mxu0 0
      %1650 = vmatpush1.bf16.msra.mxu0 0
      %1651 = vmatprep.subr.bf16.mxu0 0
      %1652 = vmatpush1.bf16.msra.mxu0 0
      %1653 = vmatprep.mubr.bf16.mxu0 %v1610
      %1654 = vmatmul.mubr.bf16.gmra.mrb[0].mxu0 %v1583
      %v1655 = vpop.f32.mrb[0].mxu0
      %v1656 = vadd.f32 0.0, %v1655
      %v1657 = vpop.f32.mrb[0].mxu0
      %v1658 = vpop.f32.mrb[0].mxu0
      %v1659 = vadd.f32 0.0, %v1658
      %v1660 = vpop.f32.mrb[0].mxu0
      %1661 = vmatprep.mubr.bf16.mxu0 %v1613
      %1662 = vmatmul.mubr.bf16.gmra.mrb[0].mxu0 %v1585
      %v1663 = vpop.f32.mrb[0].mxu0
      %v1664 = vadd.f32 0.0, %v1663
      %v1665 = vpop.f32.mrb[0].mxu0
      %v1666 = vpop.f32.mrb[0].mxu0
      %v1667 = vadd.f32 0.0, %v1666
      %v1668 = vpop.f32.mrb[0].mxu0
      %1669 = vmatprep.mubr.bf16.mxu0 %v1616
      %1670 = vmatmul.mubr.bf16.gmra.mrb[0].mxu0 %v1587
      %v1671 = vpop.f32.mrb[0].mxu0
      %v1672 = vadd.f32 0.0, %v1671
      %v1673 = vpop.f32.mrb[0].mxu0
      %v1674 = vpop.f32.mrb[0].mxu0
      %v1675 = vadd.f32 0.0, %v1674
      %v1676 = vpop.f32.mrb[0].mxu0
      %1677 = vmatprep.mubr.bf16.mxu0 %v1619
      %1678 = vmatmul.mubr.bf16.gmra.mrb[0].mxu0 %v1589
      %v1679 = vpop.f32.mrb[0].mxu0
      %v1680 = vadd.f32 0.0, %v1679
      %v1681 = vpop.f32.mrb[0].mxu0
      %v1682 = vpop.f32.mrb[0].mxu0
      %v1683 = vpop.f32.mrb[0].mxu0
      %1684 = vdwg.mxu0
      %v1685 = vpack.c.bf16 %v1659, %v1656
      %v1686 = vpack.c.bf16 %v1667, %v1664
      %v1687 = vpack.c.bf16 %v1675, %v1672
      %v1688 = vpack.c.bf16 %v1680, %v1680
      %v1690 = vlaneseq
      %v1691 = vshrl.u32 %v1690, 7
      %v1692 = vsub.s32 0, %v1691
      %v1693 = vrot.slane %v1561, %v1692
      %v1694 = vlaneseq
      %v1695 = vshrl.u32 %v1694, 7
      %v1696 = vsub.s32 1, %v1695
      %v1697 = vrot.slane %v1561, %v1696
      %v1704 = vunpack.c.l.b16 %v1557
      %v1705 = vunpack.c.h.b16 %v1557
      %v1706 = vunpack.c.l.b16 %v1558
      %v1707 = vunpack.c.h.b16 %v1558
      %v1708 = vunpack.c.l.b16 %v1559
      %v1709 = vunpack.c.h.b16 %v1559
      %v1710 = vunpack.c.l.b16 %v1560
      %v1711 = vunpack.c.h.b16 %v1560
      %v1712 = vpack.c.b16 %v1706, %v1704
      %v1713 = vpack.c.b16 %v1707, %v1705
      %v1714 = vpack.c.b16 %v1710, %v1708
      %v1715 = vpack.c.b16 %v1711, %v1709
      %v1721 = vsel %vm736, %v1685, 0
      %v1724 = vsel %vm736, %v1686, 0
      %v1727 = vsel %vm736, %v1687, 0
      %v1730 = vsel %vm736, %v1688, 0
      %1732 = vmatprep.subr.bf16.mxu0 %v1713
      %1733 = vmatpush1.bf16.msra.mxu0 %v1712
      %1734 = vmatprep.subr.bf16.mxu0 %v1715
      %1735 = vmatpush1.bf16.msra.mxu0 %v1714
      %1736 = vmatprep.subr.bf16.mxu0 0
      %1737 = vmatpush1.bf16.msra.mxu0 0
      %1738 = vmatprep.subr.bf16.mxu0 0
      %1739 = vmatpush1.bf16.msra.mxu0 0
      %1740 = vmatprep.subr.bf16.mxu0 0
      %1741 = vmatpush1.bf16.msra.mxu0 0
      %1742 = vmatprep.subr.bf16.mxu0 0
      %1743 = vmatpush1.bf16.msra.mxu0 0
      %1744 = vmatprep.subr.bf16.mxu0 0
      %1745 = vmatpush1.bf16.msra.mxu0 0
      %1746 = vmatprep.subr.bf16.mxu0 0
      %1747 = vmatpush1.bf16.msra.mxu0 0
      %1748 = vmatprep.subr.bf16.mxu0 0
      %1749 = vmatpush1.bf16.msra.mxu0 0
      %1750 = vmatprep.subr.bf16.mxu0 0
      %1751 = vmatpush1.bf16.msra.mxu0 0
      %1752 = vmatprep.subr.bf16.mxu0 0
      %1753 = vmatpush1.bf16.msra.mxu0 0
      %1754 = vmatprep.subr.bf16.mxu0 0
      %1755 = vmatpush1.bf16.msra.mxu0 0
      %1756 = vmatprep.subr.bf16.mxu0 0
      %1757 = vmatpush1.bf16.msra.mxu0 0
      %1758 = vmatprep.subr.bf16.mxu0 0
      %1759 = vmatpush1.bf16.msra.mxu0 0
      %1760 = vmatprep.subr.bf16.mxu0 0
      %1761 = vmatpush1.bf16.msra.mxu0 0
      %1762 = vmatprep.subr.bf16.mxu0 0
      %1763 = vmatpush1.bf16.msra.mxu0 0
      %1764 = vmatprep.mubr.bf16.mxu0 0
      %1765 = vmatmul.mubr.bf16.gmra.mrb[0].mxu0 %v1721
      %v1766 = vpop.f32.mrb[0].mxu0
      %v1767 = vadd.f32 %v1693, %v1766
      %v1768 = vpop.f32.mrb[0].mxu0
      %v1769 = vadd.f32 %v1697, %v1768
      %v1770 = vpop.f32.mrb[0].mxu0
      %v1771 = vadd.f32 %v1693, %v1770
      %v1772 = vpop.f32.mrb[0].mxu0
      %v1773 = vadd.f32 %v1697, %v1772
      %1774 = vmatprep.mubr.bf16.mxu0 0
      %1775 = vmatmul.mubr.bf16.gmra.mrb[0].mxu0 %v1724
      %v1776 = vpop.f32.mrb[0].mxu0
      %v1777 = vadd.f32 %v1693, %v1776
      %v1778 = vpop.f32.mrb[0].mxu0
      %v1779 = vadd.f32 %v1697, %v1778
      %v1780 = vpop.f32.mrb[0].mxu0
      %v1781 = vadd.f32 %v1693, %v1780
      %v1782 = vpop.f32.mrb[0].mxu0
      %v1783 = vadd.f32 %v1697, %v1782
      %1784 = vmatprep.mubr.bf16.mxu0 0
      %1785 = vmatmul.mubr.bf16.gmra.mrb[0].mxu0 %v1727
      %v1786 = vpop.f32.mrb[0].mxu0
      %v1787 = vadd.f32 %v1693, %v1786
      %v1788 = vpop.f32.mrb[0].mxu0
      %v1789 = vadd.f32 %v1697, %v1788
      %v1790 = vpop.f32.mrb[0].mxu0
      %v1791 = vadd.f32 %v1693, %v1790
      %v1792 = vpop.f32.mrb[0].mxu0
      %v1793 = vadd.f32 %v1697, %v1792
      %1794 = vmatprep.mubr.bf16.mxu0 0
      %1795 = vmatmul.mubr.bf16.gmra.mrb[0].mxu0 %v1730
      %v1796 = vpop.f32.mrb[0].mxu0
      %v1797 = vadd.f32 %v1693, %v1796
      %v1798 = vpop.f32.mrb[0].mxu0
      %v1799 = vadd.f32 %v1697, %v1798
      %v1800 = vpop.f32.mrb[0].mxu0
      %v1801 = vpop.f32.mrb[0].mxu0
      %1802 = vdwg.mxu0
      %v1803 = vpack.c.bf16 %v1771, %v1767
      %v1804 = vpack.c.bf16 %v1773, %v1769
      %v1805 = vpack.c.bf16 %v1781, %v1777
      %v1806 = vpack.c.bf16 %v1783, %v1779
      %v1807 = vpack.c.bf16 %v1791, %v1787
      %v1808 = vpack.c.bf16 %v1793, %v1789
      %v1809 = vpack.c.bf16 %v1797, %v1797
      %v1810 = vpack.c.bf16 %v1799, %v1799
      %v1811 = vld [vmem:[%s6] sm:$0xff]
      %v1812 = vld [vmem:[%s6 + $0x8] sm:$0xff]
      %v1813 = vld [vmem:[%s6 + $0x10] sm:$0xff]
      %v1814 = vld [vmem:[%s6 + $0x18] sm:$0xff]
      %v1815 = vld [vmem:[%s6 + $0x20] sm:$0xff]
      %v1816 = vld [vmem:[%s6 + $0x28] sm:$0xff]
      %v1817 = vld [vmem:[%s6 + $0x30] sm:$0xff]
      %v1818 = vld [vmem:[%s6 + $0x38] sm:$0xff]
      %v1819 = vld [vmem:[%s6 + $0x40] sm:$0xff]
      %v1820 = vld [vmem:[%s6 + $0x48] sm:$0xff]
      %v1821 = vld [vmem:[%s6 + $0x50] sm:$0xff]
      %v1822 = vld [vmem:[%s6 + $0x58] sm:$0xff]
      %v1823 = vld [vmem:[%s6 + $0x60] sm:$0x1]
      %v1824 = vld [vmem:[%s6 + $0x68] sm:$0x1]
      %vm1825 = vcmask 523264
      %v1827 = vsel %vm1825, %v1803, 0
      %v1830 = vsel %vm1825, %v1805, 0
      %v1833 = vsel %vm1825, %v1807, 0
      %v1836 = vsel %vm1825, %v1809, 0
      %v1839 = vsel %vm1825, %v1446, 0
      %v1842 = vsel %vm1825, %v1448, 0
      %v1845 = vsel %vm1825, %v1450, 0
      %v1848 = vsel %vm1825, %v1452, 0
      %v1851 = vsel %vm1825, %v1454, 0
      %v1854 = vsel %vm1825, %v1456, 0
      %v1857 = vsel %vm1825, %v1458, 0
      %v1860 = vsel %vm1825, %v1460, 0
      %v1863 = vsel %vm1825, %v1462, 0
      %v1866 = vsel %vm1825, %v1464, 0
      %v1869 = vsel %vm1825, %v1466, 0
      %v1872 = vsel %vm1825, %v1468, 0
      %v1875 = vsel %vm1825, %v1470, 0
      %1877 = vmatprep.subr.bf16.mxu0 0
      %1878 = vmatpush1.bf16.xpose.msra.mxu0 %v1839
      %1879 = vmatprep.subr.bf16.mxu0 0
      %1880 = vmatpush1.bf16.xpose.msra.mxu0 %v1842
      %1881 = vmatprep.subr.bf16.mxu0 0
      %1882 = vmatpush1.bf16.xpose.msra.mxu0 %v1845
      %1883 = vmatprep.subr.bf16.mxu0 0
      %1884 = vmatpush1.bf16.xpose.msra.mxu0 %v1848
      %1885 = vmatprep.subr.bf16.mxu0 0
      %1886 = vmatpush1.bf16.xpose.msra.mxu0 %v1851
      %1887 = vmatprep.subr.bf16.mxu0 0
      %1888 = vmatpush1.bf16.xpose.msra.mxu0 %v1854
      %1889 = vmatprep.subr.bf16.mxu0 0
      %1890 = vmatpush1.bf16.xpose.msra.mxu0 %v1857
      %1891 = vmatprep.subr.bf16.mxu0 0
      %1892 = vmatpush1.bf16.xpose.msra.mxu0 %v1860
      %1893 = vmatprep.subr.bf16.mxu0 0
      %1894 = vmatpush1.bf16.xpose.msra.mxu0 %v1863
      %1895 = vmatprep.subr.bf16.mxu0 0
      %1896 = vmatpush1.bf16.xpose.msra.mxu0 %v1866
      %1897 = vmatprep.subr.bf16.mxu0 0
      %1898 = vmatpush1.bf16.xpose.msra.mxu0 %v1869
      %1899 = vmatprep.subr.bf16.mxu0 0
      %1900 = vmatpush1.bf16.xpose.msra.mxu0 %v1872
      %1901 = vmatprep.subr.bf16.mxu0 0
      %1902 = vmatpush1.bf16.xpose.msra.mxu0 %v1875
      %1903 = vmatprep.subr.bf16.mxu0 0
      %1904 = vmatpush1.bf16.xpose.msra.mxu0 0
      %1905 = vmatprep.subr.bf16.mxu0 0
      %1906 = vmatpush1.bf16.xpose.msra.mxu0 0
      %1907 = vmatprep.subr.bf16.mxu0 0
      %1908 = vmatpush1.bf16.xpose.msra.mxu0 0
      %1909 = vmatprep.mubr.bf16.mxu0 0
      %1910 = vmatmul.mubr.bf16.gmra.mrb[0].mxu0 %v1827
      %v1911 = vpop.f32.mrb[0].mxu0
      %v1912 = vadd.f32 %v1811, %v1911
      %v1913 = vpop.f32.mrb[0].mxu0
      %v1914 = vadd.f32 %v1812, %v1913
      %v1915 = vpop.f32.mrb[0].mxu0
      %v1916 = vadd.f32 %v1813, %v1915
      %v1917 = vpop.f32.mrb[0].mxu0
      %v1918 = vadd.f32 %v1814, %v1917
      %1919 = vmatprep.mubr.bf16.mxu0 0
      %1920 = vmatmul.mubr.bf16.gmra.mrb[0].mxu0 %v1830
      %v1921 = vpop.f32.mrb[0].mxu0
      %v1922 = vadd.f32 %v1815, %v1921
      %v1923 = vpop.f32.mrb[0].mxu0
      %v1924 = vadd.f32 %v1816, %v1923
      %v1925 = vpop.f32.mrb[0].mxu0
      %v1926 = vadd.f32 %v1817, %v1925
      %v1927 = vpop.f32.mrb[0].mxu0
      %v1928 = vadd.f32 %v1818, %v1927
      %1929 = vmatprep.mubr.bf16.mxu0 0
      %1930 = vmatmul.mubr.bf16.gmra.mrb[0].mxu0 %v1833
      %v1931 = vpop.f32.mrb[0].mxu0
      %v1932 = vadd.f32 %v1819, %v1931
      %v1933 = vpop.f32.mrb[0].mxu0
      %v1934 = vadd.f32 %v1820, %v1933
      %v1935 = vpop.f32.mrb[0].mxu0
      %v1936 = vadd.f32 %v1821, %v1935
      %v1937 = vpop.f32.mrb[0].mxu0
      %v1938 = vadd.f32 %v1822, %v1937
      %1939 = vmatprep.mubr.bf16.mxu0 0
      %1940 = vmatmul.mubr.bf16.gmra.mrb[0].mxu0 %v1836
      %v1941 = vpop.f32.mrb[0].mxu0
      %v1942 = vadd.f32 %v1823, %v1941
      %v1943 = vpop.f32.mrb[0].mxu0
      %v1944 = vadd.f32 %v1824, %v1943
      %v1945 = vpop.f32.mrb[0].mxu0
      %v1946 = vpop.f32.mrb[0].mxu0
      %1947 = vdwg.mxu0
      %v1948 = vsel %vm1608, %v1914, -inf
      %v1949 = vmax.f32 %v1912, %v1948
      %1950 = vmax.xlane.f32.xlu0 %v1949
      %v1951 = vpop.xlane.xlu0 %1950
      %v1952 = vsel %vm1608, %v1918, -inf
      %v1953 = vmax.f32 %v1916, %v1952
      %1954 = vmax.xlane.f32.xlu0 %v1953
      %v1955 = vpop.xlane.xlu0 %1954
      %v1956 = vsel %vm1608, %v1924, -inf
      %v1957 = vmax.f32 %v1922, %v1956
      %1958 = vmax.xlane.f32.xlu0 %v1957
      %v1959 = vpop.xlane.xlu0 %1958
      %v1960 = vsel %vm1608, %v1928, -inf
      %v1961 = vmax.f32 %v1926, %v1960
      %1962 = vmax.xlane.f32.xlu0 %v1961
      %v1963 = vpop.xlane.xlu0 %1962
      %v1964 = vsel %vm1608, %v1934, -inf
      %v1965 = vmax.f32 %v1932, %v1964
      %1966 = vmax.xlane.f32.xlu0 %v1965
      %v1967 = vpop.xlane.xlu0 %1966
      %v1968 = vsel %vm1608, %v1938, -inf
      %v1969 = vmax.f32 %v1936, %v1968
      %1970 = vmax.xlane.f32.xlu0 %v1969
      %v1971 = vpop.xlane.xlu0 %1970
      %vm1972 = vcmask 1040384
      %v1973 = vsel %vm1972, %v1942, -inf
      %vm1974 = vcmask 647168
      %v1975 = vsel %vm1974, %v1944, -inf
      %v1976 = vmax.f32 %v1973, %v1975
      %1977 = vmax.xlane.f32.xlu0 %v1976
      %v1978 = vpop.xlane.xlu0 %1977
      %v1979 = vsub.f32 %v1912, %v1951
      %v1980 = vsub.f32 %v1914, %v1951
      %v1981 = vsub.f32 %v1916, %v1955
      %v1982 = vsub.f32 %v1918, %v1955
      %v1983 = vsub.f32 %v1922, %v1959
      %v1984 = vsub.f32 %v1924, %v1959
      %v1985 = vsub.f32 %v1926, %v1963
      %v1986 = vsub.f32 %v1928, %v1963
      %v1987 = vsub.f32 %v1932, %v1967
      %v1988 = vsub.f32 %v1934, %v1967
      %v1989 = vsub.f32 %v1936, %v1971
      %v1990 = vsub.f32 %v1938, %v1971
      %v1991 = vsub.f32 %v1942, %v1978
      %v1992 = vsub.f32 %v1944, %v1978
      %v1993 = vmul.f32 %v1979, 1.442695
      %v1994 = vpow.pop %v1993
      %v1995 = vmul.f32 %v1980, 1.442695
      %v1996 = vpow.pop %v1995
      %v1997 = vmul.f32 %v1981, 1.442695
      %v1998 = vpow.pop %v1997
      %v1999 = vmul.f32 %v1982, 1.442695
      %v2000 = vpow.pop %v1999
      %v2001 = vmul.f32 %v1983, 1.442695
      %v2002 = vpow.pop %v2001
      %v2003 = vmul.f32 %v1984, 1.442695
      %v2004 = vpow.pop %v2003
      %v2005 = vmul.f32 %v1985, 1.442695
      %v2006 = vpow.pop %v2005
      %v2007 = vmul.f32 %v1986, 1.442695
      %v2008 = vpow.pop %v2007
      %v2009 = vmul.f32 %v1987, 1.442695
      %v2010 = vpow.pop %v2009
      %v2011 = vmul.f32 %v1988, 1.442695
      %v2012 = vpow.pop %v2011
      %v2013 = vmul.f32 %v1989, 1.442695
      %v2014 = vpow.pop %v2013
      %v2015 = vmul.f32 %v1990, 1.442695
      %v2016 = vpow.pop %v2015
      %v2017 = vmul.f32 %v1991, 1.442695
      %v2018 = vpow.pop %v2017
      %v2019 = vmul.f32 %v1992, 1.442695
      %v2020 = vpow.pop %v2019
      %v2021 = vsel %vm1608, %v1996, 0.0
      %v2022 = vadd.f32 %v1994, %v2021
      %2023 = vadd.xlane.f32.xlu0 %v2022
      %v2024 = vpop.xlane.xlu0 %2023
      %v2025 = vsel %vm1608, %v2000, 0.0
      %v2026 = vadd.f32 %v1998, %v2025
      %2027 = vadd.xlane.f32.xlu0 %v2026
      %v2028 = vpop.xlane.xlu0 %2027
      %v2029 = vsel %vm1608, %v2004, 0.0
      %v2030 = vadd.f32 %v2002, %v2029
      %2031 = vadd.xlane.f32.xlu0 %v2030
      %v2032 = vpop.xlane.xlu0 %2031
      %v2033 = vsel %vm1608, %v2008, 0.0
      %v2034 = vadd.f32 %v2006, %v2033
      %2035 = vadd.xlane.f32.xlu0 %v2034
      %v2036 = vpop.xlane.xlu0 %2035
      %v2037 = vsel %vm1608, %v2012, 0.0
      %v2038 = vadd.f32 %v2010, %v2037
      %2039 = vadd.xlane.f32.xlu0 %v2038
      %v2040 = vpop.xlane.xlu0 %2039
      %v2041 = vsel %vm1608, %v2016, 0.0
      %v2042 = vadd.f32 %v2014, %v2041
      %2043 = vadd.xlane.f32.xlu0 %v2042
      %v2044 = vpop.xlane.xlu0 %2043
      %v2045 = vsel %vm1972, %v2018, 0.0
      %v2046 = vsel %vm1974, %v2020, 0.0
      %v2047 = vadd.f32 %v2045, %v2046
      %2048 = vadd.xlane.f32.xlu0 %v2047
      %v2049 = vpop.xlane.xlu0 %2048
      %v2050 = vrcp.pop %v2024
      %v2051 = vrcp.pop %v2028
      %v2052 = vrcp.pop %v2032
      %v2053 = vrcp.pop %v2036
      %v2054 = vrcp.pop %v2040
      %v2055 = vrcp.pop %v2044
      %v2056 = vrcp.pop %v2049
      %v2057 = vmul.f32 %v1994, %v2050
      %v2058 = vmul.f32 %v1996, %v2050
      %v2059 = vmul.f32 %v1998, %v2051
      %v2060 = vmul.f32 %v2000, %v2051
      %v2061 = vmul.f32 %v2002, %v2052
      %v2062 = vmul.f32 %v2004, %v2052
      %v2063 = vmul.f32 %v2006, %v2053
      %v2064 = vmul.f32 %v2008, %v2053
      %v2065 = vmul.f32 %v2010, %v2054
      %v2066 = vmul.f32 %v2012, %v2054
      %v2067 = vmul.f32 %v2014, %v2055
      %v2068 = vmul.f32 %v2016, %v2055
      %v2069 = vmul.f32 %v2018, %v2056
      %v2070 = vmul.f32 %v2020, %v2056
      %v2071 = vpack.c.bf16 %v2059, %v2057
      %v2072 = vpack.c.bf16 %v2060, %v2058
      %v2073 = vpack.c.bf16 %v2063, %v2061
      %v2074 = vpack.c.bf16 %v2064, %v2062
      %v2075 = vpack.c.bf16 %v2067, %v2065
      %v2076 = vpack.c.bf16 %v2068, %v2066
      %v2077 = vpack.c.bf16 %v2069, %v2069
      %v2078 = vpack.c.bf16 %v2070, %v2070
      %v2080 = vsel %vm1608, %v2072, 0
      %v2083 = vsel %vm1608, %v2074, 0
      %v2086 = vsel %vm1608, %v2076, 0
      %v2089 = vsel %vm1608, %v2078, 0
      %2091 = vmatprep.subr.bf16.mxu0 0
      %2092 = vmatpush1.bf16.msra.mxu0 %v1446
      %2093 = vmatprep.subr.bf16.mxu0 0
      %2094 = vmatpush1.bf16.msra.mxu0 %v1448
      %2095 = vmatprep.subr.bf16.mxu0 0
      %2096 = vmatpush1.bf16.msra.mxu0 %v1450
      %2097 = vmatprep.subr.bf16.mxu0 0
      %2098 = vmatpush1.bf16.msra.mxu0 %v1452
      %2099 = vmatprep.subr.bf16.mxu0 0
      %2100 = vmatpush1.bf16.msra.mxu0 %v1454
      %2101 = vmatprep.subr.bf16.mxu0 0
      %2102 = vmatpush1.bf16.msra.mxu0 %v1456
      %2103 = vmatprep.subr.bf16.mxu0 0
      %2104 = vmatpush1.bf16.msra.mxu0 %v1458
      %2105 = vmatprep.subr.bf16.mxu0 0
      %2106 = vmatpush1.bf16.msra.mxu0 %v1460
      %2107 = vmatprep.subr.bf16.mxu0 0
      %2108 = vmatpush1.bf16.msra.mxu0 %v1462
      %2109 = vmatprep.subr.bf16.mxu0 0
      %2110 = vmatpush1.bf16.msra.mxu0 %v1464
      %2111 = vmatprep.subr.bf16.mxu0 0
      %2112 = vmatpush1.bf16.msra.mxu0 %v1466
      %2113 = vmatprep.subr.bf16.mxu0 0
      %2114 = vmatpush1.bf16.msra.mxu0 %v1468
      %2115 = vmatprep.subr.bf16.mxu0 0
      %2116 = vmatpush1.bf16.msra.mxu0 %v1470
      %2117 = vmatprep.subr.bf16.mxu0 0
      %2118 = vmatpush1.bf16.msra.mxu0 0
      %2119 = vmatprep.subr.bf16.mxu0 0
      %2120 = vmatpush1.bf16.msra.mxu0 0
      %2121 = vmatprep.subr.bf16.mxu0 0
      %2122 = vmatpush1.bf16.msra.mxu0 0
      %2123 = vmatprep.mubr.bf16.mxu0 %v2080
      %2124 = vmatmul.mubr.bf16.gmra.mrb[0].mxu0 %v2071
      %v2125 = vpop.f32.mrb[0].mxu0
      %v2126 = vadd.f32 0.0, %v2125
      %v2127 = vpop.f32.mrb[0].mxu0
      %v2128 = vpop.f32.mrb[0].mxu0
      %v2129 = vadd.f32 0.0, %v2128
      %v2130 = vpop.f32.mrb[0].mxu0
      %2131 = vmatprep.mubr.bf16.mxu0 %v2083
      %2132 = vmatmul.mubr.bf16.gmra.mrb[0].mxu0 %v2073
      %v2133 = vpop.f32.mrb[0].mxu0
      %v2134 = vadd.f32 0.0, %v2133
      %v2135 = vpop.f32.mrb[0].mxu0
      %v2136 = vpop.f32.mrb[0].mxu0
      %v2137 = vadd.f32 0.0, %v2136
      %v2138 = vpop.f32.mrb[0].mxu0
      %2139 = vmatprep.mubr.bf16.mxu0 %v2086
      %2140 = vmatmul.mubr.bf16.gmra.mrb[0].mxu0 %v2075
      %v2141 = vpop.f32.mrb[0].mxu0
      %v2142 = vadd.f32 0.0, %v2141
      %v2143 = vpop.f32.mrb[0].mxu0
      %v2144 = vpop.f32.mrb[0].mxu0
      %v2145 = vadd.f32 0.0, %v2144
      %v2146 = vpop.f32.mrb[0].mxu0
      %2147 = vmatprep.mubr.bf16.mxu0 %v2089
      %2148 = vmatmul.mubr.bf16.gmra.mrb[0].mxu0 %v2077
      %v2149 = vpop.f32.mrb[0].mxu0
      %v2150 = vadd.f32 0.0, %v2149
      %v2151 = vpop.f32.mrb[0].mxu0
      %v2152 = vpop.f32.mrb[0].mxu0
      %v2153 = vpop.f32.mrb[0].mxu0
      %2154 = vdwg.mxu0
      %v2155 = vadd.f32 %v2126, 3.0
      %v2156 = vadd.f32 %v2129, 3.0
      %v2157 = vadd.f32 %v2134, 3.0
      %v2158 = vadd.f32 %v2137, 3.0
      %v2159 = vadd.f32 %v2142, 3.0
      %v2160 = vadd.f32 %v2145, 3.0
      %v2161 = vadd.f32 %v2150, 3.0
      %v2162 = vmax.f32 %v2155, 0.0
      %v2163 = vmax.f32 %v2156, 0.0
      %v2164 = vmax.f32 %v2157, 0.0
      %v2165 = vmax.f32 %v2158, 0.0
      %v2166 = vmax.f32 %v2159, 0.0
      %v2167 = vmax.f32 %v2160, 0.0
      %v2168 = vmax.f32 %v2161, 0.0
      %v2169 = vmin.f32 %v2162, 6.0
      %v2170 = vmin.f32 %v2163, 6.0
      %v2171 = vmin.f32 %v2164, 6.0
      %v2172 = vmin.f32 %v2165, 6.0
      %v2173 = vmin.f32 %v2166, 6.0
      %v2174 = vmin.f32 %v2167, 6.0
      %v2175 = vmin.f32 %v2168, 6.0
      %v2176 = vmul.f32 %v2126, %v2169
      %v2177 = vmul.f32 %v2129, %v2170
      %v2178 = vmul.f32 %v2134, %v2171
      %v2179 = vmul.f32 %v2137, %v2172
      %v2180 = vmul.f32 %v2142, %v2173
      %v2181 = vmul.f32 %v2145, %v2174
      %v2182 = vmul.f32 %v2150, %v2175
      %v2183 = vmul.f32 %v2176, 0.16666667
      %v2184 = vmul.f32 %v2177, 0.16666667
      %v2185 = vmul.f32 %v2178, 0.16666667
      %v2186 = vmul.f32 %v2179, 0.16666667
      %v2187 = vmul.f32 %v2180, 0.16666667
      %v2188 = vmul.f32 %v2181, 0.16666667
      %v2189 = vmul.f32 %v2182, 0.16666667
      %v2190 = vpack.c.bf16 %v2184, %v2183
      %v2191 = vpack.c.bf16 %v2186, %v2185
      %v2192 = vpack.c.bf16 %v2188, %v2187
      %v2193 = vpack.c.bf16 %v2189, %v2189
      %v2194 = vld [vmem:[%s7] sm:$0xf]
      %v2195 = vld [vmem:[%s7 + $0x4] sm:$0xf]
      %v2196 = vld [vmem:[%s7 + $0x8] sm:$0xf]
      %v2197 = vld [vmem:[%s7 + $0xc] sm:$0xf]
      %v2198 = vld [vmem:[%s7 + $0x10] sm:$0xf]
      %v2199 = vld [vmem:[%s7 + $0x14] sm:$0xf]
      %v2200 = vld [vmem:[%s7 + $0x18] sm:$0xf]
      %v2201 = vld [vmem:[%s7 + $0x1c] sm:$0xf]
      %s2202 = scalar_lea.vmem %s6, 112
      %v2203 = vld [vmem:[%s2202] sm:$0xff]
      %v2204 = vld [vmem:[%s2202 + $0x8] sm:$0xff]
      %v2205 = vld [vmem:[%s2202 + $0x10] sm:$0xff]
      %v2206 = vld [vmem:[%s2202 + $0x18] sm:$0xff]
      %v2207 = vld [vmem:[%s2202 + $0x20] sm:$0xff]
      %v2208 = vld [vmem:[%s2202 + $0x28] sm:$0xff]
      %v2209 = vld [vmem:[%s2202 + $0x30] sm:$0xff]
      %v2210 = vld [vmem:[%s2202 + $0x38] sm:$0xff]
      %v2211 = vld [vmem:[%s2202 + $0x40] sm:$0xff]
      %v2212 = vld [vmem:[%s2202 + $0x48] sm:$0xff]
      %v2213 = vld [vmem:[%s2202 + $0x50] sm:$0xff]
      %v2214 = vld [vmem:[%s2202 + $0x58] sm:$0xff]
      %v2215 = vld [vmem:[%s2202 + $0x60] sm:$0x1]
      %v2216 = vld [vmem:[%s2202 + $0x68] sm:$0x1]
      %2221 = vrot.lane.b32.xlu0 %v1803, 64
      %v2222 = vpop.permute.xlu0 %2221
      %2223 = vrot.lane.b32.xlu0 %v1805, 64
      %v2224 = vpop.permute.xlu0 %2223
      %2225 = vrot.lane.b32.xlu0 %v1807, 64
      %v2226 = vpop.permute.xlu0 %2225
      %2227 = vrot.lane.b32.xlu0 %v1809, 64
      %v2228 = vpop.permute.xlu0 %2227
      %2242 = vrot.lane.b32.xlu0 %v1446, 64
      %v2243 = vpop.permute.xlu0 %2242
      %2244 = vrot.lane.b32.xlu0 %v1448, 64
      %v2245 = vpop.permute.xlu0 %2244
      %2246 = vrot.lane.b32.xlu0 %v1450, 64
      %v2247 = vpop.permute.xlu0 %2246
      %2248 = vrot.lane.b32.xlu0 %v1452, 64
      %v2249 = vpop.permute.xlu0 %2248
      %2250 = vrot.lane.b32.xlu0 %v1454, 64
      %v2251 = vpop.permute.xlu0 %2250
      %2252 = vrot.lane.b32.xlu0 %v1456, 64
      %v2253 = vpop.permute.xlu0 %2252
      %2254 = vrot.lane.b32.xlu0 %v1458, 64
      %v2255 = vpop.permute.xlu0 %2254
      %2256 = vrot.lane.b32.xlu0 %v1460, 64
      %v2257 = vpop.permute.xlu0 %2256
      %2258 = vrot.lane.b32.xlu0 %v1462, 64
      %v2259 = vpop.permute.xlu0 %2258
      %2260 = vrot.lane.b32.xlu0 %v1464, 64
      %v2261 = vpop.permute.xlu0 %2260
      %2262 = vrot.lane.b32.xlu0 %v1466, 64
      %v2263 = vpop.permute.xlu0 %2262
      %2264 = vrot.lane.b32.xlu0 %v1468, 64
      %v2265 = vpop.permute.xlu0 %2264
      %2266 = vrot.lane.b32.xlu0 %v1470, 64
      %v2267 = vpop.permute.xlu0 %2266
      %v2269 = vsel %vm1825, %v2222, 0
      %v2272 = vsel %vm1825, %v2224, 0
      %v2275 = vsel %vm1825, %v2226, 0
      %v2278 = vsel %vm1825, %v2228, 0
      %v2281 = vsel %vm1825, %v2243, 0
      %v2284 = vsel %vm1825, %v2245, 0
      %v2287 = vsel %vm1825, %v2247, 0
      %v2290 = vsel %vm1825, %v2249, 0
      %v2293 = vsel %vm1825, %v2251, 0
      %v2296 = vsel %vm1825, %v2253, 0
      %v2299 = vsel %vm1825, %v2255, 0
      %v2302 = vsel %vm1825, %v2257, 0
      %v2305 = vsel %vm1825, %v2259, 0
      %v2308 = vsel %vm1825, %v2261, 0
      %v2311 = vsel %vm1825, %v2263, 0
      %v2314 = vsel %vm1825, %v2265, 0
      %v2317 = vsel %vm1825, %v2267, 0
      %2319 = vmatprep.subr.bf16.mxu0 0
      %2320 = vmatpush1.bf16.xpose.msra.mxu0 %v2281
      %2321 = vmatprep.subr.bf16.mxu0 0
      %2322 = vmatpush1.bf16.xpose.msra.mxu0 %v2284
      %2323 = vmatprep.subr.bf16.mxu0 0
      %2324 = vmatpush1.bf16.xpose.msra.mxu0 %v2287
      %2325 = vmatprep.subr.bf16.mxu0 0
      %2326 = vmatpush1.bf16.xpose.msra.mxu0 %v2290
      %2327 = vmatprep.subr.bf16.mxu0 0
      %2328 = vmatpush1.bf16.xpose.msra.mxu0 %v2293
      %2329 = vmatprep.subr.bf16.mxu0 0
      %2330 = vmatpush1.bf16.xpose.msra.mxu0 %v2296
      %2331 = vmatprep.subr.bf16.mxu0 0
      %2332 = vmatpush1.bf16.xpose.msra.mxu0 %v2299
      %2333 = vmatprep.subr.bf16.mxu0 0
      %2334 = vmatpush1.bf16.xpose.msra.mxu0 %v2302
      %2335 = vmatprep.subr.bf16.mxu0 0
      %2336 = vmatpush1.bf16.xpose.msra.mxu0 %v2305
      %2337 = vmatprep.subr.bf16.mxu0 0
      %2338 = vmatpush1.bf16.xpose.msra.mxu0 %v2308
      %2339 = vmatprep.subr.bf16.mxu0 0
      %2340 = vmatpush1.bf16.xpose.msra.mxu0 %v2311
      %2341 = vmatprep.subr.bf16.mxu0 0
      %2342 = vmatpush1.bf16.xpose.msra.mxu0 %v2314
      %2343 = vmatprep.subr.bf16.mxu0 0
      %2344 = vmatpush1.bf16.xpose.msra.mxu0 %v2317
      %2345 = vmatprep.subr.bf16.mxu0 0
      %2346 = vmatpush1.bf16.xpose.msra.mxu0 0
      %2347 = vmatprep.subr.bf16.mxu0 0
      %2348 = vmatpush1.bf16.xpose.msra.mxu0 0
      %2349 = vmatprep.subr.bf16.mxu0 0
      %2350 = vmatpush1.bf16.xpose.msra.mxu0 0
      %2351 = vmatprep.mubr.bf16.mxu0 0
      %2352 = vmatmul.mubr.bf16.gmra.mrb[0].mxu0 %v2269
      %v2353 = vpop.f32.mrb[0].mxu0
      %v2354 = vadd.f32 %v2203, %v2353
      %v2355 = vpop.f32.mrb[0].mxu0
      %v2356 = vadd.f32 %v2204, %v2355
      %v2357 = vpop.f32.mrb[0].mxu0
      %v2358 = vadd.f32 %v2205, %v2357
      %v2359 = vpop.f32.mrb[0].mxu0
      %v2360 = vadd.f32 %v2206, %v2359
      %2361 = vmatprep.mubr.bf16.mxu0 0
      %2362 = vmatmul.mubr.bf16.gmra.mrb[0].mxu0 %v2272
      %v2363 = vpop.f32.mrb[0].mxu0
      %v2364 = vadd.f32 %v2207, %v2363
      %v2365 = vpop.f32.mrb[0].mxu0
      %v2366 = vadd.f32 %v2208, %v2365
      %v2367 = vpop.f32.mrb[0].mxu0
      %v2368 = vadd.f32 %v2209, %v2367
      %v2369 = vpop.f32.mrb[0].mxu0
      %v2370 = vadd.f32 %v2210, %v2369
      %2371 = vmatprep.mubr.bf16.mxu0 0
      %2372 = vmatmul.mubr.bf16.gmra.mrb[0].mxu0 %v2275
      %v2373 = vpop.f32.mrb[0].mxu0
      %v2374 = vadd.f32 %v2211, %v2373
      %v2375 = vpop.f32.mrb[0].mxu0
      %v2376 = vadd.f32 %v2212, %v2375
      %v2377 = vpop.f32.mrb[0].mxu0
      %v2378 = vadd.f32 %v2213, %v2377
      %v2379 = vpop.f32.mrb[0].mxu0
      %v2380 = vadd.f32 %v2214, %v2379
      %2381 = vmatprep.mubr.bf16.mxu0 0
      %2382 = vmatmul.mubr.bf16.gmra.mrb[0].mxu0 %v2278
      %v2383 = vpop.f32.mrb[0].mxu0
      %v2384 = vadd.f32 %v2215, %v2383
      %v2385 = vpop.f32.mrb[0].mxu0
      %v2386 = vadd.f32 %v2216, %v2385
      %v2387 = vpop.f32.mrb[0].mxu0
      %v2388 = vpop.f32.mrb[0].mxu0
      %2389 = vdwg.mxu0
      %v2390 = vsel %vm1608, %v2356, -inf
      %v2391 = vmax.f32 %v2354, %v2390
      %2392 = vmax.xlane.f32.xlu0 %v2391
      %v2393 = vpop.xlane.xlu0 %2392
      %v2394 = vsel %vm1608, %v2360, -inf
      %v2395 = vmax.f32 %v2358, %v2394
      %2396 = vmax.xlane.f32.xlu0 %v2395
      %v2397 = vpop.xlane.xlu0 %2396
      %v2398 = vsel %vm1608, %v2366, -inf
      %v2399 = vmax.f32 %v2364, %v2398
      %2400 = vmax.xlane.f32.xlu0 %v2399
      %v2401 = vpop.xlane.xlu0 %2400
      %v2402 = vsel %vm1608, %v2370, -inf
      %v2403 = vmax.f32 %v2368, %v2402
      %2404 = vmax.xlane.f32.xlu0 %v2403
      %v2405 = vpop.xlane.xlu0 %2404
      %v2406 = vsel %vm1608, %v2376, -inf
      %v2407 = vmax.f32 %v2374, %v2406
      %2408 = vmax.xlane.f32.xlu0 %v2407
      %v2409 = vpop.xlane.xlu0 %2408
      %v2410 = vsel %vm1608, %v2380, -inf
      %v2411 = vmax.f32 %v2378, %v2410
      %2412 = vmax.xlane.f32.xlu0 %v2411
      %v2413 = vpop.xlane.xlu0 %2412
      %v2414 = vsel %vm1972, %v2384, -inf
      %v2415 = vsel %vm1974, %v2386, -inf
      %v2416 = vmax.f32 %v2414, %v2415
      %2417 = vmax.xlane.f32.xlu0 %v2416
      %v2418 = vpop.xlane.xlu0 %2417
      %v2419 = vsub.f32 %v2354, %v2393
      %v2420 = vsub.f32 %v2356, %v2393
      %v2421 = vsub.f32 %v2358, %v2397
      %v2422 = vsub.f32 %v2360, %v2397
      %v2423 = vsub.f32 %v2364, %v2401
      %v2424 = vsub.f32 %v2366, %v2401
      %v2425 = vsub.f32 %v2368, %v2405
      %v2426 = vsub.f32 %v2370, %v2405
      %v2427 = vsub.f32 %v2374, %v2409
      %v2428 = vsub.f32 %v2376, %v2409
      %v2429 = vsub.f32 %v2378, %v2413
      %v2430 = vsub.f32 %v2380, %v2413
      %v2431 = vsub.f32 %v2384, %v2418
      %v2432 = vsub.f32 %v2386, %v2418
      %v2433 = vmul.f32 %v2419, 1.442695
      %v2434 = vpow.pop %v2433
      %v2435 = vmul.f32 %v2420, 1.442695
      %v2436 = vpow.pop %v2435
      %v2437 = vmul.f32 %v2421, 1.442695
      %v2438 = vpow.pop %v2437
      %v2439 = vmul.f32 %v2422, 1.442695
      %v2440 = vpow.pop %v2439
      %v2441 = vmul.f32 %v2423, 1.442695
      %v2442 = vpow.pop %v2441
      %v2443 = vmul.f32 %v2424, 1.442695
      %v2444 = vpow.pop %v2443
      %v2445 = vmul.f32 %v2425, 1.442695
      %v2446 = vpow.pop %v2445
      %v2447 = vmul.f32 %v2426, 1.442695
      %v2448 = vpow.pop %v2447
      %v2449 = vmul.f32 %v2427, 1.442695
      %v2450 = vpow.pop %v2449
      %v2451 = vmul.f32 %v2428, 1.442695
      %v2452 = vpow.pop %v2451
      %v2453 = vmul.f32 %v2429, 1.442695
      %v2454 = vpow.pop %v2453
      %v2455 = vmul.f32 %v2430, 1.442695
      %v2456 = vpow.pop %v2455
      %v2457 = vmul.f32 %v2431, 1.442695
      %v2458 = vpow.pop %v2457
      %v2459 = vmul.f32 %v2432, 1.442695
      %v2460 = vpow.pop %v2459
      %v2461 = vsel %vm1608, %v2436, 0.0
      %v2462 = vadd.f32 %v2434, %v2461
      %2463 = vadd.xlane.f32.xlu0 %v2462
      %v2464 = vpop.xlane.xlu0 %2463
      %v2465 = vsel %vm1608, %v2440, 0.0
      %v2466 = vadd.f32 %v2438, %v2465
      %2467 = vadd.xlane.f32.xlu0 %v2466
      %v2468 = vpop.xlane.xlu0 %2467
      %v2469 = vsel %vm1608, %v2444, 0.0
      %v2470 = vadd.f32 %v2442, %v2469
      %2471 = vadd.xlane.f32.xlu0 %v2470
      %v2472 = vpop.xlane.xlu0 %2471
      %v2473 = vsel %vm1608, %v2448, 0.0
      %v2474 = vadd.f32 %v2446, %v2473
      %2475 = vadd.xlane.f32.xlu0 %v2474
      %v2476 = vpop.xlane.xlu0 %2475
      %v2477 = vsel %vm1608, %v2452, 0.0
      %v2478 = vadd.f32 %v2450, %v2477
      %2479 = vadd.xlane.f32.xlu0 %v2478
      %v2480 = vpop.xlane.xlu0 %2479
      %v2481 = vsel %vm1608, %v2456, 0.0
      %v2482 = vadd.f32 %v2454, %v2481
      %2483 = vadd.xlane.f32.xlu0 %v2482
      %v2484 = vpop.xlane.xlu0 %2483
      %v2485 = vsel %vm1972, %v2458, 0.0
      %v2486 = vsel %vm1974, %v2460, 0.0
      %v2487 = vadd.f32 %v2485, %v2486
      %2488 = vadd.xlane.f32.xlu0 %v2487
      %v2489 = vpop.xlane.xlu0 %2488
      %v2490 = vrcp.pop %v2464
      %v2491 = vrcp.pop %v2468
      %v2492 = vrcp.pop %v2472
      %v2493 = vrcp.pop %v2476
      %v2494 = vrcp.pop %v2480
      %v2495 = vrcp.pop %v2484
      %v2496 = vrcp.pop %v2489
      %v2497 = vmul.f32 %v2434, %v2490
      %v2498 = vmul.f32 %v2436, %v2490
      %v2499 = vmul.f32 %v2438, %v2491
      %v2500 = vmul.f32 %v2440, %v2491
      %v2501 = vmul.f32 %v2442, %v2492
      %v2502 = vmul.f32 %v2444, %v2492
      %v2503 = vmul.f32 %v2446, %v2493
      %v2504 = vmul.f32 %v2448, %v2493
      %v2505 = vmul.f32 %v2450, %v2494
      %v2506 = vmul.f32 %v2452, %v2494
      %v2507 = vmul.f32 %v2454, %v2495
      %v2508 = vmul.f32 %v2456, %v2495
      %v2509 = vmul.f32 %v2458, %v2496
      %v2510 = vmul.f32 %v2460, %v2496
      %v2511 = vpack.c.bf16 %v2499, %v2497
      %v2512 = vpack.c.bf16 %v2500, %v2498
      %v2513 = vpack.c.bf16 %v2503, %v2501
      %v2514 = vpack.c.bf16 %v2504, %v2502
      %v2515 = vpack.c.bf16 %v2507, %v2505
      %v2516 = vpack.c.bf16 %v2508, %v2506
      %v2517 = vpack.c.bf16 %v2509, %v2509
      %v2518 = vpack.c.bf16 %v2510, %v2510
      %v2533 = vsel %vm1608, %v2512, 0
      %v2536 = vsel %vm1608, %v2514, 0
      %v2539 = vsel %vm1608, %v2516, 0
      %v2542 = vsel %vm1608, %v2518, 0
      %2544 = vmatprep.subr.bf16.mxu0 0
      %2545 = vmatpush1.bf16.msra.mxu0 %v2243
      %2546 = vmatprep.subr.bf16.mxu0 0
      %2547 = vmatpush1.bf16.msra.mxu0 %v2245
      %2548 = vmatprep.subr.bf16.mxu0 0
      %2549 = vmatpush1.bf16.msra.mxu0 %v2247
      %2550 = vmatprep.subr.bf16.mxu0 0
      %2551 = vmatpush1.bf16.msra.mxu0 %v2249
      %2552 = vmatprep.subr.bf16.mxu0 0
      %2553 = vmatpush1.bf16.msra.mxu0 %v2251
      %2554 = vmatprep.subr.bf16.mxu0 0
      %2555 = vmatpush1.bf16.msra.mxu0 %v2253
      %2556 = vmatprep.subr.bf16.mxu0 0
      %2557 = vmatpush1.bf16.msra.mxu0 %v2255
      %2558 = vmatprep.subr.bf16.mxu0 0
      %2559 = vmatpush1.bf16.msra.mxu0 %v2257
      %2560 = vmatprep.subr.bf16.mxu0 0
      %2561 = vmatpush1.bf16.msra.mxu0 %v2259
      %2562 = vmatprep.subr.bf16.mxu0 0
      %2563 = vmatpush1.bf16.msra.mxu0 %v2261
      %2564 = vmatprep.subr.bf16.mxu0 0
      %2565 = vmatpush1.bf16.msra.mxu0 %v2263
      %2566 = vmatprep.subr.bf16.mxu0 0
      %2567 = vmatpush1.bf16.msra.mxu0 %v2265
      %2568 = vmatprep.subr.bf16.mxu0 0
      %2569 = vmatpush1.bf16.msra.mxu0 %v2267
      %2570 = vmatprep.subr.bf16.mxu0 0
      %2571 = vmatpush1.bf16.msra.mxu0 0
      %2572 = vmatprep.subr.bf16.mxu0 0
      %2573 = vmatpush1.bf16.msra.mxu0 0
      %2574 = vmatprep.subr.bf16.mxu0 0
      %2575 = vmatpush1.bf16.msra.mxu0 0
      %2576 = vmatprep.mubr.bf16.mxu0 %v2533
      %2577 = vmatmul.mubr.bf16.gmra.mrb[0].mxu0 %v2511
      %v2578 = vpop.f32.mrb[0].mxu0
      %v2579 = vadd.f32 0.0, %v2578
      %v2580 = vpop.f32.mrb[0].mxu0
      %v2581 = vpop.f32.mrb[0].mxu0
      %v2582 = vadd.f32 0.0, %v2581
      %v2583 = vpop.f32.mrb[0].mxu0
      %2584 = vmatprep.mubr.bf16.mxu0 %v2536
      %2585 = vmatmul.mubr.bf16.gmra.mrb[0].mxu0 %v2513
      %v2586 = vpop.f32.mrb[0].mxu0
      %v2587 = vadd.f32 0.0, %v2586
      %v2588 = vpop.f32.mrb[0].mxu0
      %v2589 = vpop.f32.mrb[0].mxu0
      %v2590 = vadd.f32 0.0, %v2589
      %v2591 = vpop.f32.mrb[0].mxu0
      %2592 = vmatprep.mubr.bf16.mxu0 %v2539
      %2593 = vmatmul.mubr.bf16.gmra.mrb[0].mxu0 %v2515
      %v2594 = vpop.f32.mrb[0].mxu0
      %v2595 = vadd.f32 0.0, %v2594
      %v2596 = vpop.f32.mrb[0].mxu0
      %v2597 = vpop.f32.mrb[0].mxu0
      %v2598 = vadd.f32 0.0, %v2597
      %v2599 = vpop.f32.mrb[0].mxu0
      %2600 = vmatprep.mubr.bf16.mxu0 %v2542
      %2601 = vmatmul.mubr.bf16.gmra.mrb[0].mxu0 %v2517
      %v2602 = vpop.f32.mrb[0].mxu0
      %v2603 = vadd.f32 0.0, %v2602
      %v2604 = vpop.f32.mrb[0].mxu0
      %v2605 = vpop.f32.mrb[0].mxu0
      %v2606 = vpop.f32.mrb[0].mxu0
      %2607 = vdwg.mxu0
      %v2608 = vadd.f32 %v2579, 3.0
      %v2609 = vadd.f32 %v2582, 3.0
      %v2610 = vadd.f32 %v2587, 3.0
      %v2611 = vadd.f32 %v2590, 3.0
      %v2612 = vadd.f32 %v2595, 3.0
      %v2613 = vadd.f32 %v2598, 3.0
      %v2614 = vadd.f32 %v2603, 3.0
      %v2615 = vmax.f32 %v2608, 0.0
      %v2616 = vmax.f32 %v2609, 0.0
      %v2617 = vmax.f32 %v2610, 0.0
      %v2618 = vmax.f32 %v2611, 0.0
      %v2619 = vmax.f32 %v2612, 0.0
      %v2620 = vmax.f32 %v2613, 0.0
      %v2621 = vmax.f32 %v2614, 0.0
      %v2622 = vmin.f32 %v2615, 6.0
      %v2623 = vmin.f32 %v2616, 6.0
      %v2624 = vmin.f32 %v2617, 6.0
      %v2625 = vmin.f32 %v2618, 6.0
      %v2626 = vmin.f32 %v2619, 6.0
      %v2627 = vmin.f32 %v2620, 6.0
      %v2628 = vmin.f32 %v2621, 6.0
      %v2629 = vmul.f32 %v2579, %v2622
      %v2630 = vmul.f32 %v2582, %v2623
      %v2631 = vmul.f32 %v2587, %v2624
      %v2632 = vmul.f32 %v2590, %v2625
      %v2633 = vmul.f32 %v2595, %v2626
      %v2634 = vmul.f32 %v2598, %v2627
      %v2635 = vmul.f32 %v2603, %v2628
      %v2636 = vmul.f32 %v2629, 0.16666667
      %v2637 = vmul.f32 %v2630, 0.16666667
      %v2638 = vmul.f32 %v2631, 0.16666667
      %v2639 = vmul.f32 %v2632, 0.16666667
      %v2640 = vmul.f32 %v2633, 0.16666667
      %v2641 = vmul.f32 %v2634, 0.16666667
      %v2642 = vmul.f32 %v2635, 0.16666667
      %v2643 = vpack.c.bf16 %v2637, %v2636
      %v2644 = vpack.c.bf16 %v2639, %v2638
      %v2645 = vpack.c.bf16 %v2641, %v2640
      %v2646 = vpack.c.bf16 %v2642, %v2642
      %s2647 = scalar_lea.vmem %s7, 32
      %v2648 = vld [vmem:[%s2647] sm:$0xf]
      %v2649 = vld [vmem:[%s2647 + $0x4] sm:$0xf]
      %v2650 = vld [vmem:[%s2647 + $0x8] sm:$0xf]
      %v2651 = vld [vmem:[%s2647 + $0xc] sm:$0xf]
      %v2652 = vld [vmem:[%s2647 + $0x10] sm:$0xf]
      %v2653 = vld [vmem:[%s2647 + $0x14] sm:$0xf]
      %v2654 = vld [vmem:[%s2647 + $0x18] sm:$0xf]
      %v2655 = vld [vmem:[%s2647 + $0x1c] sm:$0xf]
      %v2664 = vunpack.c.l.b16 %v2648
      %v2665 = vunpack.c.l.b16 %v2649
      %v2666 = vunpack.c.l.b16 %v2650
      %v2667 = vunpack.c.l.b16 %v2651
      %v2668 = vunpack.c.l.b16 %v2652
      %v2669 = vunpack.c.l.b16 %v2653
      %v2670 = vunpack.c.l.b16 %v2654
      %v2671 = vunpack.c.l.b16 %v2655
      %v2672 = vpack.c.b16 %v2665, %v2664
      %v2673 = vpack.c.b16 %v2667, %v2666
      %v2674 = vpack.c.b16 %v2669, %v2668
      %v2675 = vpack.c.b16 %v2671, %v2670
      %v2681 = vsel %vm1825, %v2643, 0
      %v2684 = vsel %vm1825, %v2644, 0
      %v2687 = vsel %vm1825, %v2645, 0
      %v2690 = vsel %vm1825, %v2646, 0
      %2692 = vmatprep.subr.bf16.mxu0 0
      %2693 = vmatpush1.bf16.msra.mxu0 %v2672
      %2694 = vmatprep.subr.bf16.mxu0 0
      %2695 = vmatpush1.bf16.msra.mxu0 %v2673
      %2696 = vmatprep.subr.bf16.mxu0 0
      %2697 = vmatpush1.bf16.msra.mxu0 %v2674
      %2698 = vmatprep.subr.bf16.mxu0 0
      %2699 = vmatpush1.bf16.msra.mxu0 %v2675
      %2700 = vmatprep.subr.bf16.mxu0 0
      %2701 = vmatpush1.bf16.msra.mxu0 0
      %2702 = vmatprep.subr.bf16.mxu0 0
      %2703 = vmatpush1.bf16.msra.mxu0 0
      %2704 = vmatprep.subr.bf16.mxu0 0
      %2705 = vmatpush1.bf16.msra.mxu0 0
      %2706 = vmatprep.subr.bf16.mxu0 0
      %2707 = vmatpush1.bf16.msra.mxu0 0
      %2708 = vmatprep.subr.bf16.mxu0 0
      %2709 = vmatpush1.bf16.msra.mxu0 0
      %2710 = vmatprep.subr.bf16.mxu0 0
      %2711 = vmatpush1.bf16.msra.mxu0 0
      %2712 = vmatprep.subr.bf16.mxu0 0
      %2713 = vmatpush1.bf16.msra.mxu0 0
      %2714 = vmatprep.subr.bf16.mxu0 0
      %2715 = vmatpush1.bf16.msra.mxu0 0
      %2716 = vmatprep.subr.bf16.mxu0 0
      %2717 = vmatpush1.bf16.msra.mxu0 0
      %2718 = vmatprep.subr.bf16.mxu0 0
      %2719 = vmatpush1.bf16.msra.mxu0 0
      %2720 = vmatprep.subr.bf16.mxu0 0
      %2721 = vmatpush1.bf16.msra.mxu0 0
      %2722 = vmatprep.subr.bf16.mxu0 0
      %2723 = vmatpush1.bf16.msra.mxu0 0
      %2724 = vmatprep.mubr.bf16.mxu0 0
      %2725 = vmatmul.mubr.bf16.gmra.mrb[0].mxu0 %v2681
      %v2726 = vpop.f32.mrb[0].mxu0
      %v2727 = vadd.f32 0.0, %v2726
      %v2728 = vpop.f32.mrb[0].mxu0
      %v2729 = vpop.f32.mrb[0].mxu0
      %v2730 = vadd.f32 0.0, %v2729
      %v2731 = vpop.f32.mrb[0].mxu0
      %2732 = vmatprep.mubr.bf16.mxu0 0
      %2733 = vmatmul.mubr.bf16.gmra.mrb[0].mxu0 %v2684
      %v2734 = vpop.f32.mrb[0].mxu0
      %v2735 = vadd.f32 0.0, %v2734
      %v2736 = vpop.f32.mrb[0].mxu0
      %v2737 = vpop.f32.mrb[0].mxu0
      %v2738 = vadd.f32 0.0, %v2737
      %v2739 = vpop.f32.mrb[0].mxu0
      %2740 = vmatprep.mubr.bf16.mxu0 0
      %2741 = vmatmul.mubr.bf16.gmra.mrb[0].mxu0 %v2687
      %v2742 = vpop.f32.mrb[0].mxu0
      %v2743 = vadd.f32 0.0, %v2742
      %v2744 = vpop.f32.mrb[0].mxu0
      %v2745 = vpop.f32.mrb[0].mxu0
      %v2746 = vadd.f32 0.0, %v2745
      %v2747 = vpop.f32.mrb[0].mxu0
      %2748 = vmatprep.mubr.bf16.mxu0 0
      %2749 = vmatmul.mubr.bf16.gmra.mrb[0].mxu0 %v2690
      %v2750 = vpop.f32.mrb[0].mxu0
      %v2751 = vadd.f32 0.0, %v2750
      %v2752 = vpop.f32.mrb[0].mxu0
      %v2753 = vpop.f32.mrb[0].mxu0
      %v2754 = vpop.f32.mrb[0].mxu0
      %2755 = vdwg.mxu0
      %v2764 = vunpack.c.l.b16 %v2194
      %v2765 = vunpack.c.l.b16 %v2195
      %v2766 = vunpack.c.l.b16 %v2196
      %v2767 = vunpack.c.l.b16 %v2197
      %v2768 = vunpack.c.l.b16 %v2198
      %v2769 = vunpack.c.l.b16 %v2199
      %v2770 = vunpack.c.l.b16 %v2200
      %v2771 = vunpack.c.l.b16 %v2201
      %v2772 = vpack.c.b16 %v2765, %v2764
      %v2773 = vpack.c.b16 %v2767, %v2766
      %v2774 = vpack.c.b16 %v2769, %v2768
      %v2775 = vpack.c.b16 %v2771, %v2770
      %v2781 = vsel %vm1825, %v2190, 0
      %v2784 = vsel %vm1825, %v2191, 0
      %v2787 = vsel %vm1825, %v2192, 0
      %v2790 = vsel %vm1825, %v2193, 0
      %2792 = vmatprep.subr.bf16.mxu0 0
      %2793 = vmatpush1.bf16.msra.mxu0 %v2772
      %2794 = vmatprep.subr.bf16.mxu0 0
      %2795 = vmatpush1.bf16.msra.mxu0 %v2773
      %2796 = vmatprep.subr.bf16.mxu0 0
      %2797 = vmatpush1.bf16.msra.mxu0 %v2774
      %2798 = vmatprep.subr.bf16.mxu0 0
      %2799 = vmatpush1.bf16.msra.mxu0 %v2775
      %2800 = vmatprep.subr.bf16.mxu0 0
      %2801 = vmatpush1.bf16.msra.mxu0 0
      %2802 = vmatprep.subr.bf16.mxu0 0
      %2803 = vmatpush1.bf16.msra.mxu0 0
      %2804 = vmatprep.subr.bf16.mxu0 0
      %2805 = vmatpush1.bf16.msra.mxu0 0
      %2806 = vmatprep.subr.bf16.mxu0 0
      %2807 = vmatpush1.bf16.msra.mxu0 0
      %2808 = vmatprep.subr.bf16.mxu0 0
      %2809 = vmatpush1.bf16.msra.mxu0 0
      %2810 = vmatprep.subr.bf16.mxu0 0
      %2811 = vmatpush1.bf16.msra.mxu0 0
      %2812 = vmatprep.subr.bf16.mxu0 0
      %2813 = vmatpush1.bf16.msra.mxu0 0
      %2814 = vmatprep.subr.bf16.mxu0 0
      %2815 = vmatpush1.bf16.msra.mxu0 0
      %2816 = vmatprep.subr.bf16.mxu0 0
      %2817 = vmatpush1.bf16.msra.mxu0 0
      %2818 = vmatprep.subr.bf16.mxu0 0
      %2819 = vmatpush1.bf16.msra.mxu0 0
      %2820 = vmatprep.subr.bf16.mxu0 0
      %2821 = vmatpush1.bf16.msra.mxu0 0
      %2822 = vmatprep.subr.bf16.mxu0 0
      %2823 = vmatpush1.bf16.msra.mxu0 0
      %2824 = vmatprep.mubr.bf16.mxu0 0
      %2825 = vmatmul.mubr.bf16.gmra.mrb[0].mxu0 %v2781
      %v2826 = vpop.f32.mrb[0].mxu0
      %v2827 = vadd.f32 %v2727, %v2826
      %v2828 = vpop.f32.mrb[0].mxu0
      %v2829 = vpop.f32.mrb[0].mxu0
      %v2830 = vadd.f32 %v2730, %v2829
      %v2831 = vpop.f32.mrb[0].mxu0
      %2832 = vmatprep.mubr.bf16.mxu0 0
      %2833 = vmatmul.mubr.bf16.gmra.mrb[0].mxu0 %v2784
      %v2834 = vpop.f32.mrb[0].mxu0
      %v2835 = vadd.f32 %v2735, %v2834
      %v2836 = vpop.f32.mrb[0].mxu0
      %v2837 = vpop.f32.mrb[0].mxu0
      %v2838 = vadd.f32 %v2738, %v2837
      %v2839 = vpop.f32.mrb[0].mxu0
      %2840 = vmatprep.mubr.bf16.mxu0 0
      %2841 = vmatmul.mubr.bf16.gmra.mrb[0].mxu0 %v2787
      %v2842 = vpop.f32.mrb[0].mxu0
      %v2843 = vadd.f32 %v2743, %v2842
      %v2844 = vpop.f32.mrb[0].mxu0
      %v2845 = vpop.f32.mrb[0].mxu0
      %v2846 = vadd.f32 %v2746, %v2845
      %v2847 = vpop.f32.mrb[0].mxu0
      %2848 = vmatprep.mubr.bf16.mxu0 0
      %2849 = vmatmul.mubr.bf16.gmra.mrb[0].mxu0 %v2790
      %v2850 = vpop.f32.mrb[0].mxu0
      %v2851 = vadd.f32 %v2751, %v2850
      %v2852 = vpop.f32.mrb[0].mxu0
      %v2853 = vpop.f32.mrb[0].mxu0
      %v2854 = vpop.f32.mrb[0].mxu0
      %2855 = vdwg.mxu0
      %s2856 = scalar_lea.vmem %s6, 224
      %v2857 = vld [vmem:[%s2856] sm:$0xff]
      %v2858 = vld [vmem:[%s2856 + $0x8] sm:$0xff]
      %v2859 = vld [vmem:[%s2856 + $0x10] sm:$0xff]
      %v2860 = vld [vmem:[%s2856 + $0x18] sm:$0xff]
      %v2861 = vld [vmem:[%s2856 + $0x20] sm:$0xff]
      %v2862 = vld [vmem:[%s2856 + $0x28] sm:$0xff]
      %v2863 = vld [vmem:[%s2856 + $0x30] sm:$0xff]
      %v2864 = vld [vmem:[%s2856 + $0x38] sm:$0xff]
      %v2865 = vld [vmem:[%s2856 + $0x40] sm:$0xff]
      %v2866 = vld [vmem:[%s2856 + $0x48] sm:$0xff]
      %v2867 = vld [vmem:[%s2856 + $0x50] sm:$0xff]
      %v2868 = vld [vmem:[%s2856 + $0x58] sm:$0xff]
      %v2869 = vld [vmem:[%s2856 + $0x60] sm:$0x1]
      %v2870 = vld [vmem:[%s2856 + $0x68] sm:$0x1]
      %v2872 = vsel %vm1825, %v1804, 0
      %v2875 = vsel %vm1825, %v1806, 0
      %v2878 = vsel %vm1825, %v1808, 0
      %v2881 = vsel %vm1825, %v1810, 0
      %v2884 = vsel %vm1825, %v1447, 0
      %v2887 = vsel %vm1825, %v1449, 0
      %v2890 = vsel %vm1825, %v1451, 0
      %v2893 = vsel %vm1825, %v1453, 0
      %v2896 = vsel %vm1825, %v1455, 0
      %v2899 = vsel %vm1825, %v1457, 0
      %v2902 = vsel %vm1825, %v1459, 0
      %v2905 = vsel %vm1825, %v1461, 0
      %v2908 = vsel %vm1825, %v1463, 0
      %v2911 = vsel %vm1825, %v1465, 0
      %v2914 = vsel %vm1825, %v1467, 0
      %v2917 = vsel %vm1825, %v1469, 0
      %v2920 = vsel %vm1825, %v1471, 0
      %2922 = vmatprep.subr.bf16.mxu0 0
      %2923 = vmatpush1.bf16.xpose.msra.mxu0 %v2884
      %2924 = vmatprep.subr.bf16.mxu0 0
      %2925 = vmatpush1.bf16.xpose.msra.mxu0 %v2887
      %2926 = vmatprep.subr.bf16.mxu0 0
      %2927 = vmatpush1.bf16.xpose.msra.mxu0 %v2890
      %2928 = vmatprep.subr.bf16.mxu0 0
      %2929 = vmatpush1.bf16.xpose.msra.mxu0 %v2893
      %2930 = vmatprep.subr.bf16.mxu0 0
      %2931 = vmatpush1.bf16.xpose.msra.mxu0 %v2896
      %2932 = vmatprep.subr.bf16.mxu0 0
      %2933 = vmatpush1.bf16.xpose.msra.mxu0 %v2899
      %2934 = vmatprep.subr.bf16.mxu0 0
      %2935 = vmatpush1.bf16.xpose.msra.mxu0 %v2902
      %2936 = vmatprep.subr.bf16.mxu0 0
      %2937 = vmatpush1.bf16.xpose.msra.mxu0 %v2905
      %2938 = vmatprep.subr.bf16.mxu0 0
      %2939 = vmatpush1.bf16.xpose.msra.mxu0 %v2908
      %2940 = vmatprep.subr.bf16.mxu0 0
      %2941 = vmatpush1.bf16.xpose.msra.mxu0 %v2911
      %2942 = vmatprep.subr.bf16.mxu0 0
      %2943 = vmatpush1.bf16.xpose.msra.mxu0 %v2914
      %2944 = vmatprep.subr.bf16.mxu0 0
      %2945 = vmatpush1.bf16.xpose.msra.mxu0 %v2917
      %2946 = vmatprep.subr.bf16.mxu0 0
      %2947 = vmatpush1.bf16.xpose.msra.mxu0 %v2920
      %2948 = vmatprep.subr.bf16.mxu0 0
      %2949 = vmatpush1.bf16.xpose.msra.mxu0 0
      %2950 = vmatprep.subr.bf16.mxu0 0
      %2951 = vmatpush1.bf16.xpose.msra.mxu0 0
      %2952 = vmatprep.subr.bf16.mxu0 0
      %2953 = vmatpush1.bf16.xpose.msra.mxu0 0
      %2954 = vmatprep.mubr.bf16.mxu0 0
      %2955 = vmatmul.mubr.bf16.gmra.mrb[0].mxu0 %v2872
      %v2956 = vpop.f32.mrb[0].mxu0
      %v2957 = vadd.f32 %v2857, %v2956
      %v2958 = vpop.f32.mrb[0].mxu0
      %v2959 = vadd.f32 %v2858, %v2958
      %v2960 = vpop.f32.mrb[0].mxu0
      %v2961 = vadd.f32 %v2859, %v2960
      %v2962 = vpop.f32.mrb[0].mxu0
      %v2963 = vadd.f32 %v2860, %v2962
      %2964 = vmatprep.mubr.bf16.mxu0 0
      %2965 = vmatmul.mubr.bf16.gmra.mrb[0].mxu0 %v2875
      %v2966 = vpop.f32.mrb[0].mxu0
      %v2967 = vadd.f32 %v2861, %v2966
      %v2968 = vpop.f32.mrb[0].mxu0
      %v2969 = vadd.f32 %v2862, %v2968
      %v2970 = vpop.f32.mrb[0].mxu0
      %v2971 = vadd.f32 %v2863, %v2970
      %v2972 = vpop.f32.mrb[0].mxu0
      %v2973 = vadd.f32 %v2864, %v2972
      %2974 = vmatprep.mubr.bf16.mxu0 0
      %2975 = vmatmul.mubr.bf16.gmra.mrb[0].mxu0 %v2878
      %v2976 = vpop.f32.mrb[0].mxu0
      %v2977 = vadd.f32 %v2865, %v2976
      %v2978 = vpop.f32.mrb[0].mxu0
      %v2979 = vadd.f32 %v2866, %v2978
      %v2980 = vpop.f32.mrb[0].mxu0
      %v2981 = vadd.f32 %v2867, %v2980
      %v2982 = vpop.f32.mrb[0].mxu0
      %v2983 = vadd.f32 %v2868, %v2982
      %2984 = vmatprep.mubr.bf16.mxu0 0
      %2985 = vmatmul.mubr.bf16.gmra.mrb[0].mxu0 %v2881
      %v2986 = vpop.f32.mrb[0].mxu0
      %v2987 = vadd.f32 %v2869, %v2986
      %v2988 = vpop.f32.mrb[0].mxu0
      %v2989 = vadd.f32 %v2870, %v2988
      %v2990 = vpop.f32.mrb[0].mxu0
      %v2991 = vpop.f32.mrb[0].mxu0
      %2992 = vdwg.mxu0
      %v2993 = vsel %vm1608, %v2959, -inf
      %v2994 = vmax.f32 %v2957, %v2993
      %2995 = vmax.xlane.f32.xlu0 %v2994
      %v2996 = vpop.xlane.xlu0 %2995
      %v2997 = vsel %vm1608, %v2963, -inf
      %v2998 = vmax.f32 %v2961, %v2997
      %2999 = vmax.xlane.f32.xlu0 %v2998
      %v3000 = vpop.xlane.xlu0 %2999
      %v3001 = vsel %vm1608, %v2969, -inf
      %v3002 = vmax.f32 %v2967, %v3001
      %3003 = vmax.xlane.f32.xlu0 %v3002
      %v3004 = vpop.xlane.xlu0 %3003
      %v3005 = vsel %vm1608, %v2973, -inf
      %v3006 = vmax.f32 %v2971, %v3005
      %3007 = vmax.xlane.f32.xlu0 %v3006
      %v3008 = vpop.xlane.xlu0 %3007
      %v3009 = vsel %vm1608, %v2979, -inf
      %v3010 = vmax.f32 %v2977, %v3009
      %3011 = vmax.xlane.f32.xlu0 %v3010
      %v3012 = vpop.xlane.xlu0 %3011
      %v3013 = vsel %vm1608, %v2983, -inf
      %v3014 = vmax.f32 %v2981, %v3013
      %3015 = vmax.xlane.f32.xlu0 %v3014
      %v3016 = vpop.xlane.xlu0 %3015
      %v3017 = vsel %vm1972, %v2987, -inf
      %v3018 = vsel %vm1974, %v2989, -inf
      %v3019 = vmax.f32 %v3017, %v3018
      %3020 = vmax.xlane.f32.xlu0 %v3019
      %v3021 = vpop.xlane.xlu0 %3020
      %v3022 = vsub.f32 %v2957, %v2996
      %v3023 = vsub.f32 %v2959, %v2996
      %v3024 = vsub.f32 %v2961, %v3000
      %v3025 = vsub.f32 %v2963, %v3000
      %v3026 = vsub.f32 %v2967, %v3004
      %v3027 = vsub.f32 %v2969, %v3004
      %v3028 = vsub.f32 %v2971, %v3008
      %v3029 = vsub.f32 %v2973, %v3008
      %v3030 = vsub.f32 %v2977, %v3012
      %v3031 = vsub.f32 %v2979, %v3012
      %v3032 = vsub.f32 %v2981, %v3016
      %v3033 = vsub.f32 %v2983, %v3016
      %v3034 = vsub.f32 %v2987, %v3021
      %v3035 = vsub.f32 %v2989, %v3021
      %v3036 = vmul.f32 %v3022, 1.442695
      %v3037 = vpow.pop %v3036
      %v3038 = vmul.f32 %v3023, 1.442695
      %v3039 = vpow.pop %v3038
      %v3040 = vmul.f32 %v3024, 1.442695
      %v3041 = vpow.pop %v3040
      %v3042 = vmul.f32 %v3025, 1.442695
      %v3043 = vpow.pop %v3042
      %v3044 = vmul.f32 %v3026, 1.442695
      %v3045 = vpow.pop %v3044
      %v3046 = vmul.f32 %v3027, 1.442695
      %v3047 = vpow.pop %v3046
      %v3048 = vmul.f32 %v3028, 1.442695
      %v3049 = vpow.pop %v3048
      %v3050 = vmul.f32 %v3029, 1.442695
      %v3051 = vpow.pop %v3050
      %v3052 = vmul.f32 %v3030, 1.442695
      %v3053 = vpow.pop %v3052
      %v3054 = vmul.f32 %v3031, 1.442695
      %v3055 = vpow.pop %v3054
      %v3056 = vmul.f32 %v3032, 1.442695
      %v3057 = vpow.pop %v3056
      %v3058 = vmul.f32 %v3033, 1.442695
      %v3059 = vpow.pop %v3058
      %v3060 = vmul.f32 %v3034, 1.442695
      %v3061 = vpow.pop %v3060
      %v3062 = vmul.f32 %v3035, 1.442695
      %v3063 = vpow.pop %v3062
      %v3064 = vsel %vm1608, %v3039, 0.0
      %v3065 = vadd.f32 %v3037, %v3064
      %3066 = vadd.xlane.f32.xlu0 %v3065
      %v3067 = vpop.xlane.xlu0 %3066
      %v3068 = vsel %vm1608, %v3043, 0.0
      %v3069 = vadd.f32 %v3041, %v3068
      %3070 = vadd.xlane.f32.xlu0 %v3069
      %v3071 = vpop.xlane.xlu0 %3070
      %v3072 = vsel %vm1608, %v3047, 0.0
      %v3073 = vadd.f32 %v3045, %v3072
      %3074 = vadd.xlane.f32.xlu0 %v3073
      %v3075 = vpop.xlane.xlu0 %3074
      %v3076 = vsel %vm1608, %v3051, 0.0
      %v3077 = vadd.f32 %v3049, %v3076
      %3078 = vadd.xlane.f32.xlu0 %v3077
      %v3079 = vpop.xlane.xlu0 %3078
      %v3080 = vsel %vm1608, %v3055, 0.0
      %v3081 = vadd.f32 %v3053, %v3080
      %3082 = vadd.xlane.f32.xlu0 %v3081
      %v3083 = vpop.xlane.xlu0 %3082
      %v3084 = vsel %vm1608, %v3059, 0.0
      %v3085 = vadd.f32 %v3057, %v3084
      %3086 = vadd.xlane.f32.xlu0 %v3085
      %v3087 = vpop.xlane.xlu0 %3086
      %v3088 = vsel %vm1972, %v3061, 0.0
      %v3089 = vsel %vm1974, %v3063, 0.0
      %v3090 = vadd.f32 %v3088, %v3089
      %3091 = vadd.xlane.f32.xlu0 %v3090
      %v3092 = vpop.xlane.xlu0 %3091
      %v3093 = vrcp.pop %v3067
      %v3094 = vrcp.pop %v3071
      %v3095 = vrcp.pop %v3075
      %v3096 = vrcp.pop %v3079
      %v3097 = vrcp.pop %v3083
      %v3098 = vrcp.pop %v3087
      %v3099 = vrcp.pop %v3092
      %v3100 = vmul.f32 %v3037, %v3093
      %v3101 = vmul.f32 %v3039, %v3093
      %v3102 = vmul.f32 %v3041, %v3094
      %v3103 = vmul.f32 %v3043, %v3094
      %v3104 = vmul.f32 %v3045, %v3095
      %v3105 = vmul.f32 %v3047, %v3095
      %v3106 = vmul.f32 %v3049, %v3096
      %v3107 = vmul.f32 %v3051, %v3096
      %v3108 = vmul.f32 %v3053, %v3097
      %v3109 = vmul.f32 %v3055, %v3097
      %v3110 = vmul.f32 %v3057, %v3098
      %v3111 = vmul.f32 %v3059, %v3098
      %v3112 = vmul.f32 %v3061, %v3099
      %v3113 = vmul.f32 %v3063, %v3099
      %v3114 = vpack.c.bf16 %v3102, %v3100
      %v3115 = vpack.c.bf16 %v3103, %v3101
      %v3116 = vpack.c.bf16 %v3106, %v3104
      %v3117 = vpack.c.bf16 %v3107, %v3105
      %v3118 = vpack.c.bf16 %v3110, %v3108
      %v3119 = vpack.c.bf16 %v3111, %v3109
      %v3120 = vpack.c.bf16 %v3112, %v3112
      %v3121 = vpack.c.bf16 %v3113, %v3113
      %v3123 = vsel %vm1608, %v3115, 0
      %v3126 = vsel %vm1608, %v3117, 0
      %v3129 = vsel %vm1608, %v3119, 0
      %v3132 = vsel %vm1608, %v3121, 0
      %3134 = vmatprep.subr.bf16.mxu0 0
      %3135 = vmatpush1.bf16.msra.mxu0 %v1447
      %3136 = vmatprep.subr.bf16.mxu0 0
      %3137 = vmatpush1.bf16.msra.mxu0 %v1449
      %3138 = vmatprep.subr.bf16.mxu0 0
      %3139 = vmatpush1.bf16.msra.mxu0 %v1451
      %3140 = vmatprep.subr.bf16.mxu0 0
      %3141 = vmatpush1.bf16.msra.mxu0 %v1453
      %3142 = vmatprep.subr.bf16.mxu0 0
      %3143 = vmatpush1.bf16.msra.mxu0 %v1455
      %3144 = vmatprep.subr.bf16.mxu0 0
      %3145 = vmatpush1.bf16.msra.mxu0 %v1457
      %3146 = vmatprep.subr.bf16.mxu0 0
      %3147 = vmatpush1.bf16.msra.mxu0 %v1459
      %3148 = vmatprep.subr.bf16.mxu0 0
      %3149 = vmatpush1.bf16.msra.mxu0 %v1461
      %3150 = vmatprep.subr.bf16.mxu0 0
      %3151 = vmatpush1.bf16.msra.mxu0 %v1463
      %3152 = vmatprep.subr.bf16.mxu0 0
      %3153 = vmatpush1.bf16.msra.mxu0 %v1465
      %3154 = vmatprep.subr.bf16.mxu0 0
      %3155 = vmatpush1.bf16.msra.mxu0 %v1467
      %3156 = vmatprep.subr.bf16.mxu0 0
      %3157 = vmatpush1.bf16.msra.mxu0 %v1469
      %3158 = vmatprep.subr.bf16.mxu0 0
      %3159 = vmatpush1.bf16.msra.mxu0 %v1471
      %3160 = vmatprep.subr.bf16.mxu0 0
      %3161 = vmatpush1.bf16.msra.mxu0 0
      %3162 = vmatprep.subr.bf16.mxu0 0
      %3163 = vmatpush1.bf16.msra.mxu0 0
      %3164 = vmatprep.subr.bf16.mxu0 0
      %3165 = vmatpush1.bf16.msra.mxu0 0
      %3166 = vmatprep.mubr.bf16.mxu0 %v3123
      %3167 = vmatmul.mubr.bf16.gmra.mrb[0].mxu0 %v3114
      %v3168 = vpop.f32.mrb[0].mxu0
      %v3169 = vadd.f32 0.0, %v3168
      %v3170 = vpop.f32.mrb[0].mxu0
      %v3171 = vpop.f32.mrb[0].mxu0
      %v3172 = vadd.f32 0.0, %v3171
      %v3173 = vpop.f32.mrb[0].mxu0
      %3174 = vmatprep.mubr.bf16.mxu0 %v3126
      %3175 = vmatmul.mubr.bf16.gmra.mrb[0].mxu0 %v3116
      %v3176 = vpop.f32.mrb[0].mxu0
      %v3177 = vadd.f32 0.0, %v3176
      %v3178 = vpop.f32.mrb[0].mxu0
      %v3179 = vpop.f32.mrb[0].mxu0
      %v3180 = vadd.f32 0.0, %v3179
      %v3181 = vpop.f32.mrb[0].mxu0
      %3182 = vmatprep.mubr.bf16.mxu0 %v3129
      %3183 = vmatmul.mubr.bf16.gmra.mrb[0].mxu0 %v3118
      %v3184 = vpop.f32.mrb[0].mxu0
      %v3185 = vadd.f32 0.0, %v3184
      %v3186 = vpop.f32.mrb[0].mxu0
      %v3187 = vpop.f32.mrb[0].mxu0
      %v3188 = vadd.f32 0.0, %v3187
      %v3189 = vpop.f32.mrb[0].mxu0
      %3190 = vmatprep.mubr.bf16.mxu0 %v3132
      %3191 = vmatmul.mubr.bf16.gmra.mrb[0].mxu0 %v3120
      %v3192 = vpop.f32.mrb[0].mxu0
      %v3193 = vadd.f32 0.0, %v3192
      %v3194 = vpop.f32.mrb[0].mxu0
      %v3195 = vpop.f32.mrb[0].mxu0
      %v3196 = vpop.f32.mrb[0].mxu0
      %3197 = vdwg.mxu0
      %v3198 = vadd.f32 %v3169, 3.0
      %v3199 = vadd.f32 %v3172, 3.0
      %v3200 = vadd.f32 %v3177, 3.0
      %v3201 = vadd.f32 %v3180, 3.0
      %v3202 = vadd.f32 %v3185, 3.0
      %v3203 = vadd.f32 %v3188, 3.0
      %v3204 = vadd.f32 %v3193, 3.0
      %v3205 = vmax.f32 %v3198, 0.0
      %v3206 = vmax.f32 %v3199, 0.0
      %v3207 = vmax.f32 %v3200, 0.0
      %v3208 = vmax.f32 %v3201, 0.0
      %v3209 = vmax.f32 %v3202, 0.0
      %v3210 = vmax.f32 %v3203, 0.0
      %v3211 = vmax.f32 %v3204, 0.0
      %v3212 = vmin.f32 %v3205, 6.0
      %v3213 = vmin.f32 %v3206, 6.0
      %v3214 = vmin.f32 %v3207, 6.0
      %v3215 = vmin.f32 %v3208, 6.0
      %v3216 = vmin.f32 %v3209, 6.0
      %v3217 = vmin.f32 %v3210, 6.0
      %v3218 = vmin.f32 %v3211, 6.0
      %v3219 = vmul.f32 %v3169, %v3212
      %v3220 = vmul.f32 %v3172, %v3213
      %v3221 = vmul.f32 %v3177, %v3214
      %v3222 = vmul.f32 %v3180, %v3215
      %v3223 = vmul.f32 %v3185, %v3216
      %v3224 = vmul.f32 %v3188, %v3217
      %v3225 = vmul.f32 %v3193, %v3218
      %v3226 = vmul.f32 %v3219, 0.16666667
      %v3227 = vmul.f32 %v3220, 0.16666667
      %v3228 = vmul.f32 %v3221, 0.16666667
      %v3229 = vmul.f32 %v3222, 0.16666667
      %v3230 = vmul.f32 %v3223, 0.16666667
      %v3231 = vmul.f32 %v3224, 0.16666667
      %v3232 = vmul.f32 %v3225, 0.16666667
      %v3233 = vpack.c.bf16 %v3227, %v3226
      %v3234 = vpack.c.bf16 %v3229, %v3228
      %v3235 = vpack.c.bf16 %v3231, %v3230
      %v3236 = vpack.c.bf16 %v3232, %v3232
      %s3237 = scalar_lea.vmem %s7, 64
      %v3238 = vld [vmem:[%s3237] sm:$0xf]
      %v3239 = vld [vmem:[%s3237 + $0x4] sm:$0xf]
      %v3240 = vld [vmem:[%s3237 + $0x8] sm:$0xf]
      %v3241 = vld [vmem:[%s3237 + $0xc] sm:$0xf]
      %v3242 = vld [vmem:[%s3237 + $0x10] sm:$0xf]
      %v3243 = vld [vmem:[%s3237 + $0x14] sm:$0xf]
      %v3244 = vld [vmem:[%s3237 + $0x18] sm:$0xf]
      %v3245 = vld [vmem:[%s3237 + $0x1c] sm:$0xf]
      %v3254 = vunpack.c.l.b16 %v3238
      %v3255 = vunpack.c.l.b16 %v3239
      %v3256 = vunpack.c.l.b16 %v3240
      %v3257 = vunpack.c.l.b16 %v3241
      %v3258 = vunpack.c.l.b16 %v3242
      %v3259 = vunpack.c.l.b16 %v3243
      %v3260 = vunpack.c.l.b16 %v3244
      %v3261 = vunpack.c.l.b16 %v3245
      %v3262 = vpack.c.b16 %v3255, %v3254
      %v3263 = vpack.c.b16 %v3257, %v3256
      %v3264 = vpack.c.b16 %v3259, %v3258
      %v3265 = vpack.c.b16 %v3261, %v3260
      %v3271 = vsel %vm1825, %v3233, 0
      %v3274 = vsel %vm1825, %v3234, 0
      %v3277 = vsel %vm1825, %v3235, 0
      %v3280 = vsel %vm1825, %v3236, 0
      %3282 = vmatprep.subr.bf16.mxu0 0
      %3283 = vmatpush1.bf16.msra.mxu0 %v3262
      %3284 = vmatprep.subr.bf16.mxu0 0
      %3285 = vmatpush1.bf16.msra.mxu0 %v3263
      %3286 = vmatprep.subr.bf16.mxu0 0
      %3287 = vmatpush1.bf16.msra.mxu0 %v3264
      %3288 = vmatprep.subr.bf16.mxu0 0
      %3289 = vmatpush1.bf16.msra.mxu0 %v3265
      %3290 = vmatprep.subr.bf16.mxu0 0
      %3291 = vmatpush1.bf16.msra.mxu0 0
      %3292 = vmatprep.subr.bf16.mxu0 0
      %3293 = vmatpush1.bf16.msra.mxu0 0
      %3294 = vmatprep.subr.bf16.mxu0 0
      %3295 = vmatpush1.bf16.msra.mxu0 0
      %3296 = vmatprep.subr.bf16.mxu0 0
      %3297 = vmatpush1.bf16.msra.mxu0 0
      %3298 = vmatprep.subr.bf16.mxu0 0
      %3299 = vmatpush1.bf16.msra.mxu0 0
      %3300 = vmatprep.subr.bf16.mxu0 0
      %3301 = vmatpush1.bf16.msra.mxu0 0
      %3302 = vmatprep.subr.bf16.mxu0 0
      %3303 = vmatpush1.bf16.msra.mxu0 0
      %3304 = vmatprep.subr.bf16.mxu0 0
      %3305 = vmatpush1.bf16.msra.mxu0 0
      %3306 = vmatprep.subr.bf16.mxu0 0
      %3307 = vmatpush1.bf16.msra.mxu0 0
      %3308 = vmatprep.subr.bf16.mxu0 0
      %3309 = vmatpush1.bf16.msra.mxu0 0
      %3310 = vmatprep.subr.bf16.mxu0 0
      %3311 = vmatpush1.bf16.msra.mxu0 0
      %3312 = vmatprep.subr.bf16.mxu0 0
      %3313 = vmatpush1.bf16.msra.mxu0 0
      %3314 = vmatprep.mubr.bf16.mxu0 0
      %3315 = vmatmul.mubr.bf16.gmra.mrb[0].mxu0 %v3271
      %v3316 = vpop.f32.mrb[0].mxu0
      %v3317 = vadd.f32 0.0, %v3316
      %v3318 = vpop.f32.mrb[0].mxu0
      %v3319 = vpop.f32.mrb[0].mxu0
      %v3320 = vadd.f32 0.0, %v3319
      %v3321 = vpop.f32.mrb[0].mxu0
      %3322 = vmatprep.mubr.bf16.mxu0 0
      %3323 = vmatmul.mubr.bf16.gmra.mrb[0].mxu0 %v3274
      %v3324 = vpop.f32.mrb[0].mxu0
      %v3325 = vadd.f32 0.0, %v3324
      %v3326 = vpop.f32.mrb[0].mxu0
      %v3327 = vpop.f32.mrb[0].mxu0
      %v3328 = vadd.f32 0.0, %v3327
      %v3329 = vpop.f32.mrb[0].mxu0
      %3330 = vmatprep.mubr.bf16.mxu0 0
      %3331 = vmatmul.mubr.bf16.gmra.mrb[0].mxu0 %v3277
      %v3332 = vpop.f32.mrb[0].mxu0
      %v3333 = vadd.f32 0.0, %v3332
      %v3334 = vpop.f32.mrb[0].mxu0
      %v3335 = vpop.f32.mrb[0].mxu0
      %v3336 = vadd.f32 0.0, %v3335
      %v3337 = vpop.f32.mrb[0].mxu0
      %3338 = vmatprep.mubr.bf16.mxu0 0
      %3339 = vmatmul.mubr.bf16.gmra.mrb[0].mxu0 %v3280
      %v3340 = vpop.f32.mrb[0].mxu0
      %v3341 = vadd.f32 0.0, %v3340
      %v3342 = vpop.f32.mrb[0].mxu0
      %v3343 = vpop.f32.mrb[0].mxu0
      %v3344 = vpop.f32.mrb[0].mxu0
      %3345 = vdwg.mxu0
      %v3346 = vadd.f32 %v2827, %v3317
      %v3347 = vadd.f32 %v2830, %v3320
      %v3348 = vadd.f32 %v2835, %v3325
      %v3349 = vadd.f32 %v2838, %v3328
      %v3350 = vadd.f32 %v2843, %v3333
      %v3351 = vadd.f32 %v2846, %v3336
      %v3352 = vadd.f32 %v2851, %v3341
      %s3353 = scalar_lea.vmem %s6, 336
      %v3354 = vld [vmem:[%s3353] sm:$0xff]
      %v3355 = vld [vmem:[%s3353 + $0x8] sm:$0xff]
      %v3356 = vld [vmem:[%s3353 + $0x10] sm:$0xff]
      %v3357 = vld [vmem:[%s3353 + $0x18] sm:$0xff]
      %v3358 = vld [vmem:[%s3353 + $0x20] sm:$0xff]
      %v3359 = vld [vmem:[%s3353 + $0x28] sm:$0xff]
      %v3360 = vld [vmem:[%s3353 + $0x30] sm:$0xff]
      %v3361 = vld [vmem:[%s3353 + $0x38] sm:$0xff]
      %v3362 = vld [vmem:[%s3353 + $0x40] sm:$0xff]
      %v3363 = vld [vmem:[%s3353 + $0x48] sm:$0xff]
      %v3364 = vld [vmem:[%s3353 + $0x50] sm:$0xff]
      %v3365 = vld [vmem:[%s3353 + $0x58] sm:$0xff]
      %v3366 = vld [vmem:[%s3353 + $0x60] sm:$0x1]
      %v3367 = vld [vmem:[%s3353 + $0x68] sm:$0x1]
      %3372 = vrot.lane.b32.xlu0 %v1804, 64
      %v3373 = vpop.permute.xlu0 %3372
      %3374 = vrot.lane.b32.xlu0 %v1806, 64
      %v3375 = vpop.permute.xlu0 %3374
      %3376 = vrot.lane.b32.xlu0 %v1808, 64
      %v3377 = vpop.permute.xlu0 %3376
      %3378 = vrot.lane.b32.xlu0 %v1810, 64
      %v3379 = vpop.permute.xlu0 %3378
      %3393 = vrot.lane.b32.xlu0 %v1447, 64
      %v3394 = vpop.permute.xlu0 %3393
      %3395 = vrot.lane.b32.xlu0 %v1449, 64
      %v3396 = vpop.permute.xlu0 %3395
      %3397 = vrot.lane.b32.xlu0 %v1451, 64
      %v3398 = vpop.permute.xlu0 %3397
      %3399 = vrot.lane.b32.xlu0 %v1453, 64
      %v3400 = vpop.permute.xlu0 %3399
      %3401 = vrot.lane.b32.xlu0 %v1455, 64
      %v3402 = vpop.permute.xlu0 %3401
      %3403 = vrot.lane.b32.xlu0 %v1457, 64
      %v3404 = vpop.permute.xlu0 %3403
      %3405 = vrot.lane.b32.xlu0 %v1459, 64
      %v3406 = vpop.permute.xlu0 %3405
      %3407 = vrot.lane.b32.xlu0 %v1461, 64
      %v3408 = vpop.permute.xlu0 %3407
      %3409 = vrot.lane.b32.xlu0 %v1463, 64
      %v3410 = vpop.permute.xlu0 %3409
      %3411 = vrot.lane.b32.xlu0 %v1465, 64
      %v3412 = vpop.permute.xlu0 %3411
      %3413 = vrot.lane.b32.xlu0 %v1467, 64
      %v3414 = vpop.permute.xlu0 %3413
      %3415 = vrot.lane.b32.xlu0 %v1469, 64
      %v3416 = vpop.permute.xlu0 %3415
      %3417 = vrot.lane.b32.xlu0 %v1471, 64
      %v3418 = vpop.permute.xlu0 %3417
      %v3420 = vsel %vm1825, %v3373, 0
      %v3423 = vsel %vm1825, %v3375, 0
      %v3426 = vsel %vm1825, %v3377, 0
      %v3429 = vsel %vm1825, %v3379, 0
      %v3432 = vsel %vm1825, %v3394, 0
      %v3435 = vsel %vm1825, %v3396, 0
      %v3438 = vsel %vm1825, %v3398, 0
      %v3441 = vsel %vm1825, %v3400, 0
      %v3444 = vsel %vm1825, %v3402, 0
      %v3447 = vsel %vm1825, %v3404, 0
      %v3450 = vsel %vm1825, %v3406, 0
      %v3453 = vsel %vm1825, %v3408, 0
      %v3456 = vsel %vm1825, %v3410, 0
      %v3459 = vsel %vm1825, %v3412, 0
      %v3462 = vsel %vm1825, %v3414, 0
      %v3465 = vsel %vm1825, %v3416, 0
      %v3468 = vsel %vm1825, %v3418, 0
      %3470 = vmatprep.subr.bf16.mxu0 0
      %3471 = vmatpush1.bf16.xpose.msra.mxu0 %v3432
      %3472 = vmatprep.subr.bf16.mxu0 0
      %3473 = vmatpush1.bf16.xpose.msra.mxu0 %v3435
      %3474 = vmatprep.subr.bf16.mxu0 0
      %3475 = vmatpush1.bf16.xpose.msra.mxu0 %v3438
      %3476 = vmatprep.subr.bf16.mxu0 0
      %3477 = vmatpush1.bf16.xpose.msra.mxu0 %v3441
      %3478 = vmatprep.subr.bf16.mxu0 0
      %3479 = vmatpush1.bf16.xpose.msra.mxu0 %v3444
      %3480 = vmatprep.subr.bf16.mxu0 0
      %3481 = vmatpush1.bf16.xpose.msra.mxu0 %v3447
      %3482 = vmatprep.subr.bf16.mxu0 0
      %3483 = vmatpush1.bf16.xpose.msra.mxu0 %v3450
      %3484 = vmatprep.subr.bf16.mxu0 0
      %3485 = vmatpush1.bf16.xpose.msra.mxu0 %v3453
      %3486 = vmatprep.subr.bf16.mxu0 0
      %3487 = vmatpush1.bf16.xpose.msra.mxu0 %v3456
      %3488 = vmatprep.subr.bf16.mxu0 0
      %3489 = vmatpush1.bf16.xpose.msra.mxu0 %v3459
      %3490 = vmatprep.subr.bf16.mxu0 0
      %3491 = vmatpush1.bf16.xpose.msra.mxu0 %v3462
      %3492 = vmatprep.subr.bf16.mxu0 0
      %3493 = vmatpush1.bf16.xpose.msra.mxu0 %v3465
      %3494 = vmatprep.subr.bf16.mxu0 0
      %3495 = vmatpush1.bf16.xpose.msra.mxu0 %v3468
      %3496 = vmatprep.subr.bf16.mxu0 0
      %3497 = vmatpush1.bf16.xpose.msra.mxu0 0
      %3498 = vmatprep.subr.bf16.mxu0 0
      %3499 = vmatpush1.bf16.xpose.msra.mxu0 0
      %3500 = vmatprep.subr.bf16.mxu0 0
      %3501 = vmatpush1.bf16.xpose.msra.mxu0 0
      %3502 = vmatprep.mubr.bf16.mxu0 0
      %3503 = vmatmul.mubr.bf16.gmra.mrb[0].mxu0 %v3420
      %v3504 = vpop.f32.mrb[0].mxu0
      %v3505 = vadd.f32 %v3354, %v3504
      %v3506 = vpop.f32.mrb[0].mxu0
      %v3507 = vadd.f32 %v3355, %v3506
      %v3508 = vpop.f32.mrb[0].mxu0
      %v3509 = vadd.f32 %v3356, %v3508
      %v3510 = vpop.f32.mrb[0].mxu0
      %v3511 = vadd.f32 %v3357, %v3510
      %3512 = vmatprep.mubr.bf16.mxu0 0
      %3513 = vmatmul.mubr.bf16.gmra.mrb[0].mxu0 %v3423
      %v3514 = vpop.f32.mrb[0].mxu0
      %v3515 = vadd.f32 %v3358, %v3514
      %v3516 = vpop.f32.mrb[0].mxu0
      %v3517 = vadd.f32 %v3359, %v3516
      %v3518 = vpop.f32.mrb[0].mxu0
      %v3519 = vadd.f32 %v3360, %v3518
      %v3520 = vpop.f32.mrb[0].mxu0
      %v3521 = vadd.f32 %v3361, %v3520
      %3522 = vmatprep.mubr.bf16.mxu0 0
      %3523 = vmatmul.mubr.bf16.gmra.mrb[0].mxu0 %v3426
      %v3524 = vpop.f32.mrb[0].mxu0
      %v3525 = vadd.f32 %v3362, %v3524
      %v3526 = vpop.f32.mrb[0].mxu0
      %v3527 = vadd.f32 %v3363, %v3526
      %v3528 = vpop.f32.mrb[0].mxu0
      %v3529 = vadd.f32 %v3364, %v3528
      %v3530 = vpop.f32.mrb[0].mxu0
      %v3531 = vadd.f32 %v3365, %v3530
      %3532 = vmatprep.mubr.bf16.mxu0 0
      %3533 = vmatmul.mubr.bf16.gmra.mrb[0].mxu0 %v3429
      %v3534 = vpop.f32.mrb[0].mxu0
      %v3535 = vadd.f32 %v3366, %v3534
      %v3536 = vpop.f32.mrb[0].mxu0
      %v3537 = vadd.f32 %v3367, %v3536
      %v3538 = vpop.f32.mrb[0].mxu0
      %v3539 = vpop.f32.mrb[0].mxu0
      %3540 = vdwg.mxu0
      %v3541 = vsel %vm1608, %v3507, -inf
      %v3542 = vmax.f32 %v3505, %v3541
      %3543 = vmax.xlane.f32.xlu0 %v3542
      %v3544 = vpop.xlane.xlu0 %3543
      %v3545 = vsel %vm1608, %v3511, -inf
      %v3546 = vmax.f32 %v3509, %v3545
      %3547 = vmax.xlane.f32.xlu0 %v3546
      %v3548 = vpop.xlane.xlu0 %3547
      %v3549 = vsel %vm1608, %v3517, -inf
      %v3550 = vmax.f32 %v3515, %v3549
      %3551 = vmax.xlane.f32.xlu0 %v3550
      %v3552 = vpop.xlane.xlu0 %3551
      %v3553 = vsel %vm1608, %v3521, -inf
      %v3554 = vmax.f32 %v3519, %v3553
      %3555 = vmax.xlane.f32.xlu0 %v3554
      %v3556 = vpop.xlane.xlu0 %3555
      %v3557 = vsel %vm1608, %v3527, -inf
      %v3558 = vmax.f32 %v3525, %v3557
      %3559 = vmax.xlane.f32.xlu0 %v3558
      %v3560 = vpop.xlane.xlu0 %3559
      %v3561 = vsel %vm1608, %v3531, -inf
      %v3562 = vmax.f32 %v3529, %v3561
      %3563 = vmax.xlane.f32.xlu0 %v3562
      %v3564 = vpop.xlane.xlu0 %3563
      %v3565 = vsel %vm1972, %v3535, -inf
      %v3566 = vsel %vm1974, %v3537, -inf
      %v3567 = vmax.f32 %v3565, %v3566
      %3568 = vmax.xlane.f32.xlu0 %v3567
      %v3569 = vpop.xlane.xlu0 %3568
      %v3570 = vsub.f32 %v3505, %v3544
      %v3571 = vsub.f32 %v3507, %v3544
      %v3572 = vsub.f32 %v3509, %v3548
      %v3573 = vsub.f32 %v3511, %v3548
      %v3574 = vsub.f32 %v3515, %v3552
      %v3575 = vsub.f32 %v3517, %v3552
      %v3576 = vsub.f32 %v3519, %v3556
      %v3577 = vsub.f32 %v3521, %v3556
      %v3578 = vsub.f32 %v3525, %v3560
      %v3579 = vsub.f32 %v3527, %v3560
      %v3580 = vsub.f32 %v3529, %v3564
      %v3581 = vsub.f32 %v3531, %v3564
      %v3582 = vsub.f32 %v3535, %v3569
      %v3583 = vsub.f32 %v3537, %v3569
      %v3584 = vmul.f32 %v3570, 1.442695
      %v3585 = vpow.pop %v3584
      %v3586 = vmul.f32 %v3571, 1.442695
      %v3587 = vpow.pop %v3586
      %v3588 = vmul.f32 %v3572, 1.442695
      %v3589 = vpow.pop %v3588
      %v3590 = vmul.f32 %v3573, 1.442695
      %v3591 = vpow.pop %v3590
      %v3592 = vmul.f32 %v3574, 1.442695
      %v3593 = vpow.pop %v3592
      %v3594 = vmul.f32 %v3575, 1.442695
      %v3595 = vpow.pop %v3594
      %v3596 = vmul.f32 %v3576, 1.442695
      %v3597 = vpow.pop %v3596
      %v3598 = vmul.f32 %v3577, 1.442695
      %v3599 = vpow.pop %v3598
      %v3600 = vmul.f32 %v3578, 1.442695
      %v3601 = vpow.pop %v3600
      %v3602 = vmul.f32 %v3579, 1.442695
      %v3603 = vpow.pop %v3602
      %v3604 = vmul.f32 %v3580, 1.442695
      %v3605 = vpow.pop %v3604
      %v3606 = vmul.f32 %v3581, 1.442695
      %v3607 = vpow.pop %v3606
      %v3608 = vmul.f32 %v3582, 1.442695
      %v3609 = vpow.pop %v3608
      %v3610 = vmul.f32 %v3583, 1.442695
      %v3611 = vpow.pop %v3610
      %v3612 = vsel %vm1608, %v3587, 0.0
      %v3613 = vadd.f32 %v3585, %v3612
      %3614 = vadd.xlane.f32.xlu0 %v3613
      %v3615 = vpop.xlane.xlu0 %3614
      %v3616 = vsel %vm1608, %v3591, 0.0
      %v3617 = vadd.f32 %v3589, %v3616
      %3618 = vadd.xlane.f32.xlu0 %v3617
      %v3619 = vpop.xlane.xlu0 %3618
      %v3620 = vsel %vm1608, %v3595, 0.0
      %v3621 = vadd.f32 %v3593, %v3620
      %3622 = vadd.xlane.f32.xlu0 %v3621
      %v3623 = vpop.xlane.xlu0 %3622
      %v3624 = vsel %vm1608, %v3599, 0.0
      %v3625 = vadd.f32 %v3597, %v3624
      %3626 = vadd.xlane.f32.xlu0 %v3625
      %v3627 = vpop.xlane.xlu0 %3626
      %v3628 = vsel %vm1608, %v3603, 0.0
      %v3629 = vadd.f32 %v3601, %v3628
      %3630 = vadd.xlane.f32.xlu0 %v3629
      %v3631 = vpop.xlane.xlu0 %3630
      %v3632 = vsel %vm1608, %v3607, 0.0
      %v3633 = vadd.f32 %v3605, %v3632
      %3634 = vadd.xlane.f32.xlu0 %v3633
      %v3635 = vpop.xlane.xlu0 %3634
      %v3636 = vsel %vm1972, %v3609, 0.0
      %v3637 = vsel %vm1974, %v3611, 0.0
      %v3638 = vadd.f32 %v3636, %v3637
      %3639 = vadd.xlane.f32.xlu0 %v3638
      %v3640 = vpop.xlane.xlu0 %3639
      %v3641 = vrcp.pop %v3615
      %v3642 = vrcp.pop %v3619
      %v3643 = vrcp.pop %v3623
      %v3644 = vrcp.pop %v3627
      %v3645 = vrcp.pop %v3631
      %v3646 = vrcp.pop %v3635
      %v3647 = vrcp.pop %v3640
      %v3648 = vmul.f32 %v3585, %v3641
      %v3649 = vmul.f32 %v3587, %v3641
      %v3650 = vmul.f32 %v3589, %v3642
      %v3651 = vmul.f32 %v3591, %v3642
      %v3652 = vmul.f32 %v3593, %v3643
      %v3653 = vmul.f32 %v3595, %v3643
      %v3654 = vmul.f32 %v3597, %v3644
      %v3655 = vmul.f32 %v3599, %v3644
      %v3656 = vmul.f32 %v3601, %v3645
      %v3657 = vmul.f32 %v3603, %v3645
      %v3658 = vmul.f32 %v3605, %v3646
      %v3659 = vmul.f32 %v3607, %v3646
      %v3660 = vmul.f32 %v3609, %v3647
      %v3661 = vmul.f32 %v3611, %v3647
      %v3662 = vpack.c.bf16 %v3650, %v3648
      %v3663 = vpack.c.bf16 %v3651, %v3649
      %v3664 = vpack.c.bf16 %v3654, %v3652
      %v3665 = vpack.c.bf16 %v3655, %v3653
      %v3666 = vpack.c.bf16 %v3658, %v3656
      %v3667 = vpack.c.bf16 %v3659, %v3657
      %v3668 = vpack.c.bf16 %v3660, %v3660
      %v3669 = vpack.c.bf16 %v3661, %v3661
      %v3684 = vsel %vm1608, %v3663, 0
      %v3687 = vsel %vm1608, %v3665, 0
      %v3690 = vsel %vm1608, %v3667, 0
      %v3693 = vsel %vm1608, %v3669, 0
      %3695 = vmatprep.subr.bf16.mxu0 0
      %3696 = vmatpush1.bf16.msra.mxu0 %v3394
      %3697 = vmatprep.subr.bf16.mxu0 0
      %3698 = vmatpush1.bf16.msra.mxu0 %v3396
      %3699 = vmatprep.subr.bf16.mxu0 0
      %3700 = vmatpush1.bf16.msra.mxu0 %v3398
      %3701 = vmatprep.subr.bf16.mxu0 0
      %3702 = vmatpush1.bf16.msra.mxu0 %v3400
      %3703 = vmatprep.subr.bf16.mxu0 0
      %3704 = vmatpush1.bf16.msra.mxu0 %v3402
      %3705 = vmatprep.subr.bf16.mxu0 0
      %3706 = vmatpush1.bf16.msra.mxu0 %v3404
      %3707 = vmatprep.subr.bf16.mxu0 0
      %3708 = vmatpush1.bf16.msra.mxu0 %v3406
      %3709 = vmatprep.subr.bf16.mxu0 0
      %3710 = vmatpush1.bf16.msra.mxu0 %v3408
      %3711 = vmatprep.subr.bf16.mxu0 0
      %3712 = vmatpush1.bf16.msra.mxu0 %v3410
      %3713 = vmatprep.subr.bf16.mxu0 0
      %3714 = vmatpush1.bf16.msra.mxu0 %v3412
      %3715 = vmatprep.subr.bf16.mxu0 0
      %3716 = vmatpush1.bf16.msra.mxu0 %v3414
      %3717 = vmatprep.subr.bf16.mxu0 0
      %3718 = vmatpush1.bf16.msra.mxu0 %v3416
      %3719 = vmatprep.subr.bf16.mxu0 0
      %3720 = vmatpush1.bf16.msra.mxu0 %v3418
      %3721 = vmatprep.subr.bf16.mxu0 0
      %3722 = vmatpush1.bf16.msra.mxu0 0
      %3723 = vmatprep.subr.bf16.mxu0 0
      %3724 = vmatpush1.bf16.msra.mxu0 0
      %3725 = vmatprep.subr.bf16.mxu0 0
      %3726 = vmatpush1.bf16.msra.mxu0 0
      %3727 = vmatprep.mubr.bf16.mxu0 %v3684
      %3728 = vmatmul.mubr.bf16.gmra.mrb[0].mxu0 %v3662
      %v3729 = vpop.f32.mrb[0].mxu0
      %v3730 = vadd.f32 0.0, %v3729
      %v3731 = vpop.f32.mrb[0].mxu0
      %v3732 = vpop.f32.mrb[0].mxu0
      %v3733 = vadd.f32 0.0, %v3732
      %v3734 = vpop.f32.mrb[0].mxu0
      %3735 = vmatprep.mubr.bf16.mxu0 %v3687
      %3736 = vmatmul.mubr.bf16.gmra.mrb[0].mxu0 %v3664
      %v3737 = vpop.f32.mrb[0].mxu0
      %v3738 = vadd.f32 0.0, %v3737
      %v3739 = vpop.f32.mrb[0].mxu0
      %v3740 = vpop.f32.mrb[0].mxu0
      %v3741 = vadd.f32 0.0, %v3740
      %v3742 = vpop.f32.mrb[0].mxu0
      %3743 = vmatprep.mubr.bf16.mxu0 %v3690
      %3744 = vmatmul.mubr.bf16.gmra.mrb[0].mxu0 %v3666
      %v3745 = vpop.f32.mrb[0].mxu0
      %v3746 = vadd.f32 0.0, %v3745
      %v3747 = vpop.f32.mrb[0].mxu0
      %v3748 = vpop.f32.mrb[0].mxu0
      %v3749 = vadd.f32 0.0, %v3748
      %v3750 = vpop.f32.mrb[0].mxu0
      %3751 = vmatprep.mubr.bf16.mxu0 %v3693
      %3752 = vmatmul.mubr.bf16.gmra.mrb[0].mxu0 %v3668
      %v3753 = vpop.f32.mrb[0].mxu0
      %v3754 = vadd.f32 0.0, %v3753
      %v3755 = vpop.f32.mrb[0].mxu0
      %v3756 = vpop.f32.mrb[0].mxu0
      %v3757 = vpop.f32.mrb[0].mxu0
      %3758 = vdwg.mxu0
      %v3759 = vadd.f32 %v3730, 3.0
      %v3760 = vadd.f32 %v3733, 3.0
      %v3761 = vadd.f32 %v3738, 3.0
      %v3762 = vadd.f32 %v3741, 3.0
      %v3763 = vadd.f32 %v3746, 3.0
      %v3764 = vadd.f32 %v3749, 3.0
      %v3765 = vadd.f32 %v3754, 3.0
      %v3766 = vmax.f32 %v3759, 0.0
      %v3767 = vmax.f32 %v3760, 0.0
      %v3768 = vmax.f32 %v3761, 0.0
      %v3769 = vmax.f32 %v3762, 0.0
      %v3770 = vmax.f32 %v3763, 0.0
      %v3771 = vmax.f32 %v3764, 0.0
      %v3772 = vmax.f32 %v3765, 0.0
      %v3773 = vmin.f32 %v3766, 6.0
      %v3774 = vmin.f32 %v3767, 6.0
      %v3775 = vmin.f32 %v3768, 6.0
      %v3776 = vmin.f32 %v3769, 6.0
      %v3777 = vmin.f32 %v3770, 6.0
      %v3778 = vmin.f32 %v3771, 6.0
      %v3779 = vmin.f32 %v3772, 6.0
      %v3780 = vmul.f32 %v3730, %v3773
      %v3781 = vmul.f32 %v3733, %v3774
      %v3782 = vmul.f32 %v3738, %v3775
      %v3783 = vmul.f32 %v3741, %v3776
      %v3784 = vmul.f32 %v3746, %v3777
      %v3785 = vmul.f32 %v3749, %v3778
      %v3786 = vmul.f32 %v3754, %v3779
      %v3787 = vmul.f32 %v3780, 0.16666667
      %v3788 = vmul.f32 %v3781, 0.16666667
      %v3789 = vmul.f32 %v3782, 0.16666667
      %v3790 = vmul.f32 %v3783, 0.16666667
      %v3791 = vmul.f32 %v3784, 0.16666667
      %v3792 = vmul.f32 %v3785, 0.16666667
      %v3793 = vmul.f32 %v3786, 0.16666667
      %v3794 = vpack.c.bf16 %v3788, %v3787
      %v3795 = vpack.c.bf16 %v3790, %v3789
      %v3796 = vpack.c.bf16 %v3792, %v3791
      %v3797 = vpack.c.bf16 %v3793, %v3793
      %s3798 = scalar_lea.vmem %s7, 96
      %v3799 = vld [vmem:[%s3798] sm:$0xf]
      %v3800 = vld [vmem:[%s3798 + $0x4] sm:$0xf]
      %v3801 = vld [vmem:[%s3798 + $0x8] sm:$0xf]
      %v3802 = vld [vmem:[%s3798 + $0xc] sm:$0xf]
      %v3803 = vld [vmem:[%s3798 + $0x10] sm:$0xf]
      %v3804 = vld [vmem:[%s3798 + $0x14] sm:$0xf]
      %v3805 = vld [vmem:[%s3798 + $0x18] sm:$0xf]
      %v3806 = vld [vmem:[%s3798 + $0x1c] sm:$0xf]
      %v3815 = vunpack.c.l.b16 %v3799
      %v3816 = vunpack.c.l.b16 %v3800
      %v3817 = vunpack.c.l.b16 %v3801
      %v3818 = vunpack.c.l.b16 %v3802
      %v3819 = vunpack.c.l.b16 %v3803
      %v3820 = vunpack.c.l.b16 %v3804
      %v3821 = vunpack.c.l.b16 %v3805
      %v3822 = vunpack.c.l.b16 %v3806
      %v3823 = vpack.c.b16 %v3816, %v3815
      %v3824 = vpack.c.b16 %v3818, %v3817
      %v3825 = vpack.c.b16 %v3820, %v3819
      %v3826 = vpack.c.b16 %v3822, %v3821
      %v3832 = vsel %vm1825, %v3794, 0
      %v3835 = vsel %vm1825, %v3795, 0
      %v3838 = vsel %vm1825, %v3796, 0
      %v3841 = vsel %vm1825, %v3797, 0
      %3843 = vmatprep.subr.bf16.mxu0 0
      %3844 = vmatpush1.bf16.msra.mxu0 %v3823
      %3845 = vmatprep.subr.bf16.mxu0 0
      %3846 = vmatpush1.bf16.msra.mxu0 %v3824
      %3847 = vmatprep.subr.bf16.mxu0 0
      %3848 = vmatpush1.bf16.msra.mxu0 %v3825
      %3849 = vmatprep.subr.bf16.mxu0 0
      %3850 = vmatpush1.bf16.msra.mxu0 %v3826
      %3851 = vmatprep.subr.bf16.mxu0 0
      %3852 = vmatpush1.bf16.msra.mxu0 0
      %3853 = vmatprep.subr.bf16.mxu0 0
      %3854 = vmatpush1.bf16.msra.mxu0 0
      %3855 = vmatprep.subr.bf16.mxu0 0
      %3856 = vmatpush1.bf16.msra.mxu0 0
      %3857 = vmatprep.subr.bf16.mxu0 0
      %3858 = vmatpush1.bf16.msra.mxu0 0
      %3859 = vmatprep.subr.bf16.mxu0 0
      %3860 = vmatpush1.bf16.msra.mxu0 0
      %3861 = vmatprep.subr.bf16.mxu0 0
      %3862 = vmatpush1.bf16.msra.mxu0 0
      %3863 = vmatprep.subr.bf16.mxu0 0
      %3864 = vmatpush1.bf16.msra.mxu0 0
      %3865 = vmatprep.subr.bf16.mxu0 0
      %3866 = vmatpush1.bf16.msra.mxu0 0
      %3867 = vmatprep.subr.bf16.mxu0 0
      %3868 = vmatpush1.bf16.msra.mxu0 0
      %3869 = vmatprep.subr.bf16.mxu0 0
      %3870 = vmatpush1.bf16.msra.mxu0 0
      %3871 = vmatprep.subr.bf16.mxu0 0
      %3872 = vmatpush1.bf16.msra.mxu0 0
      %3873 = vmatprep.subr.bf16.mxu0 0
      %3874 = vmatpush1.bf16.msra.mxu0 0
      %3875 = vmatprep.mubr.bf16.mxu0 0
      %3876 = vmatmul.mubr.bf16.gmra.mrb[0].mxu0 %v3832
      %v3877 = vpop.f32.mrb[0].mxu0
      %v3878 = vadd.f32 0.0, %v3877
      %v3879 = vpop.f32.mrb[0].mxu0
      %v3880 = vpop.f32.mrb[0].mxu0
      %v3881 = vadd.f32 0.0, %v3880
      %v3882 = vpop.f32.mrb[0].mxu0
      %3883 = vmatprep.mubr.bf16.mxu0 0
      %3884 = vmatmul.mubr.bf16.gmra.mrb[0].mxu0 %v3835
      %v3885 = vpop.f32.mrb[0].mxu0
      %v3886 = vadd.f32 0.0, %v3885
      %v3887 = vpop.f32.mrb[0].mxu0
      %v3888 = vpop.f32.mrb[0].mxu0
      %v3889 = vadd.f32 0.0, %v3888
      %v3890 = vpop.f32.mrb[0].mxu0
      %3891 = vmatprep.mubr.bf16.mxu0 0
      %3892 = vmatmul.mubr.bf16.gmra.mrb[0].mxu0 %v3838
      %v3893 = vpop.f32.mrb[0].mxu0
      %v3894 = vadd.f32 0.0, %v3893
      %v3895 = vpop.f32.mrb[0].mxu0
      %v3896 = vpop.f32.mrb[0].mxu0
      %v3897 = vadd.f32 0.0, %v3896
      %v3898 = vpop.f32.mrb[0].mxu0
      %3899 = vmatprep.mubr.bf16.mxu0 0
      %3900 = vmatmul.mubr.bf16.gmra.mrb[0].mxu0 %v3841
      %v3901 = vpop.f32.mrb[0].mxu0
      %v3902 = vadd.f32 0.0, %v3901
      %v3903 = vpop.f32.mrb[0].mxu0
      %v3904 = vpop.f32.mrb[0].mxu0
      %v3905 = vpop.f32.mrb[0].mxu0
      %3906 = vdwg.mxu0
      %v3907 = vadd.f32 %v3346, %v3878
      %v3908 = vadd.f32 %v3347, %v3881
      %v3909 = vadd.f32 %v3348, %v3886
      %v3910 = vadd.f32 %v3349, %v3889
      %v3911 = vadd.f32 %v3350, %v3894
      %v3912 = vadd.f32 %v3351, %v3897
      %v3913 = vadd.f32 %v3352, %v3902
      %3927 = vmatprep.subr.bf16.mxu0 0
      %3928 = vmatpush1.bf16.msra.mxu0 %v677
      %3929 = vmatprep.subr.bf16.mxu0 0
      %3930 = vmatpush1.bf16.msra.mxu0 %v678
      %3931 = vmatprep.subr.bf16.mxu0 0
      %3932 = vmatpush1.bf16.msra.mxu0 %v679
      %3933 = vmatprep.subr.bf16.mxu0 0
      %3934 = vmatpush1.bf16.msra.mxu0 %v680
      %3935 = vmatprep.subr.bf16.mxu0 0
      %3936 = vmatpush1.bf16.msra.mxu0 %v681
      %3937 = vmatprep.subr.bf16.mxu0 0
      %3938 = vmatpush1.bf16.msra.mxu0 %v682
      %3939 = vmatprep.subr.bf16.mxu0 0
      %3940 = vmatpush1.bf16.msra.mxu0 %v683
      %3941 = vmatprep.subr.bf16.mxu0 0
      %3942 = vmatpush1.bf16.msra.mxu0 %v684
      %3943 = vmatprep.subr.bf16.mxu0 0
      %3944 = vmatpush1.bf16.msra.mxu0 %v685
      %3945 = vmatprep.subr.bf16.mxu0 0
      %3946 = vmatpush1.bf16.msra.mxu0 %v686
      %3947 = vmatprep.subr.bf16.mxu0 0
      %3948 = vmatpush1.bf16.msra.mxu0 %v687
      %3949 = vmatprep.subr.bf16.mxu0 0
      %3950 = vmatpush1.bf16.msra.mxu0 %v688
      %3951 = vmatprep.subr.bf16.mxu0 0
      %3952 = vmatpush1.bf16.msra.mxu0 %v689
      %3953 = vmatprep.subr.bf16.mxu0 0
      %3954 = vmatpush1.bf16.msra.mxu0 0
      %3955 = vmatprep.subr.bf16.mxu0 0
      %3956 = vmatpush1.bf16.msra.mxu0 0
      %3957 = vmatprep.subr.bf16.mxu0 0
      %3958 = vmatpush1.bf16.msra.mxu0 0
      %3959 = vmatprep.mubr.bf16.mxu0 %v1610
      %3960 = vmatmul.mubr.bf16.gmra.mrb[0].mxu0 %v1583
      %v3961 = vpop.f32.mrb[0].mxu0
      %v3962 = vadd.f32 0.0, %v3961
      %v3963 = vpop.f32.mrb[0].mxu0
      %v3964 = vpop.f32.mrb[0].mxu0
      %v3965 = vadd.f32 0.0, %v3964
      %v3966 = vpop.f32.mrb[0].mxu0
      %3967 = vmatprep.mubr.bf16.mxu0 %v1613
      %3968 = vmatmul.mubr.bf16.gmra.mrb[0].mxu0 %v1585
      %v3969 = vpop.f32.mrb[0].mxu0
      %v3970 = vadd.f32 0.0, %v3969
      %v3971 = vpop.f32.mrb[0].mxu0
      %v3972 = vpop.f32.mrb[0].mxu0
      %v3973 = vadd.f32 0.0, %v3972
      %v3974 = vpop.f32.mrb[0].mxu0
      %3975 = vmatprep.mubr.bf16.mxu0 %v1616
      %3976 = vmatmul.mubr.bf16.gmra.mrb[0].mxu0 %v1587
      %v3977 = vpop.f32.mrb[0].mxu0
      %v3978 = vadd.f32 0.0, %v3977
      %v3979 = vpop.f32.mrb[0].mxu0
      %v3980 = vpop.f32.mrb[0].mxu0
      %v3981 = vadd.f32 0.0, %v3980
      %v3982 = vpop.f32.mrb[0].mxu0
      %3983 = vmatprep.mubr.bf16.mxu0 %v1619
      %3984 = vmatmul.mubr.bf16.gmra.mrb[0].mxu0 %v1589
      %v3985 = vpop.f32.mrb[0].mxu0
      %v3986 = vadd.f32 0.0, %v3985
      %v3987 = vpop.f32.mrb[0].mxu0
      %v3988 = vpop.f32.mrb[0].mxu0
      %v3989 = vpop.f32.mrb[0].mxu0
      %3990 = vdwg.mxu0
      %v3991 = vpack.c.bf16 %v3965, %v3962
      %v3992 = vpack.c.bf16 %v3973, %v3970
      %v3993 = vpack.c.bf16 %v3981, %v3978
      %v3994 = vpack.c.bf16 %v3986, %v3986
      %v3996 = vsel %vm736, %v3991, 0
      %v3999 = vsel %vm736, %v3992, 0
      %v4002 = vsel %vm736, %v3993, 0
      %v4005 = vsel %vm736, %v3994, 0
      %4007 = vmatprep.subr.bf16.mxu0 %v1713
      %4008 = vmatpush1.bf16.msra.mxu0 %v1712
      %4009 = vmatprep.subr.bf16.mxu0 %v1715
      %4010 = vmatpush1.bf16.msra.mxu0 %v1714
      %4011 = vmatprep.subr.bf16.mxu0 0
      %4012 = vmatpush1.bf16.msra.mxu0 0
      %4013 = vmatprep.subr.bf16.mxu0 0
      %4014 = vmatpush1.bf16.msra.mxu0 0
      %4015 = vmatprep.subr.bf16.mxu0 0
      %4016 = vmatpush1.bf16.msra.mxu0 0
      %4017 = vmatprep.subr.bf16.mxu0 0
      %4018 = vmatpush1.bf16.msra.mxu0 0
      %4019 = vmatprep.subr.bf16.mxu0 0
      %4020 = vmatpush1.bf16.msra.mxu0 0
      %4021 = vmatprep.subr.bf16.mxu0 0
      %4022 = vmatpush1.bf16.msra.mxu0 0
      %4023 = vmatprep.subr.bf16.mxu0 0
      %4024 = vmatpush1.bf16.msra.mxu0 0
      %4025 = vmatprep.subr.bf16.mxu0 0
      %4026 = vmatpush1.bf16.msra.mxu0 0
      %4027 = vmatprep.subr.bf16.mxu0 0
      %4028 = vmatpush1.bf16.msra.mxu0 0
      %4029 = vmatprep.subr.bf16.mxu0 0
      %4030 = vmatpush1.bf16.msra.mxu0 0
      %4031 = vmatprep.subr.bf16.mxu0 0
      %4032 = vmatpush1.bf16.msra.mxu0 0
      %4033 = vmatprep.subr.bf16.mxu0 0
      %4034 = vmatpush1.bf16.msra.mxu0 0
      %4035 = vmatprep.subr.bf16.mxu0 0
      %4036 = vmatpush1.bf16.msra.mxu0 0
      %4037 = vmatprep.subr.bf16.mxu0 0
      %4038 = vmatpush1.bf16.msra.mxu0 0
      %4039 = vmatprep.mubr.bf16.mxu0 0
      %4040 = vmatmul.mubr.bf16.gmra.mrb[0].mxu0 %v3996
      %v4041 = vpop.f32.mrb[0].mxu0
      %v4042 = vadd.f32 %v1693, %v4041
      %v4043 = vpop.f32.mrb[0].mxu0
      %v4044 = vadd.f32 %v1697, %v4043
      %v4045 = vpop.f32.mrb[0].mxu0
      %v4046 = vadd.f32 %v1693, %v4045
      %v4047 = vpop.f32.mrb[0].mxu0
      %v4048 = vadd.f32 %v1697, %v4047
      %4049 = vmatprep.mubr.bf16.mxu0 0
      %4050 = vmatmul.mubr.bf16.gmra.mrb[0].mxu0 %v3999
      %v4051 = vpop.f32.mrb[0].mxu0
      %v4052 = vadd.f32 %v1693, %v4051
      %v4053 = vpop.f32.mrb[0].mxu0
      %v4054 = vadd.f32 %v1697, %v4053
      %v4055 = vpop.f32.mrb[0].mxu0
      %v4056 = vadd.f32 %v1693, %v4055
      %v4057 = vpop.f32.mrb[0].mxu0
      %v4058 = vadd.f32 %v1697, %v4057
      %4059 = vmatprep.mubr.bf16.mxu0 0
      %4060 = vmatmul.mubr.bf16.gmra.mrb[0].mxu0 %v4002
      %v4061 = vpop.f32.mrb[0].mxu0
      %v4062 = vadd.f32 %v1693, %v4061
      %v4063 = vpop.f32.mrb[0].mxu0
      %v4064 = vadd.f32 %v1697, %v4063
      %v4065 = vpop.f32.mrb[0].mxu0
      %v4066 = vadd.f32 %v1693, %v4065
      %v4067 = vpop.f32.mrb[0].mxu0
      %v4068 = vadd.f32 %v1697, %v4067
      %4069 = vmatprep.mubr.bf16.mxu0 0
      %4070 = vmatmul.mubr.bf16.gmra.mrb[0].mxu0 %v4005
      %v4071 = vpop.f32.mrb[0].mxu0
      %v4072 = vadd.f32 %v1693, %v4071
      %v4073 = vpop.f32.mrb[0].mxu0
      %v4074 = vadd.f32 %v1697, %v4073
      %v4075 = vpop.f32.mrb[0].mxu0
      %v4076 = vpop.f32.mrb[0].mxu0
      %4077 = vdwg.mxu0
      %v4078 = vpack.c.bf16 %v4046, %v4042
      %v4079 = vpack.c.bf16 %v4048, %v4044
      %v4080 = vpack.c.bf16 %v4056, %v4052
      %v4081 = vpack.c.bf16 %v4058, %v4054
      %v4082 = vpack.c.bf16 %v4066, %v4062
      %v4083 = vpack.c.bf16 %v4068, %v4064
      %v4084 = vpack.c.bf16 %v4072, %v4072
      %v4085 = vpack.c.bf16 %v4074, %v4074
      %v4087 = vsel %vm1825, %v4078, 0
      %v4090 = vsel %vm1825, %v4080, 0
      %v4093 = vsel %vm1825, %v4082, 0
      %v4096 = vsel %vm1825, %v4084, 0
      %v4099 = vsel %vm1825, %v1472, 0
      %v4102 = vsel %vm1825, %v1474, 0
      %v4105 = vsel %vm1825, %v1476, 0
      %v4108 = vsel %vm1825, %v1478, 0
      %v4111 = vsel %vm1825, %v1480, 0
      %v4114 = vsel %vm1825, %v1482, 0
      %v4117 = vsel %vm1825, %v1484, 0
      %v4120 = vsel %vm1825, %v1486, 0
      %v4123 = vsel %vm1825, %v1488, 0
      %v4126 = vsel %vm1825, %v1490, 0
      %v4129 = vsel %vm1825, %v1492, 0
      %v4132 = vsel %vm1825, %v1494, 0
      %v4135 = vsel %vm1825, %v1496, 0
      %4137 = vmatprep.subr.bf16.mxu0 0
      %4138 = vmatpush1.bf16.xpose.msra.mxu0 %v4099
      %4139 = vmatprep.subr.bf16.mxu0 0
      %4140 = vmatpush1.bf16.xpose.msra.mxu0 %v4102
      %4141 = vmatprep.subr.bf16.mxu0 0
      %4142 = vmatpush1.bf16.xpose.msra.mxu0 %v4105
      %4143 = vmatprep.subr.bf16.mxu0 0
      %4144 = vmatpush1.bf16.xpose.msra.mxu0 %v4108
      %4145 = vmatprep.subr.bf16.mxu0 0
      %4146 = vmatpush1.bf16.xpose.msra.mxu0 %v4111
      %4147 = vmatprep.subr.bf16.mxu0 0
      %4148 = vmatpush1.bf16.xpose.msra.mxu0 %v4114
      %4149 = vmatprep.subr.bf16.mxu0 0
      %4150 = vmatpush1.bf16.xpose.msra.mxu0 %v4117
      %4151 = vmatprep.subr.bf16.mxu0 0
      %4152 = vmatpush1.bf16.xpose.msra.mxu0 %v4120
      %4153 = vmatprep.subr.bf16.mxu0 0
      %4154 = vmatpush1.bf16.xpose.msra.mxu0 %v4123
      %4155 = vmatprep.subr.bf16.mxu0 0
      %4156 = vmatpush1.bf16.xpose.msra.mxu0 %v4126
      %4157 = vmatprep.subr.bf16.mxu0 0
      %4158 = vmatpush1.bf16.xpose.msra.mxu0 %v4129
      %4159 = vmatprep.subr.bf16.mxu0 0
      %4160 = vmatpush1.bf16.xpose.msra.mxu0 %v4132
      %4161 = vmatprep.subr.bf16.mxu0 0
      %4162 = vmatpush1.bf16.xpose.msra.mxu0 %v4135
      %4163 = vmatprep.subr.bf16.mxu0 0
      %4164 = vmatpush1.bf16.xpose.msra.mxu0 0
      %4165 = vmatprep.subr.bf16.mxu0 0
      %4166 = vmatpush1.bf16.xpose.msra.mxu0 0
      %4167 = vmatprep.subr.bf16.mxu0 0
      %4168 = vmatpush1.bf16.xpose.msra.mxu0 0
      %4169 = vmatprep.mubr.bf16.mxu0 0
      %4170 = vmatmul.mubr.bf16.gmra.mrb[0].mxu0 %v4087
      %v4171 = vpop.f32.mrb[0].mxu0
      %v4172 = vadd.f32 %v1811, %v4171
      %v4173 = vpop.f32.mrb[0].mxu0
      %v4174 = vadd.f32 %v1812, %v4173
      %v4175 = vpop.f32.mrb[0].mxu0
      %v4176 = vadd.f32 %v1813, %v4175
      %v4177 = vpop.f32.mrb[0].mxu0
      %v4178 = vadd.f32 %v1814, %v4177
      %4179 = vmatprep.mubr.bf16.mxu0 0
      %4180 = vmatmul.mubr.bf16.gmra.mrb[0].mxu0 %v4090
      %v4181 = vpop.f32.mrb[0].mxu0
      %v4182 = vadd.f32 %v1815, %v4181
      %v4183 = vpop.f32.mrb[0].mxu0
      %v4184 = vadd.f32 %v1816, %v4183
      %v4185 = vpop.f32.mrb[0].mxu0
      %v4186 = vadd.f32 %v1817, %v4185
      %v4187 = vpop.f32.mrb[0].mxu0
      %v4188 = vadd.f32 %v1818, %v4187
      %4189 = vmatprep.mubr.bf16.mxu0 0
      %4190 = vmatmul.mubr.bf16.gmra.mrb[0].mxu0 %v4093
      %v4191 = vpop.f32.mrb[0].mxu0
      %v4192 = vadd.f32 %v1819, %v4191
      %v4193 = vpop.f32.mrb[0].mxu0
      %v4194 = vadd.f32 %v1820, %v4193
      %v4195 = vpop.f32.mrb[0].mxu0
      %v4196 = vadd.f32 %v1821, %v4195
      %v4197 = vpop.f32.mrb[0].mxu0
      %v4198 = vadd.f32 %v1822, %v4197
      %4199 = vmatprep.mubr.bf16.mxu0 0
      %4200 = vmatmul.mubr.bf16.gmra.mrb[0].mxu0 %v4096
      %v4201 = vpop.f32.mrb[0].mxu0
      %v4202 = vadd.f32 %v1823, %v4201
      %v4203 = vpop.f32.mrb[0].mxu0
      %v4204 = vadd.f32 %v1824, %v4203
      %v4205 = vpop.f32.mrb[0].mxu0
      %v4206 = vpop.f32.mrb[0].mxu0
      %4207 = vdwg.mxu0
      %v4208 = vsel %vm1608, %v4174, -inf
      %v4209 = vmax.f32 %v4172, %v4208
      %4210 = vmax.xlane.f32.xlu0 %v4209
      %v4211 = vpop.xlane.xlu0 %4210
      %v4212 = vsel %vm1608, %v4178, -inf
      %v4213 = vmax.f32 %v4176, %v4212
      %4214 = vmax.xlane.f32.xlu0 %v4213
      %v4215 = vpop.xlane.xlu0 %4214
      %v4216 = vsel %vm1608, %v4184, -inf
      %v4217 = vmax.f32 %v4182, %v4216
      %4218 = vmax.xlane.f32.xlu0 %v4217
      %v4219 = vpop.xlane.xlu0 %4218
      %v4220 = vsel %vm1608, %v4188, -inf
      %v4221 = vmax.f32 %v4186, %v4220
      %4222 = vmax.xlane.f32.xlu0 %v4221
      %v4223 = vpop.xlane.xlu0 %4222
      %v4224 = vsel %vm1608, %v4194, -inf
      %v4225 = vmax.f32 %v4192, %v4224
      %4226 = vmax.xlane.f32.xlu0 %v4225
      %v4227 = vpop.xlane.xlu0 %4226
      %v4228 = vsel %vm1608, %v4198, -inf
      %v4229 = vmax.f32 %v4196, %v4228
      %4230 = vmax.xlane.f32.xlu0 %v4229
      %v4231 = vpop.xlane.xlu0 %4230
      %v4232 = vsel %vm1972, %v4202, -inf
      %v4233 = vsel %vm1974, %v4204, -inf
      %v4234 = vmax.f32 %v4232, %v4233
      %4235 = vmax.xlane.f32.xlu0 %v4234
      %v4236 = vpop.xlane.xlu0 %4235
      %v4237 = vsub.f32 %v4172, %v4211
      %v4238 = vsub.f32 %v4174, %v4211
      %v4239 = vsub.f32 %v4176, %v4215
      %v4240 = vsub.f32 %v4178, %v4215
      %v4241 = vsub.f32 %v4182, %v4219
      %v4242 = vsub.f32 %v4184, %v4219
      %v4243 = vsub.f32 %v4186, %v4223
      %v4244 = vsub.f32 %v4188, %v4223
      %v4245 = vsub.f32 %v4192, %v4227
      %v4246 = vsub.f32 %v4194, %v4227
      %v4247 = vsub.f32 %v4196, %v4231
      %v4248 = vsub.f32 %v4198, %v4231
      %v4249 = vsub.f32 %v4202, %v4236
      %v4250 = vsub.f32 %v4204, %v4236
      %v4251 = vmul.f32 %v4237, 1.442695
      %v4252 = vpow.pop %v4251
      %v4253 = vmul.f32 %v4238, 1.442695
      %v4254 = vpow.pop %v4253
      %v4255 = vmul.f32 %v4239, 1.442695
      %v4256 = vpow.pop %v4255
      %v4257 = vmul.f32 %v4240, 1.442695
      %v4258 = vpow.pop %v4257
      %v4259 = vmul.f32 %v4241, 1.442695
      %v4260 = vpow.pop %v4259
      %v4261 = vmul.f32 %v4242, 1.442695
      %v4262 = vpow.pop %v4261
      %v4263 = vmul.f32 %v4243, 1.442695
      %v4264 = vpow.pop %v4263
      %v4265 = vmul.f32 %v4244, 1.442695
      %v4266 = vpow.pop %v4265
      %v4267 = vmul.f32 %v4245, 1.442695
      %v4268 = vpow.pop %v4267
      %v4269 = vmul.f32 %v4246, 1.442695
      %v4270 = vpow.pop %v4269
      %v4271 = vmul.f32 %v4247, 1.442695
      %v4272 = vpow.pop %v4271
      %v4273 = vmul.f32 %v4248, 1.442695
      %v4274 = vpow.pop %v4273
      %v4275 = vmul.f32 %v4249, 1.442695
      %v4276 = vpow.pop %v4275
      %v4277 = vmul.f32 %v4250, 1.442695
      %v4278 = vpow.pop %v4277
      %v4279 = vsel %vm1608, %v4254, 0.0
      %v4280 = vadd.f32 %v4252, %v4279
      %4281 = vadd.xlane.f32.xlu0 %v4280
      %v4282 = vpop.xlane.xlu0 %4281
      %v4283 = vsel %vm1608, %v4258, 0.0
      %v4284 = vadd.f32 %v4256, %v4283
      %4285 = vadd.xlane.f32.xlu0 %v4284
      %v4286 = vpop.xlane.xlu0 %4285
      %v4287 = vsel %vm1608, %v4262, 0.0
      %v4288 = vadd.f32 %v4260, %v4287
      %4289 = vadd.xlane.f32.xlu0 %v4288
      %v4290 = vpop.xlane.xlu0 %4289
      %v4291 = vsel %vm1608, %v4266, 0.0
      %v4292 = vadd.f32 %v4264, %v4291
      %4293 = vadd.xlane.f32.xlu0 %v4292
      %v4294 = vpop.xlane.xlu0 %4293
      %v4295 = vsel %vm1608, %v4270, 0.0
      %v4296 = vadd.f32 %v4268, %v4295
      %4297 = vadd.xlane.f32.xlu0 %v4296
      %v4298 = vpop.xlane.xlu0 %4297
      %v4299 = vsel %vm1608, %v4274, 0.0
      %v4300 = vadd.f32 %v4272, %v4299
      %4301 = vadd.xlane.f32.xlu0 %v4300
      %v4302 = vpop.xlane.xlu0 %4301
      %v4303 = vsel %vm1972, %v4276, 0.0
      %v4304 = vsel %vm1974, %v4278, 0.0
      %v4305 = vadd.f32 %v4303, %v4304
      %4306 = vadd.xlane.f32.xlu0 %v4305
      %v4307 = vpop.xlane.xlu0 %4306
      %v4308 = vrcp.pop %v4282
      %v4309 = vrcp.pop %v4286
      %v4310 = vrcp.pop %v4290
      %v4311 = vrcp.pop %v4294
      %v4312 = vrcp.pop %v4298
      %v4313 = vrcp.pop %v4302
      %v4314 = vrcp.pop %v4307
      %v4315 = vmul.f32 %v4252, %v4308
      %v4316 = vmul.f32 %v4254, %v4308
      %v4317 = vmul.f32 %v4256, %v4309
      %v4318 = vmul.f32 %v4258, %v4309
      %v4319 = vmul.f32 %v4260, %v4310
      %v4320 = vmul.f32 %v4262, %v4310
      %v4321 = vmul.f32 %v4264, %v4311
      %v4322 = vmul.f32 %v4266, %v4311
      %v4323 = vmul.f32 %v4268, %v4312
      %v4324 = vmul.f32 %v4270, %v4312
      %v4325 = vmul.f32 %v4272, %v4313
      %v4326 = vmul.f32 %v4274, %v4313
      %v4327 = vmul.f32 %v4276, %v4314
      %v4328 = vmul.f32 %v4278, %v4314
      %v4329 = vpack.c.bf16 %v4317, %v4315
      %v4330 = vpack.c.bf16 %v4318, %v4316
      %v4331 = vpack.c.bf16 %v4321, %v4319
      %v4332 = vpack.c.bf16 %v4322, %v4320
      %v4333 = vpack.c.bf16 %v4325, %v4323
      %v4334 = vpack.c.bf16 %v4326, %v4324
      %v4335 = vpack.c.bf16 %v4327, %v4327
      %v4336 = vpack.c.bf16 %v4328, %v4328
      %v4338 = vsel %vm1608, %v4330, 0
      %v4341 = vsel %vm1608, %v4332, 0
      %v4344 = vsel %vm1608, %v4334, 0
      %v4347 = vsel %vm1608, %v4336, 0
      %4349 = vmatprep.subr.bf16.mxu0 0
      %4350 = vmatpush1.bf16.msra.mxu0 %v1472
      %4351 = vmatprep.subr.bf16.mxu0 0
      %4352 = vmatpush1.bf16.msra.mxu0 %v1474
      %4353 = vmatprep.subr.bf16.mxu0 0
      %4354 = vmatpush1.bf16.msra.mxu0 %v1476
      %4355 = vmatprep.subr.bf16.mxu0 0
      %4356 = vmatpush1.bf16.msra.mxu0 %v1478
      %4357 = vmatprep.subr.bf16.mxu0 0
      %4358 = vmatpush1.bf16.msra.mxu0 %v1480
      %4359 = vmatprep.subr.bf16.mxu0 0
      %4360 = vmatpush1.bf16.msra.mxu0 %v1482
      %4361 = vmatprep.subr.bf16.mxu0 0
      %4362 = vmatpush1.bf16.msra.mxu0 %v1484
      %4363 = vmatprep.subr.bf16.mxu0 0
      %4364 = vmatpush1.bf16.msra.mxu0 %v1486
      %4365 = vmatprep.subr.bf16.mxu0 0
      %4366 = vmatpush1.bf16.msra.mxu0 %v1488
      %4367 = vmatprep.subr.bf16.mxu0 0
      %4368 = vmatpush1.bf16.msra.mxu0 %v1490
      %4369 = vmatprep.subr.bf16.mxu0 0
      %4370 = vmatpush1.bf16.msra.mxu0 %v1492
      %4371 = vmatprep.subr.bf16.mxu0 0
      %4372 = vmatpush1.bf16.msra.mxu0 %v1494
      %4373 = vmatprep.subr.bf16.mxu0 0
      %4374 = vmatpush1.bf16.msra.mxu0 %v1496
      %4375 = vmatprep.subr.bf16.mxu0 0
      %4376 = vmatpush1.bf16.msra.mxu0 0
      %4377 = vmatprep.subr.bf16.mxu0 0
      %4378 = vmatpush1.bf16.msra.mxu0 0
      %4379 = vmatprep.subr.bf16.mxu0 0
      %4380 = vmatpush1.bf16.msra.mxu0 0
      %4381 = vmatprep.mubr.bf16.mxu0 %v4338
      %4382 = vmatmul.mubr.bf16.gmra.mrb[0].mxu0 %v4329
      %v4383 = vpop.f32.mrb[0].mxu0
      %v4384 = vadd.f32 0.0, %v4383
      %v4385 = vpop.f32.mrb[0].mxu0
      %v4386 = vpop.f32.mrb[0].mxu0
      %v4387 = vadd.f32 0.0, %v4386
      %v4388 = vpop.f32.mrb[0].mxu0
      %4389 = vmatprep.mubr.bf16.mxu0 %v4341
      %4390 = vmatmul.mubr.bf16.gmra.mrb[0].mxu0 %v4331
      %v4391 = vpop.f32.mrb[0].mxu0
      %v4392 = vadd.f32 0.0, %v4391
      %v4393 = vpop.f32.mrb[0].mxu0
      %v4394 = vpop.f32.mrb[0].mxu0
      %v4395 = vadd.f32 0.0, %v4394
      %v4396 = vpop.f32.mrb[0].mxu0
      %4397 = vmatprep.mubr.bf16.mxu0 %v4344
      %4398 = vmatmul.mubr.bf16.gmra.mrb[0].mxu0 %v4333
      %v4399 = vpop.f32.mrb[0].mxu0
      %v4400 = vadd.f32 0.0, %v4399
      %v4401 = vpop.f32.mrb[0].mxu0
      %v4402 = vpop.f32.mrb[0].mxu0
      %v4403 = vadd.f32 0.0, %v4402
      %v4404 = vpop.f32.mrb[0].mxu0
      %4405 = vmatprep.mubr.bf16.mxu0 %v4347
      %4406 = vmatmul.mubr.bf16.gmra.mrb[0].mxu0 %v4335
      %v4407 = vpop.f32.mrb[0].mxu0
      %v4408 = vadd.f32 0.0, %v4407
      %v4409 = vpop.f32.mrb[0].mxu0
      %v4410 = vpop.f32.mrb[0].mxu0
      %v4411 = vpop.f32.mrb[0].mxu0
      %4412 = vdwg.mxu0
      %v4413 = vadd.f32 %v4384, 3.0
      %v4414 = vadd.f32 %v4387, 3.0
      %v4415 = vadd.f32 %v4392, 3.0
      %v4416 = vadd.f32 %v4395, 3.0
      %v4417 = vadd.f32 %v4400, 3.0
      %v4418 = vadd.f32 %v4403, 3.0
      %v4419 = vadd.f32 %v4408, 3.0
      %v4420 = vmax.f32 %v4413, 0.0
      %v4421 = vmax.f32 %v4414, 0.0
      %v4422 = vmax.f32 %v4415, 0.0
      %v4423 = vmax.f32 %v4416, 0.0
      %v4424 = vmax.f32 %v4417, 0.0
      %v4425 = vmax.f32 %v4418, 0.0
      %v4426 = vmax.f32 %v4419, 0.0
      %v4427 = vmin.f32 %v4420, 6.0
      %v4428 = vmin.f32 %v4421, 6.0
      %v4429 = vmin.f32 %v4422, 6.0
      %v4430 = vmin.f32 %v4423, 6.0
      %v4431 = vmin.f32 %v4424, 6.0
      %v4432 = vmin.f32 %v4425, 6.0
      %v4433 = vmin.f32 %v4426, 6.0
      %v4434 = vmul.f32 %v4384, %v4427
      %v4435 = vmul.f32 %v4387, %v4428
      %v4436 = vmul.f32 %v4392, %v4429
      %v4437 = vmul.f32 %v4395, %v4430
      %v4438 = vmul.f32 %v4400, %v4431
      %v4439 = vmul.f32 %v4403, %v4432
      %v4440 = vmul.f32 %v4408, %v4433
      %v4441 = vmul.f32 %v4434, 0.16666667
      %v4442 = vmul.f32 %v4435, 0.16666667
      %v4443 = vmul.f32 %v4436, 0.16666667
      %v4444 = vmul.f32 %v4437, 0.16666667
      %v4445 = vmul.f32 %v4438, 0.16666667
      %v4446 = vmul.f32 %v4439, 0.16666667
      %v4447 = vmul.f32 %v4440, 0.16666667
      %v4448 = vpack.c.bf16 %v4442, %v4441
      %v4449 = vpack.c.bf16 %v4444, %v4443
      %v4450 = vpack.c.bf16 %v4446, %v4445
      %v4451 = vpack.c.bf16 %v4447, %v4447
      %s4452 = scalar_lea.vmem %s7, 128
      %v4453 = vld [vmem:[%s4452] sm:$0xf]
      %v4454 = vld [vmem:[%s4452 + $0x4] sm:$0xf]
      %v4455 = vld [vmem:[%s4452 + $0x8] sm:$0xf]
      %v4456 = vld [vmem:[%s4452 + $0xc] sm:$0xf]
      %v4457 = vld [vmem:[%s4452 + $0x10] sm:$0xf]
      %v4458 = vld [vmem:[%s4452 + $0x14] sm:$0xf]
      %v4459 = vld [vmem:[%s4452 + $0x18] sm:$0xf]
      %v4460 = vld [vmem:[%s4452 + $0x1c] sm:$0xf]
      %v4469 = vunpack.c.l.b16 %v4453
      %v4470 = vunpack.c.l.b16 %v4454
      %v4471 = vunpack.c.l.b16 %v4455
      %v4472 = vunpack.c.l.b16 %v4456
      %v4473 = vunpack.c.l.b16 %v4457
      %v4474 = vunpack.c.l.b16 %v4458
      %v4475 = vunpack.c.l.b16 %v4459
      %v4476 = vunpack.c.l.b16 %v4460
      %v4477 = vpack.c.b16 %v4470, %v4469
      %v4478 = vpack.c.b16 %v4472, %v4471
      %v4479 = vpack.c.b16 %v4474, %v4473
      %v4480 = vpack.c.b16 %v4476, %v4475
      %v4486 = vsel %vm1825, %v4448, 0
      %v4489 = vsel %vm1825, %v4449, 0
      %v4492 = vsel %vm1825, %v4450, 0
      %v4495 = vsel %vm1825, %v4451, 0
      %4497 = vmatprep.subr.bf16.mxu0 0
      %4498 = vmatpush1.bf16.msra.mxu0 %v4477
      %4499 = vmatprep.subr.bf16.mxu0 0
      %4500 = vmatpush1.bf16.msra.mxu0 %v4478
      %4501 = vmatprep.subr.bf16.mxu0 0
      %4502 = vmatpush1.bf16.msra.mxu0 %v4479
      %4503 = vmatprep.subr.bf16.mxu0 0
      %4504 = vmatpush1.bf16.msra.mxu0 %v4480
      %4505 = vmatprep.subr.bf16.mxu0 0
      %4506 = vmatpush1.bf16.msra.mxu0 0
      %4507 = vmatprep.subr.bf16.mxu0 0
      %4508 = vmatpush1.bf16.msra.mxu0 0
      %4509 = vmatprep.subr.bf16.mxu0 0
      %4510 = vmatpush1.bf16.msra.mxu0 0
      %4511 = vmatprep.subr.bf16.mxu0 0
      %4512 = vmatpush1.bf16.msra.mxu0 0
      %4513 = vmatprep.subr.bf16.mxu0 0
      %4514 = vmatpush1.bf16.msra.mxu0 0
      %4515 = vmatprep.subr.bf16.mxu0 0
      %4516 = vmatpush1.bf16.msra.mxu0 0
      %4517 = vmatprep.subr.bf16.mxu0 0
      %4518 = vmatpush1.bf16.msra.mxu0 0
      %4519 = vmatprep.subr.bf16.mxu0 0
      %4520 = vmatpush1.bf16.msra.mxu0 0
      %4521 = vmatprep.subr.bf16.mxu0 0
      %4522 = vmatpush1.bf16.msra.mxu0 0
      %4523 = vmatprep.subr.bf16.mxu0 0
      %4524 = vmatpush1.bf16.msra.mxu0 0
      %4525 = vmatprep.subr.bf16.mxu0 0
      %4526 = vmatpush1.bf16.msra.mxu0 0
      %4527 = vmatprep.subr.bf16.mxu0 0
      %4528 = vmatpush1.bf16.msra.mxu0 0
      %4529 = vmatprep.mubr.bf16.mxu0 0
      %4530 = vmatmul.mubr.bf16.gmra.mrb[0].mxu0 %v4486
      %v4531 = vpop.f32.mrb[0].mxu0
      %v4532 = vadd.f32 0.0, %v4531
      %v4533 = vpop.f32.mrb[0].mxu0
      %v4534 = vpop.f32.mrb[0].mxu0
      %v4535 = vadd.f32 0.0, %v4534
      %v4536 = vpop.f32.mrb[0].mxu0
      %4537 = vmatprep.mubr.bf16.mxu0 0
      %4538 = vmatmul.mubr.bf16.gmra.mrb[0].mxu0 %v4489
      %v4539 = vpop.f32.mrb[0].mxu0
      %v4540 = vadd.f32 0.0, %v4539
      %v4541 = vpop.f32.mrb[0].mxu0
      %v4542 = vpop.f32.mrb[0].mxu0
      %v4543 = vadd.f32 0.0, %v4542
      %v4544 = vpop.f32.mrb[0].mxu0
      %4545 = vmatprep.mubr.bf16.mxu0 0
      %4546 = vmatmul.mubr.bf16.gmra.mrb[0].mxu0 %v4492
      %v4547 = vpop.f32.mrb[0].mxu0
      %v4548 = vadd.f32 0.0, %v4547
      %v4549 = vpop.f32.mrb[0].mxu0
      %v4550 = vpop.f32.mrb[0].mxu0
      %v4551 = vadd.f32 0.0, %v4550
      %v4552 = vpop.f32.mrb[0].mxu0
      %4553 = vmatprep.mubr.bf16.mxu0 0
      %4554 = vmatmul.mubr.bf16.gmra.mrb[0].mxu0 %v4495
      %v4555 = vpop.f32.mrb[0].mxu0
      %v4556 = vadd.f32 0.0, %v4555
      %v4557 = vpop.f32.mrb[0].mxu0
      %v4558 = vpop.f32.mrb[0].mxu0
      %v4559 = vpop.f32.mrb[0].mxu0
      %4560 = vdwg.mxu0
      %v4561 = vadd.f32 %v3907, %v4532
      %v4562 = vadd.f32 %v3908, %v4535
      %v4563 = vadd.f32 %v3909, %v4540
      %v4564 = vadd.f32 %v3910, %v4543
      %v4565 = vadd.f32 %v3911, %v4548
      %v4566 = vadd.f32 %v3912, %v4551
      %v4567 = vadd.f32 %v3913, %v4556
      %4572 = vrot.lane.b32.xlu0 %v4078, 64
      %v4573 = vpop.permute.xlu0 %4572
      %4574 = vrot.lane.b32.xlu0 %v4080, 64
      %v4575 = vpop.permute.xlu0 %4574
      %4576 = vrot.lane.b32.xlu0 %v4082, 64
      %v4577 = vpop.permute.xlu0 %4576
      %4578 = vrot.lane.b32.xlu0 %v4084, 64
      %v4579 = vpop.permute.xlu0 %4578
      %4593 = vrot.lane.b32.xlu0 %v1472, 64
      %v4594 = vpop.permute.xlu0 %4593
      %4595 = vrot.lane.b32.xlu0 %v1474, 64
      %v4596 = vpop.permute.xlu0 %4595
      %4597 = vrot.lane.b32.xlu0 %v1476, 64
      %v4598 = vpop.permute.xlu0 %4597
      %4599 = vrot.lane.b32.xlu0 %v1478, 64
      %v4600 = vpop.permute.xlu0 %4599
      %4601 = vrot.lane.b32.xlu0 %v1480, 64
      %v4602 = vpop.permute.xlu0 %4601
      %4603 = vrot.lane.b32.xlu0 %v1482, 64
      %v4604 = vpop.permute.xlu0 %4603
      %4605 = vrot.lane.b32.xlu0 %v1484, 64
      %v4606 = vpop.permute.xlu0 %4605
      %4607 = vrot.lane.b32.xlu0 %v1486, 64
      %v4608 = vpop.permute.xlu0 %4607
      %4609 = vrot.lane.b32.xlu0 %v1488, 64
      %v4610 = vpop.permute.xlu0 %4609
      %4611 = vrot.lane.b32.xlu0 %v1490, 64
      %v4612 = vpop.permute.xlu0 %4611
      %4613 = vrot.lane.b32.xlu0 %v1492, 64
      %v4614 = vpop.permute.xlu0 %4613
      %4615 = vrot.lane.b32.xlu0 %v1494, 64
      %v4616 = vpop.permute.xlu0 %4615
      %4617 = vrot.lane.b32.xlu0 %v1496, 64
      %v4618 = vpop.permute.xlu0 %4617
      %v4620 = vsel %vm1825, %v4573, 0
      %v4623 = vsel %vm1825, %v4575, 0
      %v4626 = vsel %vm1825, %v4577, 0
      %v4629 = vsel %vm1825, %v4579, 0
      %v4632 = vsel %vm1825, %v4594, 0
      %v4635 = vsel %vm1825, %v4596, 0
      %v4638 = vsel %vm1825, %v4598, 0
      %v4641 = vsel %vm1825, %v4600, 0
      %v4644 = vsel %vm1825, %v4602, 0
      %v4647 = vsel %vm1825, %v4604, 0
      %v4650 = vsel %vm1825, %v4606, 0
      %v4653 = vsel %vm1825, %v4608, 0
      %v4656 = vsel %vm1825, %v4610, 0
      %v4659 = vsel %vm1825, %v4612, 0
      %v4662 = vsel %vm1825, %v4614, 0
      %v4665 = vsel %vm1825, %v4616, 0
      %v4668 = vsel %vm1825, %v4618, 0
      %4670 = vmatprep.subr.bf16.mxu0 0
      %4671 = vmatpush1.bf16.xpose.msra.mxu0 %v4632
      %4672 = vmatprep.subr.bf16.mxu0 0
      %4673 = vmatpush1.bf16.xpose.msra.mxu0 %v4635
      %4674 = vmatprep.subr.bf16.mxu0 0
      %4675 = vmatpush1.bf16.xpose.msra.mxu0 %v4638
      %4676 = vmatprep.subr.bf16.mxu0 0
      %4677 = vmatpush1.bf16.xpose.msra.mxu0 %v4641
      %4678 = vmatprep.subr.bf16.mxu0 0
      %4679 = vmatpush1.bf16.xpose.msra.mxu0 %v4644
      %4680 = vmatprep.subr.bf16.mxu0 0
      %4681 = vmatpush1.bf16.xpose.msra.mxu0 %v4647
      %4682 = vmatprep.subr.bf16.mxu0 0
      %4683 = vmatpush1.bf16.xpose.msra.mxu0 %v4650
      %4684 = vmatprep.subr.bf16.mxu0 0
      %4685 = vmatpush1.bf16.xpose.msra.mxu0 %v4653
      %4686 = vmatprep.subr.bf16.mxu0 0
      %4687 = vmatpush1.bf16.xpose.msra.mxu0 %v4656
      %4688 = vmatprep.subr.bf16.mxu0 0
      %4689 = vmatpush1.bf16.xpose.msra.mxu0 %v4659
      %4690 = vmatprep.subr.bf16.mxu0 0
      %4691 = vmatpush1.bf16.xpose.msra.mxu0 %v4662
      %4692 = vmatprep.subr.bf16.mxu0 0
      %4693 = vmatpush1.bf16.xpose.msra.mxu0 %v4665
      %4694 = vmatprep.subr.bf16.mxu0 0
      %4695 = vmatpush1.bf16.xpose.msra.mxu0 %v4668
      %4696 = vmatprep.subr.bf16.mxu0 0
      %4697 = vmatpush1.bf16.xpose.msra.mxu0 0
      %4698 = vmatprep.subr.bf16.mxu0 0
      %4699 = vmatpush1.bf16.xpose.msra.mxu0 0
      %4700 = vmatprep.subr.bf16.mxu0 0
      %4701 = vmatpush1.bf16.xpose.msra.mxu0 0
      %4702 = vmatprep.mubr.bf16.mxu0 0
      %4703 = vmatmul.mubr.bf16.gmra.mrb[0].mxu0 %v4620
      %v4704 = vpop.f32.mrb[0].mxu0
      %v4705 = vadd.f32 %v2203, %v4704
      %v4706 = vpop.f32.mrb[0].mxu0
      %v4707 = vadd.f32 %v2204, %v4706
      %v4708 = vpop.f32.mrb[0].mxu0
      %v4709 = vadd.f32 %v2205, %v4708
      %v4710 = vpop.f32.mrb[0].mxu0
      %v4711 = vadd.f32 %v2206, %v4710
      %4712 = vmatprep.mubr.bf16.mxu0 0
      %4713 = vmatmul.mubr.bf16.gmra.mrb[0].mxu0 %v4623
      %v4714 = vpop.f32.mrb[0].mxu0
      %v4715 = vadd.f32 %v2207, %v4714
      %v4716 = vpop.f32.mrb[0].mxu0
      %v4717 = vadd.f32 %v2208, %v4716
      %v4718 = vpop.f32.mrb[0].mxu0
      %v4719 = vadd.f32 %v2209, %v4718
      %v4720 = vpop.f32.mrb[0].mxu0
      %v4721 = vadd.f32 %v2210, %v4720
      %4722 = vmatprep.mubr.bf16.mxu0 0
      %4723 = vmatmul.mubr.bf16.gmra.mrb[0].mxu0 %v4626
      %v4724 = vpop.f32.mrb[0].mxu0
      %v4725 = vadd.f32 %v2211, %v4724
      %v4726 = vpop.f32.mrb[0].mxu0
      %v4727 = vadd.f32 %v2212, %v4726
      %v4728 = vpop.f32.mrb[0].mxu0
      %v4729 = vadd.f32 %v2213, %v4728
      %v4730 = vpop.f32.mrb[0].mxu0
      %v4731 = vadd.f32 %v2214, %v4730
      %4732 = vmatprep.mubr.bf16.mxu0 0
      %4733 = vmatmul.mubr.bf16.gmra.mrb[0].mxu0 %v4629
      %v4734 = vpop.f32.mrb[0].mxu0
      %v4735 = vadd.f32 %v2215, %v4734
      %v4736 = vpop.f32.mrb[0].mxu0
      %v4737 = vadd.f32 %v2216, %v4736
      %v4738 = vpop.f32.mrb[0].mxu0
      %v4739 = vpop.f32.mrb[0].mxu0
      %4740 = vdwg.mxu0
      %v4741 = vsel %vm1608, %v4707, -inf
      %v4742 = vmax.f32 %v4705, %v4741
      %4743 = vmax.xlane.f32.xlu0 %v4742
      %v4744 = vpop.xlane.xlu0 %4743
      %v4745 = vsel %vm1608, %v4711, -inf
      %v4746 = vmax.f32 %v4709, %v4745
      %4747 = vmax.xlane.f32.xlu0 %v4746
      %v4748 = vpop.xlane.xlu0 %4747
      %v4749 = vsel %vm1608, %v4717, -inf
      %v4750 = vmax.f32 %v4715, %v4749
      %4751 = vmax.xlane.f32.xlu0 %v4750
      %v4752 = vpop.xlane.xlu0 %4751
      %v4753 = vsel %vm1608, %v4721, -inf
      %v4754 = vmax.f32 %v4719, %v4753
      %4755 = vmax.xlane.f32.xlu0 %v4754
      %v4756 = vpop.xlane.xlu0 %4755
      %v4757 = vsel %vm1608, %v4727, -inf
      %v4758 = vmax.f32 %v4725, %v4757
      %4759 = vmax.xlane.f32.xlu0 %v4758
      %v4760 = vpop.xlane.xlu0 %4759
      %v4761 = vsel %vm1608, %v4731, -inf
      %v4762 = vmax.f32 %v4729, %v4761
      %4763 = vmax.xlane.f32.xlu0 %v4762
      %v4764 = vpop.xlane.xlu0 %4763
      %v4765 = vsel %vm1972, %v4735, -inf
      %v4766 = vsel %vm1974, %v4737, -inf
      %v4767 = vmax.f32 %v4765, %v4766
      %4768 = vmax.xlane.f32.xlu0 %v4767
      %v4769 = vpop.xlane.xlu0 %4768
      %v4770 = vsub.f32 %v4705, %v4744
      %v4771 = vsub.f32 %v4707, %v4744
      %v4772 = vsub.f32 %v4709, %v4748
      %v4773 = vsub.f32 %v4711, %v4748
      %v4774 = vsub.f32 %v4715, %v4752
      %v4775 = vsub.f32 %v4717, %v4752
      %v4776 = vsub.f32 %v4719, %v4756
      %v4777 = vsub.f32 %v4721, %v4756
      %v4778 = vsub.f32 %v4725, %v4760
      %v4779 = vsub.f32 %v4727, %v4760
      %v4780 = vsub.f32 %v4729, %v4764
      %v4781 = vsub.f32 %v4731, %v4764
      %v4782 = vsub.f32 %v4735, %v4769
      %v4783 = vsub.f32 %v4737, %v4769
      %v4784 = vmul.f32 %v4770, 1.442695
      %v4785 = vpow.pop %v4784
      %v4786 = vmul.f32 %v4771, 1.442695
      %v4787 = vpow.pop %v4786
      %v4788 = vmul.f32 %v4772, 1.442695
      %v4789 = vpow.pop %v4788
      %v4790 = vmul.f32 %v4773, 1.442695
      %v4791 = vpow.pop %v4790
      %v4792 = vmul.f32 %v4774, 1.442695
      %v4793 = vpow.pop %v4792
      %v4794 = vmul.f32 %v4775, 1.442695
      %v4795 = vpow.pop %v4794
      %v4796 = vmul.f32 %v4776, 1.442695
      %v4797 = vpow.pop %v4796
      %v4798 = vmul.f32 %v4777, 1.442695
      %v4799 = vpow.pop %v4798
      %v4800 = vmul.f32 %v4778, 1.442695
      %v4801 = vpow.pop %v4800
      %v4802 = vmul.f32 %v4779, 1.442695
      %v4803 = vpow.pop %v4802
      %v4804 = vmul.f32 %v4780, 1.442695
      %v4805 = vpow.pop %v4804
      %v4806 = vmul.f32 %v4781, 1.442695
      %v4807 = vpow.pop %v4806
      %v4808 = vmul.f32 %v4782, 1.442695
      %v4809 = vpow.pop %v4808
      %v4810 = vmul.f32 %v4783, 1.442695
      %v4811 = vpow.pop %v4810
      %v4812 = vsel %vm1608, %v4787, 0.0
      %v4813 = vadd.f32 %v4785, %v4812
      %4814 = vadd.xlane.f32.xlu0 %v4813
      %v4815 = vpop.xlane.xlu0 %4814
      %v4816 = vsel %vm1608, %v4791, 0.0
      %v4817 = vadd.f32 %v4789, %v4816
      %4818 = vadd.xlane.f32.xlu0 %v4817
      %v4819 = vpop.xlane.xlu0 %4818
      %v4820 = vsel %vm1608, %v4795, 0.0
      %v4821 = vadd.f32 %v4793, %v4820
      %4822 = vadd.xlane.f32.xlu0 %v4821
      %v4823 = vpop.xlane.xlu0 %4822
      %v4824 = vsel %vm1608, %v4799, 0.0
      %v4825 = vadd.f32 %v4797, %v4824
      %4826 = vadd.xlane.f32.xlu0 %v4825
      %v4827 = vpop.xlane.xlu0 %4826
      %v4828 = vsel %vm1608, %v4803, 0.0
      %v4829 = vadd.f32 %v4801, %v4828
      %4830 = vadd.xlane.f32.xlu0 %v4829
      %v4831 = vpop.xlane.xlu0 %4830
      %v4832 = vsel %vm1608, %v4807, 0.0
      %v4833 = vadd.f32 %v4805, %v4832
      %4834 = vadd.xlane.f32.xlu0 %v4833
      %v4835 = vpop.xlane.xlu0 %4834
      %v4836 = vsel %vm1972, %v4809, 0.0
      %v4837 = vsel %vm1974, %v4811, 0.0
      %v4838 = vadd.f32 %v4836, %v4837
      %4839 = vadd.xlane.f32.xlu0 %v4838
      %v4840 = vpop.xlane.xlu0 %4839
      %v4841 = vrcp.pop %v4815
      %v4842 = vrcp.pop %v4819
      %v4843 = vrcp.pop %v4823
      %v4844 = vrcp.pop %v4827
      %v4845 = vrcp.pop %v4831
      %v4846 = vrcp.pop %v4835
      %v4847 = vrcp.pop %v4840
      %v4848 = vmul.f32 %v4785, %v4841
      %v4849 = vmul.f32 %v4787, %v4841
      %v4850 = vmul.f32 %v4789, %v4842
      %v4851 = vmul.f32 %v4791, %v4842
      %v4852 = vmul.f32 %v4793, %v4843
      %v4853 = vmul.f32 %v4795, %v4843
      %v4854 = vmul.f32 %v4797, %v4844
      %v4855 = vmul.f32 %v4799, %v4844
      %v4856 = vmul.f32 %v4801, %v4845
      %v4857 = vmul.f32 %v4803, %v4845
      %v4858 = vmul.f32 %v4805, %v4846
      %v4859 = vmul.f32 %v4807, %v4846
      %v4860 = vmul.f32 %v4809, %v4847
      %v4861 = vmul.f32 %v4811, %v4847
      %v4862 = vpack.c.bf16 %v4850, %v4848
      %v4863 = vpack.c.bf16 %v4851, %v4849
      %v4864 = vpack.c.bf16 %v4854, %v4852
      %v4865 = vpack.c.bf16 %v4855, %v4853
      %v4866 = vpack.c.bf16 %v4858, %v4856
      %v4867 = vpack.c.bf16 %v4859, %v4857
      %v4868 = vpack.c.bf16 %v4860, %v4860
      %v4869 = vpack.c.bf16 %v4861, %v4861
      %v4884 = vsel %vm1608, %v4863, 0
      %v4887 = vsel %vm1608, %v4865, 0
      %v4890 = vsel %vm1608, %v4867, 0
      %v4893 = vsel %vm1608, %v4869, 0
      %4895 = vmatprep.subr.bf16.mxu0 0
      %4896 = vmatpush1.bf16.msra.mxu0 %v4594
      %4897 = vmatprep.subr.bf16.mxu0 0
      %4898 = vmatpush1.bf16.msra.mxu0 %v4596
      %4899 = vmatprep.subr.bf16.mxu0 0
      %4900 = vmatpush1.bf16.msra.mxu0 %v4598
      %4901 = vmatprep.subr.bf16.mxu0 0
      %4902 = vmatpush1.bf16.msra.mxu0 %v4600
      %4903 = vmatprep.subr.bf16.mxu0 0
      %4904 = vmatpush1.bf16.msra.mxu0 %v4602
      %4905 = vmatprep.subr.bf16.mxu0 0
      %4906 = vmatpush1.bf16.msra.mxu0 %v4604
      %4907 = vmatprep.subr.bf16.mxu0 0
      %4908 = vmatpush1.bf16.msra.mxu0 %v4606
      %4909 = vmatprep.subr.bf16.mxu0 0
      %4910 = vmatpush1.bf16.msra.mxu0 %v4608
      %4911 = vmatprep.subr.bf16.mxu0 0
      %4912 = vmatpush1.bf16.msra.mxu0 %v4610
      %4913 = vmatprep.subr.bf16.mxu0 0
      %4914 = vmatpush1.bf16.msra.mxu0 %v4612
      %4915 = vmatprep.subr.bf16.mxu0 0
      %4916 = vmatpush1.bf16.msra.mxu0 %v4614
      %4917 = vmatprep.subr.bf16.mxu0 0
      %4918 = vmatpush1.bf16.msra.mxu0 %v4616
      %4919 = vmatprep.subr.bf16.mxu0 0
      %4920 = vmatpush1.bf16.msra.mxu0 %v4618
      %4921 = vmatprep.subr.bf16.mxu0 0
      %4922 = vmatpush1.bf16.msra.mxu0 0
      %4923 = vmatprep.subr.bf16.mxu0 0
      %4924 = vmatpush1.bf16.msra.mxu0 0
      %4925 = vmatprep.subr.bf16.mxu0 0
      %4926 = vmatpush1.bf16.msra.mxu0 0
      %4927 = vmatprep.mubr.bf16.mxu0 %v4884
      %4928 = vmatmul.mubr.bf16.gmra.mrb[0].mxu0 %v4862
      %v4929 = vpop.f32.mrb[0].mxu0
      %v4930 = vadd.f32 0.0, %v4929
      %v4931 = vpop.f32.mrb[0].mxu0
      %v4932 = vpop.f32.mrb[0].mxu0
      %v4933 = vadd.f32 0.0, %v4932
      %v4934 = vpop.f32.mrb[0].mxu0
      %4935 = vmatprep.mubr.bf16.mxu0 %v4887
      %4936 = vmatmul.mubr.bf16.gmra.mrb[0].mxu0 %v4864
      %v4937 = vpop.f32.mrb[0].mxu0
      %v4938 = vadd.f32 0.0, %v4937
      %v4939 = vpop.f32.mrb[0].mxu0
      %v4940 = vpop.f32.mrb[0].mxu0
      %v4941 = vadd.f32 0.0, %v4940
      %v4942 = vpop.f32.mrb[0].mxu0
      %4943 = vmatprep.mubr.bf16.mxu0 %v4890
      %4944 = vmatmul.mubr.bf16.gmra.mrb[0].mxu0 %v4866
      %v4945 = vpop.f32.mrb[0].mxu0
      %v4946 = vadd.f32 0.0, %v4945
      %v4947 = vpop.f32.mrb[0].mxu0
      %v4948 = vpop.f32.mrb[0].mxu0
      %v4949 = vadd.f32 0.0, %v4948
      %v4950 = vpop.f32.mrb[0].mxu0
      %4951 = vmatprep.mubr.bf16.mxu0 %v4893
      %4952 = vmatmul.mubr.bf16.gmra.mrb[0].mxu0 %v4868
      %v4953 = vpop.f32.mrb[0].mxu0
      %v4954 = vadd.f32 0.0, %v4953
      %v4955 = vpop.f32.mrb[0].mxu0
      %v4956 = vpop.f32.mrb[0].mxu0
      %v4957 = vpop.f32.mrb[0].mxu0
      %4958 = vdwg.mxu0
      %v4959 = vadd.f32 %v4930, 3.0
      %v4960 = vadd.f32 %v4933, 3.0
      %v4961 = vadd.f32 %v4938, 3.0
      %v4962 = vadd.f32 %v4941, 3.0
      %v4963 = vadd.f32 %v4946, 3.0
      %v4964 = vadd.f32 %v4949, 3.0
      %v4965 = vadd.f32 %v4954, 3.0
      %v4966 = vmax.f32 %v4959, 0.0
      %v4967 = vmax.f32 %v4960, 0.0
      %v4968 = vmax.f32 %v4961, 0.0
      %v4969 = vmax.f32 %v4962, 0.0
      %v4970 = vmax.f32 %v4963, 0.0
      %v4971 = vmax.f32 %v4964, 0.0
      %v4972 = vmax.f32 %v4965, 0.0
      %v4973 = vmin.f32 %v4966, 6.0
      %v4974 = vmin.f32 %v4967, 6.0
      %v4975 = vmin.f32 %v4968, 6.0
      %v4976 = vmin.f32 %v4969, 6.0
      %v4977 = vmin.f32 %v4970, 6.0
      %v4978 = vmin.f32 %v4971, 6.0
      %v4979 = vmin.f32 %v4972, 6.0
      %v4980 = vmul.f32 %v4930, %v4973
      %v4981 = vmul.f32 %v4933, %v4974
      %v4982 = vmul.f32 %v4938, %v4975
      %v4983 = vmul.f32 %v4941, %v4976
      %v4984 = vmul.f32 %v4946, %v4977
      %v4985 = vmul.f32 %v4949, %v4978
      %v4986 = vmul.f32 %v4954, %v4979
      %v4987 = vmul.f32 %v4980, 0.16666667
      %v4988 = vmul.f32 %v4981, 0.16666667
      %v4989 = vmul.f32 %v4982, 0.16666667
      %v4990 = vmul.f32 %v4983, 0.16666667
      %v4991 = vmul.f32 %v4984, 0.16666667
      %v4992 = vmul.f32 %v4985, 0.16666667
      %v4993 = vmul.f32 %v4986, 0.16666667
      %v4994 = vpack.c.bf16 %v4988, %v4987
      %v4995 = vpack.c.bf16 %v4990, %v4989
      %v4996 = vpack.c.bf16 %v4992, %v4991
      %v4997 = vpack.c.bf16 %v4993, %v4993
      %s4998 = scalar_lea.vmem %s7, 160
      %v4999 = vld [vmem:[%s4998] sm:$0xf]
      %v5000 = vld [vmem:[%s4998 + $0x4] sm:$0xf]
      %v5001 = vld [vmem:[%s4998 + $0x8] sm:$0xf]
      %v5002 = vld [vmem:[%s4998 + $0xc] sm:$0xf]
      %v5003 = vld [vmem:[%s4998 + $0x10] sm:$0xf]
      %v5004 = vld [vmem:[%s4998 + $0x14] sm:$0xf]
      %v5005 = vld [vmem:[%s4998 + $0x18] sm:$0xf]
      %v5006 = vld [vmem:[%s4998 + $0x1c] sm:$0xf]
      %v5015 = vunpack.c.l.b16 %v4999
      %v5016 = vunpack.c.l.b16 %v5000
      %v5017 = vunpack.c.l.b16 %v5001
      %v5018 = vunpack.c.l.b16 %v5002
      %v5019 = vunpack.c.l.b16 %v5003
      %v5020 = vunpack.c.l.b16 %v5004
      %v5021 = vunpack.c.l.b16 %v5005
      %v5022 = vunpack.c.l.b16 %v5006
      %v5023 = vpack.c.b16 %v5016, %v5015
      %v5024 = vpack.c.b16 %v5018, %v5017
      %v5025 = vpack.c.b16 %v5020, %v5019
      %v5026 = vpack.c.b16 %v5022, %v5021
      %v5032 = vsel %vm1825, %v4994, 0
      %v5035 = vsel %vm1825, %v4995, 0
      %v5038 = vsel %vm1825, %v4996, 0
      %v5041 = vsel %vm1825, %v4997, 0
      %5043 = vmatprep.subr.bf16.mxu0 0
      %5044 = vmatpush1.bf16.msra.mxu0 %v5023
      %5045 = vmatprep.subr.bf16.mxu0 0
      %5046 = vmatpush1.bf16.msra.mxu0 %v5024
      %5047 = vmatprep.subr.bf16.mxu0 0
      %5048 = vmatpush1.bf16.msra.mxu0 %v5025
      %5049 = vmatprep.subr.bf16.mxu0 0
      %5050 = vmatpush1.bf16.msra.mxu0 %v5026
      %5051 = vmatprep.subr.bf16.mxu0 0
      %5052 = vmatpush1.bf16.msra.mxu0 0
      %5053 = vmatprep.subr.bf16.mxu0 0
      %5054 = vmatpush1.bf16.msra.mxu0 0
      %5055 = vmatprep.subr.bf16.mxu0 0
      %5056 = vmatpush1.bf16.msra.mxu0 0
      %5057 = vmatprep.subr.bf16.mxu0 0
      %5058 = vmatpush1.bf16.msra.mxu0 0
      %5059 = vmatprep.subr.bf16.mxu0 0
      %5060 = vmatpush1.bf16.msra.mxu0 0
      %5061 = vmatprep.subr.bf16.mxu0 0
      %5062 = vmatpush1.bf16.msra.mxu0 0
      %5063 = vmatprep.subr.bf16.mxu0 0
      %5064 = vmatpush1.bf16.msra.mxu0 0
      %5065 = vmatprep.subr.bf16.mxu0 0
      %5066 = vmatpush1.bf16.msra.mxu0 0
      %5067 = vmatprep.subr.bf16.mxu0 0
      %5068 = vmatpush1.bf16.msra.mxu0 0
      %5069 = vmatprep.subr.bf16.mxu0 0
      %5070 = vmatpush1.bf16.msra.mxu0 0
      %5071 = vmatprep.subr.bf16.mxu0 0
      %5072 = vmatpush1.bf16.msra.mxu0 0
      %5073 = vmatprep.subr.bf16.mxu0 0
      %5074 = vmatpush1.bf16.msra.mxu0 0
      %5075 = vmatprep.mubr.bf16.mxu0 0
      %5076 = vmatmul.mubr.bf16.gmra.mrb[0].mxu0 %v5032
      %v5077 = vpop.f32.mrb[0].mxu0
      %v5078 = vadd.f32 0.0, %v5077
      %v5079 = vpop.f32.mrb[0].mxu0
      %v5080 = vpop.f32.mrb[0].mxu0
      %v5081 = vadd.f32 0.0, %v5080
      %v5082 = vpop.f32.mrb[0].mxu0
      %5083 = vmatprep.mubr.bf16.mxu0 0
      %5084 = vmatmul.mubr.bf16.gmra.mrb[0].mxu0 %v5035
      %v5085 = vpop.f32.mrb[0].mxu0
      %v5086 = vadd.f32 0.0, %v5085
      %v5087 = vpop.f32.mrb[0].mxu0
      %v5088 = vpop.f32.mrb[0].mxu0
      %v5089 = vadd.f32 0.0, %v5088
      %v5090 = vpop.f32.mrb[0].mxu0
      %5091 = vmatprep.mubr.bf16.mxu0 0
      %5092 = vmatmul.mubr.bf16.gmra.mrb[0].mxu0 %v5038
      %v5093 = vpop.f32.mrb[0].mxu0
      %v5094 = vadd.f32 0.0, %v5093
      %v5095 = vpop.f32.mrb[0].mxu0
      %v5096 = vpop.f32.mrb[0].mxu0
      %v5097 = vadd.f32 0.0, %v5096
      %v5098 = vpop.f32.mrb[0].mxu0
      %5099 = vmatprep.mubr.bf16.mxu0 0
      %5100 = vmatmul.mubr.bf16.gmra.mrb[0].mxu0 %v5041
      %v5101 = vpop.f32.mrb[0].mxu0
      %v5102 = vadd.f32 0.0, %v5101
      %v5103 = vpop.f32.mrb[0].mxu0
      %v5104 = vpop.f32.mrb[0].mxu0
      %v5105 = vpop.f32.mrb[0].mxu0
      %5106 = vdwg.mxu0
      %v5107 = vadd.f32 %v4561, %v5078
      %v5108 = vadd.f32 %v4562, %v5081
      %v5109 = vadd.f32 %v4563, %v5086
      %v5110 = vadd.f32 %v4564, %v5089
      %v5111 = vadd.f32 %v4565, %v5094
      %v5112 = vadd.f32 %v4566, %v5097
      %v5113 = vadd.f32 %v4567, %v5102
      %v5115 = vsel %vm1825, %v4079, 0
      %v5118 = vsel %vm1825, %v4081, 0
      %v5121 = vsel %vm1825, %v4083, 0
      %v5124 = vsel %vm1825, %v4085, 0
      %v5127 = vsel %vm1825, %v1473, 0
      %v5130 = vsel %vm1825, %v1475, 0
      %v5133 = vsel %vm1825, %v1477, 0
      %v5136 = vsel %vm1825, %v1479, 0
      %v5139 = vsel %vm1825, %v1481, 0
      %v5142 = vsel %vm1825, %v1483, 0
      %v5145 = vsel %vm1825, %v1485, 0
      %v5148 = vsel %vm1825, %v1487, 0
      %v5151 = vsel %vm1825, %v1489, 0
      %v5154 = vsel %vm1825, %v1491, 0
      %v5157 = vsel %vm1825, %v1493, 0
      %v5160 = vsel %vm1825, %v1495, 0
      %v5163 = vsel %vm1825, %v1497, 0
      %5165 = vmatprep.subr.bf16.mxu0 0
      %5166 = vmatpush1.bf16.xpose.msra.mxu0 %v5127
      %5167 = vmatprep.subr.bf16.mxu0 0
      %5168 = vmatpush1.bf16.xpose.msra.mxu0 %v5130
      %5169 = vmatprep.subr.bf16.mxu0 0
      %5170 = vmatpush1.bf16.xpose.msra.mxu0 %v5133
      %5171 = vmatprep.subr.bf16.mxu0 0
      %5172 = vmatpush1.bf16.xpose.msra.mxu0 %v5136
      %5173 = vmatprep.subr.bf16.mxu0 0
      %5174 = vmatpush1.bf16.xpose.msra.mxu0 %v5139
      %5175 = vmatprep.subr.bf16.mxu0 0
      %5176 = vmatpush1.bf16.xpose.msra.mxu0 %v5142
      %5177 = vmatprep.subr.bf16.mxu0 0
      %5178 = vmatpush1.bf16.xpose.msra.mxu0 %v5145
      %5179 = vmatprep.subr.bf16.mxu0 0
      %5180 = vmatpush1.bf16.xpose.msra.mxu0 %v5148
      %5181 = vmatprep.subr.bf16.mxu0 0
      %5182 = vmatpush1.bf16.xpose.msra.mxu0 %v5151
      %5183 = vmatprep.subr.bf16.mxu0 0
      %5184 = vmatpush1.bf16.xpose.msra.mxu0 %v5154
      %5185 = vmatprep.subr.bf16.mxu0 0
      %5186 = vmatpush1.bf16.xpose.msra.mxu0 %v5157
      %5187 = vmatprep.subr.bf16.mxu0 0
      %5188 = vmatpush1.bf16.xpose.msra.mxu0 %v5160
      %5189 = vmatprep.subr.bf16.mxu0 0
      %5190 = vmatpush1.bf16.xpose.msra.mxu0 %v5163
      %5191 = vmatprep.subr.bf16.mxu0 0
      %5192 = vmatpush1.bf16.xpose.msra.mxu0 0
      %5193 = vmatprep.subr.bf16.mxu0 0
      %5194 = vmatpush1.bf16.xpose.msra.mxu0 0
      %5195 = vmatprep.subr.bf16.mxu0 0
      %5196 = vmatpush1.bf16.xpose.msra.mxu0 0
      %5197 = vmatprep.mubr.bf16.mxu0 0
      %5198 = vmatmul.mubr.bf16.gmra.mrb[0].mxu0 %v5115
      %v5199 = vpop.f32.mrb[0].mxu0
      %v5200 = vadd.f32 %v2857, %v5199
      %v5201 = vpop.f32.mrb[0].mxu0
      %v5202 = vadd.f32 %v2858, %v5201
      %v5203 = vpop.f32.mrb[0].mxu0
      %v5204 = vadd.f32 %v2859, %v5203
      %v5205 = vpop.f32.mrb[0].mxu0
      %v5206 = vadd.f32 %v2860, %v5205
      %5207 = vmatprep.mubr.bf16.mxu0 0
      %5208 = vmatmul.mubr.bf16.gmra.mrb[0].mxu0 %v5118
      %v5209 = vpop.f32.mrb[0].mxu0
      %v5210 = vadd.f32 %v2861, %v5209
      %v5211 = vpop.f32.mrb[0].mxu0
      %v5212 = vadd.f32 %v2862, %v5211
      %v5213 = vpop.f32.mrb[0].mxu0
      %v5214 = vadd.f32 %v2863, %v5213
      %v5215 = vpop.f32.mrb[0].mxu0
      %v5216 = vadd.f32 %v2864, %v5215
      %5217 = vmatprep.mubr.bf16.mxu0 0
      %5218 = vmatmul.mubr.bf16.gmra.mrb[0].mxu0 %v5121
      %v5219 = vpop.f32.mrb[0].mxu0
      %v5220 = vadd.f32 %v2865, %v5219
      %v5221 = vpop.f32.mrb[0].mxu0
      %v5222 = vadd.f32 %v2866, %v5221
      %v5223 = vpop.f32.mrb[0].mxu0
      %v5224 = vadd.f32 %v2867, %v5223
      %v5225 = vpop.f32.mrb[0].mxu0
      %v5226 = vadd.f32 %v2868, %v5225
      %5227 = vmatprep.mubr.bf16.mxu0 0
      %5228 = vmatmul.mubr.bf16.gmra.mrb[0].mxu0 %v5124
      %v5229 = vpop.f32.mrb[0].mxu0
      %v5230 = vadd.f32 %v2869, %v5229
      %v5231 = vpop.f32.mrb[0].mxu0
      %v5232 = vadd.f32 %v2870, %v5231
      %v5233 = vpop.f32.mrb[0].mxu0
      %v5234 = vpop.f32.mrb[0].mxu0
      %5235 = vdwg.mxu0
      %v5236 = vsel %vm1608, %v5202, -inf
      %v5237 = vmax.f32 %v5200, %v5236
      %5238 = vmax.xlane.f32.xlu0 %v5237
      %v5239 = vpop.xlane.xlu0 %5238
      %v5240 = vsel %vm1608, %v5206, -inf
      %v5241 = vmax.f32 %v5204, %v5240
      %5242 = vmax.xlane.f32.xlu0 %v5241
      %v5243 = vpop.xlane.xlu0 %5242
      %v5244 = vsel %vm1608, %v5212, -inf
      %v5245 = vmax.f32 %v5210, %v5244
      %5246 = vmax.xlane.f32.xlu0 %v5245
      %v5247 = vpop.xlane.xlu0 %5246
      %v5248 = vsel %vm1608, %v5216, -inf
      %v5249 = vmax.f32 %v5214, %v5248
      %5250 = vmax.xlane.f32.xlu0 %v5249
      %v5251 = vpop.xlane.xlu0 %5250
      %v5252 = vsel %vm1608, %v5222, -inf
      %v5253 = vmax.f32 %v5220, %v5252
      %5254 = vmax.xlane.f32.xlu0 %v5253
      %v5255 = vpop.xlane.xlu0 %5254
      %v5256 = vsel %vm1608, %v5226, -inf
      %v5257 = vmax.f32 %v5224, %v5256
      %5258 = vmax.xlane.f32.xlu0 %v5257
      %v5259 = vpop.xlane.xlu0 %5258
      %v5260 = vsel %vm1972, %v5230, -inf
      %v5261 = vsel %vm1974, %v5232, -inf
      %v5262 = vmax.f32 %v5260, %v5261
      %5263 = vmax.xlane.f32.xlu0 %v5262
      %v5264 = vpop.xlane.xlu0 %5263
      %v5265 = vsub.f32 %v5200, %v5239
      %v5266 = vsub.f32 %v5202, %v5239
      %v5267 = vsub.f32 %v5204, %v5243
      %v5268 = vsub.f32 %v5206, %v5243
      %v5269 = vsub.f32 %v5210, %v5247
      %v5270 = vsub.f32 %v5212, %v5247
      %v5271 = vsub.f32 %v5214, %v5251
      %v5272 = vsub.f32 %v5216, %v5251
      %v5273 = vsub.f32 %v5220, %v5255
      %v5274 = vsub.f32 %v5222, %v5255
      %v5275 = vsub.f32 %v5224, %v5259
      %v5276 = vsub.f32 %v5226, %v5259
      %v5277 = vsub.f32 %v5230, %v5264
      %v5278 = vsub.f32 %v5232, %v5264
      %v5279 = vmul.f32 %v5265, 1.442695
      %v5280 = vpow.pop %v5279
      %v5281 = vmul.f32 %v5266, 1.442695
      %v5282 = vpow.pop %v5281
      %v5283 = vmul.f32 %v5267, 1.442695
      %v5284 = vpow.pop %v5283
      %v5285 = vmul.f32 %v5268, 1.442695
      %v5286 = vpow.pop %v5285
      %v5287 = vmul.f32 %v5269, 1.442695
      %v5288 = vpow.pop %v5287
      %v5289 = vmul.f32 %v5270, 1.442695
      %v5290 = vpow.pop %v5289
      %v5291 = vmul.f32 %v5271, 1.442695
      %v5292 = vpow.pop %v5291
      %v5293 = vmul.f32 %v5272, 1.442695
      %v5294 = vpow.pop %v5293
      %v5295 = vmul.f32 %v5273, 1.442695
      %v5296 = vpow.pop %v5295
      %v5297 = vmul.f32 %v5274, 1.442695
      %v5298 = vpow.pop %v5297
      %v5299 = vmul.f32 %v5275, 1.442695
      %v5300 = vpow.pop %v5299
      %v5301 = vmul.f32 %v5276, 1.442695
      %v5302 = vpow.pop %v5301
      %v5303 = vmul.f32 %v5277, 1.442695
      %v5304 = vpow.pop %v5303
      %v5305 = vmul.f32 %v5278, 1.442695
      %v5306 = vpow.pop %v5305
      %v5307 = vsel %vm1608, %v5282, 0.0
      %v5308 = vadd.f32 %v5280, %v5307
      %5309 = vadd.xlane.f32.xlu0 %v5308
      %v5310 = vpop.xlane.xlu0 %5309
      %v5311 = vsel %vm1608, %v5286, 0.0
      %v5312 = vadd.f32 %v5284, %v5311
      %5313 = vadd.xlane.f32.xlu0 %v5312
      %v5314 = vpop.xlane.xlu0 %5313
      %v5315 = vsel %vm1608, %v5290, 0.0
      %v5316 = vadd.f32 %v5288, %v5315
      %5317 = vadd.xlane.f32.xlu0 %v5316
      %v5318 = vpop.xlane.xlu0 %5317
      %v5319 = vsel %vm1608, %v5294, 0.0
      %v5320 = vadd.f32 %v5292, %v5319
      %5321 = vadd.xlane.f32.xlu0 %v5320
      %v5322 = vpop.xlane.xlu0 %5321
      %v5323 = vsel %vm1608, %v5298, 0.0
      %v5324 = vadd.f32 %v5296, %v5323
      %5325 = vadd.xlane.f32.xlu0 %v5324
      %v5326 = vpop.xlane.xlu0 %5325
      %v5327 = vsel %vm1608, %v5302, 0.0
      %v5328 = vadd.f32 %v5300, %v5327
      %5329 = vadd.xlane.f32.xlu0 %v5328
      %v5330 = vpop.xlane.xlu0 %5329
      %v5331 = vsel %vm1972, %v5304, 0.0
      %v5332 = vsel %vm1974, %v5306, 0.0
      %v5333 = vadd.f32 %v5331, %v5332
      %5334 = vadd.xlane.f32.xlu0 %v5333
      %v5335 = vpop.xlane.xlu0 %5334
      %v5336 = vrcp.pop %v5310
      %v5337 = vrcp.pop %v5314
      %v5338 = vrcp.pop %v5318
      %v5339 = vrcp.pop %v5322
      %v5340 = vrcp.pop %v5326
      %v5341 = vrcp.pop %v5330
      %v5342 = vrcp.pop %v5335
      %v5343 = vmul.f32 %v5280, %v5336
      %v5344 = vmul.f32 %v5282, %v5336
      %v5345 = vmul.f32 %v5284, %v5337
      %v5346 = vmul.f32 %v5286, %v5337
      %v5347 = vmul.f32 %v5288, %v5338
      %v5348 = vmul.f32 %v5290, %v5338
      %v5349 = vmul.f32 %v5292, %v5339
      %v5350 = vmul.f32 %v5294, %v5339
      %v5351 = vmul.f32 %v5296, %v5340
      %v5352 = vmul.f32 %v5298, %v5340
      %v5353 = vmul.f32 %v5300, %v5341
      %v5354 = vmul.f32 %v5302, %v5341
      %v5355 = vmul.f32 %v5304, %v5342
      %v5356 = vmul.f32 %v5306, %v5342
      %v5357 = vpack.c.bf16 %v5345, %v5343
      %v5358 = vpack.c.bf16 %v5346, %v5344
      %v5359 = vpack.c.bf16 %v5349, %v5347
      %v5360 = vpack.c.bf16 %v5350, %v5348
      %v5361 = vpack.c.bf16 %v5353, %v5351
      %v5362 = vpack.c.bf16 %v5354, %v5352
      %v5363 = vpack.c.bf16 %v5355, %v5355
      %v5364 = vpack.c.bf16 %v5356, %v5356
      %v5366 = vsel %vm1608, %v5358, 0
      %v5369 = vsel %vm1608, %v5360, 0
      %v5372 = vsel %vm1608, %v5362, 0
      %v5375 = vsel %vm1608, %v5364, 0
      %5377 = vmatprep.subr.bf16.mxu0 0
      %5378 = vmatpush1.bf16.msra.mxu0 %v1473
      %5379 = vmatprep.subr.bf16.mxu0 0
      %5380 = vmatpush1.bf16.msra.mxu0 %v1475
      %5381 = vmatprep.subr.bf16.mxu0 0
      %5382 = vmatpush1.bf16.msra.mxu0 %v1477
      %5383 = vmatprep.subr.bf16.mxu0 0
      %5384 = vmatpush1.bf16.msra.mxu0 %v1479
      %5385 = vmatprep.subr.bf16.mxu0 0
      %5386 = vmatpush1.bf16.msra.mxu0 %v1481
      %5387 = vmatprep.subr.bf16.mxu0 0
      %5388 = vmatpush1.bf16.msra.mxu0 %v1483
      %5389 = vmatprep.subr.bf16.mxu0 0
      %5390 = vmatpush1.bf16.msra.mxu0 %v1485
      %5391 = vmatprep.subr.bf16.mxu0 0
      %5392 = vmatpush1.bf16.msra.mxu0 %v1487
      %5393 = vmatprep.subr.bf16.mxu0 0
      %5394 = vmatpush1.bf16.msra.mxu0 %v1489
      %5395 = vmatprep.subr.bf16.mxu0 0
      %5396 = vmatpush1.bf16.msra.mxu0 %v1491
      %5397 = vmatprep.subr.bf16.mxu0 0
      %5398 = vmatpush1.bf16.msra.mxu0 %v1493
      %5399 = vmatprep.subr.bf16.mxu0 0
      %5400 = vmatpush1.bf16.msra.mxu0 %v1495
      %5401 = vmatprep.subr.bf16.mxu0 0
      %5402 = vmatpush1.bf16.msra.mxu0 %v1497
      %5403 = vmatprep.subr.bf16.mxu0 0
      %5404 = vmatpush1.bf16.msra.mxu0 0
      %5405 = vmatprep.subr.bf16.mxu0 0
      %5406 = vmatpush1.bf16.msra.mxu0 0
      %5407 = vmatprep.subr.bf16.mxu0 0
      %5408 = vmatpush1.bf16.msra.mxu0 0
      %5409 = vmatprep.mubr.bf16.mxu0 %v5366
      %5410 = vmatmul.mubr.bf16.gmra.mrb[0].mxu0 %v5357
      %v5411 = vpop.f32.mrb[0].mxu0
      %v5412 = vadd.f32 0.0, %v5411
      %v5413 = vpop.f32.mrb[0].mxu0
      %v5414 = vpop.f32.mrb[0].mxu0
      %v5415 = vadd.f32 0.0, %v5414
      %v5416 = vpop.f32.mrb[0].mxu0
      %5417 = vmatprep.mubr.bf16.mxu0 %v5369
      %5418 = vmatmul.mubr.bf16.gmra.mrb[0].mxu0 %v5359
      %v5419 = vpop.f32.mrb[0].mxu0
      %v5420 = vadd.f32 0.0, %v5419
      %v5421 = vpop.f32.mrb[0].mxu0
      %v5422 = vpop.f32.mrb[0].mxu0
      %v5423 = vadd.f32 0.0, %v5422
      %v5424 = vpop.f32.mrb[0].mxu0
      %5425 = vmatprep.mubr.bf16.mxu0 %v5372
      %5426 = vmatmul.mubr.bf16.gmra.mrb[0].mxu0 %v5361
      %v5427 = vpop.f32.mrb[0].mxu0
      %v5428 = vadd.f32 0.0, %v5427
      %v5429 = vpop.f32.mrb[0].mxu0
      %v5430 = vpop.f32.mrb[0].mxu0
      %v5431 = vadd.f32 0.0, %v5430
      %v5432 = vpop.f32.mrb[0].mxu0
      %5433 = vmatprep.mubr.bf16.mxu0 %v5375
      %5434 = vmatmul.mubr.bf16.gmra.mrb[0].mxu0 %v5363
      %v5435 = vpop.f32.mrb[0].mxu0
      %v5436 = vadd.f32 0.0, %v5435
      %v5437 = vpop.f32.mrb[0].mxu0
      %v5438 = vpop.f32.mrb[0].mxu0
      %v5439 = vpop.f32.mrb[0].mxu0
      %5440 = vdwg.mxu0
      %v5441 = vadd.f32 %v5412, 3.0
      %v5442 = vadd.f32 %v5415, 3.0
      %v5443 = vadd.f32 %v5420, 3.0
      %v5444 = vadd.f32 %v5423, 3.0
      %v5445 = vadd.f32 %v5428, 3.0
      %v5446 = vadd.f32 %v5431, 3.0
      %v5447 = vadd.f32 %v5436, 3.0
      %v5448 = vmax.f32 %v5441, 0.0
      %v5449 = vmax.f32 %v5442, 0.0
      %v5450 = vmax.f32 %v5443, 0.0
      %v5451 = vmax.f32 %v5444, 0.0
      %v5452 = vmax.f32 %v5445, 0.0
      %v5453 = vmax.f32 %v5446, 0.0
      %v5454 = vmax.f32 %v5447, 0.0
      %v5455 = vmin.f32 %v5448, 6.0
      %v5456 = vmin.f32 %v5449, 6.0
      %v5457 = vmin.f32 %v5450, 6.0
      %v5458 = vmin.f32 %v5451, 6.0
      %v5459 = vmin.f32 %v5452, 6.0
      %v5460 = vmin.f32 %v5453, 6.0
      %v5461 = vmin.f32 %v5454, 6.0
      %v5462 = vmul.f32 %v5412, %v5455
      %v5463 = vmul.f32 %v5415, %v5456
      %v5464 = vmul.f32 %v5420, %v5457
      %v5465 = vmul.f32 %v5423, %v5458
      %v5466 = vmul.f32 %v5428, %v5459
      %v5467 = vmul.f32 %v5431, %v5460
      %v5468 = vmul.f32 %v5436, %v5461
      %v5469 = vmul.f32 %v5462, 0.16666667
      %v5470 = vmul.f32 %v5463, 0.16666667
      %v5471 = vmul.f32 %v5464, 0.16666667
      %v5472 = vmul.f32 %v5465, 0.16666667
      %v5473 = vmul.f32 %v5466, 0.16666667
      %v5474 = vmul.f32 %v5467, 0.16666667
      %v5475 = vmul.f32 %v5468, 0.16666667
      %v5476 = vpack.c.bf16 %v5470, %v5469
      %v5477 = vpack.c.bf16 %v5472, %v5471
      %v5478 = vpack.c.bf16 %v5474, %v5473
      %v5479 = vpack.c.bf16 %v5475, %v5475
      %s5480 = scalar_lea.vmem %s7, 192
      %v5481 = vld [vmem:[%s5480] sm:$0xf]
      %v5482 = vld [vmem:[%s5480 + $0x4] sm:$0xf]
      %v5483 = vld [vmem:[%s5480 + $0x8] sm:$0xf]
      %v5484 = vld [vmem:[%s5480 + $0xc] sm:$0xf]
      %v5485 = vld [vmem:[%s5480 + $0x10] sm:$0xf]
      %v5486 = vld [vmem:[%s5480 + $0x14] sm:$0xf]
      %v5487 = vld [vmem:[%s5480 + $0x18] sm:$0xf]
      %v5488 = vld [vmem:[%s5480 + $0x1c] sm:$0xf]
      %v5497 = vunpack.c.l.b16 %v5481
      %v5498 = vunpack.c.l.b16 %v5482
      %v5499 = vunpack.c.l.b16 %v5483
      %v5500 = vunpack.c.l.b16 %v5484
      %v5501 = vunpack.c.l.b16 %v5485
      %v5502 = vunpack.c.l.b16 %v5486
      %v5503 = vunpack.c.l.b16 %v5487
      %v5504 = vunpack.c.l.b16 %v5488
      %v5505 = vpack.c.b16 %v5498, %v5497
      %v5506 = vpack.c.b16 %v5500, %v5499
      %v5507 = vpack.c.b16 %v5502, %v5501
      %v5508 = vpack.c.b16 %v5504, %v5503
      %v5514 = vsel %vm1825, %v5476, 0
      %v5517 = vsel %vm1825, %v5477, 0
      %v5520 = vsel %vm1825, %v5478, 0
      %v5523 = vsel %vm1825, %v5479, 0
      %5525 = vmatprep.subr.bf16.mxu0 0
      %5526 = vmatpush1.bf16.msra.mxu0 %v5505
      %5527 = vmatprep.subr.bf16.mxu0 0
      %5528 = vmatpush1.bf16.msra.mxu0 %v5506
      %5529 = vmatprep.subr.bf16.mxu0 0
      %5530 = vmatpush1.bf16.msra.mxu0 %v5507
      %5531 = vmatprep.subr.bf16.mxu0 0
      %5532 = vmatpush1.bf16.msra.mxu0 %v5508
      %5533 = vmatprep.subr.bf16.mxu0 0
      %5534 = vmatpush1.bf16.msra.mxu0 0
      %5535 = vmatprep.subr.bf16.mxu0 0
      %5536 = vmatpush1.bf16.msra.mxu0 0
      %5537 = vmatprep.subr.bf16.mxu0 0
      %5538 = vmatpush1.bf16.msra.mxu0 0
      %5539 = vmatprep.subr.bf16.mxu0 0
      %5540 = vmatpush1.bf16.msra.mxu0 0
      %5541 = vmatprep.subr.bf16.mxu0 0
      %5542 = vmatpush1.bf16.msra.mxu0 0
      %5543 = vmatprep.subr.bf16.mxu0 0
      %5544 = vmatpush1.bf16.msra.mxu0 0
      %5545 = vmatprep.subr.bf16.mxu0 0
      %5546 = vmatpush1.bf16.msra.mxu0 0
      %5547 = vmatprep.subr.bf16.mxu0 0
      %5548 = vmatpush1.bf16.msra.mxu0 0
      %5549 = vmatprep.subr.bf16.mxu0 0
      %5550 = vmatpush1.bf16.msra.mxu0 0
      %5551 = vmatprep.subr.bf16.mxu0 0
      %5552 = vmatpush1.bf16.msra.mxu0 0
      %5553 = vmatprep.subr.bf16.mxu0 0
      %5554 = vmatpush1.bf16.msra.mxu0 0
      %5555 = vmatprep.subr.bf16.mxu0 0
      %5556 = vmatpush1.bf16.msra.mxu0 0
      %5557 = vmatprep.mubr.bf16.mxu0 0
      %5558 = vmatmul.mubr.bf16.gmra.mrb[0].mxu0 %v5514
      %v5559 = vpop.f32.mrb[0].mxu0
      %v5560 = vadd.f32 0.0, %v5559
      %v5561 = vpop.f32.mrb[0].mxu0
      %v5562 = vpop.f32.mrb[0].mxu0
      %v5563 = vadd.f32 0.0, %v5562
      %v5564 = vpop.f32.mrb[0].mxu0
      %5565 = vmatprep.mubr.bf16.mxu0 0
      %5566 = vmatmul.mubr.bf16.gmra.mrb[0].mxu0 %v5517
      %v5567 = vpop.f32.mrb[0].mxu0
      %v5568 = vadd.f32 0.0, %v5567
      %v5569 = vpop.f32.mrb[0].mxu0
      %v5570 = vpop.f32.mrb[0].mxu0
      %v5571 = vadd.f32 0.0, %v5570
      %v5572 = vpop.f32.mrb[0].mxu0
      %5573 = vmatprep.mubr.bf16.mxu0 0
      %5574 = vmatmul.mubr.bf16.gmra.mrb[0].mxu0 %v5520
      %v5575 = vpop.f32.mrb[0].mxu0
      %v5576 = vadd.f32 0.0, %v5575
      %v5577 = vpop.f32.mrb[0].mxu0
      %v5578 = vpop.f32.mrb[0].mxu0
      %v5579 = vadd.f32 0.0, %v5578
      %v5580 = vpop.f32.mrb[0].mxu0
      %5581 = vmatprep.mubr.bf16.mxu0 0
      %5582 = vmatmul.mubr.bf16.gmra.mrb[0].mxu0 %v5523
      %v5583 = vpop.f32.mrb[0].mxu0
      %v5584 = vadd.f32 0.0, %v5583
      %v5585 = vpop.f32.mrb[0].mxu0
      %v5586 = vpop.f32.mrb[0].mxu0
      %v5587 = vpop.f32.mrb[0].mxu0
      %5588 = vdwg.mxu0
      %v5589 = vadd.f32 %v5107, %v5560
      %v5590 = vadd.f32 %v5108, %v5563
      %v5591 = vadd.f32 %v5109, %v5568
      %v5592 = vadd.f32 %v5110, %v5571
      %v5593 = vadd.f32 %v5111, %v5576
      %v5594 = vadd.f32 %v5112, %v5579
      %v5595 = vadd.f32 %v5113, %v5584
      %5600 = vrot.lane.b32.xlu0 %v4079, 64
      %v5601 = vpop.permute.xlu0 %5600
      %5602 = vrot.lane.b32.xlu0 %v4081, 64
      %v5603 = vpop.permute.xlu0 %5602
      %5604 = vrot.lane.b32.xlu0 %v4083, 64
      %v5605 = vpop.permute.xlu0 %5604
      %5606 = vrot.lane.b32.xlu0 %v4085, 64
      %v5607 = vpop.permute.xlu0 %5606
      %5621 = vrot.lane.b32.xlu0 %v1473, 64
      %v5622 = vpop.permute.xlu0 %5621
      %5623 = vrot.lane.b32.xlu0 %v1475, 64
      %v5624 = vpop.permute.xlu0 %5623
      %5625 = vrot.lane.b32.xlu0 %v1477, 64
      %v5626 = vpop.permute.xlu0 %5625
      %5627 = vrot.lane.b32.xlu0 %v1479, 64
      %v5628 = vpop.permute.xlu0 %5627
      %5629 = vrot.lane.b32.xlu0 %v1481, 64
      %v5630 = vpop.permute.xlu0 %5629
      %5631 = vrot.lane.b32.xlu0 %v1483, 64
      %v5632 = vpop.permute.xlu0 %5631
      %5633 = vrot.lane.b32.xlu0 %v1485, 64
      %v5634 = vpop.permute.xlu0 %5633
      %5635 = vrot.lane.b32.xlu0 %v1487, 64
      %v5636 = vpop.permute.xlu0 %5635
      %5637 = vrot.lane.b32.xlu0 %v1489, 64
      %v5638 = vpop.permute.xlu0 %5637
      %5639 = vrot.lane.b32.xlu0 %v1491, 64
      %v5640 = vpop.permute.xlu0 %5639
      %5641 = vrot.lane.b32.xlu0 %v1493, 64
      %v5642 = vpop.permute.xlu0 %5641
      %5643 = vrot.lane.b32.xlu0 %v1495, 64
      %v5644 = vpop.permute.xlu0 %5643
      %5645 = vrot.lane.b32.xlu0 %v1497, 64
      %v5646 = vpop.permute.xlu0 %5645
      %v5648 = vsel %vm1825, %v5601, 0
      %v5651 = vsel %vm1825, %v5603, 0
      %v5654 = vsel %vm1825, %v5605, 0
      %v5657 = vsel %vm1825, %v5607, 0
      %v5660 = vsel %vm1825, %v5622, 0
      %v5663 = vsel %vm1825, %v5624, 0
      %v5666 = vsel %vm1825, %v5626, 0
      %v5669 = vsel %vm1825, %v5628, 0
      %v5672 = vsel %vm1825, %v5630, 0
      %v5675 = vsel %vm1825, %v5632, 0
      %v5678 = vsel %vm1825, %v5634, 0
      %v5681 = vsel %vm1825, %v5636, 0
      %v5684 = vsel %vm1825, %v5638, 0
      %v5687 = vsel %vm1825, %v5640, 0
      %v5690 = vsel %vm1825, %v5642, 0
      %v5693 = vsel %vm1825, %v5644, 0
      %v5696 = vsel %vm1825, %v5646, 0
      %5698 = vmatprep.subr.bf16.mxu0 0
      %5699 = vmatpush1.bf16.xpose.msra.mxu0 %v5660
      %5700 = vmatprep.subr.bf16.mxu0 0
      %5701 = vmatpush1.bf16.xpose.msra.mxu0 %v5663
      %5702 = vmatprep.subr.bf16.mxu0 0
      %5703 = vmatpush1.bf16.xpose.msra.mxu0 %v5666
      %5704 = vmatprep.subr.bf16.mxu0 0
      %5705 = vmatpush1.bf16.xpose.msra.mxu0 %v5669
      %5706 = vmatprep.subr.bf16.mxu0 0
      %5707 = vmatpush1.bf16.xpose.msra.mxu0 %v5672
      %5708 = vmatprep.subr.bf16.mxu0 0
      %5709 = vmatpush1.bf16.xpose.msra.mxu0 %v5675
      %5710 = vmatprep.subr.bf16.mxu0 0
      %5711 = vmatpush1.bf16.xpose.msra.mxu0 %v5678
      %5712 = vmatprep.subr.bf16.mxu0 0
      %5713 = vmatpush1.bf16.xpose.msra.mxu0 %v5681
      %5714 = vmatprep.subr.bf16.mxu0 0
      %5715 = vmatpush1.bf16.xpose.msra.mxu0 %v5684
      %5716 = vmatprep.subr.bf16.mxu0 0
      %5717 = vmatpush1.bf16.xpose.msra.mxu0 %v5687
      %5718 = vmatprep.subr.bf16.mxu0 0
      %5719 = vmatpush1.bf16.xpose.msra.mxu0 %v5690
      %5720 = vmatprep.subr.bf16.mxu0 0
      %5721 = vmatpush1.bf16.xpose.msra.mxu0 %v5693
      %5722 = vmatprep.subr.bf16.mxu0 0
      %5723 = vmatpush1.bf16.xpose.msra.mxu0 %v5696
      %5724 = vmatprep.subr.bf16.mxu0 0
      %5725 = vmatpush1.bf16.xpose.msra.mxu0 0
      %5726 = vmatprep.subr.bf16.mxu0 0
      %5727 = vmatpush1.bf16.xpose.msra.mxu0 0
      %5728 = vmatprep.subr.bf16.mxu0 0
      %5729 = vmatpush1.bf16.xpose.msra.mxu0 0
      %5730 = vmatprep.mubr.bf16.mxu0 0
      %5731 = vmatmul.mubr.bf16.gmra.mrb[0].mxu0 %v5648
      %v5732 = vpop.f32.mrb[0].mxu0
      %v5733 = vadd.f32 %v3354, %v5732
      %v5734 = vpop.f32.mrb[0].mxu0
      %v5735 = vadd.f32 %v3355, %v5734
      %v5736 = vpop.f32.mrb[0].mxu0
      %v5737 = vadd.f32 %v3356, %v5736
      %v5738 = vpop.f32.mrb[0].mxu0
      %v5739 = vadd.f32 %v3357, %v5738
      %5740 = vmatprep.mubr.bf16.mxu0 0
      %5741 = vmatmul.mubr.bf16.gmra.mrb[0].mxu0 %v5651
      %v5742 = vpop.f32.mrb[0].mxu0
      %v5743 = vadd.f32 %v3358, %v5742
      %v5744 = vpop.f32.mrb[0].mxu0
      %v5745 = vadd.f32 %v3359, %v5744
      %v5746 = vpop.f32.mrb[0].mxu0
      %v5747 = vadd.f32 %v3360, %v5746
      %v5748 = vpop.f32.mrb[0].mxu0
      %v5749 = vadd.f32 %v3361, %v5748
      %5750 = vmatprep.mubr.bf16.mxu0 0
      %5751 = vmatmul.mubr.bf16.gmra.mrb[0].mxu0 %v5654
      %v5752 = vpop.f32.mrb[0].mxu0
      %v5753 = vadd.f32 %v3362, %v5752
      %v5754 = vpop.f32.mrb[0].mxu0
      %v5755 = vadd.f32 %v3363, %v5754
      %v5756 = vpop.f32.mrb[0].mxu0
      %v5757 = vadd.f32 %v3364, %v5756
      %v5758 = vpop.f32.mrb[0].mxu0
      %v5759 = vadd.f32 %v3365, %v5758
      %5760 = vmatprep.mubr.bf16.mxu0 0
      %5761 = vmatmul.mubr.bf16.gmra.mrb[0].mxu0 %v5657
      %v5762 = vpop.f32.mrb[0].mxu0
      %v5763 = vadd.f32 %v3366, %v5762
      %v5764 = vpop.f32.mrb[0].mxu0
      %v5765 = vadd.f32 %v3367, %v5764
      %v5766 = vpop.f32.mrb[0].mxu0
      %v5767 = vpop.f32.mrb[0].mxu0
      %5768 = vdwg.mxu0
      %v5769 = vsel %vm1608, %v5735, -inf
      %v5770 = vmax.f32 %v5733, %v5769
      %5771 = vmax.xlane.f32.xlu0 %v5770
      %v5772 = vpop.xlane.xlu0 %5771
      %v5773 = vsel %vm1608, %v5739, -inf
      %v5774 = vmax.f32 %v5737, %v5773
      %5775 = vmax.xlane.f32.xlu0 %v5774
      %v5776 = vpop.xlane.xlu0 %5775
      %v5777 = vsel %vm1608, %v5745, -inf
      %v5778 = vmax.f32 %v5743, %v5777
      %5779 = vmax.xlane.f32.xlu0 %v5778
      %v5780 = vpop.xlane.xlu0 %5779
      %v5781 = vsel %vm1608, %v5749, -inf
      %v5782 = vmax.f32 %v5747, %v5781
      %5783 = vmax.xlane.f32.xlu0 %v5782
      %v5784 = vpop.xlane.xlu0 %5783
      %v5785 = vsel %vm1608, %v5755, -inf
      %v5786 = vmax.f32 %v5753, %v5785
      %5787 = vmax.xlane.f32.xlu0 %v5786
      %v5788 = vpop.xlane.xlu0 %5787
      %v5789 = vsel %vm1608, %v5759, -inf
      %v5790 = vmax.f32 %v5757, %v5789
      %5791 = vmax.xlane.f32.xlu0 %v5790
      %v5792 = vpop.xlane.xlu0 %5791
      %v5793 = vsel %vm1972, %v5763, -inf
      %v5794 = vsel %vm1974, %v5765, -inf
      %v5795 = vmax.f32 %v5793, %v5794
      %5796 = vmax.xlane.f32.xlu0 %v5795
      %v5797 = vpop.xlane.xlu0 %5796
      %v5798 = vsub.f32 %v5733, %v5772
      %v5799 = vsub.f32 %v5735, %v5772
      %v5800 = vsub.f32 %v5737, %v5776
      %v5801 = vsub.f32 %v5739, %v5776
      %v5802 = vsub.f32 %v5743, %v5780
      %v5803 = vsub.f32 %v5745, %v5780
      %v5804 = vsub.f32 %v5747, %v5784
      %v5805 = vsub.f32 %v5749, %v5784
      %v5806 = vsub.f32 %v5753, %v5788
      %v5807 = vsub.f32 %v5755, %v5788
      %v5808 = vsub.f32 %v5757, %v5792
      %v5809 = vsub.f32 %v5759, %v5792
      %v5810 = vsub.f32 %v5763, %v5797
      %v5811 = vsub.f32 %v5765, %v5797
      %v5812 = vmul.f32 %v5798, 1.442695
      %v5813 = vpow.pop %v5812
      %v5814 = vmul.f32 %v5799, 1.442695
      %v5815 = vpow.pop %v5814
      %v5816 = vmul.f32 %v5800, 1.442695
      %v5817 = vpow.pop %v5816
      %v5818 = vmul.f32 %v5801, 1.442695
      %v5819 = vpow.pop %v5818
      %v5820 = vmul.f32 %v5802, 1.442695
      %v5821 = vpow.pop %v5820
      %v5822 = vmul.f32 %v5803, 1.442695
      %v5823 = vpow.pop %v5822
      %v5824 = vmul.f32 %v5804, 1.442695
      %v5825 = vpow.pop %v5824
      %v5826 = vmul.f32 %v5805, 1.442695
      %v5827 = vpow.pop %v5826
      %v5828 = vmul.f32 %v5806, 1.442695
      %v5829 = vpow.pop %v5828
      %v5830 = vmul.f32 %v5807, 1.442695
      %v5831 = vpow.pop %v5830
      %v5832 = vmul.f32 %v5808, 1.442695
      %v5833 = vpow.pop %v5832
      %v5834 = vmul.f32 %v5809, 1.442695
      %v5835 = vpow.pop %v5834
      %v5836 = vmul.f32 %v5810, 1.442695
      %v5837 = vpow.pop %v5836
      %v5838 = vmul.f32 %v5811, 1.442695
      %v5839 = vpow.pop %v5838
      %v5840 = vsel %vm1608, %v5815, 0.0
      %v5841 = vadd.f32 %v5813, %v5840
      %5842 = vadd.xlane.f32.xlu0 %v5841
      %v5843 = vpop.xlane.xlu0 %5842
      %v5844 = vsel %vm1608, %v5819, 0.0
      %v5845 = vadd.f32 %v5817, %v5844
      %5846 = vadd.xlane.f32.xlu0 %v5845
      %v5847 = vpop.xlane.xlu0 %5846
      %v5848 = vsel %vm1608, %v5823, 0.0
      %v5849 = vadd.f32 %v5821, %v5848
      %5850 = vadd.xlane.f32.xlu0 %v5849
      %v5851 = vpop.xlane.xlu0 %5850
      %v5852 = vsel %vm1608, %v5827, 0.0
      %v5853 = vadd.f32 %v5825, %v5852
      %5854 = vadd.xlane.f32.xlu0 %v5853
      %v5855 = vpop.xlane.xlu0 %5854
      %v5856 = vsel %vm1608, %v5831, 0.0
      %v5857 = vadd.f32 %v5829, %v5856
      %5858 = vadd.xlane.f32.xlu0 %v5857
      %v5859 = vpop.xlane.xlu0 %5858
      %v5860 = vsel %vm1608, %v5835, 0.0
      %v5861 = vadd.f32 %v5833, %v5860
      %5862 = vadd.xlane.f32.xlu0 %v5861
      %v5863 = vpop.xlane.xlu0 %5862
      %v5864 = vsel %vm1972, %v5837, 0.0
      %v5865 = vsel %vm1974, %v5839, 0.0
      %v5866 = vadd.f32 %v5864, %v5865
      %5867 = vadd.xlane.f32.xlu0 %v5866
      %v5868 = vpop.xlane.xlu0 %5867
      %v5869 = vrcp.pop %v5843
      %v5870 = vrcp.pop %v5847
      %v5871 = vrcp.pop %v5851
      %v5872 = vrcp.pop %v5855
      %v5873 = vrcp.pop %v5859
      %v5874 = vrcp.pop %v5863
      %v5875 = vrcp.pop %v5868
      %v5876 = vmul.f32 %v5813, %v5869
      %v5877 = vmul.f32 %v5815, %v5869
      %v5878 = vmul.f32 %v5817, %v5870
      %v5879 = vmul.f32 %v5819, %v5870
      %v5880 = vmul.f32 %v5821, %v5871
      %v5881 = vmul.f32 %v5823, %v5871
      %v5882 = vmul.f32 %v5825, %v5872
      %v5883 = vmul.f32 %v5827, %v5872
      %v5884 = vmul.f32 %v5829, %v5873
      %v5885 = vmul.f32 %v5831, %v5873
      %v5886 = vmul.f32 %v5833, %v5874
      %v5887 = vmul.f32 %v5835, %v5874
      %v5888 = vmul.f32 %v5837, %v5875
      %v5889 = vmul.f32 %v5839, %v5875
      %v5890 = vpack.c.bf16 %v5878, %v5876
      %v5891 = vpack.c.bf16 %v5879, %v5877
      %v5892 = vpack.c.bf16 %v5882, %v5880
      %v5893 = vpack.c.bf16 %v5883, %v5881
      %v5894 = vpack.c.bf16 %v5886, %v5884
      %v5895 = vpack.c.bf16 %v5887, %v5885
      %v5896 = vpack.c.bf16 %v5888, %v5888
      %v5897 = vpack.c.bf16 %v5889, %v5889
      %v5912 = vsel %vm1608, %v5891, 0
      %v5915 = vsel %vm1608, %v5893, 0
      %v5918 = vsel %vm1608, %v5895, 0
      %v5921 = vsel %vm1608, %v5897, 0
      %5923 = vmatprep.subr.bf16.mxu0 0
      %5924 = vmatpush1.bf16.msra.mxu0 %v5622
      %5925 = vmatprep.subr.bf16.mxu0 0
      %5926 = vmatpush1.bf16.msra.mxu0 %v5624
      %5927 = vmatprep.subr.bf16.mxu0 0
      %5928 = vmatpush1.bf16.msra.mxu0 %v5626
      %5929 = vmatprep.subr.bf16.mxu0 0
      %5930 = vmatpush1.bf16.msra.mxu0 %v5628
      %5931 = vmatprep.subr.bf16.mxu0 0
      %5932 = vmatpush1.bf16.msra.mxu0 %v5630
      %5933 = vmatprep.subr.bf16.mxu0 0
      %5934 = vmatpush1.bf16.msra.mxu0 %v5632
      %5935 = vmatprep.subr.bf16.mxu0 0
      %5936 = vmatpush1.bf16.msra.mxu0 %v5634
      %5937 = vmatprep.subr.bf16.mxu0 0
      %5938 = vmatpush1.bf16.msra.mxu0 %v5636
      %5939 = vmatprep.subr.bf16.mxu0 0
      %5940 = vmatpush1.bf16.msra.mxu0 %v5638
      %5941 = vmatprep.subr.bf16.mxu0 0
      %5942 = vmatpush1.bf16.msra.mxu0 %v5640
      %5943 = vmatprep.subr.bf16.mxu0 0
      %5944 = vmatpush1.bf16.msra.mxu0 %v5642
      %5945 = vmatprep.subr.bf16.mxu0 0
      %5946 = vmatpush1.bf16.msra.mxu0 %v5644
      %5947 = vmatprep.subr.bf16.mxu0 0
      %5948 = vmatpush1.bf16.msra.mxu0 %v5646
      %5949 = vmatprep.subr.bf16.mxu0 0
      %5950 = vmatpush1.bf16.msra.mxu0 0
      %5951 = vmatprep.subr.bf16.mxu0 0
      %5952 = vmatpush1.bf16.msra.mxu0 0
      %5953 = vmatprep.subr.bf16.mxu0 0
      %5954 = vmatpush1.bf16.msra.mxu0 0
      %5955 = vmatprep.mubr.bf16.mxu0 %v5912
      %5956 = vmatmul.mubr.bf16.gmra.mrb[0].mxu0 %v5890
      %v5957 = vpop.f32.mrb[0].mxu0
      %v5958 = vadd.f32 0.0, %v5957
      %v5959 = vpop.f32.mrb[0].mxu0
      %v5960 = vpop.f32.mrb[0].mxu0
      %v5961 = vadd.f32 0.0, %v5960
      %v5962 = vpop.f32.mrb[0].mxu0
      %5963 = vmatprep.mubr.bf16.mxu0 %v5915
      %5964 = vmatmul.mubr.bf16.gmra.mrb[0].mxu0 %v5892
      %v5965 = vpop.f32.mrb[0].mxu0
      %v5966 = vadd.f32 0.0, %v5965
      %v5967 = vpop.f32.mrb[0].mxu0
      %v5968 = vpop.f32.mrb[0].mxu0
      %v5969 = vadd.f32 0.0, %v5968
      %v5970 = vpop.f32.mrb[0].mxu0
      %5971 = vmatprep.mubr.bf16.mxu0 %v5918
      %5972 = vmatmul.mubr.bf16.gmra.mrb[0].mxu0 %v5894
      %v5973 = vpop.f32.mrb[0].mxu0
      %v5974 = vadd.f32 0.0, %v5973
      %v5975 = vpop.f32.mrb[0].mxu0
      %v5976 = vpop.f32.mrb[0].mxu0
      %v5977 = vadd.f32 0.0, %v5976
      %v5978 = vpop.f32.mrb[0].mxu0
      %5979 = vmatprep.mubr.bf16.mxu0 %v5921
      %5980 = vmatmul.mubr.bf16.gmra.mrb[0].mxu0 %v5896
      %v5981 = vpop.f32.mrb[0].mxu0
      %v5982 = vadd.f32 0.0, %v5981
      %v5983 = vpop.f32.mrb[0].mxu0
      %v5984 = vpop.f32.mrb[0].mxu0
      %v5985 = vpop.f32.mrb[0].mxu0
      %5986 = vdwg.mxu0
      %v5987 = vadd.f32 %v5958, 3.0
      %v5988 = vadd.f32 %v5961, 3.0
      %v5989 = vadd.f32 %v5966, 3.0
      %v5990 = vadd.f32 %v5969, 3.0
      %v5991 = vadd.f32 %v5974, 3.0
      %v5992 = vadd.f32 %v5977, 3.0
      %v5993 = vadd.f32 %v5982, 3.0
      %v5994 = vmax.f32 %v5987, 0.0
      %v5995 = vmax.f32 %v5988, 0.0
      %v5996 = vmax.f32 %v5989, 0.0
      %v5997 = vmax.f32 %v5990, 0.0
      %v5998 = vmax.f32 %v5991, 0.0
      %v5999 = vmax.f32 %v5992, 0.0
      %v6000 = vmax.f32 %v5993, 0.0
      %v6001 = vmin.f32 %v5994, 6.0
      %v6002 = vmin.f32 %v5995, 6.0
      %v6003 = vmin.f32 %v5996, 6.0
      %v6004 = vmin.f32 %v5997, 6.0
      %v6005 = vmin.f32 %v5998, 6.0
      %v6006 = vmin.f32 %v5999, 6.0
      %v6007 = vmin.f32 %v6000, 6.0
      %v6008 = vmul.f32 %v5958, %v6001
      %v6009 = vmul.f32 %v5961, %v6002
      %v6010 = vmul.f32 %v5966, %v6003
      %v6011 = vmul.f32 %v5969, %v6004
      %v6012 = vmul.f32 %v5974, %v6005
      %v6013 = vmul.f32 %v5977, %v6006
      %v6014 = vmul.f32 %v5982, %v6007
      %v6015 = vmul.f32 %v6008, 0.16666667
      %v6016 = vmul.f32 %v6009, 0.16666667
      %v6017 = vmul.f32 %v6010, 0.16666667
      %v6018 = vmul.f32 %v6011, 0.16666667
      %v6019 = vmul.f32 %v6012, 0.16666667
      %v6020 = vmul.f32 %v6013, 0.16666667
      %v6021 = vmul.f32 %v6014, 0.16666667
      %v6022 = vpack.c.bf16 %v6016, %v6015
      %v6023 = vpack.c.bf16 %v6018, %v6017
      %v6024 = vpack.c.bf16 %v6020, %v6019
      %v6025 = vpack.c.bf16 %v6021, %v6021
      %s6026 = scalar_lea.vmem %s7, 224
      %v6027 = vld [vmem:[%s6026] sm:$0xf]
      %v6028 = vld [vmem:[%s6026 + $0x4] sm:$0xf]
      %v6029 = vld [vmem:[%s6026 + $0x8] sm:$0xf]
      %v6030 = vld [vmem:[%s6026 + $0xc] sm:$0xf]
      %v6031 = vld [vmem:[%s6026 + $0x10] sm:$0xf]
      %v6032 = vld [vmem:[%s6026 + $0x14] sm:$0xf]
      %v6033 = vld [vmem:[%s6026 + $0x18] sm:$0xf]
      %v6034 = vld [vmem:[%s6026 + $0x1c] sm:$0xf]
      %v6043 = vunpack.c.l.b16 %v6027
      %v6044 = vunpack.c.l.b16 %v6028
      %v6045 = vunpack.c.l.b16 %v6029
      %v6046 = vunpack.c.l.b16 %v6030
      %v6047 = vunpack.c.l.b16 %v6031
      %v6048 = vunpack.c.l.b16 %v6032
      %v6049 = vunpack.c.l.b16 %v6033
      %v6050 = vunpack.c.l.b16 %v6034
      %v6051 = vpack.c.b16 %v6044, %v6043
      %v6052 = vpack.c.b16 %v6046, %v6045
      %v6053 = vpack.c.b16 %v6048, %v6047
      %v6054 = vpack.c.b16 %v6050, %v6049
      %v6060 = vsel %vm1825, %v6022, 0
      %v6063 = vsel %vm1825, %v6023, 0
      %v6066 = vsel %vm1825, %v6024, 0
      %v6069 = vsel %vm1825, %v6025, 0
      %6071 = vmatprep.subr.bf16.mxu0 0
      %6072 = vmatpush1.bf16.msra.mxu0 %v6051
      %6073 = vmatprep.subr.bf16.mxu0 0
      %6074 = vmatpush1.bf16.msra.mxu0 %v6052
      %6075 = vmatprep.subr.bf16.mxu0 0
      %6076 = vmatpush1.bf16.msra.mxu0 %v6053
      %6077 = vmatprep.subr.bf16.mxu0 0
      %6078 = vmatpush1.bf16.msra.mxu0 %v6054
      %6079 = vmatprep.subr.bf16.mxu0 0
      %6080 = vmatpush1.bf16.msra.mxu0 0
      %6081 = vmatprep.subr.bf16.mxu0 0
      %6082 = vmatpush1.bf16.msra.mxu0 0
      %6083 = vmatprep.subr.bf16.mxu0 0
      %6084 = vmatpush1.bf16.msra.mxu0 0
      %6085 = vmatprep.subr.bf16.mxu0 0
      %6086 = vmatpush1.bf16.msra.mxu0 0
      %6087 = vmatprep.subr.bf16.mxu0 0
      %6088 = vmatpush1.bf16.msra.mxu0 0
      %6089 = vmatprep.subr.bf16.mxu0 0
      %6090 = vmatpush1.bf16.msra.mxu0 0
      %6091 = vmatprep.subr.bf16.mxu0 0
      %6092 = vmatpush1.bf16.msra.mxu0 0
      %6093 = vmatprep.subr.bf16.mxu0 0
      %6094 = vmatpush1.bf16.msra.mxu0 0
      %6095 = vmatprep.subr.bf16.mxu0 0
      %6096 = vmatpush1.bf16.msra.mxu0 0
      %6097 = vmatprep.subr.bf16.mxu0 0
      %6098 = vmatpush1.bf16.msra.mxu0 0
      %6099 = vmatprep.subr.bf16.mxu0 0
      %6100 = vmatpush1.bf16.msra.mxu0 0
      %6101 = vmatprep.subr.bf16.mxu0 0
      %6102 = vmatpush1.bf16.msra.mxu0 0
      %6103 = vmatprep.mubr.bf16.mxu0 0
      %6104 = vmatmul.mubr.bf16.gmra.mrb[0].mxu0 %v6060
      %v6105 = vpop.f32.mrb[0].mxu0
      %v6106 = vadd.f32 0.0, %v6105
      %v6107 = vpop.f32.mrb[0].mxu0
      %v6108 = vpop.f32.mrb[0].mxu0
      %v6109 = vadd.f32 0.0, %v6108
      %v6110 = vpop.f32.mrb[0].mxu0
      %6111 = vmatprep.mubr.bf16.mxu0 0
      %6112 = vmatmul.mubr.bf16.gmra.mrb[0].mxu0 %v6063
      %v6113 = vpop.f32.mrb[0].mxu0
      %v6114 = vadd.f32 0.0, %v6113
      %v6115 = vpop.f32.mrb[0].mxu0
      %v6116 = vpop.f32.mrb[0].mxu0
      %v6117 = vadd.f32 0.0, %v6116
      %v6118 = vpop.f32.mrb[0].mxu0
      %6119 = vmatprep.mubr.bf16.mxu0 0
      %6120 = vmatmul.mubr.bf16.gmra.mrb[0].mxu0 %v6066
      %v6121 = vpop.f32.mrb[0].mxu0
      %v6122 = vadd.f32 0.0, %v6121
      %v6123 = vpop.f32.mrb[0].mxu0
      %v6124 = vpop.f32.mrb[0].mxu0
      %v6125 = vadd.f32 0.0, %v6124
      %v6126 = vpop.f32.mrb[0].mxu0
      %6127 = vmatprep.mubr.bf16.mxu0 0
      %6128 = vmatmul.mubr.bf16.gmra.mrb[0].mxu0 %v6069
      %v6129 = vpop.f32.mrb[0].mxu0
      %v6130 = vadd.f32 0.0, %v6129
      %v6131 = vpop.f32.mrb[0].mxu0
      %v6132 = vpop.f32.mrb[0].mxu0
      %v6133 = vpop.f32.mrb[0].mxu0
      %6134 = vdwg.mxu0
      %v6135 = vadd.f32 %v5589, %v6106
      %v6136 = vadd.f32 %v5590, %v6109
      %v6137 = vadd.f32 %v5591, %v6114
      %v6138 = vadd.f32 %v5592, %v6117
      %v6139 = vadd.f32 %v5593, %v6122
      %v6140 = vadd.f32 %v5594, %v6125
      %v6141 = vadd.f32 %v5595, %v6130
      %6155 = vmatprep.subr.bf16.mxu0 0
      %6156 = vmatpush1.bf16.msra.mxu0 %v690
      %6157 = vmatprep.subr.bf16.mxu0 0
      %6158 = vmatpush1.bf16.msra.mxu0 %v691
      %6159 = vmatprep.subr.bf16.mxu0 0
      %6160 = vmatpush1.bf16.msra.mxu0 %v692
      %6161 = vmatprep.subr.bf16.mxu0 0
      %6162 = vmatpush1.bf16.msra.mxu0 %v693
      %6163 = vmatprep.subr.bf16.mxu0 0
      %6164 = vmatpush1.bf16.msra.mxu0 %v694
      %6165 = vmatprep.subr.bf16.mxu0 0
      %6166 = vmatpush1.bf16.msra.mxu0 %v695
      %6167 = vmatprep.subr.bf16.mxu0 0
      %6168 = vmatpush1.bf16.msra.mxu0 %v696
      %6169 = vmatprep.subr.bf16.mxu0 0
      %6170 = vmatpush1.bf16.msra.mxu0 %v697
      %6171 = vmatprep.subr.bf16.mxu0 0
      %6172 = vmatpush1.bf16.msra.mxu0 %v698
      %6173 = vmatprep.subr.bf16.mxu0 0
      %6174 = vmatpush1.bf16.msra.mxu0 %v699
      %6175 = vmatprep.subr.bf16.mxu0 0
      %6176 = vmatpush1.bf16.msra.mxu0 %v700
      %6177 = vmatprep.subr.bf16.mxu0 0
      %6178 = vmatpush1.bf16.msra.mxu0 %v701
      %6179 = vmatprep.subr.bf16.mxu0 0
      %6180 = vmatpush1.bf16.msra.mxu0 %v702
      %6181 = vmatprep.subr.bf16.mxu0 0
      %6182 = vmatpush1.bf16.msra.mxu0 0
      %6183 = vmatprep.subr.bf16.mxu0 0
      %6184 = vmatpush1.bf16.msra.mxu0 0
      %6185 = vmatprep.subr.bf16.mxu0 0
      %6186 = vmatpush1.bf16.msra.mxu0 0
      %6187 = vmatprep.mubr.bf16.mxu0 %v1610
      %6188 = vmatmul.mubr.bf16.gmra.mrb[0].mxu0 %v1583
      %v6189 = vpop.f32.mrb[0].mxu0
      %v6190 = vadd.f32 0.0, %v6189
      %v6191 = vpop.f32.mrb[0].mxu0
      %v6192 = vpop.f32.mrb[0].mxu0
      %v6193 = vadd.f32 0.0, %v6192
      %v6194 = vpop.f32.mrb[0].mxu0
      %6195 = vmatprep.mubr.bf16.mxu0 %v1613
      %6196 = vmatmul.mubr.bf16.gmra.mrb[0].mxu0 %v1585
      %v6197 = vpop.f32.mrb[0].mxu0
      %v6198 = vadd.f32 0.0, %v6197
      %v6199 = vpop.f32.mrb[0].mxu0
      %v6200 = vpop.f32.mrb[0].mxu0
      %v6201 = vadd.f32 0.0, %v6200
      %v6202 = vpop.f32.mrb[0].mxu0
      %6203 = vmatprep.mubr.bf16.mxu0 %v1616
      %6204 = vmatmul.mubr.bf16.gmra.mrb[0].mxu0 %v1587
      %v6205 = vpop.f32.mrb[0].mxu0
      %v6206 = vadd.f32 0.0, %v6205
      %v6207 = vpop.f32.mrb[0].mxu0
      %v6208 = vpop.f32.mrb[0].mxu0
      %v6209 = vadd.f32 0.0, %v6208
      %v6210 = vpop.f32.mrb[0].mxu0
      %6211 = vmatprep.mubr.bf16.mxu0 %v1619
      %6212 = vmatmul.mubr.bf16.gmra.mrb[0].mxu0 %v1589
      %v6213 = vpop.f32.mrb[0].mxu0
      %v6214 = vadd.f32 0.0, %v6213
      %v6215 = vpop.f32.mrb[0].mxu0
      %v6216 = vpop.f32.mrb[0].mxu0
      %v6217 = vpop.f32.mrb[0].mxu0
      %6218 = vdwg.mxu0
      %v6219 = vpack.c.bf16 %v6193, %v6190
      %v6220 = vpack.c.bf16 %v6201, %v6198
      %v6221 = vpack.c.bf16 %v6209, %v6206
      %v6222 = vpack.c.bf16 %v6214, %v6214
      %v6224 = vsel %vm736, %v6219, 0
      %v6227 = vsel %vm736, %v6220, 0
      %v6230 = vsel %vm736, %v6221, 0
      %v6233 = vsel %vm736, %v6222, 0
      %6235 = vmatprep.subr.bf16.mxu0 %v1713
      %6236 = vmatpush1.bf16.msra.mxu0 %v1712
      %6237 = vmatprep.subr.bf16.mxu0 %v1715
      %6238 = vmatpush1.bf16.msra.mxu0 %v1714
      %6239 = vmatprep.subr.bf16.mxu0 0
      %6240 = vmatpush1.bf16.msra.mxu0 0
      %6241 = vmatprep.subr.bf16.mxu0 0
      %6242 = vmatpush1.bf16.msra.mxu0 0
      %6243 = vmatprep.subr.bf16.mxu0 0
      %6244 = vmatpush1.bf16.msra.mxu0 0
      %6245 = vmatprep.subr.bf16.mxu0 0
      %6246 = vmatpush1.bf16.msra.mxu0 0
      %6247 = vmatprep.subr.bf16.mxu0 0
      %6248 = vmatpush1.bf16.msra.mxu0 0
      %6249 = vmatprep.subr.bf16.mxu0 0
      %6250 = vmatpush1.bf16.msra.mxu0 0
      %6251 = vmatprep.subr.bf16.mxu0 0
      %6252 = vmatpush1.bf16.msra.mxu0 0
      %6253 = vmatprep.subr.bf16.mxu0 0
      %6254 = vmatpush1.bf16.msra.mxu0 0
      %6255 = vmatprep.subr.bf16.mxu0 0
      %6256 = vmatpush1.bf16.msra.mxu0 0
      %6257 = vmatprep.subr.bf16.mxu0 0
      %6258 = vmatpush1.bf16.msra.mxu0 0
      %6259 = vmatprep.subr.bf16.mxu0 0
      %6260 = vmatpush1.bf16.msra.mxu0 0
      %6261 = vmatprep.subr.bf16.mxu0 0
      %6262 = vmatpush1.bf16.msra.mxu0 0
      %6263 = vmatprep.subr.bf16.mxu0 0
      %6264 = vmatpush1.bf16.msra.mxu0 0
      %6265 = vmatprep.subr.bf16.mxu0 0
      %6266 = vmatpush1.bf16.msra.mxu0 0
      %6267 = vmatprep.mubr.bf16.mxu0 0
      %6268 = vmatmul.mubr.bf16.gmra.mrb[0].mxu0 %v6224
      %v6269 = vpop.f32.mrb[0].mxu0
      %v6270 = vadd.f32 %v1693, %v6269
      %v6271 = vpop.f32.mrb[0].mxu0
      %v6272 = vadd.f32 %v1697, %v6271
      %v6273 = vpop.f32.mrb[0].mxu0
      %v6274 = vadd.f32 %v1693, %v6273
      %v6275 = vpop.f32.mrb[0].mxu0
      %v6276 = vadd.f32 %v1697, %v6275
      %6277 = vmatprep.mubr.bf16.mxu0 0
      %6278 = vmatmul.mubr.bf16.gmra.mrb[0].mxu0 %v6227
      %v6279 = vpop.f32.mrb[0].mxu0
      %v6280 = vadd.f32 %v1693, %v6279
      %v6281 = vpop.f32.mrb[0].mxu0
      %v6282 = vadd.f32 %v1697, %v6281
      %v6283 = vpop.f32.mrb[0].mxu0
      %v6284 = vadd.f32 %v1693, %v6283
      %v6285 = vpop.f32.mrb[0].mxu0
      %v6286 = vadd.f32 %v1697, %v6285
      %6287 = vmatprep.mubr.bf16.mxu0 0
      %6288 = vmatmul.mubr.bf16.gmra.mrb[0].mxu0 %v6230
      %v6289 = vpop.f32.mrb[0].mxu0
      %v6290 = vadd.f32 %v1693, %v6289
      %v6291 = vpop.f32.mrb[0].mxu0
      %v6292 = vadd.f32 %v1697, %v6291
      %v6293 = vpop.f32.mrb[0].mxu0
      %v6294 = vadd.f32 %v1693, %v6293
      %v6295 = vpop.f32.mrb[0].mxu0
      %v6296 = vadd.f32 %v1697, %v6295
      %6297 = vmatprep.mubr.bf16.mxu0 0
      %6298 = vmatmul.mubr.bf16.gmra.mrb[0].mxu0 %v6233
      %v6299 = vpop.f32.mrb[0].mxu0
      %v6300 = vadd.f32 %v1693, %v6299
      %v6301 = vpop.f32.mrb[0].mxu0
      %v6302 = vadd.f32 %v1697, %v6301
      %v6303 = vpop.f32.mrb[0].mxu0
      %v6304 = vpop.f32.mrb[0].mxu0
      %6305 = vdwg.mxu0
      %v6306 = vpack.c.bf16 %v6274, %v6270
      %v6307 = vpack.c.bf16 %v6276, %v6272
      %v6308 = vpack.c.bf16 %v6284, %v6280
      %v6309 = vpack.c.bf16 %v6286, %v6282
      %v6310 = vpack.c.bf16 %v6294, %v6290
      %v6311 = vpack.c.bf16 %v6296, %v6292
      %v6312 = vpack.c.bf16 %v6300, %v6300
      %v6313 = vpack.c.bf16 %v6302, %v6302
      %v6315 = vsel %vm1825, %v6306, 0
      %v6318 = vsel %vm1825, %v6308, 0
      %v6321 = vsel %vm1825, %v6310, 0
      %v6324 = vsel %vm1825, %v6312, 0
      %v6327 = vsel %vm1825, %v1498, 0
      %v6330 = vsel %vm1825, %v1500, 0
      %v6333 = vsel %vm1825, %v1502, 0
      %v6336 = vsel %vm1825, %v1504, 0
      %v6339 = vsel %vm1825, %v1506, 0
      %v6342 = vsel %vm1825, %v1508, 0
      %v6345 = vsel %vm1825, %v1510, 0
      %v6348 = vsel %vm1825, %v1512, 0
      %v6351 = vsel %vm1825, %v1514, 0
      %v6354 = vsel %vm1825, %v1516, 0
      %v6357 = vsel %vm1825, %v1518, 0
      %v6360 = vsel %vm1825, %v1520, 0
      %v6363 = vsel %vm1825, %v1522, 0
      %6365 = vmatprep.subr.bf16.mxu0 0
      %6366 = vmatpush1.bf16.xpose.msra.mxu0 %v6327
      %6367 = vmatprep.subr.bf16.mxu0 0
      %6368 = vmatpush1.bf16.xpose.msra.mxu0 %v6330
      %6369 = vmatprep.subr.bf16.mxu0 0
      %6370 = vmatpush1.bf16.xpose.msra.mxu0 %v6333
      %6371 = vmatprep.subr.bf16.mxu0 0
      %6372 = vmatpush1.bf16.xpose.msra.mxu0 %v6336
      %6373 = vmatprep.subr.bf16.mxu0 0
      %6374 = vmatpush1.bf16.xpose.msra.mxu0 %v6339
      %6375 = vmatprep.subr.bf16.mxu0 0
      %6376 = vmatpush1.bf16.xpose.msra.mxu0 %v6342
      %6377 = vmatprep.subr.bf16.mxu0 0
      %6378 = vmatpush1.bf16.xpose.msra.mxu0 %v6345
      %6379 = vmatprep.subr.bf16.mxu0 0
      %6380 = vmatpush1.bf16.xpose.msra.mxu0 %v6348
      %6381 = vmatprep.subr.bf16.mxu0 0
      %6382 = vmatpush1.bf16.xpose.msra.mxu0 %v6351
      %6383 = vmatprep.subr.bf16.mxu0 0
      %6384 = vmatpush1.bf16.xpose.msra.mxu0 %v6354
      %6385 = vmatprep.subr.bf16.mxu0 0
      %6386 = vmatpush1.bf16.xpose.msra.mxu0 %v6357
      %6387 = vmatprep.subr.bf16.mxu0 0
      %6388 = vmatpush1.bf16.xpose.msra.mxu0 %v6360
      %6389 = vmatprep.subr.bf16.mxu0 0
      %6390 = vmatpush1.bf16.xpose.msra.mxu0 %v6363
      %6391 = vmatprep.subr.bf16.mxu0 0
      %6392 = vmatpush1.bf16.xpose.msra.mxu0 0
      %6393 = vmatprep.subr.bf16.mxu0 0
      %6394 = vmatpush1.bf16.xpose.msra.mxu0 0
      %6395 = vmatprep.subr.bf16.mxu0 0
      %6396 = vmatpush1.bf16.xpose.msra.mxu0 0
      %6397 = vmatprep.mubr.bf16.mxu0 0
      %6398 = vmatmul.mubr.bf16.gmra.mrb[0].mxu0 %v6315
      %v6399 = vpop.f32.mrb[0].mxu0
      %v6400 = vadd.f32 %v1811, %v6399
      %v6401 = vpop.f32.mrb[0].mxu0
      %v6402 = vadd.f32 %v1812, %v6401
      %v6403 = vpop.f32.mrb[0].mxu0
      %v6404 = vadd.f32 %v1813, %v6403
      %v6405 = vpop.f32.mrb[0].mxu0
      %v6406 = vadd.f32 %v1814, %v6405
      %6407 = vmatprep.mubr.bf16.mxu0 0
      %6408 = vmatmul.mubr.bf16.gmra.mrb[0].mxu0 %v6318
      %v6409 = vpop.f32.mrb[0].mxu0
      %v6410 = vadd.f32 %v1815, %v6409
      %v6411 = vpop.f32.mrb[0].mxu0
      %v6412 = vadd.f32 %v1816, %v6411
      %v6413 = vpop.f32.mrb[0].mxu0
      %v6414 = vadd.f32 %v1817, %v6413
      %v6415 = vpop.f32.mrb[0].mxu0
      %v6416 = vadd.f32 %v1818, %v6415
      %6417 = vmatprep.mubr.bf16.mxu0 0
      %6418 = vmatmul.mubr.bf16.gmra.mrb[0].mxu0 %v6321
      %v6419 = vpop.f32.mrb[0].mxu0
      %v6420 = vadd.f32 %v1819, %v6419
      %v6421 = vpop.f32.mrb[0].mxu0
      %v6422 = vadd.f32 %v1820, %v6421
      %v6423 = vpop.f32.mrb[0].mxu0
      %v6424 = vadd.f32 %v1821, %v6423
      %v6425 = vpop.f32.mrb[0].mxu0
      %v6426 = vadd.f32 %v1822, %v6425
      %6427 = vmatprep.mubr.bf16.mxu0 0
      %6428 = vmatmul.mubr.bf16.gmra.mrb[0].mxu0 %v6324
      %v6429 = vpop.f32.mrb[0].mxu0
      %v6430 = vadd.f32 %v1823, %v6429
      %v6431 = vpop.f32.mrb[0].mxu0
      %v6432 = vadd.f32 %v1824, %v6431
      %v6433 = vpop.f32.mrb[0].mxu0
      %v6434 = vpop.f32.mrb[0].mxu0
      %6435 = vdwg.mxu0
      %v6436 = vsel %vm1608, %v6402, -inf
      %v6437 = vmax.f32 %v6400, %v6436
      %6438 = vmax.xlane.f32.xlu0 %v6437
      %v6439 = vpop.xlane.xlu0 %6438
      %v6440 = vsel %vm1608, %v6406, -inf
      %v6441 = vmax.f32 %v6404, %v6440
      %6442 = vmax.xlane.f32.xlu0 %v6441
      %v6443 = vpop.xlane.xlu0 %6442
      %v6444 = vsel %vm1608, %v6412, -inf
      %v6445 = vmax.f32 %v6410, %v6444
      %6446 = vmax.xlane.f32.xlu0 %v6445
      %v6447 = vpop.xlane.xlu0 %6446
      %v6448 = vsel %vm1608, %v6416, -inf
      %v6449 = vmax.f32 %v6414, %v6448
      %6450 = vmax.xlane.f32.xlu0 %v6449
      %v6451 = vpop.xlane.xlu0 %6450
      %v6452 = vsel %vm1608, %v6422, -inf
      %v6453 = vmax.f32 %v6420, %v6452
      %6454 = vmax.xlane.f32.xlu0 %v6453
      %v6455 = vpop.xlane.xlu0 %6454
      %v6456 = vsel %vm1608, %v6426, -inf
      %v6457 = vmax.f32 %v6424, %v6456
      %6458 = vmax.xlane.f32.xlu0 %v6457
      %v6459 = vpop.xlane.xlu0 %6458
      %v6460 = vsel %vm1972, %v6430, -inf
      %v6461 = vsel %vm1974, %v6432, -inf
      %v6462 = vmax.f32 %v6460, %v6461
      %6463 = vmax.xlane.f32.xlu0 %v6462
      %v6464 = vpop.xlane.xlu0 %6463
      %v6465 = vsub.f32 %v6400, %v6439
      %v6466 = vsub.f32 %v6402, %v6439
      %v6467 = vsub.f32 %v6404, %v6443
      %v6468 = vsub.f32 %v6406, %v6443
      %v6469 = vsub.f32 %v6410, %v6447
      %v6470 = vsub.f32 %v6412, %v6447
      %v6471 = vsub.f32 %v6414, %v6451
      %v6472 = vsub.f32 %v6416, %v6451
      %v6473 = vsub.f32 %v6420, %v6455
      %v6474 = vsub.f32 %v6422, %v6455
      %v6475 = vsub.f32 %v6424, %v6459
      %v6476 = vsub.f32 %v6426, %v6459
      %v6477 = vsub.f32 %v6430, %v6464
      %v6478 = vsub.f32 %v6432, %v6464
      %v6479 = vmul.f32 %v6465, 1.442695
      %v6480 = vpow.pop %v6479
      %v6481 = vmul.f32 %v6466, 1.442695
      %v6482 = vpow.pop %v6481
      %v6483 = vmul.f32 %v6467, 1.442695
      %v6484 = vpow.pop %v6483
      %v6485 = vmul.f32 %v6468, 1.442695
      %v6486 = vpow.pop %v6485
      %v6487 = vmul.f32 %v6469, 1.442695
      %v6488 = vpow.pop %v6487
      %v6489 = vmul.f32 %v6470, 1.442695
      %v6490 = vpow.pop %v6489
      %v6491 = vmul.f32 %v6471, 1.442695
      %v6492 = vpow.pop %v6491
      %v6493 = vmul.f32 %v6472, 1.442695
      %v6494 = vpow.pop %v6493
      %v6495 = vmul.f32 %v6473, 1.442695
      %v6496 = vpow.pop %v6495
      %v6497 = vmul.f32 %v6474, 1.442695
      %v6498 = vpow.pop %v6497
      %v6499 = vmul.f32 %v6475, 1.442695
      %v6500 = vpow.pop %v6499
      %v6501 = vmul.f32 %v6476, 1.442695
      %v6502 = vpow.pop %v6501
      %v6503 = vmul.f32 %v6477, 1.442695
      %v6504 = vpow.pop %v6503
      %v6505 = vmul.f32 %v6478, 1.442695
      %v6506 = vpow.pop %v6505
      %v6507 = vsel %vm1608, %v6482, 0.0
      %v6508 = vadd.f32 %v6480, %v6507
      %6509 = vadd.xlane.f32.xlu0 %v6508
      %v6510 = vpop.xlane.xlu0 %6509
      %v6511 = vsel %vm1608, %v6486, 0.0
      %v6512 = vadd.f32 %v6484, %v6511
      %6513 = vadd.xlane.f32.xlu0 %v6512
      %v6514 = vpop.xlane.xlu0 %6513
      %v6515 = vsel %vm1608, %v6490, 0.0
      %v6516 = vadd.f32 %v6488, %v6515
      %6517 = vadd.xlane.f32.xlu0 %v6516
      %v6518 = vpop.xlane.xlu0 %6517
      %v6519 = vsel %vm1608, %v6494, 0.0
      %v6520 = vadd.f32 %v6492, %v6519
      %6521 = vadd.xlane.f32.xlu0 %v6520
      %v6522 = vpop.xlane.xlu0 %6521
      %v6523 = vsel %vm1608, %v6498, 0.0
      %v6524 = vadd.f32 %v6496, %v6523
      %6525 = vadd.xlane.f32.xlu0 %v6524
      %v6526 = vpop.xlane.xlu0 %6525
      %v6527 = vsel %vm1608, %v6502, 0.0
      %v6528 = vadd.f32 %v6500, %v6527
      %6529 = vadd.xlane.f32.xlu0 %v6528
      %v6530 = vpop.xlane.xlu0 %6529
      %v6531 = vsel %vm1972, %v6504, 0.0
      %v6532 = vsel %vm1974, %v6506, 0.0
      %v6533 = vadd.f32 %v6531, %v6532
      %6534 = vadd.xlane.f32.xlu0 %v6533
      %v6535 = vpop.xlane.xlu0 %6534
      %v6536 = vrcp.pop %v6510
      %v6537 = vrcp.pop %v6514
      %v6538 = vrcp.pop %v6518
      %v6539 = vrcp.pop %v6522
      %v6540 = vrcp.pop %v6526
      %v6541 = vrcp.pop %v6530
      %v6542 = vrcp.pop %v6535
      %v6543 = vmul.f32 %v6480, %v6536
      %v6544 = vmul.f32 %v6482, %v6536
      %v6545 = vmul.f32 %v6484, %v6537
      %v6546 = vmul.f32 %v6486, %v6537
      %v6547 = vmul.f32 %v6488, %v6538
      %v6548 = vmul.f32 %v6490, %v6538
      %v6549 = vmul.f32 %v6492, %v6539
      %v6550 = vmul.f32 %v6494, %v6539
      %v6551 = vmul.f32 %v6496, %v6540
      %v6552 = vmul.f32 %v6498, %v6540
      %v6553 = vmul.f32 %v6500, %v6541
      %v6554 = vmul.f32 %v6502, %v6541
      %v6555 = vmul.f32 %v6504, %v6542
      %v6556 = vmul.f32 %v6506, %v6542
      %v6557 = vpack.c.bf16 %v6545, %v6543
      %v6558 = vpack.c.bf16 %v6546, %v6544
      %v6559 = vpack.c.bf16 %v6549, %v6547
      %v6560 = vpack.c.bf16 %v6550, %v6548
      %v6561 = vpack.c.bf16 %v6553, %v6551
      %v6562 = vpack.c.bf16 %v6554, %v6552
      %v6563 = vpack.c.bf16 %v6555, %v6555
      %v6564 = vpack.c.bf16 %v6556, %v6556
      %v6566 = vsel %vm1608, %v6558, 0
      %v6569 = vsel %vm1608, %v6560, 0
      %v6572 = vsel %vm1608, %v6562, 0
      %v6575 = vsel %vm1608, %v6564, 0
      %6577 = vmatprep.subr.bf16.mxu0 0
      %6578 = vmatpush1.bf16.msra.mxu0 %v1498
      %6579 = vmatprep.subr.bf16.mxu0 0
      %6580 = vmatpush1.bf16.msra.mxu0 %v1500
      %6581 = vmatprep.subr.bf16.mxu0 0
      %6582 = vmatpush1.bf16.msra.mxu0 %v1502
      %6583 = vmatprep.subr.bf16.mxu0 0
      %6584 = vmatpush1.bf16.msra.mxu0 %v1504
      %6585 = vmatprep.subr.bf16.mxu0 0
      %6586 = vmatpush1.bf16.msra.mxu0 %v1506
      %6587 = vmatprep.subr.bf16.mxu0 0
      %6588 = vmatpush1.bf16.msra.mxu0 %v1508
      %6589 = vmatprep.subr.bf16.mxu0 0
      %6590 = vmatpush1.bf16.msra.mxu0 %v1510
      %6591 = vmatprep.subr.bf16.mxu0 0
      %6592 = vmatpush1.bf16.msra.mxu0 %v1512
      %6593 = vmatprep.subr.bf16.mxu0 0
      %6594 = vmatpush1.bf16.msra.mxu0 %v1514
      %6595 = vmatprep.subr.bf16.mxu0 0
      %6596 = vmatpush1.bf16.msra.mxu0 %v1516
      %6597 = vmatprep.subr.bf16.mxu0 0
      %6598 = vmatpush1.bf16.msra.mxu0 %v1518
      %6599 = vmatprep.subr.bf16.mxu0 0
      %6600 = vmatpush1.bf16.msra.mxu0 %v1520
      %6601 = vmatprep.subr.bf16.mxu0 0
      %6602 = vmatpush1.bf16.msra.mxu0 %v1522
      %6603 = vmatprep.subr.bf16.mxu0 0
      %6604 = vmatpush1.bf16.msra.mxu0 0
      %6605 = vmatprep.subr.bf16.mxu0 0
      %6606 = vmatpush1.bf16.msra.mxu0 0
      %6607 = vmatprep.subr.bf16.mxu0 0
      %6608 = vmatpush1.bf16.msra.mxu0 0
      %6609 = vmatprep.mubr.bf16.mxu0 %v6566
      %6610 = vmatmul.mubr.bf16.gmra.mrb[0].mxu0 %v6557
      %v6611 = vpop.f32.mrb[0].mxu0
      %v6612 = vadd.f32 0.0, %v6611
      %v6613 = vpop.f32.mrb[0].mxu0
      %v6614 = vpop.f32.mrb[0].mxu0
      %v6615 = vadd.f32 0.0, %v6614
      %v6616 = vpop.f32.mrb[0].mxu0
      %6617 = vmatprep.mubr.bf16.mxu0 %v6569
      %6618 = vmatmul.mubr.bf16.gmra.mrb[0].mxu0 %v6559
      %v6619 = vpop.f32.mrb[0].mxu0
      %v6620 = vadd.f32 0.0, %v6619
      %v6621 = vpop.f32.mrb[0].mxu0
      %v6622 = vpop.f32.mrb[0].mxu0
      %v6623 = vadd.f32 0.0, %v6622
      %v6624 = vpop.f32.mrb[0].mxu0
      %6625 = vmatprep.mubr.bf16.mxu0 %v6572
      %6626 = vmatmul.mubr.bf16.gmra.mrb[0].mxu0 %v6561
      %v6627 = vpop.f32.mrb[0].mxu0
      %v6628 = vadd.f32 0.0, %v6627
      %v6629 = vpop.f32.mrb[0].mxu0
      %v6630 = vpop.f32.mrb[0].mxu0
      %v6631 = vadd.f32 0.0, %v6630
      %v6632 = vpop.f32.mrb[0].mxu0
      %6633 = vmatprep.mubr.bf16.mxu0 %v6575
      %6634 = vmatmul.mubr.bf16.gmra.mrb[0].mxu0 %v6563
      %v6635 = vpop.f32.mrb[0].mxu0
      %v6636 = vadd.f32 0.0, %v6635
      %v6637 = vpop.f32.mrb[0].mxu0
      %v6638 = vpop.f32.mrb[0].mxu0
      %v6639 = vpop.f32.mrb[0].mxu0
      %6640 = vdwg.mxu0
      %v6641 = vadd.f32 %v6612, 3.0
      %v6642 = vadd.f32 %v6615, 3.0
      %v6643 = vadd.f32 %v6620, 3.0
      %v6644 = vadd.f32 %v6623, 3.0
      %v6645 = vadd.f32 %v6628, 3.0
      %v6646 = vadd.f32 %v6631, 3.0
      %v6647 = vadd.f32 %v6636, 3.0
      %v6648 = vmax.f32 %v6641, 0.0
      %v6649 = vmax.f32 %v6642, 0.0
      %v6650 = vmax.f32 %v6643, 0.0
      %v6651 = vmax.f32 %v6644, 0.0
      %v6652 = vmax.f32 %v6645, 0.0
      %v6653 = vmax.f32 %v6646, 0.0
      %v6654 = vmax.f32 %v6647, 0.0
      %v6655 = vmin.f32 %v6648, 6.0
      %v6656 = vmin.f32 %v6649, 6.0
      %v6657 = vmin.f32 %v6650, 6.0
      %v6658 = vmin.f32 %v6651, 6.0
      %v6659 = vmin.f32 %v6652, 6.0
      %v6660 = vmin.f32 %v6653, 6.0
      %v6661 = vmin.f32 %v6654, 6.0
      %v6662 = vmul.f32 %v6612, %v6655
      %v6663 = vmul.f32 %v6615, %v6656
      %v6664 = vmul.f32 %v6620, %v6657
      %v6665 = vmul.f32 %v6623, %v6658
      %v6666 = vmul.f32 %v6628, %v6659
      %v6667 = vmul.f32 %v6631, %v6660
      %v6668 = vmul.f32 %v6636, %v6661
      %v6669 = vmul.f32 %v6662, 0.16666667
      %v6670 = vmul.f32 %v6663, 0.16666667
      %v6671 = vmul.f32 %v6664, 0.16666667
      %v6672 = vmul.f32 %v6665, 0.16666667
      %v6673 = vmul.f32 %v6666, 0.16666667
      %v6674 = vmul.f32 %v6667, 0.16666667
      %v6675 = vmul.f32 %v6668, 0.16666667
      %v6676 = vpack.c.bf16 %v6670, %v6669
      %v6677 = vpack.c.bf16 %v6672, %v6671
      %v6678 = vpack.c.bf16 %v6674, %v6673
      %v6679 = vpack.c.bf16 %v6675, %v6675
      %s6680 = scalar_lea.vmem %s7, 256
      %v6681 = vld [vmem:[%s6680] sm:$0xf]
      %v6682 = vld [vmem:[%s6680 + $0x4] sm:$0xf]
      %v6683 = vld [vmem:[%s6680 + $0x8] sm:$0xf]
      %v6684 = vld [vmem:[%s6680 + $0xc] sm:$0xf]
      %v6685 = vld [vmem:[%s6680 + $0x10] sm:$0xf]
      %v6686 = vld [vmem:[%s6680 + $0x14] sm:$0xf]
      %v6687 = vld [vmem:[%s6680 + $0x18] sm:$0xf]
      %v6688 = vld [vmem:[%s6680 + $0x1c] sm:$0xf]
      %v6697 = vunpack.c.l.b16 %v6681
      %v6698 = vunpack.c.l.b16 %v6682
      %v6699 = vunpack.c.l.b16 %v6683
      %v6700 = vunpack.c.l.b16 %v6684
      %v6701 = vunpack.c.l.b16 %v6685
      %v6702 = vunpack.c.l.b16 %v6686
      %v6703 = vunpack.c.l.b16 %v6687
      %v6704 = vunpack.c.l.b16 %v6688
      %v6705 = vpack.c.b16 %v6698, %v6697
      %v6706 = vpack.c.b16 %v6700, %v6699
      %v6707 = vpack.c.b16 %v6702, %v6701
      %v6708 = vpack.c.b16 %v6704, %v6703
      %v6714 = vsel %vm1825, %v6676, 0
      %v6717 = vsel %vm1825, %v6677, 0
      %v6720 = vsel %vm1825, %v6678, 0
      %v6723 = vsel %vm1825, %v6679, 0
      %6725 = vmatprep.subr.bf16.mxu0 0
      %6726 = vmatpush1.bf16.msra.mxu0 %v6705
      %6727 = vmatprep.subr.bf16.mxu0 0
      %6728 = vmatpush1.bf16.msra.mxu0 %v6706
      %6729 = vmatprep.subr.bf16.mxu0 0
      %6730 = vmatpush1.bf16.msra.mxu0 %v6707
      %6731 = vmatprep.subr.bf16.mxu0 0
      %6732 = vmatpush1.bf16.msra.mxu0 %v6708
      %6733 = vmatprep.subr.bf16.mxu0 0
      %6734 = vmatpush1.bf16.msra.mxu0 0
      %6735 = vmatprep.subr.bf16.mxu0 0
      %6736 = vmatpush1.bf16.msra.mxu0 0
      %6737 = vmatprep.subr.bf16.mxu0 0
      %6738 = vmatpush1.bf16.msra.mxu0 0
      %6739 = vmatprep.subr.bf16.mxu0 0
      %6740 = vmatpush1.bf16.msra.mxu0 0
      %6741 = vmatprep.subr.bf16.mxu0 0
      %6742 = vmatpush1.bf16.msra.mxu0 0
      %6743 = vmatprep.subr.bf16.mxu0 0
      %6744 = vmatpush1.bf16.msra.mxu0 0
      %6745 = vmatprep.subr.bf16.mxu0 0
      %6746 = vmatpush1.bf16.msra.mxu0 0
      %6747 = vmatprep.subr.bf16.mxu0 0
      %6748 = vmatpush1.bf16.msra.mxu0 0
      %6749 = vmatprep.subr.bf16.mxu0 0
      %6750 = vmatpush1.bf16.msra.mxu0 0
      %6751 = vmatprep.subr.bf16.mxu0 0
      %6752 = vmatpush1.bf16.msra.mxu0 0
      %6753 = vmatprep.subr.bf16.mxu0 0
      %6754 = vmatpush1.bf16.msra.mxu0 0
      %6755 = vmatprep.subr.bf16.mxu0 0
      %6756 = vmatpush1.bf16.msra.mxu0 0
      %6757 = vmatprep.mubr.bf16.mxu0 0
      %6758 = vmatmul.mubr.bf16.gmra.mrb[0].mxu0 %v6714
      %v6759 = vpop.f32.mrb[0].mxu0
      %v6760 = vadd.f32 0.0, %v6759
      %v6761 = vpop.f32.mrb[0].mxu0
      %v6762 = vpop.f32.mrb[0].mxu0
      %v6763 = vadd.f32 0.0, %v6762
      %v6764 = vpop.f32.mrb[0].mxu0
      %6765 = vmatprep.mubr.bf16.mxu0 0
      %6766 = vmatmul.mubr.bf16.gmra.mrb[0].mxu0 %v6717
      %v6767 = vpop.f32.mrb[0].mxu0
      %v6768 = vadd.f32 0.0, %v6767
      %v6769 = vpop.f32.mrb[0].mxu0
      %v6770 = vpop.f32.mrb[0].mxu0
      %v6771 = vadd.f32 0.0, %v6770
      %v6772 = vpop.f32.mrb[0].mxu0
      %6773 = vmatprep.mubr.bf16.mxu0 0
      %6774 = vmatmul.mubr.bf16.gmra.mrb[0].mxu0 %v6720
      %v6775 = vpop.f32.mrb[0].mxu0
      %v6776 = vadd.f32 0.0, %v6775
      %v6777 = vpop.f32.mrb[0].mxu0
      %v6778 = vpop.f32.mrb[0].mxu0
      %v6779 = vadd.f32 0.0, %v6778
      %v6780 = vpop.f32.mrb[0].mxu0
      %6781 = vmatprep.mubr.bf16.mxu0 0
      %6782 = vmatmul.mubr.bf16.gmra.mrb[0].mxu0 %v6723
      %v6783 = vpop.f32.mrb[0].mxu0
      %v6784 = vadd.f32 0.0, %v6783
      %v6785 = vpop.f32.mrb[0].mxu0
      %v6786 = vpop.f32.mrb[0].mxu0
      %v6787 = vpop.f32.mrb[0].mxu0
      %6788 = vdwg.mxu0
      %v6789 = vadd.f32 %v6135, %v6760
      %v6790 = vadd.f32 %v6136, %v6763
      %v6791 = vadd.f32 %v6137, %v6768
      %v6792 = vadd.f32 %v6138, %v6771
      %v6793 = vadd.f32 %v6139, %v6776
      %v6794 = vadd.f32 %v6140, %v6779
      %v6795 = vadd.f32 %v6141, %v6784
      %6800 = vrot.lane.b32.xlu0 %v6306, 64
      %v6801 = vpop.permute.xlu0 %6800
      %6802 = vrot.lane.b32.xlu0 %v6308, 64
      %v6803 = vpop.permute.xlu0 %6802
      %6804 = vrot.lane.b32.xlu0 %v6310, 64
      %v6805 = vpop.permute.xlu0 %6804
      %6806 = vrot.lane.b32.xlu0 %v6312, 64
      %v6807 = vpop.permute.xlu0 %6806
      %6821 = vrot.lane.b32.xlu0 %v1498, 64
      %v6822 = vpop.permute.xlu0 %6821
      %6823 = vrot.lane.b32.xlu0 %v1500, 64
      %v6824 = vpop.permute.xlu0 %6823
      %6825 = vrot.lane.b32.xlu0 %v1502, 64
      %v6826 = vpop.permute.xlu0 %6825
      %6827 = vrot.lane.b32.xlu0 %v1504, 64
      %v6828 = vpop.permute.xlu0 %6827
      %6829 = vrot.lane.b32.xlu0 %v1506, 64
      %v6830 = vpop.permute.xlu0 %6829
      %6831 = vrot.lane.b32.xlu0 %v1508, 64
      %v6832 = vpop.permute.xlu0 %6831
      %6833 = vrot.lane.b32.xlu0 %v1510, 64
      %v6834 = vpop.permute.xlu0 %6833
      %6835 = vrot.lane.b32.xlu0 %v1512, 64
      %v6836 = vpop.permute.xlu0 %6835
      %6837 = vrot.lane.b32.xlu0 %v1514, 64
      %v6838 = vpop.permute.xlu0 %6837
      %6839 = vrot.lane.b32.xlu0 %v1516, 64
      %v6840 = vpop.permute.xlu0 %6839
      %6841 = vrot.lane.b32.xlu0 %v1518, 64
      %v6842 = vpop.permute.xlu0 %6841
      %6843 = vrot.lane.b32.xlu0 %v1520, 64
      %v6844 = vpop.permute.xlu0 %6843
      %6845 = vrot.lane.b32.xlu0 %v1522, 64
      %v6846 = vpop.permute.xlu0 %6845
      %v6848 = vsel %vm1825, %v6801, 0
      %v6851 = vsel %vm1825, %v6803, 0
      %v6854 = vsel %vm1825, %v6805, 0
      %v6857 = vsel %vm1825, %v6807, 0
      %v6860 = vsel %vm1825, %v6822, 0
      %v6863 = vsel %vm1825, %v6824, 0
      %v6866 = vsel %vm1825, %v6826, 0
      %v6869 = vsel %vm1825, %v6828, 0
      %v6872 = vsel %vm1825, %v6830, 0
      %v6875 = vsel %vm1825, %v6832, 0
      %v6878 = vsel %vm1825, %v6834, 0
      %v6881 = vsel %vm1825, %v6836, 0
      %v6884 = vsel %vm1825, %v6838, 0
      %v6887 = vsel %vm1825, %v6840, 0
      %v6890 = vsel %vm1825, %v6842, 0
      %v6893 = vsel %vm1825, %v6844, 0
      %v6896 = vsel %vm1825, %v6846, 0
      %6898 = vmatprep.subr.bf16.mxu0 0
      %6899 = vmatpush1.bf16.xpose.msra.mxu0 %v6860
      %6900 = vmatprep.subr.bf16.mxu0 0
      %6901 = vmatpush1.bf16.xpose.msra.mxu0 %v6863
      %6902 = vmatprep.subr.bf16.mxu0 0
      %6903 = vmatpush1.bf16.xpose.msra.mxu0 %v6866
      %6904 = vmatprep.subr.bf16.mxu0 0
      %6905 = vmatpush1.bf16.xpose.msra.mxu0 %v6869
      %6906 = vmatprep.subr.bf16.mxu0 0
      %6907 = vmatpush1.bf16.xpose.msra.mxu0 %v6872
      %6908 = vmatprep.subr.bf16.mxu0 0
      %6909 = vmatpush1.bf16.xpose.msra.mxu0 %v6875
      %6910 = vmatprep.subr.bf16.mxu0 0
      %6911 = vmatpush1.bf16.xpose.msra.mxu0 %v6878
      %6912 = vmatprep.subr.bf16.mxu0 0
      %6913 = vmatpush1.bf16.xpose.msra.mxu0 %v6881
      %6914 = vmatprep.subr.bf16.mxu0 0
      %6915 = vmatpush1.bf16.xpose.msra.mxu0 %v6884
      %6916 = vmatprep.subr.bf16.mxu0 0
      %6917 = vmatpush1.bf16.xpose.msra.mxu0 %v6887
      %6918 = vmatprep.subr.bf16.mxu0 0
      %6919 = vmatpush1.bf16.xpose.msra.mxu0 %v6890
      %6920 = vmatprep.subr.bf16.mxu0 0
      %6921 = vmatpush1.bf16.xpose.msra.mxu0 %v6893
      %6922 = vmatprep.subr.bf16.mxu0 0
      %6923 = vmatpush1.bf16.xpose.msra.mxu0 %v6896
      %6924 = vmatprep.subr.bf16.mxu0 0
      %6925 = vmatpush1.bf16.xpose.msra.mxu0 0
      %6926 = vmatprep.subr.bf16.mxu0 0
      %6927 = vmatpush1.bf16.xpose.msra.mxu0 0
      %6928 = vmatprep.subr.bf16.mxu0 0
      %6929 = vmatpush1.bf16.xpose.msra.mxu0 0
      %6930 = vmatprep.mubr.bf16.mxu0 0
      %6931 = vmatmul.mubr.bf16.gmra.mrb[0].mxu0 %v6848
      %v6932 = vpop.f32.mrb[0].mxu0
      %v6933 = vadd.f32 %v2203, %v6932
      %v6934 = vpop.f32.mrb[0].mxu0
      %v6935 = vadd.f32 %v2204, %v6934
      %v6936 = vpop.f32.mrb[0].mxu0
      %v6937 = vadd.f32 %v2205, %v6936
      %v6938 = vpop.f32.mrb[0].mxu0
      %v6939 = vadd.f32 %v2206, %v6938
      %6940 = vmatprep.mubr.bf16.mxu0 0
      %6941 = vmatmul.mubr.bf16.gmra.mrb[0].mxu0 %v6851
      %v6942 = vpop.f32.mrb[0].mxu0
      %v6943 = vadd.f32 %v2207, %v6942
      %v6944 = vpop.f32.mrb[0].mxu0
      %v6945 = vadd.f32 %v2208, %v6944
      %v6946 = vpop.f32.mrb[0].mxu0
      %v6947 = vadd.f32 %v2209, %v6946
      %v6948 = vpop.f32.mrb[0].mxu0
      %v6949 = vadd.f32 %v2210, %v6948
      %6950 = vmatprep.mubr.bf16.mxu0 0
      %6951 = vmatmul.mubr.bf16.gmra.mrb[0].mxu0 %v6854
      %v6952 = vpop.f32.mrb[0].mxu0
      %v6953 = vadd.f32 %v2211, %v6952
      %v6954 = vpop.f32.mrb[0].mxu0
      %v6955 = vadd.f32 %v2212, %v6954
      %v6956 = vpop.f32.mrb[0].mxu0
      %v6957 = vadd.f32 %v2213, %v6956
      %v6958 = vpop.f32.mrb[0].mxu0
      %v6959 = vadd.f32 %v2214, %v6958
      %6960 = vmatprep.mubr.bf16.mxu0 0
      %6961 = vmatmul.mubr.bf16.gmra.mrb[0].mxu0 %v6857
      %v6962 = vpop.f32.mrb[0].mxu0
      %v6963 = vadd.f32 %v2215, %v6962
      %v6964 = vpop.f32.mrb[0].mxu0
      %v6965 = vadd.f32 %v2216, %v6964
      %v6966 = vpop.f32.mrb[0].mxu0
      %v6967 = vpop.f32.mrb[0].mxu0
      %6968 = vdwg.mxu0
      %v6969 = vsel %vm1608, %v6935, -inf
      %v6970 = vmax.f32 %v6933, %v6969
      %6971 = vmax.xlane.f32.xlu0 %v6970
      %v6972 = vpop.xlane.xlu0 %6971
      %v6973 = vsel %vm1608, %v6939, -inf
      %v6974 = vmax.f32 %v6937, %v6973
      %6975 = vmax.xlane.f32.xlu0 %v6974
      %v6976 = vpop.xlane.xlu0 %6975
      %v6977 = vsel %vm1608, %v6945, -inf
      %v6978 = vmax.f32 %v6943, %v6977
      %6979 = vmax.xlane.f32.xlu0 %v6978
      %v6980 = vpop.xlane.xlu0 %6979
      %v6981 = vsel %vm1608, %v6949, -inf
      %v6982 = vmax.f32 %v6947, %v6981
      %6983 = vmax.xlane.f32.xlu0 %v6982
      %v6984 = vpop.xlane.xlu0 %6983
      %v6985 = vsel %vm1608, %v6955, -inf
      %v6986 = vmax.f32 %v6953, %v6985
      %6987 = vmax.xlane.f32.xlu0 %v6986
      %v6988 = vpop.xlane.xlu0 %6987
      %v6989 = vsel %vm1608, %v6959, -inf
      %v6990 = vmax.f32 %v6957, %v6989
      %6991 = vmax.xlane.f32.xlu0 %v6990
      %v6992 = vpop.xlane.xlu0 %6991
      %v6993 = vsel %vm1972, %v6963, -inf
      %v6994 = vsel %vm1974, %v6965, -inf
      %v6995 = vmax.f32 %v6993, %v6994
      %6996 = vmax.xlane.f32.xlu0 %v6995
      %v6997 = vpop.xlane.xlu0 %6996
      %v6998 = vsub.f32 %v6933, %v6972
      %v6999 = vsub.f32 %v6935, %v6972
      %v7000 = vsub.f32 %v6937, %v6976
      %v7001 = vsub.f32 %v6939, %v6976
      %v7002 = vsub.f32 %v6943, %v6980
      %v7003 = vsub.f32 %v6945, %v6980
      %v7004 = vsub.f32 %v6947, %v6984
      %v7005 = vsub.f32 %v6949, %v6984
      %v7006 = vsub.f32 %v6953, %v6988
      %v7007 = vsub.f32 %v6955, %v6988
      %v7008 = vsub.f32 %v6957, %v6992
      %v7009 = vsub.f32 %v6959, %v6992
      %v7010 = vsub.f32 %v6963, %v6997
      %v7011 = vsub.f32 %v6965, %v6997
      %v7012 = vmul.f32 %v6998, 1.442695
      %v7013 = vpow.pop %v7012
      %v7014 = vmul.f32 %v6999, 1.442695
      %v7015 = vpow.pop %v7014
      %v7016 = vmul.f32 %v7000, 1.442695
      %v7017 = vpow.pop %v7016
      %v7018 = vmul.f32 %v7001, 1.442695
      %v7019 = vpow.pop %v7018
      %v7020 = vmul.f32 %v7002, 1.442695
      %v7021 = vpow.pop %v7020
      %v7022 = vmul.f32 %v7003, 1.442695
      %v7023 = vpow.pop %v7022
      %v7024 = vmul.f32 %v7004, 1.442695
      %v7025 = vpow.pop %v7024
      %v7026 = vmul.f32 %v7005, 1.442695
      %v7027 = vpow.pop %v7026
      %v7028 = vmul.f32 %v7006, 1.442695
      %v7029 = vpow.pop %v7028
      %v7030 = vmul.f32 %v7007, 1.442695
      %v7031 = vpow.pop %v7030
      %v7032 = vmul.f32 %v7008, 1.442695
      %v7033 = vpow.pop %v7032
      %v7034 = vmul.f32 %v7009, 1.442695
      %v7035 = vpow.pop %v7034
      %v7036 = vmul.f32 %v7010, 1.442695
      %v7037 = vpow.pop %v7036
      %v7038 = vmul.f32 %v7011, 1.442695
      %v7039 = vpow.pop %v7038
      %v7040 = vsel %vm1608, %v7015, 0.0
      %v7041 = vadd.f32 %v7013, %v7040
      %7042 = vadd.xlane.f32.xlu0 %v7041
      %v7043 = vpop.xlane.xlu0 %7042
      %v7044 = vsel %vm1608, %v7019, 0.0
      %v7045 = vadd.f32 %v7017, %v7044
      %7046 = vadd.xlane.f32.xlu0 %v7045
      %v7047 = vpop.xlane.xlu0 %7046
      %v7048 = vsel %vm1608, %v7023, 0.0
      %v7049 = vadd.f32 %v7021, %v7048
      %7050 = vadd.xlane.f32.xlu0 %v7049
      %v7051 = vpop.xlane.xlu0 %7050
      %v7052 = vsel %vm1608, %v7027, 0.0
      %v7053 = vadd.f32 %v7025, %v7052
      %7054 = vadd.xlane.f32.xlu0 %v7053
      %v7055 = vpop.xlane.xlu0 %7054
      %v7056 = vsel %vm1608, %v7031, 0.0
      %v7057 = vadd.f32 %v7029, %v7056
      %7058 = vadd.xlane.f32.xlu0 %v7057
      %v7059 = vpop.xlane.xlu0 %7058
      %v7060 = vsel %vm1608, %v7035, 0.0
      %v7061 = vadd.f32 %v7033, %v7060
      %7062 = vadd.xlane.f32.xlu0 %v7061
      %v7063 = vpop.xlane.xlu0 %7062
      %v7064 = vsel %vm1972, %v7037, 0.0
      %v7065 = vsel %vm1974, %v7039, 0.0
      %v7066 = vadd.f32 %v7064, %v7065
      %7067 = vadd.xlane.f32.xlu0 %v7066
      %v7068 = vpop.xlane.xlu0 %7067
      %v7069 = vrcp.pop %v7043
      %v7070 = vrcp.pop %v7047
      %v7071 = vrcp.pop %v7051
      %v7072 = vrcp.pop %v7055
      %v7073 = vrcp.pop %v7059
      %v7074 = vrcp.pop %v7063
      %v7075 = vrcp.pop %v7068
      %v7076 = vmul.f32 %v7013, %v7069
      %v7077 = vmul.f32 %v7015, %v7069
      %v7078 = vmul.f32 %v7017, %v7070
      %v7079 = vmul.f32 %v7019, %v7070
      %v7080 = vmul.f32 %v7021, %v7071
      %v7081 = vmul.f32 %v7023, %v7071
      %v7082 = vmul.f32 %v7025, %v7072
      %v7083 = vmul.f32 %v7027, %v7072
      %v7084 = vmul.f32 %v7029, %v7073
      %v7085 = vmul.f32 %v7031, %v7073
      %v7086 = vmul.f32 %v7033, %v7074
      %v7087 = vmul.f32 %v7035, %v7074
      %v7088 = vmul.f32 %v7037, %v7075
      %v7089 = vmul.f32 %v7039, %v7075
      %v7090 = vpack.c.bf16 %v7078, %v7076
      %v7091 = vpack.c.bf16 %v7079, %v7077
      %v7092 = vpack.c.bf16 %v7082, %v7080
      %v7093 = vpack.c.bf16 %v7083, %v7081
      %v7094 = vpack.c.bf16 %v7086, %v7084
      %v7095 = vpack.c.bf16 %v7087, %v7085
      %v7096 = vpack.c.bf16 %v7088, %v7088
      %v7097 = vpack.c.bf16 %v7089, %v7089
      %v7112 = vsel %vm1608, %v7091, 0
      %v7115 = vsel %vm1608, %v7093, 0
      %v7118 = vsel %vm1608, %v7095, 0
      %v7121 = vsel %vm1608, %v7097, 0
      %7123 = vmatprep.subr.bf16.mxu0 0
      %7124 = vmatpush1.bf16.msra.mxu0 %v6822
      %7125 = vmatprep.subr.bf16.mxu0 0
      %7126 = vmatpush1.bf16.msra.mxu0 %v6824
      %7127 = vmatprep.subr.bf16.mxu0 0
      %7128 = vmatpush1.bf16.msra.mxu0 %v6826
      %7129 = vmatprep.subr.bf16.mxu0 0
      %7130 = vmatpush1.bf16.msra.mxu0 %v6828
      %7131 = vmatprep.subr.bf16.mxu0 0
      %7132 = vmatpush1.bf16.msra.mxu0 %v6830
      %7133 = vmatprep.subr.bf16.mxu0 0
      %7134 = vmatpush1.bf16.msra.mxu0 %v6832
      %7135 = vmatprep.subr.bf16.mxu0 0
      %7136 = vmatpush1.bf16.msra.mxu0 %v6834
      %7137 = vmatprep.subr.bf16.mxu0 0
      %7138 = vmatpush1.bf16.msra.mxu0 %v6836
      %7139 = vmatprep.subr.bf16.mxu0 0
      %7140 = vmatpush1.bf16.msra.mxu0 %v6838
      %7141 = vmatprep.subr.bf16.mxu0 0
      %7142 = vmatpush1.bf16.msra.mxu0 %v6840
      %7143 = vmatprep.subr.bf16.mxu0 0
      %7144 = vmatpush1.bf16.msra.mxu0 %v6842
      %7145 = vmatprep.subr.bf16.mxu0 0
      %7146 = vmatpush1.bf16.msra.mxu0 %v6844
      %7147 = vmatprep.subr.bf16.mxu0 0
      %7148 = vmatpush1.bf16.msra.mxu0 %v6846
      %7149 = vmatprep.subr.bf16.mxu0 0
      %7150 = vmatpush1.bf16.msra.mxu0 0
      %7151 = vmatprep.subr.bf16.mxu0 0
      %7152 = vmatpush1.bf16.msra.mxu0 0
      %7153 = vmatprep.subr.bf16.mxu0 0
      %7154 = vmatpush1.bf16.msra.mxu0 0
      %7155 = vmatprep.mubr.bf16.mxu0 %v7112
      %7156 = vmatmul.mubr.bf16.gmra.mrb[0].mxu0 %v7090
      %v7157 = vpop.f32.mrb[0].mxu0
      %v7158 = vadd.f32 0.0, %v7157
      %v7159 = vpop.f32.mrb[0].mxu0
      %v7160 = vpop.f32.mrb[0].mxu0
      %v7161 = vadd.f32 0.0, %v7160
      %v7162 = vpop.f32.mrb[0].mxu0
      %7163 = vmatprep.mubr.bf16.mxu0 %v7115
      %7164 = vmatmul.mubr.bf16.gmra.mrb[0].mxu0 %v7092
      %v7165 = vpop.f32.mrb[0].mxu0
      %v7166 = vadd.f32 0.0, %v7165
      %v7167 = vpop.f32.mrb[0].mxu0
      %v7168 = vpop.f32.mrb[0].mxu0
      %v7169 = vadd.f32 0.0, %v7168
      %v7170 = vpop.f32.mrb[0].mxu0
      %7171 = vmatprep.mubr.bf16.mxu0 %v7118
      %7172 = vmatmul.mubr.bf16.gmra.mrb[0].mxu0 %v7094
      %v7173 = vpop.f32.mrb[0].mxu0
      %v7174 = vadd.f32 0.0, %v7173
      %v7175 = vpop.f32.mrb[0].mxu0
      %v7176 = vpop.f32.mrb[0].mxu0
      %v7177 = vadd.f32 0.0, %v7176
      %v7178 = vpop.f32.mrb[0].mxu0
      %7179 = vmatprep.mubr.bf16.mxu0 %v7121
      %7180 = vmatmul.mubr.bf16.gmra.mrb[0].mxu0 %v7096
      %v7181 = vpop.f32.mrb[0].mxu0
      %v7182 = vadd.f32 0.0, %v7181
      %v7183 = vpop.f32.mrb[0].mxu0
      %v7184 = vpop.f32.mrb[0].mxu0
      %v7185 = vpop.f32.mrb[0].mxu0
      %7186 = vdwg.mxu0
      %v7187 = vadd.f32 %v7158, 3.0
      %v7188 = vadd.f32 %v7161, 3.0
      %v7189 = vadd.f32 %v7166, 3.0
      %v7190 = vadd.f32 %v7169, 3.0
      %v7191 = vadd.f32 %v7174, 3.0
      %v7192 = vadd.f32 %v7177, 3.0
      %v7193 = vadd.f32 %v7182, 3.0
      %v7194 = vmax.f32 %v7187, 0.0
      %v7195 = vmax.f32 %v7188, 0.0
      %v7196 = vmax.f32 %v7189, 0.0
      %v7197 = vmax.f32 %v7190, 0.0
      %v7198 = vmax.f32 %v7191, 0.0
      %v7199 = vmax.f32 %v7192, 0.0
      %v7200 = vmax.f32 %v7193, 0.0
      %v7201 = vmin.f32 %v7194, 6.0
      %v7202 = vmin.f32 %v7195, 6.0
      %v7203 = vmin.f32 %v7196, 6.0
      %v7204 = vmin.f32 %v7197, 6.0
      %v7205 = vmin.f32 %v7198, 6.0
      %v7206 = vmin.f32 %v7199, 6.0
      %v7207 = vmin.f32 %v7200, 6.0
      %v7208 = vmul.f32 %v7158, %v7201
      %v7209 = vmul.f32 %v7161, %v7202
      %v7210 = vmul.f32 %v7166, %v7203
      %v7211 = vmul.f32 %v7169, %v7204
      %v7212 = vmul.f32 %v7174, %v7205
      %v7213 = vmul.f32 %v7177, %v7206
      %v7214 = vmul.f32 %v7182, %v7207
      %v7215 = vmul.f32 %v7208, 0.16666667
      %v7216 = vmul.f32 %v7209, 0.16666667
      %v7217 = vmul.f32 %v7210, 0.16666667
      %v7218 = vmul.f32 %v7211, 0.16666667
      %v7219 = vmul.f32 %v7212, 0.16666667
      %v7220 = vmul.f32 %v7213, 0.16666667
      %v7221 = vmul.f32 %v7214, 0.16666667
      %v7222 = vpack.c.bf16 %v7216, %v7215
      %v7223 = vpack.c.bf16 %v7218, %v7217
      %v7224 = vpack.c.bf16 %v7220, %v7219
      %v7225 = vpack.c.bf16 %v7221, %v7221
      %s7226 = scalar_lea.vmem %s7, 288
      %v7227 = vld [vmem:[%s7226] sm:$0xf]
      %v7228 = vld [vmem:[%s7226 + $0x4] sm:$0xf]
      %v7229 = vld [vmem:[%s7226 + $0x8] sm:$0xf]
      %v7230 = vld [vmem:[%s7226 + $0xc] sm:$0xf]
      %v7231 = vld [vmem:[%s7226 + $0x10] sm:$0xf]
      %v7232 = vld [vmem:[%s7226 + $0x14] sm:$0xf]
      %v7233 = vld [vmem:[%s7226 + $0x18] sm:$0xf]
      %v7234 = vld [vmem:[%s7226 + $0x1c] sm:$0xf]
      %v7243 = vunpack.c.l.b16 %v7227
      %v7244 = vunpack.c.l.b16 %v7228
      %v7245 = vunpack.c.l.b16 %v7229
      %v7246 = vunpack.c.l.b16 %v7230
      %v7247 = vunpack.c.l.b16 %v7231
      %v7248 = vunpack.c.l.b16 %v7232
      %v7249 = vunpack.c.l.b16 %v7233
      %v7250 = vunpack.c.l.b16 %v7234
      %v7251 = vpack.c.b16 %v7244, %v7243
      %v7252 = vpack.c.b16 %v7246, %v7245
      %v7253 = vpack.c.b16 %v7248, %v7247
      %v7254 = vpack.c.b16 %v7250, %v7249
      %v7260 = vsel %vm1825, %v7222, 0
      %v7263 = vsel %vm1825, %v7223, 0
      %v7266 = vsel %vm1825, %v7224, 0
      %v7269 = vsel %vm1825, %v7225, 0
      %7271 = vmatprep.subr.bf16.mxu0 0
      %7272 = vmatpush1.bf16.msra.mxu0 %v7251
      %7273 = vmatprep.subr.bf16.mxu0 0
      %7274 = vmatpush1.bf16.msra.mxu0 %v7252
      %7275 = vmatprep.subr.bf16.mxu0 0
      %7276 = vmatpush1.bf16.msra.mxu0 %v7253
      %7277 = vmatprep.subr.bf16.mxu0 0
      %7278 = vmatpush1.bf16.msra.mxu0 %v7254
      %7279 = vmatprep.subr.bf16.mxu0 0
      %7280 = vmatpush1.bf16.msra.mxu0 0
      %7281 = vmatprep.subr.bf16.mxu0 0
      %7282 = vmatpush1.bf16.msra.mxu0 0
      %7283 = vmatprep.subr.bf16.mxu0 0
      %7284 = vmatpush1.bf16.msra.mxu0 0
      %7285 = vmatprep.subr.bf16.mxu0 0
      %7286 = vmatpush1.bf16.msra.mxu0 0
      %7287 = vmatprep.subr.bf16.mxu0 0
      %7288 = vmatpush1.bf16.msra.mxu0 0
      %7289 = vmatprep.subr.bf16.mxu0 0
      %7290 = vmatpush1.bf16.msra.mxu0 0
      %7291 = vmatprep.subr.bf16.mxu0 0
      %7292 = vmatpush1.bf16.msra.mxu0 0
      %7293 = vmatprep.subr.bf16.mxu0 0
      %7294 = vmatpush1.bf16.msra.mxu0 0
      %7295 = vmatprep.subr.bf16.mxu0 0
      %7296 = vmatpush1.bf16.msra.mxu0 0
      %7297 = vmatprep.subr.bf16.mxu0 0
      %7298 = vmatpush1.bf16.msra.mxu0 0
      %7299 = vmatprep.subr.bf16.mxu0 0
      %7300 = vmatpush1.bf16.msra.mxu0 0
      %7301 = vmatprep.subr.bf16.mxu0 0
      %7302 = vmatpush1.bf16.msra.mxu0 0
      %7303 = vmatprep.mubr.bf16.mxu0 0
      %7304 = vmatmul.mubr.bf16.gmra.mrb[0].mxu0 %v7260
      %v7305 = vpop.f32.mrb[0].mxu0
      %v7306 = vadd.f32 0.0, %v7305
      %v7307 = vpop.f32.mrb[0].mxu0
      %v7308 = vpop.f32.mrb[0].mxu0
      %v7309 = vadd.f32 0.0, %v7308
      %v7310 = vpop.f32.mrb[0].mxu0
      %7311 = vmatprep.mubr.bf16.mxu0 0
      %7312 = vmatmul.mubr.bf16.gmra.mrb[0].mxu0 %v7263
      %v7313 = vpop.f32.mrb[0].mxu0
      %v7314 = vadd.f32 0.0, %v7313
      %v7315 = vpop.f32.mrb[0].mxu0
      %v7316 = vpop.f32.mrb[0].mxu0
      %v7317 = vadd.f32 0.0, %v7316
      %v7318 = vpop.f32.mrb[0].mxu0
      %7319 = vmatprep.mubr.bf16.mxu0 0
      %7320 = vmatmul.mubr.bf16.gmra.mrb[0].mxu0 %v7266
      %v7321 = vpop.f32.mrb[0].mxu0
      %v7322 = vadd.f32 0.0, %v7321
      %v7323 = vpop.f32.mrb[0].mxu0
      %v7324 = vpop.f32.mrb[0].mxu0
      %v7325 = vadd.f32 0.0, %v7324
      %v7326 = vpop.f32.mrb[0].mxu0
      %7327 = vmatprep.mubr.bf16.mxu0 0
      %7328 = vmatmul.mubr.bf16.gmra.mrb[0].mxu0 %v7269
      %v7329 = vpop.f32.mrb[0].mxu0
      %v7330 = vadd.f32 0.0, %v7329
      %v7331 = vpop.f32.mrb[0].mxu0
      %v7332 = vpop.f32.mrb[0].mxu0
      %v7333 = vpop.f32.mrb[0].mxu0
      %7334 = vdwg.mxu0
      %v7335 = vadd.f32 %v6789, %v7306
      %v7336 = vadd.f32 %v6790, %v7309
      %v7337 = vadd.f32 %v6791, %v7314
      %v7338 = vadd.f32 %v6792, %v7317
      %v7339 = vadd.f32 %v6793, %v7322
      %v7340 = vadd.f32 %v6794, %v7325
      %v7341 = vadd.f32 %v6795, %v7330
      %v7343 = vsel %vm1825, %v6307, 0
      %v7346 = vsel %vm1825, %v6309, 0
      %v7349 = vsel %vm1825, %v6311, 0
      %v7352 = vsel %vm1825, %v6313, 0
      %v7355 = vsel %vm1825, %v1499, 0
      %v7358 = vsel %vm1825, %v1501, 0
      %v7361 = vsel %vm1825, %v1503, 0
      %v7364 = vsel %vm1825, %v1505, 0
      %v7367 = vsel %vm1825, %v1507, 0
      %v7370 = vsel %vm1825, %v1509, 0
      %v7373 = vsel %vm1825, %v1511, 0
      %v7376 = vsel %vm1825, %v1513, 0
      %v7379 = vsel %vm1825, %v1515, 0
      %v7382 = vsel %vm1825, %v1517, 0
      %v7385 = vsel %vm1825, %v1519, 0
      %v7388 = vsel %vm1825, %v1521, 0
      %v7391 = vsel %vm1825, %v1523, 0
      %7393 = vmatprep.subr.bf16.mxu0 0
      %7394 = vmatpush1.bf16.xpose.msra.mxu0 %v7355
      %7395 = vmatprep.subr.bf16.mxu0 0
      %7396 = vmatpush1.bf16.xpose.msra.mxu0 %v7358
      %7397 = vmatprep.subr.bf16.mxu0 0
      %7398 = vmatpush1.bf16.xpose.msra.mxu0 %v7361
      %7399 = vmatprep.subr.bf16.mxu0 0
      %7400 = vmatpush1.bf16.xpose.msra.mxu0 %v7364
      %7401 = vmatprep.subr.bf16.mxu0 0
      %7402 = vmatpush1.bf16.xpose.msra.mxu0 %v7367
      %7403 = vmatprep.subr.bf16.mxu0 0
      %7404 = vmatpush1.bf16.xpose.msra.mxu0 %v7370
      %7405 = vmatprep.subr.bf16.mxu0 0
      %7406 = vmatpush1.bf16.xpose.msra.mxu0 %v7373
      %7407 = vmatprep.subr.bf16.mxu0 0
      %7408 = vmatpush1.bf16.xpose.msra.mxu0 %v7376
      %7409 = vmatprep.subr.bf16.mxu0 0
      %7410 = vmatpush1.bf16.xpose.msra.mxu0 %v7379
      %7411 = vmatprep.subr.bf16.mxu0 0
      %7412 = vmatpush1.bf16.xpose.msra.mxu0 %v7382
      %7413 = vmatprep.subr.bf16.mxu0 0
      %7414 = vmatpush1.bf16.xpose.msra.mxu0 %v7385
      %7415 = vmatprep.subr.bf16.mxu0 0
      %7416 = vmatpush1.bf16.xpose.msra.mxu0 %v7388
      %7417 = vmatprep.subr.bf16.mxu0 0
      %7418 = vmatpush1.bf16.xpose.msra.mxu0 %v7391
      %7419 = vmatprep.subr.bf16.mxu0 0
      %7420 = vmatpush1.bf16.xpose.msra.mxu0 0
      %7421 = vmatprep.subr.bf16.mxu0 0
      %7422 = vmatpush1.bf16.xpose.msra.mxu0 0
      %7423 = vmatprep.subr.bf16.mxu0 0
      %7424 = vmatpush1.bf16.xpose.msra.mxu0 0
      %7425 = vmatprep.mubr.bf16.mxu0 0
      %7426 = vmatmul.mubr.bf16.gmra.mrb[0].mxu0 %v7343
      %v7427 = vpop.f32.mrb[0].mxu0
      %v7428 = vadd.f32 %v2857, %v7427
      %v7429 = vpop.f32.mrb[0].mxu0
      %v7430 = vadd.f32 %v2858, %v7429
      %v7431 = vpop.f32.mrb[0].mxu0
      %v7432 = vadd.f32 %v2859, %v7431
      %v7433 = vpop.f32.mrb[0].mxu0
      %v7434 = vadd.f32 %v2860, %v7433
      %7435 = vmatprep.mubr.bf16.mxu0 0
      %7436 = vmatmul.mubr.bf16.gmra.mrb[0].mxu0 %v7346
      %v7437 = vpop.f32.mrb[0].mxu0
      %v7438 = vadd.f32 %v2861, %v7437
      %v7439 = vpop.f32.mrb[0].mxu0
      %v7440 = vadd.f32 %v2862, %v7439
      %v7441 = vpop.f32.mrb[0].mxu0
      %v7442 = vadd.f32 %v2863, %v7441
      %v7443 = vpop.f32.mrb[0].mxu0
      %v7444 = vadd.f32 %v2864, %v7443
      %7445 = vmatprep.mubr.bf16.mxu0 0
      %7446 = vmatmul.mubr.bf16.gmra.mrb[0].mxu0 %v7349
      %v7447 = vpop.f32.mrb[0].mxu0
      %v7448 = vadd.f32 %v2865, %v7447
      %v7449 = vpop.f32.mrb[0].mxu0
      %v7450 = vadd.f32 %v2866, %v7449
      %v7451 = vpop.f32.mrb[0].mxu0
      %v7452 = vadd.f32 %v2867, %v7451
      %v7453 = vpop.f32.mrb[0].mxu0
      %v7454 = vadd.f32 %v2868, %v7453
      %7455 = vmatprep.mubr.bf16.mxu0 0
      %7456 = vmatmul.mubr.bf16.gmra.mrb[0].mxu0 %v7352
      %v7457 = vpop.f32.mrb[0].mxu0
      %v7458 = vadd.f32 %v2869, %v7457
      %v7459 = vpop.f32.mrb[0].mxu0
      %v7460 = vadd.f32 %v2870, %v7459
      %v7461 = vpop.f32.mrb[0].mxu0
      %v7462 = vpop.f32.mrb[0].mxu0
      %7463 = vdwg.mxu0
      %v7464 = vsel %vm1608, %v7430, -inf
      %v7465 = vmax.f32 %v7428, %v7464
      %7466 = vmax.xlane.f32.xlu0 %v7465
      %v7467 = vpop.xlane.xlu0 %7466
      %v7468 = vsel %vm1608, %v7434, -inf
      %v7469 = vmax.f32 %v7432, %v7468
      %7470 = vmax.xlane.f32.xlu0 %v7469
      %v7471 = vpop.xlane.xlu0 %7470
      %v7472 = vsel %vm1608, %v7440, -inf
      %v7473 = vmax.f32 %v7438, %v7472
      %7474 = vmax.xlane.f32.xlu0 %v7473
      %v7475 = vpop.xlane.xlu0 %7474
      %v7476 = vsel %vm1608, %v7444, -inf
      %v7477 = vmax.f32 %v7442, %v7476
      %7478 = vmax.xlane.f32.xlu0 %v7477
      %v7479 = vpop.xlane.xlu0 %7478
      %v7480 = vsel %vm1608, %v7450, -inf
      %v7481 = vmax.f32 %v7448, %v7480
      %7482 = vmax.xlane.f32.xlu0 %v7481
      %v7483 = vpop.xlane.xlu0 %7482
      %v7484 = vsel %vm1608, %v7454, -inf
      %v7485 = vmax.f32 %v7452, %v7484
      %7486 = vmax.xlane.f32.xlu0 %v7485
      %v7487 = vpop.xlane.xlu0 %7486
      %v7488 = vsel %vm1972, %v7458, -inf
      %v7489 = vsel %vm1974, %v7460, -inf
      %v7490 = vmax.f32 %v7488, %v7489
      %7491 = vmax.xlane.f32.xlu0 %v7490
      %v7492 = vpop.xlane.xlu0 %7491
      %v7493 = vsub.f32 %v7428, %v7467
      %v7494 = vsub.f32 %v7430, %v7467
      %v7495 = vsub.f32 %v7432, %v7471
      %v7496 = vsub.f32 %v7434, %v7471
      %v7497 = vsub.f32 %v7438, %v7475
      %v7498 = vsub.f32 %v7440, %v7475
      %v7499 = vsub.f32 %v7442, %v7479
      %v7500 = vsub.f32 %v7444, %v7479
      %v7501 = vsub.f32 %v7448, %v7483
      %v7502 = vsub.f32 %v7450, %v7483
      %v7503 = vsub.f32 %v7452, %v7487
      %v7504 = vsub.f32 %v7454, %v7487
      %v7505 = vsub.f32 %v7458, %v7492
      %v7506 = vsub.f32 %v7460, %v7492
      %v7507 = vmul.f32 %v7493, 1.442695
      %v7508 = vpow.pop %v7507
      %v7509 = vmul.f32 %v7494, 1.442695
      %v7510 = vpow.pop %v7509
      %v7511 = vmul.f32 %v7495, 1.442695
      %v7512 = vpow.pop %v7511
      %v7513 = vmul.f32 %v7496, 1.442695
      %v7514 = vpow.pop %v7513
      %v7515 = vmul.f32 %v7497, 1.442695
      %v7516 = vpow.pop %v7515
      %v7517 = vmul.f32 %v7498, 1.442695
      %v7518 = vpow.pop %v7517
      %v7519 = vmul.f32 %v7499, 1.442695
      %v7520 = vpow.pop %v7519
      %v7521 = vmul.f32 %v7500, 1.442695
      %v7522 = vpow.pop %v7521
      %v7523 = vmul.f32 %v7501, 1.442695
      %v7524 = vpow.pop %v7523
      %v7525 = vmul.f32 %v7502, 1.442695
      %v7526 = vpow.pop %v7525
      %v7527 = vmul.f32 %v7503, 1.442695
      %v7528 = vpow.pop %v7527
      %v7529 = vmul.f32 %v7504, 1.442695
      %v7530 = vpow.pop %v7529
      %v7531 = vmul.f32 %v7505, 1.442695
      %v7532 = vpow.pop %v7531
      %v7533 = vmul.f32 %v7506, 1.442695
      %v7534 = vpow.pop %v7533
      %v7535 = vsel %vm1608, %v7510, 0.0
      %v7536 = vadd.f32 %v7508, %v7535
      %7537 = vadd.xlane.f32.xlu0 %v7536
      %v7538 = vpop.xlane.xlu0 %7537
      %v7539 = vsel %vm1608, %v7514, 0.0
      %v7540 = vadd.f32 %v7512, %v7539
      %7541 = vadd.xlane.f32.xlu0 %v7540
      %v7542 = vpop.xlane.xlu0 %7541
      %v7543 = vsel %vm1608, %v7518, 0.0
      %v7544 = vadd.f32 %v7516, %v7543
      %7545 = vadd.xlane.f32.xlu0 %v7544
      %v7546 = vpop.xlane.xlu0 %7545
      %v7547 = vsel %vm1608, %v7522, 0.0
      %v7548 = vadd.f32 %v7520, %v7547
      %7549 = vadd.xlane.f32.xlu0 %v7548
      %v7550 = vpop.xlane.xlu0 %7549
      %v7551 = vsel %vm1608, %v7526, 0.0
      %v7552 = vadd.f32 %v7524, %v7551
      %7553 = vadd.xlane.f32.xlu0 %v7552
      %v7554 = vpop.xlane.xlu0 %7553
      %v7555 = vsel %vm1608, %v7530, 0.0
      %v7556 = vadd.f32 %v7528, %v7555
      %7557 = vadd.xlane.f32.xlu0 %v7556
      %v7558 = vpop.xlane.xlu0 %7557
      %v7559 = vsel %vm1972, %v7532, 0.0
      %v7560 = vsel %vm1974, %v7534, 0.0
      %v7561 = vadd.f32 %v7559, %v7560
      %7562 = vadd.xlane.f32.xlu0 %v7561
      %v7563 = vpop.xlane.xlu0 %7562
      %v7564 = vrcp.pop %v7538
      %v7565 = vrcp.pop %v7542
      %v7566 = vrcp.pop %v7546
      %v7567 = vrcp.pop %v7550
      %v7568 = vrcp.pop %v7554
      %v7569 = vrcp.pop %v7558
      %v7570 = vrcp.pop %v7563
      %v7571 = vmul.f32 %v7508, %v7564
      %v7572 = vmul.f32 %v7510, %v7564
      %v7573 = vmul.f32 %v7512, %v7565
      %v7574 = vmul.f32 %v7514, %v7565
      %v7575 = vmul.f32 %v7516, %v7566
      %v7576 = vmul.f32 %v7518, %v7566
      %v7577 = vmul.f32 %v7520, %v7567
      %v7578 = vmul.f32 %v7522, %v7567
      %v7579 = vmul.f32 %v7524, %v7568
      %v7580 = vmul.f32 %v7526, %v7568
      %v7581 = vmul.f32 %v7528, %v7569
      %v7582 = vmul.f32 %v7530, %v7569
      %v7583 = vmul.f32 %v7532, %v7570
      %v7584 = vmul.f32 %v7534, %v7570
      %v7585 = vpack.c.bf16 %v7573, %v7571
      %v7586 = vpack.c.bf16 %v7574, %v7572
      %v7587 = vpack.c.bf16 %v7577, %v7575
      %v7588 = vpack.c.bf16 %v7578, %v7576
      %v7589 = vpack.c.bf16 %v7581, %v7579
      %v7590 = vpack.c.bf16 %v7582, %v7580
      %v7591 = vpack.c.bf16 %v7583, %v7583
      %v7592 = vpack.c.bf16 %v7584, %v7584
      %v7594 = vsel %vm1608, %v7586, 0
      %v7597 = vsel %vm1608, %v7588, 0
      %v7600 = vsel %vm1608, %v7590, 0
      %v7603 = vsel %vm1608, %v7592, 0
      %7605 = vmatprep.subr.bf16.mxu0 0
      %7606 = vmatpush1.bf16.msra.mxu0 %v1499
      %7607 = vmatprep.subr.bf16.mxu0 0
      %7608 = vmatpush1.bf16.msra.mxu0 %v1501
      %7609 = vmatprep.subr.bf16.mxu0 0
      %7610 = vmatpush1.bf16.msra.mxu0 %v1503
      %7611 = vmatprep.subr.bf16.mxu0 0
      %7612 = vmatpush1.bf16.msra.mxu0 %v1505
      %7613 = vmatprep.subr.bf16.mxu0 0
      %7614 = vmatpush1.bf16.msra.mxu0 %v1507
      %7615 = vmatprep.subr.bf16.mxu0 0
      %7616 = vmatpush1.bf16.msra.mxu0 %v1509
      %7617 = vmatprep.subr.bf16.mxu0 0
      %7618 = vmatpush1.bf16.msra.mxu0 %v1511
      %7619 = vmatprep.subr.bf16.mxu0 0
      %7620 = vmatpush1.bf16.msra.mxu0 %v1513
      %7621 = vmatprep.subr.bf16.mxu0 0
      %7622 = vmatpush1.bf16.msra.mxu0 %v1515
      %7623 = vmatprep.subr.bf16.mxu0 0
      %7624 = vmatpush1.bf16.msra.mxu0 %v1517
      %7625 = vmatprep.subr.bf16.mxu0 0
      %7626 = vmatpush1.bf16.msra.mxu0 %v1519
      %7627 = vmatprep.subr.bf16.mxu0 0
      %7628 = vmatpush1.bf16.msra.mxu0 %v1521
      %7629 = vmatprep.subr.bf16.mxu0 0
      %7630 = vmatpush1.bf16.msra.mxu0 %v1523
      %7631 = vmatprep.subr.bf16.mxu0 0
      %7632 = vmatpush1.bf16.msra.mxu0 0
      %7633 = vmatprep.subr.bf16.mxu0 0
      %7634 = vmatpush1.bf16.msra.mxu0 0
      %7635 = vmatprep.subr.bf16.mxu0 0
      %7636 = vmatpush1.bf16.msra.mxu0 0
      %7637 = vmatprep.mubr.bf16.mxu0 %v7594
      %7638 = vmatmul.mubr.bf16.gmra.mrb[0].mxu0 %v7585
      %v7639 = vpop.f32.mrb[0].mxu0
      %v7640 = vadd.f32 0.0, %v7639
      %v7641 = vpop.f32.mrb[0].mxu0
      %v7642 = vpop.f32.mrb[0].mxu0
      %v7643 = vadd.f32 0.0, %v7642
      %v7644 = vpop.f32.mrb[0].mxu0
      %7645 = vmatprep.mubr.bf16.mxu0 %v7597
      %7646 = vmatmul.mubr.bf16.gmra.mrb[0].mxu0 %v7587
      %v7647 = vpop.f32.mrb[0].mxu0
      %v7648 = vadd.f32 0.0, %v7647
      %v7649 = vpop.f32.mrb[0].mxu0
      %v7650 = vpop.f32.mrb[0].mxu0
      %v7651 = vadd.f32 0.0, %v7650
      %v7652 = vpop.f32.mrb[0].mxu0
      %7653 = vmatprep.mubr.bf16.mxu0 %v7600
      %7654 = vmatmul.mubr.bf16.gmra.mrb[0].mxu0 %v7589
      %v7655 = vpop.f32.mrb[0].mxu0
      %v7656 = vadd.f32 0.0, %v7655
      %v7657 = vpop.f32.mrb[0].mxu0
      %v7658 = vpop.f32.mrb[0].mxu0
      %v7659 = vadd.f32 0.0, %v7658
      %v7660 = vpop.f32.mrb[0].mxu0
      %7661 = vmatprep.mubr.bf16.mxu0 %v7603
      %7662 = vmatmul.mubr.bf16.gmra.mrb[0].mxu0 %v7591
      %v7663 = vpop.f32.mrb[0].mxu0
      %v7664 = vadd.f32 0.0, %v7663
      %v7665 = vpop.f32.mrb[0].mxu0
      %v7666 = vpop.f32.mrb[0].mxu0
      %v7667 = vpop.f32.mrb[0].mxu0
      %7668 = vdwg.mxu0
      %v7669 = vadd.f32 %v7640, 3.0
      %v7670 = vadd.f32 %v7643, 3.0
      %v7671 = vadd.f32 %v7648, 3.0
      %v7672 = vadd.f32 %v7651, 3.0
      %v7673 = vadd.f32 %v7656, 3.0
      %v7674 = vadd.f32 %v7659, 3.0
      %v7675 = vadd.f32 %v7664, 3.0
      %v7676 = vmax.f32 %v7669, 0.0
      %v7677 = vmax.f32 %v7670, 0.0
      %v7678 = vmax.f32 %v7671, 0.0
      %v7679 = vmax.f32 %v7672, 0.0
      %v7680 = vmax.f32 %v7673, 0.0
      %v7681 = vmax.f32 %v7674, 0.0
      %v7682 = vmax.f32 %v7675, 0.0
      %v7683 = vmin.f32 %v7676, 6.0
      %v7684 = vmin.f32 %v7677, 6.0
      %v7685 = vmin.f32 %v7678, 6.0
      %v7686 = vmin.f32 %v7679, 6.0
      %v7687 = vmin.f32 %v7680, 6.0
      %v7688 = vmin.f32 %v7681, 6.0
      %v7689 = vmin.f32 %v7682, 6.0
      %v7690 = vmul.f32 %v7640, %v7683
      %v7691 = vmul.f32 %v7643, %v7684
      %v7692 = vmul.f32 %v7648, %v7685
      %v7693 = vmul.f32 %v7651, %v7686
      %v7694 = vmul.f32 %v7656, %v7687
      %v7695 = vmul.f32 %v7659, %v7688
      %v7696 = vmul.f32 %v7664, %v7689
      %v7697 = vmul.f32 %v7690, 0.16666667
      %v7698 = vmul.f32 %v7691, 0.16666667
      %v7699 = vmul.f32 %v7692, 0.16666667
      %v7700 = vmul.f32 %v7693, 0.16666667
      %v7701 = vmul.f32 %v7694, 0.16666667
      %v7702 = vmul.f32 %v7695, 0.16666667
      %v7703 = vmul.f32 %v7696, 0.16666667
      %v7704 = vpack.c.bf16 %v7698, %v7697
      %v7705 = vpack.c.bf16 %v7700, %v7699
      %v7706 = vpack.c.bf16 %v7702, %v7701
      %v7707 = vpack.c.bf16 %v7703, %v7703
      %s7708 = scalar_lea.vmem %s7, 320
      %v7709 = vld [vmem:[%s7708] sm:$0xf]
      %v7710 = vld [vmem:[%s7708 + $0x4] sm:$0xf]
      %v7711 = vld [vmem:[%s7708 + $0x8] sm:$0xf]
      %v7712 = vld [vmem:[%s7708 + $0xc] sm:$0xf]
      %v7713 = vld [vmem:[%s7708 + $0x10] sm:$0xf]
      %v7714 = vld [vmem:[%s7708 + $0x14] sm:$0xf]
      %v7715 = vld [vmem:[%s7708 + $0x18] sm:$0xf]
      %v7716 = vld [vmem:[%s7708 + $0x1c] sm:$0xf]
      %v7725 = vunpack.c.l.b16 %v7709
      %v7726 = vunpack.c.l.b16 %v7710
      %v7727 = vunpack.c.l.b16 %v7711
      %v7728 = vunpack.c.l.b16 %v7712
      %v7729 = vunpack.c.l.b16 %v7713
      %v7730 = vunpack.c.l.b16 %v7714
      %v7731 = vunpack.c.l.b16 %v7715
      %v7732 = vunpack.c.l.b16 %v7716
      %v7733 = vpack.c.b16 %v7726, %v7725
      %v7734 = vpack.c.b16 %v7728, %v7727
      %v7735 = vpack.c.b16 %v7730, %v7729
      %v7736 = vpack.c.b16 %v7732, %v7731
      %v7742 = vsel %vm1825, %v7704, 0
      %v7745 = vsel %vm1825, %v7705, 0
      %v7748 = vsel %vm1825, %v7706, 0
      %v7751 = vsel %vm1825, %v7707, 0
      %7753 = vmatprep.subr.bf16.mxu0 0
      %7754 = vmatpush1.bf16.msra.mxu0 %v7733
      %7755 = vmatprep.subr.bf16.mxu0 0
      %7756 = vmatpush1.bf16.msra.mxu0 %v7734
      %7757 = vmatprep.subr.bf16.mxu0 0
      %7758 = vmatpush1.bf16.msra.mxu0 %v7735
      %7759 = vmatprep.subr.bf16.mxu0 0
      %7760 = vmatpush1.bf16.msra.mxu0 %v7736
      %7761 = vmatprep.subr.bf16.mxu0 0
      %7762 = vmatpush1.bf16.msra.mxu0 0
      %7763 = vmatprep.subr.bf16.mxu0 0
      %7764 = vmatpush1.bf16.msra.mxu0 0
      %7765 = vmatprep.subr.bf16.mxu0 0
      %7766 = vmatpush1.bf16.msra.mxu0 0
      %7767 = vmatprep.subr.bf16.mxu0 0
      %7768 = vmatpush1.bf16.msra.mxu0 0
      %7769 = vmatprep.subr.bf16.mxu0 0
      %7770 = vmatpush1.bf16.msra.mxu0 0
      %7771 = vmatprep.subr.bf16.mxu0 0
      %7772 = vmatpush1.bf16.msra.mxu0 0
      %7773 = vmatprep.subr.bf16.mxu0 0
      %7774 = vmatpush1.bf16.msra.mxu0 0
      %7775 = vmatprep.subr.bf16.mxu0 0
      %7776 = vmatpush1.bf16.msra.mxu0 0
      %7777 = vmatprep.subr.bf16.mxu0 0
      %7778 = vmatpush1.bf16.msra.mxu0 0
      %7779 = vmatprep.subr.bf16.mxu0 0
      %7780 = vmatpush1.bf16.msra.mxu0 0
      %7781 = vmatprep.subr.bf16.mxu0 0
      %7782 = vmatpush1.bf16.msra.mxu0 0
      %7783 = vmatprep.subr.bf16.mxu0 0
      %7784 = vmatpush1.bf16.msra.mxu0 0
      %7785 = vmatprep.mubr.bf16.mxu0 0
      %7786 = vmatmul.mubr.bf16.gmra.mrb[0].mxu0 %v7742
      %v7787 = vpop.f32.mrb[0].mxu0
      %v7788 = vadd.f32 0.0, %v7787
      %v7789 = vpop.f32.mrb[0].mxu0
      %v7790 = vpop.f32.mrb[0].mxu0
      %v7791 = vadd.f32 0.0, %v7790
      %v7792 = vpop.f32.mrb[0].mxu0
      %7793 = vmatprep.mubr.bf16.mxu0 0
      %7794 = vmatmul.mubr.bf16.gmra.mrb[0].mxu0 %v7745
      %v7795 = vpop.f32.mrb[0].mxu0
      %v7796 = vadd.f32 0.0, %v7795
      %v7797 = vpop.f32.mrb[0].mxu0
      %v7798 = vpop.f32.mrb[0].mxu0
      %v7799 = vadd.f32 0.0, %v7798
      %v7800 = vpop.f32.mrb[0].mxu0
      %7801 = vmatprep.mubr.bf16.mxu0 0
      %7802 = vmatmul.mubr.bf16.gmra.mrb[0].mxu0 %v7748
      %v7803 = vpop.f32.mrb[0].mxu0
      %v7804 = vadd.f32 0.0, %v7803
      %v7805 = vpop.f32.mrb[0].mxu0
      %v7806 = vpop.f32.mrb[0].mxu0
      %v7807 = vadd.f32 0.0, %v7806
      %v7808 = vpop.f32.mrb[0].mxu0
      %7809 = vmatprep.mubr.bf16.mxu0 0
      %7810 = vmatmul.mubr.bf16.gmra.mrb[0].mxu0 %v7751
      %v7811 = vpop.f32.mrb[0].mxu0
      %v7812 = vadd.f32 0.0, %v7811
      %v7813 = vpop.f32.mrb[0].mxu0
      %v7814 = vpop.f32.mrb[0].mxu0
      %v7815 = vpop.f32.mrb[0].mxu0
      %7816 = vdwg.mxu0
      %v7817 = vadd.f32 %v7335, %v7788
      %v7818 = vadd.f32 %v7336, %v7791
      %v7819 = vadd.f32 %v7337, %v7796
      %v7820 = vadd.f32 %v7338, %v7799
      %v7821 = vadd.f32 %v7339, %v7804
      %v7822 = vadd.f32 %v7340, %v7807
      %v7823 = vadd.f32 %v7341, %v7812
      %7828 = vrot.lane.b32.xlu0 %v6307, 64
      %v7829 = vpop.permute.xlu0 %7828
      %7830 = vrot.lane.b32.xlu0 %v6309, 64
      %v7831 = vpop.permute.xlu0 %7830
      %7832 = vrot.lane.b32.xlu0 %v6311, 64
      %v7833 = vpop.permute.xlu0 %7832
      %7834 = vrot.lane.b32.xlu0 %v6313, 64
      %v7835 = vpop.permute.xlu0 %7834
      %7849 = vrot.lane.b32.xlu0 %v1499, 64
      %v7850 = vpop.permute.xlu0 %7849
      %7851 = vrot.lane.b32.xlu0 %v1501, 64
      %v7852 = vpop.permute.xlu0 %7851
      %7853 = vrot.lane.b32.xlu0 %v1503, 64
      %v7854 = vpop.permute.xlu0 %7853
      %7855 = vrot.lane.b32.xlu0 %v1505, 64
      %v7856 = vpop.permute.xlu0 %7855
      %7857 = vrot.lane.b32.xlu0 %v1507, 64
      %v7858 = vpop.permute.xlu0 %7857
      %7859 = vrot.lane.b32.xlu0 %v1509, 64
      %v7860 = vpop.permute.xlu0 %7859
      %7861 = vrot.lane.b32.xlu0 %v1511, 64
      %v7862 = vpop.permute.xlu0 %7861
      %7863 = vrot.lane.b32.xlu0 %v1513, 64
      %v7864 = vpop.permute.xlu0 %7863
      %7865 = vrot.lane.b32.xlu0 %v1515, 64
      %v7866 = vpop.permute.xlu0 %7865
      %7867 = vrot.lane.b32.xlu0 %v1517, 64
      %v7868 = vpop.permute.xlu0 %7867
      %7869 = vrot.lane.b32.xlu0 %v1519, 64
      %v7870 = vpop.permute.xlu0 %7869
      %7871 = vrot.lane.b32.xlu0 %v1521, 64
      %v7872 = vpop.permute.xlu0 %7871
      %7873 = vrot.lane.b32.xlu0 %v1523, 64
      %v7874 = vpop.permute.xlu0 %7873
      %v7876 = vsel %vm1825, %v7829, 0
      %v7879 = vsel %vm1825, %v7831, 0
      %v7882 = vsel %vm1825, %v7833, 0
      %v7885 = vsel %vm1825, %v7835, 0
      %v7888 = vsel %vm1825, %v7850, 0
      %v7891 = vsel %vm1825, %v7852, 0
      %v7894 = vsel %vm1825, %v7854, 0
      %v7897 = vsel %vm1825, %v7856, 0
      %v7900 = vsel %vm1825, %v7858, 0
      %v7903 = vsel %vm1825, %v7860, 0
      %v7906 = vsel %vm1825, %v7862, 0
      %v7909 = vsel %vm1825, %v7864, 0
      %v7912 = vsel %vm1825, %v7866, 0
      %v7915 = vsel %vm1825, %v7868, 0
      %v7918 = vsel %vm1825, %v7870, 0
      %v7921 = vsel %vm1825, %v7872, 0
      %v7924 = vsel %vm1825, %v7874, 0
      %7926 = vmatprep.subr.bf16.mxu0 0
      %7927 = vmatpush1.bf16.xpose.msra.mxu0 %v7888
      %7928 = vmatprep.subr.bf16.mxu0 0
      %7929 = vmatpush1.bf16.xpose.msra.mxu0 %v7891
      %7930 = vmatprep.subr.bf16.mxu0 0
      %7931 = vmatpush1.bf16.xpose.msra.mxu0 %v7894
      %7932 = vmatprep.subr.bf16.mxu0 0
      %7933 = vmatpush1.bf16.xpose.msra.mxu0 %v7897
      %7934 = vmatprep.subr.bf16.mxu0 0
      %7935 = vmatpush1.bf16.xpose.msra.mxu0 %v7900
      %7936 = vmatprep.subr.bf16.mxu0 0
      %7937 = vmatpush1.bf16.xpose.msra.mxu0 %v7903
      %7938 = vmatprep.subr.bf16.mxu0 0
      %7939 = vmatpush1.bf16.xpose.msra.mxu0 %v7906
      %7940 = vmatprep.subr.bf16.mxu0 0
      %7941 = vmatpush1.bf16.xpose.msra.mxu0 %v7909
      %7942 = vmatprep.subr.bf16.mxu0 0
      %7943 = vmatpush1.bf16.xpose.msra.mxu0 %v7912
      %7944 = vmatprep.subr.bf16.mxu0 0
      %7945 = vmatpush1.bf16.xpose.msra.mxu0 %v7915
      %7946 = vmatprep.subr.bf16.mxu0 0
      %7947 = vmatpush1.bf16.xpose.msra.mxu0 %v7918
      %7948 = vmatprep.subr.bf16.mxu0 0
      %7949 = vmatpush1.bf16.xpose.msra.mxu0 %v7921
      %7950 = vmatprep.subr.bf16.mxu0 0
      %7951 = vmatpush1.bf16.xpose.msra.mxu0 %v7924
      %7952 = vmatprep.subr.bf16.mxu0 0
      %7953 = vmatpush1.bf16.xpose.msra.mxu0 0
      %7954 = vmatprep.subr.bf16.mxu0 0
      %7955 = vmatpush1.bf16.xpose.msra.mxu0 0
      %7956 = vmatprep.subr.bf16.mxu0 0
      %7957 = vmatpush1.bf16.xpose.msra.mxu0 0
      %7958 = vmatprep.mubr.bf16.mxu0 0
      %7959 = vmatmul.mubr.bf16.gmra.mrb[0].mxu0 %v7876
      %v7960 = vpop.f32.mrb[0].mxu0
      %v7961 = vadd.f32 %v3354, %v7960
      %v7962 = vpop.f32.mrb[0].mxu0
      %v7963 = vadd.f32 %v3355, %v7962
      %v7964 = vpop.f32.mrb[0].mxu0
      %v7965 = vadd.f32 %v3356, %v7964
      %v7966 = vpop.f32.mrb[0].mxu0
      %v7967 = vadd.f32 %v3357, %v7966
      %7968 = vmatprep.mubr.bf16.mxu0 0
      %7969 = vmatmul.mubr.bf16.gmra.mrb[0].mxu0 %v7879
      %v7970 = vpop.f32.mrb[0].mxu0
      %v7971 = vadd.f32 %v3358, %v7970
      %v7972 = vpop.f32.mrb[0].mxu0
      %v7973 = vadd.f32 %v3359, %v7972
      %v7974 = vpop.f32.mrb[0].mxu0
      %v7975 = vadd.f32 %v3360, %v7974
      %v7976 = vpop.f32.mrb[0].mxu0
      %v7977 = vadd.f32 %v3361, %v7976
      %7978 = vmatprep.mubr.bf16.mxu0 0
      %7979 = vmatmul.mubr.bf16.gmra.mrb[0].mxu0 %v7882
      %v7980 = vpop.f32.mrb[0].mxu0
      %v7981 = vadd.f32 %v3362, %v7980
      %v7982 = vpop.f32.mrb[0].mxu0
      %v7983 = vadd.f32 %v3363, %v7982
      %v7984 = vpop.f32.mrb[0].mxu0
      %v7985 = vadd.f32 %v3364, %v7984
      %v7986 = vpop.f32.mrb[0].mxu0
      %v7987 = vadd.f32 %v3365, %v7986
      %7988 = vmatprep.mubr.bf16.mxu0 0
      %7989 = vmatmul.mubr.bf16.gmra.mrb[0].mxu0 %v7885
      %v7990 = vpop.f32.mrb[0].mxu0
      %v7991 = vadd.f32 %v3366, %v7990
      %v7992 = vpop.f32.mrb[0].mxu0
      %v7993 = vadd.f32 %v3367, %v7992
      %v7994 = vpop.f32.mrb[0].mxu0
      %v7995 = vpop.f32.mrb[0].mxu0
      %7996 = vdwg.mxu0
      %v7997 = vsel %vm1608, %v7963, -inf
      %v7998 = vmax.f32 %v7961, %v7997
      %7999 = vmax.xlane.f32.xlu0 %v7998
      %v8000 = vpop.xlane.xlu0 %7999
      %v8001 = vsel %vm1608, %v7967, -inf
      %v8002 = vmax.f32 %v7965, %v8001
      %8003 = vmax.xlane.f32.xlu0 %v8002
      %v8004 = vpop.xlane.xlu0 %8003
      %v8005 = vsel %vm1608, %v7973, -inf
      %v8006 = vmax.f32 %v7971, %v8005
      %8007 = vmax.xlane.f32.xlu0 %v8006
      %v8008 = vpop.xlane.xlu0 %8007
      %v8009 = vsel %vm1608, %v7977, -inf
      %v8010 = vmax.f32 %v7975, %v8009
      %8011 = vmax.xlane.f32.xlu0 %v8010
      %v8012 = vpop.xlane.xlu0 %8011
      %v8013 = vsel %vm1608, %v7983, -inf
      %v8014 = vmax.f32 %v7981, %v8013
      %8015 = vmax.xlane.f32.xlu0 %v8014
      %v8016 = vpop.xlane.xlu0 %8015
      %v8017 = vsel %vm1608, %v7987, -inf
      %v8018 = vmax.f32 %v7985, %v8017
      %8019 = vmax.xlane.f32.xlu0 %v8018
      %v8020 = vpop.xlane.xlu0 %8019
      %v8021 = vsel %vm1972, %v7991, -inf
      %v8022 = vsel %vm1974, %v7993, -inf
      %v8023 = vmax.f32 %v8021, %v8022
      %8024 = vmax.xlane.f32.xlu0 %v8023
      %v8025 = vpop.xlane.xlu0 %8024
      %v8026 = vsub.f32 %v7961, %v8000
      %v8027 = vsub.f32 %v7963, %v8000
      %v8028 = vsub.f32 %v7965, %v8004
      %v8029 = vsub.f32 %v7967, %v8004
      %v8030 = vsub.f32 %v7971, %v8008
      %v8031 = vsub.f32 %v7973, %v8008
      %v8032 = vsub.f32 %v7975, %v8012
      %v8033 = vsub.f32 %v7977, %v8012
      %v8034 = vsub.f32 %v7981, %v8016
      %v8035 = vsub.f32 %v7983, %v8016
      %v8036 = vsub.f32 %v7985, %v8020
      %v8037 = vsub.f32 %v7987, %v8020
      %v8038 = vsub.f32 %v7991, %v8025
      %v8039 = vsub.f32 %v7993, %v8025
      %v8040 = vmul.f32 %v8026, 1.442695
      %v8041 = vpow.pop %v8040
      %v8042 = vmul.f32 %v8027, 1.442695
      %v8043 = vpow.pop %v8042
      %v8044 = vmul.f32 %v8028, 1.442695
      %v8045 = vpow.pop %v8044
      %v8046 = vmul.f32 %v8029, 1.442695
      %v8047 = vpow.pop %v8046
      %v8048 = vmul.f32 %v8030, 1.442695
      %v8049 = vpow.pop %v8048
      %v8050 = vmul.f32 %v8031, 1.442695
      %v8051 = vpow.pop %v8050
      %v8052 = vmul.f32 %v8032, 1.442695
      %v8053 = vpow.pop %v8052
      %v8054 = vmul.f32 %v8033, 1.442695
      %v8055 = vpow.pop %v8054
      %v8056 = vmul.f32 %v8034, 1.442695
      %v8057 = vpow.pop %v8056
      %v8058 = vmul.f32 %v8035, 1.442695
      %v8059 = vpow.pop %v8058
      %v8060 = vmul.f32 %v8036, 1.442695
      %v8061 = vpow.pop %v8060
      %v8062 = vmul.f32 %v8037, 1.442695
      %v8063 = vpow.pop %v8062
      %v8064 = vmul.f32 %v8038, 1.442695
      %v8065 = vpow.pop %v8064
      %v8066 = vmul.f32 %v8039, 1.442695
      %v8067 = vpow.pop %v8066
      %v8068 = vsel %vm1608, %v8043, 0.0
      %v8069 = vadd.f32 %v8041, %v8068
      %8070 = vadd.xlane.f32.xlu0 %v8069
      %v8071 = vpop.xlane.xlu0 %8070
      %v8072 = vsel %vm1608, %v8047, 0.0
      %v8073 = vadd.f32 %v8045, %v8072
      %8074 = vadd.xlane.f32.xlu0 %v8073
      %v8075 = vpop.xlane.xlu0 %8074
      %v8076 = vsel %vm1608, %v8051, 0.0
      %v8077 = vadd.f32 %v8049, %v8076
      %8078 = vadd.xlane.f32.xlu0 %v8077
      %v8079 = vpop.xlane.xlu0 %8078
      %v8080 = vsel %vm1608, %v8055, 0.0
      %v8081 = vadd.f32 %v8053, %v8080
      %8082 = vadd.xlane.f32.xlu0 %v8081
      %v8083 = vpop.xlane.xlu0 %8082
      %v8084 = vsel %vm1608, %v8059, 0.0
      %v8085 = vadd.f32 %v8057, %v8084
      %8086 = vadd.xlane.f32.xlu0 %v8085
      %v8087 = vpop.xlane.xlu0 %8086
      %v8088 = vsel %vm1608, %v8063, 0.0
      %v8089 = vadd.f32 %v8061, %v8088
      %8090 = vadd.xlane.f32.xlu0 %v8089
      %v8091 = vpop.xlane.xlu0 %8090
      %v8092 = vsel %vm1972, %v8065, 0.0
      %v8093 = vsel %vm1974, %v8067, 0.0
      %v8094 = vadd.f32 %v8092, %v8093
      %8095 = vadd.xlane.f32.xlu0 %v8094
      %v8096 = vpop.xlane.xlu0 %8095
      %v8097 = vrcp.pop %v8071
      %v8098 = vrcp.pop %v8075
      %v8099 = vrcp.pop %v8079
      %v8100 = vrcp.pop %v8083
      %v8101 = vrcp.pop %v8087
      %v8102 = vrcp.pop %v8091
      %v8103 = vrcp.pop %v8096
      %v8104 = vmul.f32 %v8041, %v8097
      %v8105 = vmul.f32 %v8043, %v8097
      %v8106 = vmul.f32 %v8045, %v8098
      %v8107 = vmul.f32 %v8047, %v8098
      %v8108 = vmul.f32 %v8049, %v8099
      %v8109 = vmul.f32 %v8051, %v8099
      %v8110 = vmul.f32 %v8053, %v8100
      %v8111 = vmul.f32 %v8055, %v8100
      %v8112 = vmul.f32 %v8057, %v8101
      %v8113 = vmul.f32 %v8059, %v8101
      %v8114 = vmul.f32 %v8061, %v8102
      %v8115 = vmul.f32 %v8063, %v8102
      %v8116 = vmul.f32 %v8065, %v8103
      %v8117 = vmul.f32 %v8067, %v8103
      %v8118 = vpack.c.bf16 %v8106, %v8104
      %v8119 = vpack.c.bf16 %v8107, %v8105
      %v8120 = vpack.c.bf16 %v8110, %v8108
      %v8121 = vpack.c.bf16 %v8111, %v8109
      %v8122 = vpack.c.bf16 %v8114, %v8112
      %v8123 = vpack.c.bf16 %v8115, %v8113
      %v8124 = vpack.c.bf16 %v8116, %v8116
      %v8125 = vpack.c.bf16 %v8117, %v8117
      %v8140 = vsel %vm1608, %v8119, 0
      %v8143 = vsel %vm1608, %v8121, 0
      %v8146 = vsel %vm1608, %v8123, 0
      %v8149 = vsel %vm1608, %v8125, 0
      %8151 = vmatprep.subr.bf16.mxu0 0
      %8152 = vmatpush1.bf16.msra.mxu0 %v7850
      %8153 = vmatprep.subr.bf16.mxu0 0
      %8154 = vmatpush1.bf16.msra.mxu0 %v7852
      %8155 = vmatprep.subr.bf16.mxu0 0
      %8156 = vmatpush1.bf16.msra.mxu0 %v7854
      %8157 = vmatprep.subr.bf16.mxu0 0
      %8158 = vmatpush1.bf16.msra.mxu0 %v7856
      %8159 = vmatprep.subr.bf16.mxu0 0
      %8160 = vmatpush1.bf16.msra.mxu0 %v7858
      %8161 = vmatprep.subr.bf16.mxu0 0
      %8162 = vmatpush1.bf16.msra.mxu0 %v7860
      %8163 = vmatprep.subr.bf16.mxu0 0
      %8164 = vmatpush1.bf16.msra.mxu0 %v7862
      %8165 = vmatprep.subr.bf16.mxu0 0
      %8166 = vmatpush1.bf16.msra.mxu0 %v7864
      %8167 = vmatprep.subr.bf16.mxu0 0
      %8168 = vmatpush1.bf16.msra.mxu0 %v7866
      %8169 = vmatprep.subr.bf16.mxu0 0
      %8170 = vmatpush1.bf16.msra.mxu0 %v7868
      %8171 = vmatprep.subr.bf16.mxu0 0
      %8172 = vmatpush1.bf16.msra.mxu0 %v7870
      %8173 = vmatprep.subr.bf16.mxu0 0
      %8174 = vmatpush1.bf16.msra.mxu0 %v7872
      %8175 = vmatprep.subr.bf16.mxu0 0
      %8176 = vmatpush1.bf16.msra.mxu0 %v7874
      %8177 = vmatprep.subr.bf16.mxu0 0
      %8178 = vmatpush1.bf16.msra.mxu0 0
      %8179 = vmatprep.subr.bf16.mxu0 0
      %8180 = vmatpush1.bf16.msra.mxu0 0
      %8181 = vmatprep.subr.bf16.mxu0 0
      %8182 = vmatpush1.bf16.msra.mxu0 0
      %8183 = vmatprep.mubr.bf16.mxu0 %v8140
      %8184 = vmatmul.mubr.bf16.gmra.mrb[0].mxu0 %v8118
      %v8185 = vpop.f32.mrb[0].mxu0
      %v8186 = vadd.f32 0.0, %v8185
      %v8187 = vpop.f32.mrb[0].mxu0
      %v8188 = vpop.f32.mrb[0].mxu0
      %v8189 = vadd.f32 0.0, %v8188
      %v8190 = vpop.f32.mrb[0].mxu0
      %8191 = vmatprep.mubr.bf16.mxu0 %v8143
      %8192 = vmatmul.mubr.bf16.gmra.mrb[0].mxu0 %v8120
      %v8193 = vpop.f32.mrb[0].mxu0
      %v8194 = vadd.f32 0.0, %v8193
      %v8195 = vpop.f32.mrb[0].mxu0
      %v8196 = vpop.f32.mrb[0].mxu0
      %v8197 = vadd.f32 0.0, %v8196
      %v8198 = vpop.f32.mrb[0].mxu0
      %8199 = vmatprep.mubr.bf16.mxu0 %v8146
      %8200 = vmatmul.mubr.bf16.gmra.mrb[0].mxu0 %v8122
      %v8201 = vpop.f32.mrb[0].mxu0
      %v8202 = vadd.f32 0.0, %v8201
      %v8203 = vpop.f32.mrb[0].mxu0
      %v8204 = vpop.f32.mrb[0].mxu0
      %v8205 = vadd.f32 0.0, %v8204
      %v8206 = vpop.f32.mrb[0].mxu0
      %8207 = vmatprep.mubr.bf16.mxu0 %v8149
      %8208 = vmatmul.mubr.bf16.gmra.mrb[0].mxu0 %v8124
      %v8209 = vpop.f32.mrb[0].mxu0
      %v8210 = vadd.f32 0.0, %v8209
      %v8211 = vpop.f32.mrb[0].mxu0
      %v8212 = vpop.f32.mrb[0].mxu0
      %v8213 = vpop.f32.mrb[0].mxu0
      %8214 = vdwg.mxu0
      %v8215 = vadd.f32 %v8186, 3.0
      %v8216 = vadd.f32 %v8189, 3.0
      %v8217 = vadd.f32 %v8194, 3.0
      %v8218 = vadd.f32 %v8197, 3.0
      %v8219 = vadd.f32 %v8202, 3.0
      %v8220 = vadd.f32 %v8205, 3.0
      %v8221 = vadd.f32 %v8210, 3.0
      %v8222 = vmax.f32 %v8215, 0.0
      %v8223 = vmax.f32 %v8216, 0.0
      %v8224 = vmax.f32 %v8217, 0.0
      %v8225 = vmax.f32 %v8218, 0.0
      %v8226 = vmax.f32 %v8219, 0.0
      %v8227 = vmax.f32 %v8220, 0.0
      %v8228 = vmax.f32 %v8221, 0.0
      %v8229 = vmin.f32 %v8222, 6.0
      %v8230 = vmin.f32 %v8223, 6.0
      %v8231 = vmin.f32 %v8224, 6.0
      %v8232 = vmin.f32 %v8225, 6.0
      %v8233 = vmin.f32 %v8226, 6.0
      %v8234 = vmin.f32 %v8227, 6.0
      %v8235 = vmin.f32 %v8228, 6.0
      %v8236 = vmul.f32 %v8186, %v8229
      %v8237 = vmul.f32 %v8189, %v8230
      %v8238 = vmul.f32 %v8194, %v8231
      %v8239 = vmul.f32 %v8197, %v8232
      %v8240 = vmul.f32 %v8202, %v8233
      %v8241 = vmul.f32 %v8205, %v8234
      %v8242 = vmul.f32 %v8210, %v8235
      %v8243 = vmul.f32 %v8236, 0.16666667
      %v8244 = vmul.f32 %v8237, 0.16666667
      %v8245 = vmul.f32 %v8238, 0.16666667
      %v8246 = vmul.f32 %v8239, 0.16666667
      %v8247 = vmul.f32 %v8240, 0.16666667
      %v8248 = vmul.f32 %v8241, 0.16666667
      %v8249 = vmul.f32 %v8242, 0.16666667
      %v8250 = vpack.c.bf16 %v8244, %v8243
      %v8251 = vpack.c.bf16 %v8246, %v8245
      %v8252 = vpack.c.bf16 %v8248, %v8247
      %v8253 = vpack.c.bf16 %v8249, %v8249
      %s8254 = scalar_lea.vmem %s7, 352
      %v8255 = vld [vmem:[%s8254] sm:$0xf]
      %v8256 = vld [vmem:[%s8254 + $0x4] sm:$0xf]
      %v8257 = vld [vmem:[%s8254 + $0x8] sm:$0xf]
      %v8258 = vld [vmem:[%s8254 + $0xc] sm:$0xf]
      %v8259 = vld [vmem:[%s8254 + $0x10] sm:$0xf]
      %v8260 = vld [vmem:[%s8254 + $0x14] sm:$0xf]
      %v8261 = vld [vmem:[%s8254 + $0x18] sm:$0xf]
      %v8262 = vld [vmem:[%s8254 + $0x1c] sm:$0xf]
      %v8271 = vunpack.c.l.b16 %v8255
      %v8272 = vunpack.c.l.b16 %v8256
      %v8273 = vunpack.c.l.b16 %v8257
      %v8274 = vunpack.c.l.b16 %v8258
      %v8275 = vunpack.c.l.b16 %v8259
      %v8276 = vunpack.c.l.b16 %v8260
      %v8277 = vunpack.c.l.b16 %v8261
      %v8278 = vunpack.c.l.b16 %v8262
      %v8279 = vpack.c.b16 %v8272, %v8271
      %v8280 = vpack.c.b16 %v8274, %v8273
      %v8281 = vpack.c.b16 %v8276, %v8275
      %v8282 = vpack.c.b16 %v8278, %v8277
      %v8288 = vsel %vm1825, %v8250, 0
      %v8291 = vsel %vm1825, %v8251, 0
      %v8294 = vsel %vm1825, %v8252, 0
      %v8297 = vsel %vm1825, %v8253, 0
      %8299 = vmatprep.subr.bf16.mxu0 0
      %8300 = vmatpush1.bf16.msra.mxu0 %v8279
      %8301 = vmatprep.subr.bf16.mxu0 0
      %8302 = vmatpush1.bf16.msra.mxu0 %v8280
      %8303 = vmatprep.subr.bf16.mxu0 0
      %8304 = vmatpush1.bf16.msra.mxu0 %v8281
      %8305 = vmatprep.subr.bf16.mxu0 0
      %8306 = vmatpush1.bf16.msra.mxu0 %v8282
      %8307 = vmatprep.subr.bf16.mxu0 0
      %8308 = vmatpush1.bf16.msra.mxu0 0
      %8309 = vmatprep.subr.bf16.mxu0 0
      %8310 = vmatpush1.bf16.msra.mxu0 0
      %8311 = vmatprep.subr.bf16.mxu0 0
      %8312 = vmatpush1.bf16.msra.mxu0 0
      %8313 = vmatprep.subr.bf16.mxu0 0
      %8314 = vmatpush1.bf16.msra.mxu0 0
      %8315 = vmatprep.subr.bf16.mxu0 0
      %8316 = vmatpush1.bf16.msra.mxu0 0
      %8317 = vmatprep.subr.bf16.mxu0 0
      %8318 = vmatpush1.bf16.msra.mxu0 0
      %8319 = vmatprep.subr.bf16.mxu0 0
      %8320 = vmatpush1.bf16.msra.mxu0 0
      %8321 = vmatprep.subr.bf16.mxu0 0
      %8322 = vmatpush1.bf16.msra.mxu0 0
      %8323 = vmatprep.subr.bf16.mxu0 0
      %8324 = vmatpush1.bf16.msra.mxu0 0
      %8325 = vmatprep.subr.bf16.mxu0 0
      %8326 = vmatpush1.bf16.msra.mxu0 0
      %8327 = vmatprep.subr.bf16.mxu0 0
      %8328 = vmatpush1.bf16.msra.mxu0 0
      %8329 = vmatprep.subr.bf16.mxu0 0
      %8330 = vmatpush1.bf16.msra.mxu0 0
      %8331 = vmatprep.mubr.bf16.mxu0 0
      %8332 = vmatmul.mubr.bf16.gmra.mrb[0].mxu0 %v8288
      %v8333 = vpop.f32.mrb[0].mxu0
      %v8334 = vadd.f32 0.0, %v8333
      %v8335 = vpop.f32.mrb[0].mxu0
      %v8336 = vpop.f32.mrb[0].mxu0
      %v8337 = vadd.f32 0.0, %v8336
      %v8338 = vpop.f32.mrb[0].mxu0
      %8339 = vmatprep.mubr.bf16.mxu0 0
      %8340 = vmatmul.mubr.bf16.gmra.mrb[0].mxu0 %v8291
      %v8341 = vpop.f32.mrb[0].mxu0
      %v8342 = vadd.f32 0.0, %v8341
      %v8343 = vpop.f32.mrb[0].mxu0
      %v8344 = vpop.f32.mrb[0].mxu0
      %v8345 = vadd.f32 0.0, %v8344
      %v8346 = vpop.f32.mrb[0].mxu0
      %8347 = vmatprep.mubr.bf16.mxu0 0
      %8348 = vmatmul.mubr.bf16.gmra.mrb[0].mxu0 %v8294
      %v8349 = vpop.f32.mrb[0].mxu0
      %v8350 = vadd.f32 0.0, %v8349
      %v8351 = vpop.f32.mrb[0].mxu0
      %v8352 = vpop.f32.mrb[0].mxu0
      %v8353 = vadd.f32 0.0, %v8352
      %v8354 = vpop.f32.mrb[0].mxu0
      %8355 = vmatprep.mubr.bf16.mxu0 0
      %8356 = vmatmul.mubr.bf16.gmra.mrb[0].mxu0 %v8297
      %v8357 = vpop.f32.mrb[0].mxu0
      %v8358 = vadd.f32 0.0, %v8357
      %v8359 = vpop.f32.mrb[0].mxu0
      %v8360 = vpop.f32.mrb[0].mxu0
      %v8361 = vpop.f32.mrb[0].mxu0
      %8362 = vdwg.mxu0
      %v8363 = vadd.f32 %v7817, %v8334
      %v8364 = vadd.f32 %v7818, %v8337
      %v8365 = vadd.f32 %v7819, %v8342
      %v8366 = vadd.f32 %v7820, %v8345
      %v8367 = vadd.f32 %v7821, %v8350
      %v8368 = vadd.f32 %v7822, %v8353
      %v8369 = vadd.f32 %v7823, %v8358
      %8383 = vmatprep.subr.bf16.mxu0 0
      %8384 = vmatpush1.bf16.msra.mxu0 %v703
      %8385 = vmatprep.subr.bf16.mxu0 0
      %8386 = vmatpush1.bf16.msra.mxu0 %v704
      %8387 = vmatprep.subr.bf16.mxu0 0
      %8388 = vmatpush1.bf16.msra.mxu0 %v705
      %8389 = vmatprep.subr.bf16.mxu0 0
      %8390 = vmatpush1.bf16.msra.mxu0 %v706
      %8391 = vmatprep.subr.bf16.mxu0 0
      %8392 = vmatpush1.bf16.msra.mxu0 %v707
      %8393 = vmatprep.subr.bf16.mxu0 0
      %8394 = vmatpush1.bf16.msra.mxu0 %v708
      %8395 = vmatprep.subr.bf16.mxu0 0
      %8396 = vmatpush1.bf16.msra.mxu0 %v709
      %8397 = vmatprep.subr.bf16.mxu0 0
      %8398 = vmatpush1.bf16.msra.mxu0 %v710
      %8399 = vmatprep.subr.bf16.mxu0 0
      %8400 = vmatpush1.bf16.msra.mxu0 %v711
      %8401 = vmatprep.subr.bf16.mxu0 0
      %8402 = vmatpush1.bf16.msra.mxu0 %v712
      %8403 = vmatprep.subr.bf16.mxu0 0
      %8404 = vmatpush1.bf16.msra.mxu0 %v713
      %8405 = vmatprep.subr.bf16.mxu0 0
      %8406 = vmatpush1.bf16.msra.mxu0 %v714
      %8407 = vmatprep.subr.bf16.mxu0 0
      %8408 = vmatpush1.bf16.msra.mxu0 %v715
      %8409 = vmatprep.subr.bf16.mxu0 0
      %8410 = vmatpush1.bf16.msra.mxu0 0
      %8411 = vmatprep.subr.bf16.mxu0 0
      %8412 = vmatpush1.bf16.msra.mxu0 0
      %8413 = vmatprep.subr.bf16.mxu0 0
      %8414 = vmatpush1.bf16.msra.mxu0 0
      %8415 = vmatprep.mubr.bf16.mxu0 %v1610
      %8416 = vmatmul.mubr.bf16.gmra.mrb[0].mxu0 %v1583
      %v8417 = vpop.f32.mrb[0].mxu0
      %v8418 = vadd.f32 0.0, %v8417
      %v8419 = vpop.f32.mrb[0].mxu0
      %v8420 = vpop.f32.mrb[0].mxu0
      %v8421 = vadd.f32 0.0, %v8420
      %v8422 = vpop.f32.mrb[0].mxu0
      %8423 = vmatprep.mubr.bf16.mxu0 %v1613
      %8424 = vmatmul.mubr.bf16.gmra.mrb[0].mxu0 %v1585
      %v8425 = vpop.f32.mrb[0].mxu0
      %v8426 = vadd.f32 0.0, %v8425
      %v8427 = vpop.f32.mrb[0].mxu0
      %v8428 = vpop.f32.mrb[0].mxu0
      %v8429 = vadd.f32 0.0, %v8428
      %v8430 = vpop.f32.mrb[0].mxu0
      %8431 = vmatprep.mubr.bf16.mxu0 %v1616
      %8432 = vmatmul.mubr.bf16.gmra.mrb[0].mxu0 %v1587
      %v8433 = vpop.f32.mrb[0].mxu0
      %v8434 = vadd.f32 0.0, %v8433
      %v8435 = vpop.f32.mrb[0].mxu0
      %v8436 = vpop.f32.mrb[0].mxu0
      %v8437 = vadd.f32 0.0, %v8436
      %v8438 = vpop.f32.mrb[0].mxu0
      %8439 = vmatprep.mubr.bf16.mxu0 %v1619
      %8440 = vmatmul.mubr.bf16.gmra.mrb[0].mxu0 %v1589
      %v8441 = vpop.f32.mrb[0].mxu0
      %v8442 = vadd.f32 0.0, %v8441
      %v8443 = vpop.f32.mrb[0].mxu0
      %v8444 = vpop.f32.mrb[0].mxu0
      %v8445 = vpop.f32.mrb[0].mxu0
      %8446 = vdwg.mxu0
      %v8447 = vpack.c.bf16 %v8421, %v8418
      %v8448 = vpack.c.bf16 %v8429, %v8426
      %v8449 = vpack.c.bf16 %v8437, %v8434
      %v8450 = vpack.c.bf16 %v8442, %v8442
      %v8452 = vsel %vm736, %v8447, 0
      %v8455 = vsel %vm736, %v8448, 0
      %v8458 = vsel %vm736, %v8449, 0
      %v8461 = vsel %vm736, %v8450, 0
      %8463 = vmatprep.subr.bf16.mxu0 %v1713
      %8464 = vmatpush1.bf16.msra.mxu0 %v1712
      %8465 = vmatprep.subr.bf16.mxu0 %v1715
      %8466 = vmatpush1.bf16.msra.mxu0 %v1714
      %8467 = vmatprep.subr.bf16.mxu0 0
      %8468 = vmatpush1.bf16.msra.mxu0 0
      %8469 = vmatprep.subr.bf16.mxu0 0
      %8470 = vmatpush1.bf16.msra.mxu0 0
      %8471 = vmatprep.subr.bf16.mxu0 0
      %8472 = vmatpush1.bf16.msra.mxu0 0
      %8473 = vmatprep.subr.bf16.mxu0 0
      %8474 = vmatpush1.bf16.msra.mxu0 0
      %8475 = vmatprep.subr.bf16.mxu0 0
      %8476 = vmatpush1.bf16.msra.mxu0 0
      %8477 = vmatprep.subr.bf16.mxu0 0
      %8478 = vmatpush1.bf16.msra.mxu0 0
      %8479 = vmatprep.subr.bf16.mxu0 0
      %8480 = vmatpush1.bf16.msra.mxu0 0
      %8481 = vmatprep.subr.bf16.mxu0 0
      %8482 = vmatpush1.bf16.msra.mxu0 0
      %8483 = vmatprep.subr.bf16.mxu0 0
      %8484 = vmatpush1.bf16.msra.mxu0 0
      %8485 = vmatprep.subr.bf16.mxu0 0
      %8486 = vmatpush1.bf16.msra.mxu0 0
      %8487 = vmatprep.subr.bf16.mxu0 0
      %8488 = vmatpush1.bf16.msra.mxu0 0
      %8489 = vmatprep.subr.bf16.mxu0 0
      %8490 = vmatpush1.bf16.msra.mxu0 0
      %8491 = vmatprep.subr.bf16.mxu0 0
      %8492 = vmatpush1.bf16.msra.mxu0 0
      %8493 = vmatprep.subr.bf16.mxu0 0
      %8494 = vmatpush1.bf16.msra.mxu0 0
      %8495 = vmatprep.mubr.bf16.mxu0 0
      %8496 = vmatmul.mubr.bf16.gmra.mrb[0].mxu0 %v8452
      %v8497 = vpop.f32.mrb[0].mxu0
      %v8498 = vadd.f32 %v1693, %v8497
      %v8499 = vpop.f32.mrb[0].mxu0
      %v8500 = vadd.f32 %v1697, %v8499
      %v8501 = vpop.f32.mrb[0].mxu0
      %v8502 = vadd.f32 %v1693, %v8501
      %v8503 = vpop.f32.mrb[0].mxu0
      %v8504 = vadd.f32 %v1697, %v8503
      %8505 = vmatprep.mubr.bf16.mxu0 0
      %8506 = vmatmul.mubr.bf16.gmra.mrb[0].mxu0 %v8455
      %v8507 = vpop.f32.mrb[0].mxu0
      %v8508 = vadd.f32 %v1693, %v8507
      %v8509 = vpop.f32.mrb[0].mxu0
      %v8510 = vadd.f32 %v1697, %v8509
      %v8511 = vpop.f32.mrb[0].mxu0
      %v8512 = vadd.f32 %v1693, %v8511
      %v8513 = vpop.f32.mrb[0].mxu0
      %v8514 = vadd.f32 %v1697, %v8513
      %8515 = vmatprep.mubr.bf16.mxu0 0
      %8516 = vmatmul.mubr.bf16.gmra.mrb[0].mxu0 %v8458
      %v8517 = vpop.f32.mrb[0].mxu0
      %v8518 = vadd.f32 %v1693, %v8517
      %v8519 = vpop.f32.mrb[0].mxu0
      %v8520 = vadd.f32 %v1697, %v8519
      %v8521 = vpop.f32.mrb[0].mxu0
      %v8522 = vadd.f32 %v1693, %v8521
      %v8523 = vpop.f32.mrb[0].mxu0
      %v8524 = vadd.f32 %v1697, %v8523
      %8525 = vmatprep.mubr.bf16.mxu0 0
      %8526 = vmatmul.mubr.bf16.gmra.mrb[0].mxu0 %v8461
      %v8527 = vpop.f32.mrb[0].mxu0
      %v8528 = vadd.f32 %v1693, %v8527
      %v8529 = vpop.f32.mrb[0].mxu0
      %v8530 = vadd.f32 %v1697, %v8529
      %v8531 = vpop.f32.mrb[0].mxu0
      %v8532 = vpop.f32.mrb[0].mxu0
      %8533 = vdwg.mxu0
      %v8534 = vpack.c.bf16 %v8502, %v8498
      %v8535 = vpack.c.bf16 %v8504, %v8500
      %v8536 = vpack.c.bf16 %v8512, %v8508
      %v8537 = vpack.c.bf16 %v8514, %v8510
      %v8538 = vpack.c.bf16 %v8522, %v8518
      %v8539 = vpack.c.bf16 %v8524, %v8520
      %v8540 = vpack.c.bf16 %v8528, %v8528
      %v8541 = vpack.c.bf16 %v8530, %v8530
      %v8543 = vsel %vm1825, %v8534, 0
      %v8546 = vsel %vm1825, %v8536, 0
      %v8549 = vsel %vm1825, %v8538, 0
      %v8552 = vsel %vm1825, %v8540, 0
      %v8555 = vsel %vm1825, %v1524, 0
      %v8558 = vsel %vm1825, %v1526, 0
      %v8561 = vsel %vm1825, %v1528, 0
      %v8564 = vsel %vm1825, %v1530, 0
      %v8567 = vsel %vm1825, %v1532, 0
      %v8570 = vsel %vm1825, %v1534, 0
      %v8573 = vsel %vm1825, %v1536, 0
      %v8576 = vsel %vm1825, %v1538, 0
      %v8579 = vsel %vm1825, %v1540, 0
      %v8582 = vsel %vm1825, %v1542, 0
      %v8585 = vsel %vm1825, %v1544, 0
      %v8588 = vsel %vm1825, %v1546, 0
      %v8591 = vsel %vm1825, %v1548, 0
      %8593 = vmatprep.subr.bf16.mxu0 0
      %8594 = vmatpush1.bf16.xpose.msra.mxu0 %v8555
      %8595 = vmatprep.subr.bf16.mxu0 0
      %8596 = vmatpush1.bf16.xpose.msra.mxu0 %v8558
      %8597 = vmatprep.subr.bf16.mxu0 0
      %8598 = vmatpush1.bf16.xpose.msra.mxu0 %v8561
      %8599 = vmatprep.subr.bf16.mxu0 0
      %8600 = vmatpush1.bf16.xpose.msra.mxu0 %v8564
      %8601 = vmatprep.subr.bf16.mxu0 0
      %8602 = vmatpush1.bf16.xpose.msra.mxu0 %v8567
      %8603 = vmatprep.subr.bf16.mxu0 0
      %8604 = vmatpush1.bf16.xpose.msra.mxu0 %v8570
      %8605 = vmatprep.subr.bf16.mxu0 0
      %8606 = vmatpush1.bf16.xpose.msra.mxu0 %v8573
      %8607 = vmatprep.subr.bf16.mxu0 0
      %8608 = vmatpush1.bf16.xpose.msra.mxu0 %v8576
      %8609 = vmatprep.subr.bf16.mxu0 0
      %8610 = vmatpush1.bf16.xpose.msra.mxu0 %v8579
      %8611 = vmatprep.subr.bf16.mxu0 0
      %8612 = vmatpush1.bf16.xpose.msra.mxu0 %v8582
      %8613 = vmatprep.subr.bf16.mxu0 0
      %8614 = vmatpush1.bf16.xpose.msra.mxu0 %v8585
      %8615 = vmatprep.subr.bf16.mxu0 0
      %8616 = vmatpush1.bf16.xpose.msra.mxu0 %v8588
      %8617 = vmatprep.subr.bf16.mxu0 0
      %8618 = vmatpush1.bf16.xpose.msra.mxu0 %v8591
      %8619 = vmatprep.subr.bf16.mxu0 0
      %8620 = vmatpush1.bf16.xpose.msra.mxu0 0
      %8621 = vmatprep.subr.bf16.mxu0 0
      %8622 = vmatpush1.bf16.xpose.msra.mxu0 0
      %8623 = vmatprep.subr.bf16.mxu0 0
      %8624 = vmatpush1.bf16.xpose.msra.mxu0 0
      %8625 = vmatprep.mubr.bf16.mxu0 0
      %8626 = vmatmul.mubr.bf16.gmra.mrb[0].mxu0 %v8543
      %v8627 = vpop.f32.mrb[0].mxu0
      %v8628 = vadd.f32 %v1811, %v8627
      %v8629 = vpop.f32.mrb[0].mxu0
      %v8630 = vadd.f32 %v1812, %v8629
      %v8631 = vpop.f32.mrb[0].mxu0
      %v8632 = vadd.f32 %v1813, %v8631
      %v8633 = vpop.f32.mrb[0].mxu0
      %v8634 = vadd.f32 %v1814, %v8633
      %8635 = vmatprep.mubr.bf16.mxu0 0
      %8636 = vmatmul.mubr.bf16.gmra.mrb[0].mxu0 %v8546
      %v8637 = vpop.f32.mrb[0].mxu0
      %v8638 = vadd.f32 %v1815, %v8637
      %v8639 = vpop.f32.mrb[0].mxu0
      %v8640 = vadd.f32 %v1816, %v8639
      %v8641 = vpop.f32.mrb[0].mxu0
      %v8642 = vadd.f32 %v1817, %v8641
      %v8643 = vpop.f32.mrb[0].mxu0
      %v8644 = vadd.f32 %v1818, %v8643
      %8645 = vmatprep.mubr.bf16.mxu0 0
      %8646 = vmatmul.mubr.bf16.gmra.mrb[0].mxu0 %v8549
      %v8647 = vpop.f32.mrb[0].mxu0
      %v8648 = vadd.f32 %v1819, %v8647
      %v8649 = vpop.f32.mrb[0].mxu0
      %v8650 = vadd.f32 %v1820, %v8649
      %v8651 = vpop.f32.mrb[0].mxu0
      %v8652 = vadd.f32 %v1821, %v8651
      %v8653 = vpop.f32.mrb[0].mxu0
      %v8654 = vadd.f32 %v1822, %v8653
      %8655 = vmatprep.mubr.bf16.mxu0 0
      %8656 = vmatmul.mubr.bf16.gmra.mrb[0].mxu0 %v8552
      %v8657 = vpop.f32.mrb[0].mxu0
      %v8658 = vadd.f32 %v1823, %v8657
      %v8659 = vpop.f32.mrb[0].mxu0
      %v8660 = vadd.f32 %v1824, %v8659
      %v8661 = vpop.f32.mrb[0].mxu0
      %v8662 = vpop.f32.mrb[0].mxu0
      %8663 = vdwg.mxu0
      %v8664 = vsel %vm1608, %v8630, -inf
      %v8665 = vmax.f32 %v8628, %v8664
      %8666 = vmax.xlane.f32.xlu0 %v8665
      %v8667 = vpop.xlane.xlu0 %8666
      %v8668 = vsel %vm1608, %v8634, -inf
      %v8669 = vmax.f32 %v8632, %v8668
      %8670 = vmax.xlane.f32.xlu0 %v8669
      %v8671 = vpop.xlane.xlu0 %8670
      %v8672 = vsel %vm1608, %v8640, -inf
      %v8673 = vmax.f32 %v8638, %v8672
      %8674 = vmax.xlane.f32.xlu0 %v8673
      %v8675 = vpop.xlane.xlu0 %8674
      %v8676 = vsel %vm1608, %v8644, -inf
      %v8677 = vmax.f32 %v8642, %v8676
      %8678 = vmax.xlane.f32.xlu0 %v8677
      %v8679 = vpop.xlane.xlu0 %8678
      %v8680 = vsel %vm1608, %v8650, -inf
      %v8681 = vmax.f32 %v8648, %v8680
      %8682 = vmax.xlane.f32.xlu0 %v8681
      %v8683 = vpop.xlane.xlu0 %8682
      %v8684 = vsel %vm1608, %v8654, -inf
      %v8685 = vmax.f32 %v8652, %v8684
      %8686 = vmax.xlane.f32.xlu0 %v8685
      %v8687 = vpop.xlane.xlu0 %8686
      %v8688 = vsel %vm1972, %v8658, -inf
      %v8689 = vsel %vm1974, %v8660, -inf
      %v8690 = vmax.f32 %v8688, %v8689
      %8691 = vmax.xlane.f32.xlu0 %v8690
      %v8692 = vpop.xlane.xlu0 %8691
      %v8693 = vsub.f32 %v8628, %v8667
      %v8694 = vsub.f32 %v8630, %v8667
      %v8695 = vsub.f32 %v8632, %v8671
      %v8696 = vsub.f32 %v8634, %v8671
      %v8697 = vsub.f32 %v8638, %v8675
      %v8698 = vsub.f32 %v8640, %v8675
      %v8699 = vsub.f32 %v8642, %v8679
      %v8700 = vsub.f32 %v8644, %v8679
      %v8701 = vsub.f32 %v8648, %v8683
      %v8702 = vsub.f32 %v8650, %v8683
      %v8703 = vsub.f32 %v8652, %v8687
      %v8704 = vsub.f32 %v8654, %v8687
      %v8705 = vsub.f32 %v8658, %v8692
      %v8706 = vsub.f32 %v8660, %v8692
      %v8707 = vmul.f32 %v8693, 1.442695
      %v8708 = vpow.pop %v8707
      %v8709 = vmul.f32 %v8694, 1.442695
      %v8710 = vpow.pop %v8709
      %v8711 = vmul.f32 %v8695, 1.442695
      %v8712 = vpow.pop %v8711
      %v8713 = vmul.f32 %v8696, 1.442695
      %v8714 = vpow.pop %v8713
      %v8715 = vmul.f32 %v8697, 1.442695
      %v8716 = vpow.pop %v8715
      %v8717 = vmul.f32 %v8698, 1.442695
      %v8718 = vpow.pop %v8717
      %v8719 = vmul.f32 %v8699, 1.442695
      %v8720 = vpow.pop %v8719
      %v8721 = vmul.f32 %v8700, 1.442695
      %v8722 = vpow.pop %v8721
      %v8723 = vmul.f32 %v8701, 1.442695
      %v8724 = vpow.pop %v8723
      %v8725 = vmul.f32 %v8702, 1.442695
      %v8726 = vpow.pop %v8725
      %v8727 = vmul.f32 %v8703, 1.442695
      %v8728 = vpow.pop %v8727
      %v8729 = vmul.f32 %v8704, 1.442695
      %v8730 = vpow.pop %v8729
      %v8731 = vmul.f32 %v8705, 1.442695
      %v8732 = vpow.pop %v8731
      %v8733 = vmul.f32 %v8706, 1.442695
      %v8734 = vpow.pop %v8733
      %v8735 = vsel %vm1608, %v8710, 0.0
      %v8736 = vadd.f32 %v8708, %v8735
      %8737 = vadd.xlane.f32.xlu0 %v8736
      %v8738 = vpop.xlane.xlu0 %8737
      %v8739 = vsel %vm1608, %v8714, 0.0
      %v8740 = vadd.f32 %v8712, %v8739
      %8741 = vadd.xlane.f32.xlu0 %v8740
      %v8742 = vpop.xlane.xlu0 %8741
      %v8743 = vsel %vm1608, %v8718, 0.0
      %v8744 = vadd.f32 %v8716, %v8743
      %8745 = vadd.xlane.f32.xlu0 %v8744
      %v8746 = vpop.xlane.xlu0 %8745
      %v8747 = vsel %vm1608, %v8722, 0.0
      %v8748 = vadd.f32 %v8720, %v8747
      %8749 = vadd.xlane.f32.xlu0 %v8748
      %v8750 = vpop.xlane.xlu0 %8749
      %v8751 = vsel %vm1608, %v8726, 0.0
      %v8752 = vadd.f32 %v8724, %v8751
      %8753 = vadd.xlane.f32.xlu0 %v8752
      %v8754 = vpop.xlane.xlu0 %8753
      %v8755 = vsel %vm1608, %v8730, 0.0
      %v8756 = vadd.f32 %v8728, %v8755
      %8757 = vadd.xlane.f32.xlu0 %v8756
      %v8758 = vpop.xlane.xlu0 %8757
      %v8759 = vsel %vm1972, %v8732, 0.0
      %v8760 = vsel %vm1974, %v8734, 0.0
      %v8761 = vadd.f32 %v8759, %v8760
      %8762 = vadd.xlane.f32.xlu0 %v8761
      %v8763 = vpop.xlane.xlu0 %8762
      %v8764 = vrcp.pop %v8738
      %v8765 = vrcp.pop %v8742
      %v8766 = vrcp.pop %v8746
      %v8767 = vrcp.pop %v8750
      %v8768 = vrcp.pop %v8754
      %v8769 = vrcp.pop %v8758
      %v8770 = vrcp.pop %v8763
      %v8771 = vmul.f32 %v8708, %v8764
      %v8772 = vmul.f32 %v8710, %v8764
      %v8773 = vmul.f32 %v8712, %v8765
      %v8774 = vmul.f32 %v8714, %v8765
      %v8775 = vmul.f32 %v8716, %v8766
      %v8776 = vmul.f32 %v8718, %v8766
      %v8777 = vmul.f32 %v8720, %v8767
      %v8778 = vmul.f32 %v8722, %v8767
      %v8779 = vmul.f32 %v8724, %v8768
      %v8780 = vmul.f32 %v8726, %v8768
      %v8781 = vmul.f32 %v8728, %v8769
      %v8782 = vmul.f32 %v8730, %v8769
      %v8783 = vmul.f32 %v8732, %v8770
      %v8784 = vmul.f32 %v8734, %v8770
      %v8785 = vpack.c.bf16 %v8773, %v8771
      %v8786 = vpack.c.bf16 %v8774, %v8772
      %v8787 = vpack.c.bf16 %v8777, %v8775
      %v8788 = vpack.c.bf16 %v8778, %v8776
      %v8789 = vpack.c.bf16 %v8781, %v8779
      %v8790 = vpack.c.bf16 %v8782, %v8780
      %v8791 = vpack.c.bf16 %v8783, %v8783
      %v8792 = vpack.c.bf16 %v8784, %v8784
      %v8794 = vsel %vm1608, %v8786, 0
      %v8797 = vsel %vm1608, %v8788, 0
      %v8800 = vsel %vm1608, %v8790, 0
      %v8803 = vsel %vm1608, %v8792, 0
      %8805 = vmatprep.subr.bf16.mxu0 0
      %8806 = vmatpush1.bf16.msra.mxu0 %v1524
      %8807 = vmatprep.subr.bf16.mxu0 0
      %8808 = vmatpush1.bf16.msra.mxu0 %v1526
      %8809 = vmatprep.subr.bf16.mxu0 0
      %8810 = vmatpush1.bf16.msra.mxu0 %v1528
      %8811 = vmatprep.subr.bf16.mxu0 0
      %8812 = vmatpush1.bf16.msra.mxu0 %v1530
      %8813 = vmatprep.subr.bf16.mxu0 0
      %8814 = vmatpush1.bf16.msra.mxu0 %v1532
      %8815 = vmatprep.subr.bf16.mxu0 0
      %8816 = vmatpush1.bf16.msra.mxu0 %v1534
      %8817 = vmatprep.subr.bf16.mxu0 0
      %8818 = vmatpush1.bf16.msra.mxu0 %v1536
      %8819 = vmatprep.subr.bf16.mxu0 0
      %8820 = vmatpush1.bf16.msra.mxu0 %v1538
      %8821 = vmatprep.subr.bf16.mxu0 0
      %8822 = vmatpush1.bf16.msra.mxu0 %v1540
      %8823 = vmatprep.subr.bf16.mxu0 0
      %8824 = vmatpush1.bf16.msra.mxu0 %v1542
      %8825 = vmatprep.subr.bf16.mxu0 0
      %8826 = vmatpush1.bf16.msra.mxu0 %v1544
      %8827 = vmatprep.subr.bf16.mxu0 0
      %8828 = vmatpush1.bf16.msra.mxu0 %v1546
      %8829 = vmatprep.subr.bf16.mxu0 0
      %8830 = vmatpush1.bf16.msra.mxu0 %v1548
      %8831 = vmatprep.subr.bf16.mxu0 0
      %8832 = vmatpush1.bf16.msra.mxu0 0
      %8833 = vmatprep.subr.bf16.mxu0 0
      %8834 = vmatpush1.bf16.msra.mxu0 0
      %8835 = vmatprep.subr.bf16.mxu0 0
      %8836 = vmatpush1.bf16.msra.mxu0 0
      %8837 = vmatprep.mubr.bf16.mxu0 %v8794
      %8838 = vmatmul.mubr.bf16.gmra.mrb[0].mxu0 %v8785
      %v8839 = vpop.f32.mrb[0].mxu0
      %v8840 = vadd.f32 0.0, %v8839
      %v8841 = vpop.f32.mrb[0].mxu0
      %v8842 = vpop.f32.mrb[0].mxu0
      %v8843 = vadd.f32 0.0, %v8842
      %v8844 = vpop.f32.mrb[0].mxu0
      %8845 = vmatprep.mubr.bf16.mxu0 %v8797
      %8846 = vmatmul.mubr.bf16.gmra.mrb[0].mxu0 %v8787
      %v8847 = vpop.f32.mrb[0].mxu0
      %v8848 = vadd.f32 0.0, %v8847
      %v8849 = vpop.f32.mrb[0].mxu0
      %v8850 = vpop.f32.mrb[0].mxu0
      %v8851 = vadd.f32 0.0, %v8850
      %v8852 = vpop.f32.mrb[0].mxu0
      %8853 = vmatprep.mubr.bf16.mxu0 %v8800
      %8854 = vmatmul.mubr.bf16.gmra.mrb[0].mxu0 %v8789
      %v8855 = vpop.f32.mrb[0].mxu0
      %v8856 = vadd.f32 0.0, %v8855
      %v8857 = vpop.f32.mrb[0].mxu0
      %v8858 = vpop.f32.mrb[0].mxu0
      %v8859 = vadd.f32 0.0, %v8858
      %v8860 = vpop.f32.mrb[0].mxu0
      %8861 = vmatprep.mubr.bf16.mxu0 %v8803
      %8862 = vmatmul.mubr.bf16.gmra.mrb[0].mxu0 %v8791
      %v8863 = vpop.f32.mrb[0].mxu0
      %v8864 = vadd.f32 0.0, %v8863
      %v8865 = vpop.f32.mrb[0].mxu0
      %v8866 = vpop.f32.mrb[0].mxu0
      %v8867 = vpop.f32.mrb[0].mxu0
      %8868 = vdwg.mxu0
      %v8869 = vadd.f32 %v8840, 3.0
      %v8870 = vadd.f32 %v8843, 3.0
      %v8871 = vadd.f32 %v8848, 3.0
      %v8872 = vadd.f32 %v8851, 3.0
      %v8873 = vadd.f32 %v8856, 3.0
      %v8874 = vadd.f32 %v8859, 3.0
      %v8875 = vadd.f32 %v8864, 3.0
      %v8876 = vmax.f32 %v8869, 0.0
      %v8877 = vmax.f32 %v8870, 0.0
      %v8878 = vmax.f32 %v8871, 0.0
      %v8879 = vmax.f32 %v8872, 0.0
      %v8880 = vmax.f32 %v8873, 0.0
      %v8881 = vmax.f32 %v8874, 0.0
      %v8882 = vmax.f32 %v8875, 0.0
      %v8883 = vmin.f32 %v8876, 6.0
      %v8884 = vmin.f32 %v8877, 6.0
      %v8885 = vmin.f32 %v8878, 6.0
      %v8886 = vmin.f32 %v8879, 6.0
      %v8887 = vmin.f32 %v8880, 6.0
      %v8888 = vmin.f32 %v8881, 6.0
      %v8889 = vmin.f32 %v8882, 6.0
      %v8890 = vmul.f32 %v8840, %v8883
      %v8891 = vmul.f32 %v8843, %v8884
      %v8892 = vmul.f32 %v8848, %v8885
      %v8893 = vmul.f32 %v8851, %v8886
      %v8894 = vmul.f32 %v8856, %v8887
      %v8895 = vmul.f32 %v8859, %v8888
      %v8896 = vmul.f32 %v8864, %v8889
      %v8897 = vmul.f32 %v8890, 0.16666667
      %v8898 = vmul.f32 %v8891, 0.16666667
      %v8899 = vmul.f32 %v8892, 0.16666667
      %v8900 = vmul.f32 %v8893, 0.16666667
      %v8901 = vmul.f32 %v8894, 0.16666667
      %v8902 = vmul.f32 %v8895, 0.16666667
      %v8903 = vmul.f32 %v8896, 0.16666667
      %v8904 = vpack.c.bf16 %v8898, %v8897
      %v8905 = vpack.c.bf16 %v8900, %v8899
      %v8906 = vpack.c.bf16 %v8902, %v8901
      %v8907 = vpack.c.bf16 %v8903, %v8903
      %s8908 = scalar_lea.vmem %s7, 384
      %v8909 = vld [vmem:[%s8908] sm:$0xf]
      %v8910 = vld [vmem:[%s8908 + $0x4] sm:$0xf]
      %v8911 = vld [vmem:[%s8908 + $0x8] sm:$0xf]
      %v8912 = vld [vmem:[%s8908 + $0xc] sm:$0xf]
      %v8913 = vld [vmem:[%s8908 + $0x10] sm:$0xf]
      %v8914 = vld [vmem:[%s8908 + $0x14] sm:$0xf]
      %v8915 = vld [vmem:[%s8908 + $0x18] sm:$0xf]
      %v8916 = vld [vmem:[%s8908 + $0x1c] sm:$0xf]
      %v8925 = vunpack.c.l.b16 %v8909
      %v8926 = vunpack.c.l.b16 %v8910
      %v8927 = vunpack.c.l.b16 %v8911
      %v8928 = vunpack.c.l.b16 %v8912
      %v8929 = vunpack.c.l.b16 %v8913
      %v8930 = vunpack.c.l.b16 %v8914
      %v8931 = vunpack.c.l.b16 %v8915
      %v8932 = vunpack.c.l.b16 %v8916
      %v8933 = vpack.c.b16 %v8926, %v8925
      %v8934 = vpack.c.b16 %v8928, %v8927
      %v8935 = vpack.c.b16 %v8930, %v8929
      %v8936 = vpack.c.b16 %v8932, %v8931
      %v8942 = vsel %vm1825, %v8904, 0
      %v8945 = vsel %vm1825, %v8905, 0
      %v8948 = vsel %vm1825, %v8906, 0
      %v8951 = vsel %vm1825, %v8907, 0
      %8953 = vmatprep.subr.bf16.mxu0 0
      %8954 = vmatpush1.bf16.msra.mxu0 %v8933
      %8955 = vmatprep.subr.bf16.mxu0 0
      %8956 = vmatpush1.bf16.msra.mxu0 %v8934
      %8957 = vmatprep.subr.bf16.mxu0 0
      %8958 = vmatpush1.bf16.msra.mxu0 %v8935
      %8959 = vmatprep.subr.bf16.mxu0 0
      %8960 = vmatpush1.bf16.msra.mxu0 %v8936
      %8961 = vmatprep.subr.bf16.mxu0 0
      %8962 = vmatpush1.bf16.msra.mxu0 0
      %8963 = vmatprep.subr.bf16.mxu0 0
      %8964 = vmatpush1.bf16.msra.mxu0 0
      %8965 = vmatprep.subr.bf16.mxu0 0
      %8966 = vmatpush1.bf16.msra.mxu0 0
      %8967 = vmatprep.subr.bf16.mxu0 0
      %8968 = vmatpush1.bf16.msra.mxu0 0
      %8969 = vmatprep.subr.bf16.mxu0 0
      %8970 = vmatpush1.bf16.msra.mxu0 0
      %8971 = vmatprep.subr.bf16.mxu0 0
      %8972 = vmatpush1.bf16.msra.mxu0 0
      %8973 = vmatprep.subr.bf16.mxu0 0
      %8974 = vmatpush1.bf16.msra.mxu0 0
      %8975 = vmatprep.subr.bf16.mxu0 0
      %8976 = vmatpush1.bf16.msra.mxu0 0
      %8977 = vmatprep.subr.bf16.mxu0 0
      %8978 = vmatpush1.bf16.msra.mxu0 0
      %8979 = vmatprep.subr.bf16.mxu0 0
      %8980 = vmatpush1.bf16.msra.mxu0 0
      %8981 = vmatprep.subr.bf16.mxu0 0
      %8982 = vmatpush1.bf16.msra.mxu0 0
      %8983 = vmatprep.subr.bf16.mxu0 0
      %8984 = vmatpush1.bf16.msra.mxu0 0
      %8985 = vmatprep.mubr.bf16.mxu0 0
      %8986 = vmatmul.mubr.bf16.gmra.mrb[0].mxu0 %v8942
      %v8987 = vpop.f32.mrb[0].mxu0
      %v8988 = vadd.f32 0.0, %v8987
      %v8989 = vpop.f32.mrb[0].mxu0
      %v8990 = vpop.f32.mrb[0].mxu0
      %v8991 = vadd.f32 0.0, %v8990
      %v8992 = vpop.f32.mrb[0].mxu0
      %8993 = vmatprep.mubr.bf16.mxu0 0
      %8994 = vmatmul.mubr.bf16.gmra.mrb[0].mxu0 %v8945
      %v8995 = vpop.f32.mrb[0].mxu0
      %v8996 = vadd.f32 0.0, %v8995
      %v8997 = vpop.f32.mrb[0].mxu0
      %v8998 = vpop.f32.mrb[0].mxu0
      %v8999 = vadd.f32 0.0, %v8998
      %v9000 = vpop.f32.mrb[0].mxu0
      %9001 = vmatprep.mubr.bf16.mxu0 0
      %9002 = vmatmul.mubr.bf16.gmra.mrb[0].mxu0 %v8948
      %v9003 = vpop.f32.mrb[0].mxu0
      %v9004 = vadd.f32 0.0, %v9003
      %v9005 = vpop.f32.mrb[0].mxu0
      %v9006 = vpop.f32.mrb[0].mxu0
      %v9007 = vadd.f32 0.0, %v9006
      %v9008 = vpop.f32.mrb[0].mxu0
      %9009 = vmatprep.mubr.bf16.mxu0 0
      %9010 = vmatmul.mubr.bf16.gmra.mrb[0].mxu0 %v8951
      %v9011 = vpop.f32.mrb[0].mxu0
      %v9012 = vadd.f32 0.0, %v9011
      %v9013 = vpop.f32.mrb[0].mxu0
      %v9014 = vpop.f32.mrb[0].mxu0
      %v9015 = vpop.f32.mrb[0].mxu0
      %9016 = vdwg.mxu0
      %v9017 = vadd.f32 %v8363, %v8988
      %v9018 = vadd.f32 %v8364, %v8991
      %v9019 = vadd.f32 %v8365, %v8996
      %v9020 = vadd.f32 %v8366, %v8999
      %v9021 = vadd.f32 %v8367, %v9004
      %v9022 = vadd.f32 %v8368, %v9007
      %v9023 = vadd.f32 %v8369, %v9012
      %9028 = vrot.lane.b32.xlu0 %v8534, 64
      %v9029 = vpop.permute.xlu0 %9028
      %9030 = vrot.lane.b32.xlu0 %v8536, 64
      %v9031 = vpop.permute.xlu0 %9030
      %9032 = vrot.lane.b32.xlu0 %v8538, 64
      %v9033 = vpop.permute.xlu0 %9032
      %9034 = vrot.lane.b32.xlu0 %v8540, 64
      %v9035 = vpop.permute.xlu0 %9034
      %9049 = vrot.lane.b32.xlu0 %v1524, 64
      %v9050 = vpop.permute.xlu0 %9049
      %9051 = vrot.lane.b32.xlu0 %v1526, 64
      %v9052 = vpop.permute.xlu0 %9051
      %9053 = vrot.lane.b32.xlu0 %v1528, 64
      %v9054 = vpop.permute.xlu0 %9053
      %9055 = vrot.lane.b32.xlu0 %v1530, 64
      %v9056 = vpop.permute.xlu0 %9055
      %9057 = vrot.lane.b32.xlu0 %v1532, 64
      %v9058 = vpop.permute.xlu0 %9057
      %9059 = vrot.lane.b32.xlu0 %v1534, 64
      %v9060 = vpop.permute.xlu0 %9059
      %9061 = vrot.lane.b32.xlu0 %v1536, 64
      %v9062 = vpop.permute.xlu0 %9061
      %9063 = vrot.lane.b32.xlu0 %v1538, 64
      %v9064 = vpop.permute.xlu0 %9063
      %9065 = vrot.lane.b32.xlu0 %v1540, 64
      %v9066 = vpop.permute.xlu0 %9065
      %9067 = vrot.lane.b32.xlu0 %v1542, 64
      %v9068 = vpop.permute.xlu0 %9067
      %9069 = vrot.lane.b32.xlu0 %v1544, 64
      %v9070 = vpop.permute.xlu0 %9069
      %9071 = vrot.lane.b32.xlu0 %v1546, 64
      %v9072 = vpop.permute.xlu0 %9071
      %9073 = vrot.lane.b32.xlu0 %v1548, 64
      %v9074 = vpop.permute.xlu0 %9073
      %v9076 = vsel %vm1825, %v9029, 0
      %v9079 = vsel %vm1825, %v9031, 0
      %v9082 = vsel %vm1825, %v9033, 0
      %v9085 = vsel %vm1825, %v9035, 0
      %v9088 = vsel %vm1825, %v9050, 0
      %v9091 = vsel %vm1825, %v9052, 0
      %v9094 = vsel %vm1825, %v9054, 0
      %v9097 = vsel %vm1825, %v9056, 0
      %v9100 = vsel %vm1825, %v9058, 0
      %v9103 = vsel %vm1825, %v9060, 0
      %v9106 = vsel %vm1825, %v9062, 0
      %v9109 = vsel %vm1825, %v9064, 0
      %v9112 = vsel %vm1825, %v9066, 0
      %v9115 = vsel %vm1825, %v9068, 0
      %v9118 = vsel %vm1825, %v9070, 0
      %v9121 = vsel %vm1825, %v9072, 0
      %v9124 = vsel %vm1825, %v9074, 0
      %9126 = vmatprep.subr.bf16.mxu0 0
      %9127 = vmatpush1.bf16.xpose.msra.mxu0 %v9088
      %9128 = vmatprep.subr.bf16.mxu0 0
      %9129 = vmatpush1.bf16.xpose.msra.mxu0 %v9091
      %9130 = vmatprep.subr.bf16.mxu0 0
      %9131 = vmatpush1.bf16.xpose.msra.mxu0 %v9094
      %9132 = vmatprep.subr.bf16.mxu0 0
      %9133 = vmatpush1.bf16.xpose.msra.mxu0 %v9097
      %9134 = vmatprep.subr.bf16.mxu0 0
      %9135 = vmatpush1.bf16.xpose.msra.mxu0 %v9100
      %9136 = vmatprep.subr.bf16.mxu0 0
      %9137 = vmatpush1.bf16.xpose.msra.mxu0 %v9103
      %9138 = vmatprep.subr.bf16.mxu0 0
      %9139 = vmatpush1.bf16.xpose.msra.mxu0 %v9106
      %9140 = vmatprep.subr.bf16.mxu0 0
      %9141 = vmatpush1.bf16.xpose.msra.mxu0 %v9109
      %9142 = vmatprep.subr.bf16.mxu0 0
      %9143 = vmatpush1.bf16.xpose.msra.mxu0 %v9112
      %9144 = vmatprep.subr.bf16.mxu0 0
      %9145 = vmatpush1.bf16.xpose.msra.mxu0 %v9115
      %9146 = vmatprep.subr.bf16.mxu0 0
      %9147 = vmatpush1.bf16.xpose.msra.mxu0 %v9118
      %9148 = vmatprep.subr.bf16.mxu0 0
      %9149 = vmatpush1.bf16.xpose.msra.mxu0 %v9121
      %9150 = vmatprep.subr.bf16.mxu0 0
      %9151 = vmatpush1.bf16.xpose.msra.mxu0 %v9124
      %9152 = vmatprep.subr.bf16.mxu0 0
      %9153 = vmatpush1.bf16.xpose.msra.mxu0 0
      %9154 = vmatprep.subr.bf16.mxu0 0
      %9155 = vmatpush1.bf16.xpose.msra.mxu0 0
      %9156 = vmatprep.subr.bf16.mxu0 0
      %9157 = vmatpush1.bf16.xpose.msra.mxu0 0
      %9158 = vmatprep.mubr.bf16.mxu0 0
      %9159 = vmatmul.mubr.bf16.gmra.mrb[0].mxu0 %v9076
      %v9160 = vpop.f32.mrb[0].mxu0
      %v9161 = vadd.f32 %v2203, %v9160
      %v9162 = vpop.f32.mrb[0].mxu0
      %v9163 = vadd.f32 %v2204, %v9162
      %v9164 = vpop.f32.mrb[0].mxu0
      %v9165 = vadd.f32 %v2205, %v9164
      %v9166 = vpop.f32.mrb[0].mxu0
      %v9167 = vadd.f32 %v2206, %v9166
      %9168 = vmatprep.mubr.bf16.mxu0 0
      %9169 = vmatmul.mubr.bf16.gmra.mrb[0].mxu0 %v9079
      %v9170 = vpop.f32.mrb[0].mxu0
      %v9171 = vadd.f32 %v2207, %v9170
      %v9172 = vpop.f32.mrb[0].mxu0
      %v9173 = vadd.f32 %v2208, %v9172
      %v9174 = vpop.f32.mrb[0].mxu0
      %v9175 = vadd.f32 %v2209, %v9174
      %v9176 = vpop.f32.mrb[0].mxu0
      %v9177 = vadd.f32 %v2210, %v9176
      %9178 = vmatprep.mubr.bf16.mxu0 0
      %9179 = vmatmul.mubr.bf16.gmra.mrb[0].mxu0 %v9082
      %v9180 = vpop.f32.mrb[0].mxu0
      %v9181 = vadd.f32 %v2211, %v9180
      %v9182 = vpop.f32.mrb[0].mxu0
      %v9183 = vadd.f32 %v2212, %v9182
      %v9184 = vpop.f32.mrb[0].mxu0
      %v9185 = vadd.f32 %v2213, %v9184
      %v9186 = vpop.f32.mrb[0].mxu0
      %v9187 = vadd.f32 %v2214, %v9186
      %9188 = vmatprep.mubr.bf16.mxu0 0
      %9189 = vmatmul.mubr.bf16.gmra.mrb[0].mxu0 %v9085
      %v9190 = vpop.f32.mrb[0].mxu0
      %v9191 = vadd.f32 %v2215, %v9190
      %v9192 = vpop.f32.mrb[0].mxu0
      %v9193 = vadd.f32 %v2216, %v9192
      %v9194 = vpop.f32.mrb[0].mxu0
      %v9195 = vpop.f32.mrb[0].mxu0
      %9196 = vdwg.mxu0
      %v9197 = vsel %vm1608, %v9163, -inf
      %v9198 = vmax.f32 %v9161, %v9197
      %9199 = vmax.xlane.f32.xlu0 %v9198
      %v9200 = vpop.xlane.xlu0 %9199
      %v9201 = vsel %vm1608, %v9167, -inf
      %v9202 = vmax.f32 %v9165, %v9201
      %9203 = vmax.xlane.f32.xlu0 %v9202
      %v9204 = vpop.xlane.xlu0 %9203
      %v9205 = vsel %vm1608, %v9173, -inf
      %v9206 = vmax.f32 %v9171, %v9205
      %9207 = vmax.xlane.f32.xlu0 %v9206
      %v9208 = vpop.xlane.xlu0 %9207
      %v9209 = vsel %vm1608, %v9177, -inf
      %v9210 = vmax.f32 %v9175, %v9209
      %9211 = vmax.xlane.f32.xlu0 %v9210
      %v9212 = vpop.xlane.xlu0 %9211
      %v9213 = vsel %vm1608, %v9183, -inf
      %v9214 = vmax.f32 %v9181, %v9213
      %9215 = vmax.xlane.f32.xlu0 %v9214
      %v9216 = vpop.xlane.xlu0 %9215
      %v9217 = vsel %vm1608, %v9187, -inf
      %v9218 = vmax.f32 %v9185, %v9217
      %9219 = vmax.xlane.f32.xlu0 %v9218
      %v9220 = vpop.xlane.xlu0 %9219
      %v9221 = vsel %vm1972, %v9191, -inf
      %v9222 = vsel %vm1974, %v9193, -inf
      %v9223 = vmax.f32 %v9221, %v9222
      %9224 = vmax.xlane.f32.xlu0 %v9223
      %v9225 = vpop.xlane.xlu0 %9224
      %v9226 = vsub.f32 %v9161, %v9200
      %v9227 = vsub.f32 %v9163, %v9200
      %v9228 = vsub.f32 %v9165, %v9204
      %v9229 = vsub.f32 %v9167, %v9204
      %v9230 = vsub.f32 %v9171, %v9208
      %v9231 = vsub.f32 %v9173, %v9208
      %v9232 = vsub.f32 %v9175, %v9212
      %v9233 = vsub.f32 %v9177, %v9212
      %v9234 = vsub.f32 %v9181, %v9216
      %v9235 = vsub.f32 %v9183, %v9216
      %v9236 = vsub.f32 %v9185, %v9220
      %v9237 = vsub.f32 %v9187, %v9220
      %v9238 = vsub.f32 %v9191, %v9225
      %v9239 = vsub.f32 %v9193, %v9225
      %v9240 = vmul.f32 %v9226, 1.442695
      %v9241 = vpow.pop %v9240
      %v9242 = vmul.f32 %v9227, 1.442695
      %v9243 = vpow.pop %v9242
      %v9244 = vmul.f32 %v9228, 1.442695
      %v9245 = vpow.pop %v9244
      %v9246 = vmul.f32 %v9229, 1.442695
      %v9247 = vpow.pop %v9246
      %v9248 = vmul.f32 %v9230, 1.442695
      %v9249 = vpow.pop %v9248
      %v9250 = vmul.f32 %v9231, 1.442695
      %v9251 = vpow.pop %v9250
      %v9252 = vmul.f32 %v9232, 1.442695
      %v9253 = vpow.pop %v9252
      %v9254 = vmul.f32 %v9233, 1.442695
      %v9255 = vpow.pop %v9254
      %v9256 = vmul.f32 %v9234, 1.442695
      %v9257 = vpow.pop %v9256
      %v9258 = vmul.f32 %v9235, 1.442695
      %v9259 = vpow.pop %v9258
      %v9260 = vmul.f32 %v9236, 1.442695
      %v9261 = vpow.pop %v9260
      %v9262 = vmul.f32 %v9237, 1.442695
      %v9263 = vpow.pop %v9262
      %v9264 = vmul.f32 %v9238, 1.442695
      %v9265 = vpow.pop %v9264
      %v9266 = vmul.f32 %v9239, 1.442695
      %v9267 = vpow.pop %v9266
      %v9268 = vsel %vm1608, %v9243, 0.0
      %v9269 = vadd.f32 %v9241, %v9268
      %9270 = vadd.xlane.f32.xlu0 %v9269
      %v9271 = vpop.xlane.xlu0 %9270
      %v9272 = vsel %vm1608, %v9247, 0.0
      %v9273 = vadd.f32 %v9245, %v9272
      %9274 = vadd.xlane.f32.xlu0 %v9273
      %v9275 = vpop.xlane.xlu0 %9274
      %v9276 = vsel %vm1608, %v9251, 0.0
      %v9277 = vadd.f32 %v9249, %v9276
      %9278 = vadd.xlane.f32.xlu0 %v9277
      %v9279 = vpop.xlane.xlu0 %9278
      %v9280 = vsel %vm1608, %v9255, 0.0
      %v9281 = vadd.f32 %v9253, %v9280
      %9282 = vadd.xlane.f32.xlu0 %v9281
      %v9283 = vpop.xlane.xlu0 %9282
      %v9284 = vsel %vm1608, %v9259, 0.0
      %v9285 = vadd.f32 %v9257, %v9284
      %9286 = vadd.xlane.f32.xlu0 %v9285
      %v9287 = vpop.xlane.xlu0 %9286
      %v9288 = vsel %vm1608, %v9263, 0.0
      %v9289 = vadd.f32 %v9261, %v9288
      %9290 = vadd.xlane.f32.xlu0 %v9289
      %v9291 = vpop.xlane.xlu0 %9290
      %v9292 = vsel %vm1972, %v9265, 0.0
      %v9293 = vsel %vm1974, %v9267, 0.0
      %v9294 = vadd.f32 %v9292, %v9293
      %9295 = vadd.xlane.f32.xlu0 %v9294
      %v9296 = vpop.xlane.xlu0 %9295
      %v9297 = vrcp.pop %v9271
      %v9298 = vrcp.pop %v9275
      %v9299 = vrcp.pop %v9279
      %v9300 = vrcp.pop %v9283
      %v9301 = vrcp.pop %v9287
      %v9302 = vrcp.pop %v9291
      %v9303 = vrcp.pop %v9296
      %v9304 = vmul.f32 %v9241, %v9297
      %v9305 = vmul.f32 %v9243, %v9297
      %v9306 = vmul.f32 %v9245, %v9298
      %v9307 = vmul.f32 %v9247, %v9298
      %v9308 = vmul.f32 %v9249, %v9299
      %v9309 = vmul.f32 %v9251, %v9299
      %v9310 = vmul.f32 %v9253, %v9300
      %v9311 = vmul.f32 %v9255, %v9300
      %v9312 = vmul.f32 %v9257, %v9301
      %v9313 = vmul.f32 %v9259, %v9301
      %v9314 = vmul.f32 %v9261, %v9302
      %v9315 = vmul.f32 %v9263, %v9302
      %v9316 = vmul.f32 %v9265, %v9303
      %v9317 = vmul.f32 %v9267, %v9303
      %v9318 = vpack.c.bf16 %v9306, %v9304
      %v9319 = vpack.c.bf16 %v9307, %v9305
      %v9320 = vpack.c.bf16 %v9310, %v9308
      %v9321 = vpack.c.bf16 %v9311, %v9309
      %v9322 = vpack.c.bf16 %v9314, %v9312
      %v9323 = vpack.c.bf16 %v9315, %v9313
      %v9324 = vpack.c.bf16 %v9316, %v9316
      %v9325 = vpack.c.bf16 %v9317, %v9317
      %v9340 = vsel %vm1608, %v9319, 0
      %v9343 = vsel %vm1608, %v9321, 0
      %v9346 = vsel %vm1608, %v9323, 0
      %v9349 = vsel %vm1608, %v9325, 0
      %9351 = vmatprep.subr.bf16.mxu0 0
      %9352 = vmatpush1.bf16.msra.mxu0 %v9050
      %9353 = vmatprep.subr.bf16.mxu0 0
      %9354 = vmatpush1.bf16.msra.mxu0 %v9052
      %9355 = vmatprep.subr.bf16.mxu0 0
      %9356 = vmatpush1.bf16.msra.mxu0 %v9054
      %9357 = vmatprep.subr.bf16.mxu0 0
      %9358 = vmatpush1.bf16.msra.mxu0 %v9056
      %9359 = vmatprep.subr.bf16.mxu0 0
      %9360 = vmatpush1.bf16.msra.mxu0 %v9058
      %9361 = vmatprep.subr.bf16.mxu0 0
      %9362 = vmatpush1.bf16.msra.mxu0 %v9060
      %9363 = vmatprep.subr.bf16.mxu0 0
      %9364 = vmatpush1.bf16.msra.mxu0 %v9062
      %9365 = vmatprep.subr.bf16.mxu0 0
      %9366 = vmatpush1.bf16.msra.mxu0 %v9064
      %9367 = vmatprep.subr.bf16.mxu0 0
      %9368 = vmatpush1.bf16.msra.mxu0 %v9066
      %9369 = vmatprep.subr.bf16.mxu0 0
      %9370 = vmatpush1.bf16.msra.mxu0 %v9068
      %9371 = vmatprep.subr.bf16.mxu0 0
      %9372 = vmatpush1.bf16.msra.mxu0 %v9070
      %9373 = vmatprep.subr.bf16.mxu0 0
      %9374 = vmatpush1.bf16.msra.mxu0 %v9072
      %9375 = vmatprep.subr.bf16.mxu0 0
      %9376 = vmatpush1.bf16.msra.mxu0 %v9074
      %9377 = vmatprep.subr.bf16.mxu0 0
      %9378 = vmatpush1.bf16.msra.mxu0 0
      %9379 = vmatprep.subr.bf16.mxu0 0
      %9380 = vmatpush1.bf16.msra.mxu0 0
      %9381 = vmatprep.subr.bf16.mxu0 0
      %9382 = vmatpush1.bf16.msra.mxu0 0
      %9383 = vmatprep.mubr.bf16.mxu0 %v9340
      %9384 = vmatmul.mubr.bf16.gmra.mrb[0].mxu0 %v9318
      %v9385 = vpop.f32.mrb[0].mxu0
      %v9386 = vadd.f32 0.0, %v9385
      %v9387 = vpop.f32.mrb[0].mxu0
      %v9388 = vpop.f32.mrb[0].mxu0
      %v9389 = vadd.f32 0.0, %v9388
      %v9390 = vpop.f32.mrb[0].mxu0
      %9391 = vmatprep.mubr.bf16.mxu0 %v9343
      %9392 = vmatmul.mubr.bf16.gmra.mrb[0].mxu0 %v9320
      %v9393 = vpop.f32.mrb[0].mxu0
      %v9394 = vadd.f32 0.0, %v9393
      %v9395 = vpop.f32.mrb[0].mxu0
      %v9396 = vpop.f32.mrb[0].mxu0
      %v9397 = vadd.f32 0.0, %v9396
      %v9398 = vpop.f32.mrb[0].mxu0
      %9399 = vmatprep.mubr.bf16.mxu0 %v9346
      %9400 = vmatmul.mubr.bf16.gmra.mrb[0].mxu0 %v9322
      %v9401 = vpop.f32.mrb[0].mxu0
      %v9402 = vadd.f32 0.0, %v9401
      %v9403 = vpop.f32.mrb[0].mxu0
      %v9404 = vpop.f32.mrb[0].mxu0
      %v9405 = vadd.f32 0.0, %v9404
      %v9406 = vpop.f32.mrb[0].mxu0
      %9407 = vmatprep.mubr.bf16.mxu0 %v9349
      %9408 = vmatmul.mubr.bf16.gmra.mrb[0].mxu0 %v9324
      %v9409 = vpop.f32.mrb[0].mxu0
      %v9410 = vadd.f32 0.0, %v9409
      %v9411 = vpop.f32.mrb[0].mxu0
      %v9412 = vpop.f32.mrb[0].mxu0
      %v9413 = vpop.f32.mrb[0].mxu0
      %9414 = vdwg.mxu0
      %v9415 = vadd.f32 %v9386, 3.0
      %v9416 = vadd.f32 %v9389, 3.0
      %v9417 = vadd.f32 %v9394, 3.0
      %v9418 = vadd.f32 %v9397, 3.0
      %v9419 = vadd.f32 %v9402, 3.0
      %v9420 = vadd.f32 %v9405, 3.0
      %v9421 = vadd.f32 %v9410, 3.0
      %v9422 = vmax.f32 %v9415, 0.0
      %v9423 = vmax.f32 %v9416, 0.0
      %v9424 = vmax.f32 %v9417, 0.0
      %v9425 = vmax.f32 %v9418, 0.0
      %v9426 = vmax.f32 %v9419, 0.0
      %v9427 = vmax.f32 %v9420, 0.0
      %v9428 = vmax.f32 %v9421, 0.0
      %v9429 = vmin.f32 %v9422, 6.0
      %v9430 = vmin.f32 %v9423, 6.0
      %v9431 = vmin.f32 %v9424, 6.0
      %v9432 = vmin.f32 %v9425, 6.0
      %v9433 = vmin.f32 %v9426, 6.0
      %v9434 = vmin.f32 %v9427, 6.0
      %v9435 = vmin.f32 %v9428, 6.0
      %v9436 = vmul.f32 %v9386, %v9429
      %v9437 = vmul.f32 %v9389, %v9430
      %v9438 = vmul.f32 %v9394, %v9431
      %v9439 = vmul.f32 %v9397, %v9432
      %v9440 = vmul.f32 %v9402, %v9433
      %v9441 = vmul.f32 %v9405, %v9434
      %v9442 = vmul.f32 %v9410, %v9435
      %v9443 = vmul.f32 %v9436, 0.16666667
      %v9444 = vmul.f32 %v9437, 0.16666667
      %v9445 = vmul.f32 %v9438, 0.16666667
      %v9446 = vmul.f32 %v9439, 0.16666667
      %v9447 = vmul.f32 %v9440, 0.16666667
      %v9448 = vmul.f32 %v9441, 0.16666667
      %v9449 = vmul.f32 %v9442, 0.16666667
      %v9450 = vpack.c.bf16 %v9444, %v9443
      %v9451 = vpack.c.bf16 %v9446, %v9445
      %v9452 = vpack.c.bf16 %v9448, %v9447
      %v9453 = vpack.c.bf16 %v9449, %v9449
      %s9454 = scalar_lea.vmem %s7, 416
      %v9455 = vld [vmem:[%s9454] sm:$0xf]
      %v9456 = vld [vmem:[%s9454 + $0x4] sm:$0xf]
      %v9457 = vld [vmem:[%s9454 + $0x8] sm:$0xf]
      %v9458 = vld [vmem:[%s9454 + $0xc] sm:$0xf]
      %v9459 = vld [vmem:[%s9454 + $0x10] sm:$0xf]
      %v9460 = vld [vmem:[%s9454 + $0x14] sm:$0xf]
      %v9461 = vld [vmem:[%s9454 + $0x18] sm:$0xf]
      %v9462 = vld [vmem:[%s9454 + $0x1c] sm:$0xf]
      %v9471 = vunpack.c.l.b16 %v9455
      %v9472 = vunpack.c.l.b16 %v9456
      %v9473 = vunpack.c.l.b16 %v9457
      %v9474 = vunpack.c.l.b16 %v9458
      %v9475 = vunpack.c.l.b16 %v9459
      %v9476 = vunpack.c.l.b16 %v9460
      %v9477 = vunpack.c.l.b16 %v9461
      %v9478 = vunpack.c.l.b16 %v9462
      %v9479 = vpack.c.b16 %v9472, %v9471
      %v9480 = vpack.c.b16 %v9474, %v9473
      %v9481 = vpack.c.b16 %v9476, %v9475
      %v9482 = vpack.c.b16 %v9478, %v9477
      %v9488 = vsel %vm1825, %v9450, 0
      %v9491 = vsel %vm1825, %v9451, 0
      %v9494 = vsel %vm1825, %v9452, 0
      %v9497 = vsel %vm1825, %v9453, 0
      %9499 = vmatprep.subr.bf16.mxu0 0
      %9500 = vmatpush1.bf16.msra.mxu0 %v9479
      %9501 = vmatprep.subr.bf16.mxu0 0
      %9502 = vmatpush1.bf16.msra.mxu0 %v9480
      %9503 = vmatprep.subr.bf16.mxu0 0
      %9504 = vmatpush1.bf16.msra.mxu0 %v9481
      %9505 = vmatprep.subr.bf16.mxu0 0
      %9506 = vmatpush1.bf16.msra.mxu0 %v9482
      %9507 = vmatprep.subr.bf16.mxu0 0
      %9508 = vmatpush1.bf16.msra.mxu0 0
      %9509 = vmatprep.subr.bf16.mxu0 0
      %9510 = vmatpush1.bf16.msra.mxu0 0
      %9511 = vmatprep.subr.bf16.mxu0 0
      %9512 = vmatpush1.bf16.msra.mxu0 0
      %9513 = vmatprep.subr.bf16.mxu0 0
      %9514 = vmatpush1.bf16.msra.mxu0 0
      %9515 = vmatprep.subr.bf16.mxu0 0
      %9516 = vmatpush1.bf16.msra.mxu0 0
      %9517 = vmatprep.subr.bf16.mxu0 0
      %9518 = vmatpush1.bf16.msra.mxu0 0
      %9519 = vmatprep.subr.bf16.mxu0 0
      %9520 = vmatpush1.bf16.msra.mxu0 0
      %9521 = vmatprep.subr.bf16.mxu0 0
      %9522 = vmatpush1.bf16.msra.mxu0 0
      %9523 = vmatprep.subr.bf16.mxu0 0
      %9524 = vmatpush1.bf16.msra.mxu0 0
      %9525 = vmatprep.subr.bf16.mxu0 0
      %9526 = vmatpush1.bf16.msra.mxu0 0
      %9527 = vmatprep.subr.bf16.mxu0 0
      %9528 = vmatpush1.bf16.msra.mxu0 0
      %9529 = vmatprep.subr.bf16.mxu0 0
      %9530 = vmatpush1.bf16.msra.mxu0 0
      %9531 = vmatprep.mubr.bf16.mxu0 0
      %9532 = vmatmul.mubr.bf16.gmra.mrb[0].mxu0 %v9488
      %v9533 = vpop.f32.mrb[0].mxu0
      %v9534 = vadd.f32 0.0, %v9533
      %v9535 = vpop.f32.mrb[0].mxu0
      %v9536 = vpop.f32.mrb[0].mxu0
      %v9537 = vadd.f32 0.0, %v9536
      %v9538 = vpop.f32.mrb[0].mxu0
      %9539 = vmatprep.mubr.bf16.mxu0 0
      %9540 = vmatmul.mubr.bf16.gmra.mrb[0].mxu0 %v9491
      %v9541 = vpop.f32.mrb[0].mxu0
      %v9542 = vadd.f32 0.0, %v9541
      %v9543 = vpop.f32.mrb[0].mxu0
      %v9544 = vpop.f32.mrb[0].mxu0
      %v9545 = vadd.f32 0.0, %v9544
      %v9546 = vpop.f32.mrb[0].mxu0
      %9547 = vmatprep.mubr.bf16.mxu0 0
      %9548 = vmatmul.mubr.bf16.gmra.mrb[0].mxu0 %v9494
      %v9549 = vpop.f32.mrb[0].mxu0
      %v9550 = vadd.f32 0.0, %v9549
      %v9551 = vpop.f32.mrb[0].mxu0
      %v9552 = vpop.f32.mrb[0].mxu0
      %v9553 = vadd.f32 0.0, %v9552
      %v9554 = vpop.f32.mrb[0].mxu0
      %9555 = vmatprep.mubr.bf16.mxu0 0
      %9556 = vmatmul.mubr.bf16.gmra.mrb[0].mxu0 %v9497
      %v9557 = vpop.f32.mrb[0].mxu0
      %v9558 = vadd.f32 0.0, %v9557
      %v9559 = vpop.f32.mrb[0].mxu0
      %v9560 = vpop.f32.mrb[0].mxu0
      %v9561 = vpop.f32.mrb[0].mxu0
      %9562 = vdwg.mxu0
      %v9563 = vadd.f32 %v9017, %v9534
      %v9564 = vadd.f32 %v9018, %v9537
      %v9565 = vadd.f32 %v9019, %v9542
      %v9566 = vadd.f32 %v9020, %v9545
      %v9567 = vadd.f32 %v9021, %v9550
      %v9568 = vadd.f32 %v9022, %v9553
      %v9569 = vadd.f32 %v9023, %v9558
      %v9571 = vsel %vm1825, %v8535, 0
      %v9574 = vsel %vm1825, %v8537, 0
      %v9577 = vsel %vm1825, %v8539, 0
      %v9580 = vsel %vm1825, %v8541, 0
      %v9583 = vsel %vm1825, %v1525, 0
      %v9586 = vsel %vm1825, %v1527, 0
      %v9589 = vsel %vm1825, %v1529, 0
      %v9592 = vsel %vm1825, %v1531, 0
      %v9595 = vsel %vm1825, %v1533, 0
      %v9598 = vsel %vm1825, %v1535, 0
      %v9601 = vsel %vm1825, %v1537, 0
      %v9604 = vsel %vm1825, %v1539, 0
      %v9607 = vsel %vm1825, %v1541, 0
      %v9610 = vsel %vm1825, %v1543, 0
      %v9613 = vsel %vm1825, %v1545, 0
      %v9616 = vsel %vm1825, %v1547, 0
      %v9619 = vsel %vm1825, %v1549, 0
      %9621 = vmatprep.subr.bf16.mxu0 0
      %9622 = vmatpush1.bf16.xpose.msra.mxu0 %v9583
      %9623 = vmatprep.subr.bf16.mxu0 0
      %9624 = vmatpush1.bf16.xpose.msra.mxu0 %v9586
      %9625 = vmatprep.subr.bf16.mxu0 0
      %9626 = vmatpush1.bf16.xpose.msra.mxu0 %v9589
      %9627 = vmatprep.subr.bf16.mxu0 0
      %9628 = vmatpush1.bf16.xpose.msra.mxu0 %v9592
      %9629 = vmatprep.subr.bf16.mxu0 0
      %9630 = vmatpush1.bf16.xpose.msra.mxu0 %v9595
      %9631 = vmatprep.subr.bf16.mxu0 0
      %9632 = vmatpush1.bf16.xpose.msra.mxu0 %v9598
      %9633 = vmatprep.subr.bf16.mxu0 0
      %9634 = vmatpush1.bf16.xpose.msra.mxu0 %v9601
      %9635 = vmatprep.subr.bf16.mxu0 0
      %9636 = vmatpush1.bf16.xpose.msra.mxu0 %v9604
      %9637 = vmatprep.subr.bf16.mxu0 0
      %9638 = vmatpush1.bf16.xpose.msra.mxu0 %v9607
      %9639 = vmatprep.subr.bf16.mxu0 0
      %9640 = vmatpush1.bf16.xpose.msra.mxu0 %v9610
      %9641 = vmatprep.subr.bf16.mxu0 0
      %9642 = vmatpush1.bf16.xpose.msra.mxu0 %v9613
      %9643 = vmatprep.subr.bf16.mxu0 0
      %9644 = vmatpush1.bf16.xpose.msra.mxu0 %v9616
      %9645 = vmatprep.subr.bf16.mxu0 0
      %9646 = vmatpush1.bf16.xpose.msra.mxu0 %v9619
      %9647 = vmatprep.subr.bf16.mxu0 0
      %9648 = vmatpush1.bf16.xpose.msra.mxu0 0
      %9649 = vmatprep.subr.bf16.mxu0 0
      %9650 = vmatpush1.bf16.xpose.msra.mxu0 0
      %9651 = vmatprep.subr.bf16.mxu0 0
      %9652 = vmatpush1.bf16.xpose.msra.mxu0 0
      %9653 = vmatprep.mubr.bf16.mxu0 0
      %9654 = vmatmul.mubr.bf16.gmra.mrb[0].mxu0 %v9571
      %v9655 = vpop.f32.mrb[0].mxu0
      %v9656 = vadd.f32 %v2857, %v9655
      %v9657 = vpop.f32.mrb[0].mxu0
      %v9658 = vadd.f32 %v2858, %v9657
      %v9659 = vpop.f32.mrb[0].mxu0
      %v9660 = vadd.f32 %v2859, %v9659
      %v9661 = vpop.f32.mrb[0].mxu0
      %v9662 = vadd.f32 %v2860, %v9661
      %9663 = vmatprep.mubr.bf16.mxu0 0
      %9664 = vmatmul.mubr.bf16.gmra.mrb[0].mxu0 %v9574
      %v9665 = vpop.f32.mrb[0].mxu0
      %v9666 = vadd.f32 %v2861, %v9665
      %v9667 = vpop.f32.mrb[0].mxu0
      %v9668 = vadd.f32 %v2862, %v9667
      %v9669 = vpop.f32.mrb[0].mxu0
      %v9670 = vadd.f32 %v2863, %v9669
      %v9671 = vpop.f32.mrb[0].mxu0
      %v9672 = vadd.f32 %v2864, %v9671
      %9673 = vmatprep.mubr.bf16.mxu0 0
      %9674 = vmatmul.mubr.bf16.gmra.mrb[0].mxu0 %v9577
      %v9675 = vpop.f32.mrb[0].mxu0
      %v9676 = vadd.f32 %v2865, %v9675
      %v9677 = vpop.f32.mrb[0].mxu0
      %v9678 = vadd.f32 %v2866, %v9677
      %v9679 = vpop.f32.mrb[0].mxu0
      %v9680 = vadd.f32 %v2867, %v9679
      %v9681 = vpop.f32.mrb[0].mxu0
      %v9682 = vadd.f32 %v2868, %v9681
      %9683 = vmatprep.mubr.bf16.mxu0 0
      %9684 = vmatmul.mubr.bf16.gmra.mrb[0].mxu0 %v9580
      %v9685 = vpop.f32.mrb[0].mxu0
      %v9686 = vadd.f32 %v2869, %v9685
      %v9687 = vpop.f32.mrb[0].mxu0
      %v9688 = vadd.f32 %v2870, %v9687
      %v9689 = vpop.f32.mrb[0].mxu0
      %v9690 = vpop.f32.mrb[0].mxu0
      %9691 = vdwg.mxu0
      %v9692 = vsel %vm1608, %v9658, -inf
      %v9693 = vmax.f32 %v9656, %v9692
      %9694 = vmax.xlane.f32.xlu0 %v9693
      %v9695 = vpop.xlane.xlu0 %9694
      %v9696 = vsel %vm1608, %v9662, -inf
      %v9697 = vmax.f32 %v9660, %v9696
      %9698 = vmax.xlane.f32.xlu0 %v9697
      %v9699 = vpop.xlane.xlu0 %9698
      %v9700 = vsel %vm1608, %v9668, -inf
      %v9701 = vmax.f32 %v9666, %v9700
      %9702 = vmax.xlane.f32.xlu0 %v9701
      %v9703 = vpop.xlane.xlu0 %9702
      %v9704 = vsel %vm1608, %v9672, -inf
      %v9705 = vmax.f32 %v9670, %v9704
      %9706 = vmax.xlane.f32.xlu0 %v9705
      %v9707 = vpop.xlane.xlu0 %9706
      %v9708 = vsel %vm1608, %v9678, -inf
      %v9709 = vmax.f32 %v9676, %v9708
      %9710 = vmax.xlane.f32.xlu0 %v9709
      %v9711 = vpop.xlane.xlu0 %9710
      %v9712 = vsel %vm1608, %v9682, -inf
      %v9713 = vmax.f32 %v9680, %v9712
      %9714 = vmax.xlane.f32.xlu0 %v9713
      %v9715 = vpop.xlane.xlu0 %9714
      %v9716 = vsel %vm1972, %v9686, -inf
      %v9717 = vsel %vm1974, %v9688, -inf
      %v9718 = vmax.f32 %v9716, %v9717
      %9719 = vmax.xlane.f32.xlu0 %v9718
      %v9720 = vpop.xlane.xlu0 %9719
      %v9721 = vsub.f32 %v9656, %v9695
      %v9722 = vsub.f32 %v9658, %v9695
      %v9723 = vsub.f32 %v9660, %v9699
      %v9724 = vsub.f32 %v9662, %v9699
      %v9725 = vsub.f32 %v9666, %v9703
      %v9726 = vsub.f32 %v9668, %v9703
      %v9727 = vsub.f32 %v9670, %v9707
      %v9728 = vsub.f32 %v9672, %v9707
      %v9729 = vsub.f32 %v9676, %v9711
      %v9730 = vsub.f32 %v9678, %v9711
      %v9731 = vsub.f32 %v9680, %v9715
      %v9732 = vsub.f32 %v9682, %v9715
      %v9733 = vsub.f32 %v9686, %v9720
      %v9734 = vsub.f32 %v9688, %v9720
      %v9735 = vmul.f32 %v9721, 1.442695
      %v9736 = vpow.pop %v9735
      %v9737 = vmul.f32 %v9722, 1.442695
      %v9738 = vpow.pop %v9737
      %v9739 = vmul.f32 %v9723, 1.442695
      %v9740 = vpow.pop %v9739
      %v9741 = vmul.f32 %v9724, 1.442695
      %v9742 = vpow.pop %v9741
      %v9743 = vmul.f32 %v9725, 1.442695
      %v9744 = vpow.pop %v9743
      %v9745 = vmul.f32 %v9726, 1.442695
      %v9746 = vpow.pop %v9745
      %v9747 = vmul.f32 %v9727, 1.442695
      %v9748 = vpow.pop %v9747
      %v9749 = vmul.f32 %v9728, 1.442695
      %v9750 = vpow.pop %v9749
      %v9751 = vmul.f32 %v9729, 1.442695
      %v9752 = vpow.pop %v9751
      %v9753 = vmul.f32 %v9730, 1.442695
      %v9754 = vpow.pop %v9753
      %v9755 = vmul.f32 %v9731, 1.442695
      %v9756 = vpow.pop %v9755
      %v9757 = vmul.f32 %v9732, 1.442695
      %v9758 = vpow.pop %v9757
      %v9759 = vmul.f32 %v9733, 1.442695
      %v9760 = vpow.pop %v9759
      %v9761 = vmul.f32 %v9734, 1.442695
      %v9762 = vpow.pop %v9761
      %v9763 = vsel %vm1608, %v9738, 0.0
      %v9764 = vadd.f32 %v9736, %v9763
      %9765 = vadd.xlane.f32.xlu0 %v9764
      %v9766 = vpop.xlane.xlu0 %9765
      %v9767 = vsel %vm1608, %v9742, 0.0
      %v9768 = vadd.f32 %v9740, %v9767
      %9769 = vadd.xlane.f32.xlu0 %v9768
      %v9770 = vpop.xlane.xlu0 %9769
      %v9771 = vsel %vm1608, %v9746, 0.0
      %v9772 = vadd.f32 %v9744, %v9771
      %9773 = vadd.xlane.f32.xlu0 %v9772
      %v9774 = vpop.xlane.xlu0 %9773
      %v9775 = vsel %vm1608, %v9750, 0.0
      %v9776 = vadd.f32 %v9748, %v9775
      %9777 = vadd.xlane.f32.xlu0 %v9776
      %v9778 = vpop.xlane.xlu0 %9777
      %v9779 = vsel %vm1608, %v9754, 0.0
      %v9780 = vadd.f32 %v9752, %v9779
      %9781 = vadd.xlane.f32.xlu0 %v9780
      %v9782 = vpop.xlane.xlu0 %9781
      %v9783 = vsel %vm1608, %v9758, 0.0
      %v9784 = vadd.f32 %v9756, %v9783
      %9785 = vadd.xlane.f32.xlu0 %v9784
      %v9786 = vpop.xlane.xlu0 %9785
      %v9787 = vsel %vm1972, %v9760, 0.0
      %v9788 = vsel %vm1974, %v9762, 0.0
      %v9789 = vadd.f32 %v9787, %v9788
      %9790 = vadd.xlane.f32.xlu0 %v9789
      %v9791 = vpop.xlane.xlu0 %9790
      %v9792 = vrcp.pop %v9766
      %v9793 = vrcp.pop %v9770
      %v9794 = vrcp.pop %v9774
      %v9795 = vrcp.pop %v9778
      %v9796 = vrcp.pop %v9782
      %v9797 = vrcp.pop %v9786
      %v9798 = vrcp.pop %v9791
      %v9799 = vmul.f32 %v9736, %v9792
      %v9800 = vmul.f32 %v9738, %v9792
      %v9801 = vmul.f32 %v9740, %v9793
      %v9802 = vmul.f32 %v9742, %v9793
      %v9803 = vmul.f32 %v9744, %v9794
      %v9804 = vmul.f32 %v9746, %v9794
      %v9805 = vmul.f32 %v9748, %v9795
      %v9806 = vmul.f32 %v9750, %v9795
      %v9807 = vmul.f32 %v9752, %v9796
      %v9808 = vmul.f32 %v9754, %v9796
      %v9809 = vmul.f32 %v9756, %v9797
      %v9810 = vmul.f32 %v9758, %v9797
      %v9811 = vmul.f32 %v9760, %v9798
      %v9812 = vmul.f32 %v9762, %v9798
      %v9813 = vpack.c.bf16 %v9801, %v9799
      %v9814 = vpack.c.bf16 %v9802, %v9800
      %v9815 = vpack.c.bf16 %v9805, %v9803
      %v9816 = vpack.c.bf16 %v9806, %v9804
      %v9817 = vpack.c.bf16 %v9809, %v9807
      %v9818 = vpack.c.bf16 %v9810, %v9808
      %v9819 = vpack.c.bf16 %v9811, %v9811
      %v9820 = vpack.c.bf16 %v9812, %v9812
      %v9822 = vsel %vm1608, %v9814, 0
      %v9825 = vsel %vm1608, %v9816, 0
      %v9828 = vsel %vm1608, %v9818, 0
      %v9831 = vsel %vm1608, %v9820, 0
      %9833 = vmatprep.subr.bf16.mxu0 0
      %9834 = vmatpush1.bf16.msra.mxu0 %v1525
      %9835 = vmatprep.subr.bf16.mxu0 0
      %9836 = vmatpush1.bf16.msra.mxu0 %v1527
      %9837 = vmatprep.subr.bf16.mxu0 0
      %9838 = vmatpush1.bf16.msra.mxu0 %v1529
      %9839 = vmatprep.subr.bf16.mxu0 0
      %9840 = vmatpush1.bf16.msra.mxu0 %v1531
      %9841 = vmatprep.subr.bf16.mxu0 0
      %9842 = vmatpush1.bf16.msra.mxu0 %v1533
      %9843 = vmatprep.subr.bf16.mxu0 0
      %9844 = vmatpush1.bf16.msra.mxu0 %v1535
      %9845 = vmatprep.subr.bf16.mxu0 0
      %9846 = vmatpush1.bf16.msra.mxu0 %v1537
      %9847 = vmatprep.subr.bf16.mxu0 0
      %9848 = vmatpush1.bf16.msra.mxu0 %v1539
      %9849 = vmatprep.subr.bf16.mxu0 0
      %9850 = vmatpush1.bf16.msra.mxu0 %v1541
      %9851 = vmatprep.subr.bf16.mxu0 0
      %9852 = vmatpush1.bf16.msra.mxu0 %v1543
      %9853 = vmatprep.subr.bf16.mxu0 0
      %9854 = vmatpush1.bf16.msra.mxu0 %v1545
      %9855 = vmatprep.subr.bf16.mxu0 0
      %9856 = vmatpush1.bf16.msra.mxu0 %v1547
      %9857 = vmatprep.subr.bf16.mxu0 0
      %9858 = vmatpush1.bf16.msra.mxu0 %v1549
      %9859 = vmatprep.subr.bf16.mxu0 0
      %9860 = vmatpush1.bf16.msra.mxu0 0
      %9861 = vmatprep.subr.bf16.mxu0 0
      %9862 = vmatpush1.bf16.msra.mxu0 0
      %9863 = vmatprep.subr.bf16.mxu0 0
      %9864 = vmatpush1.bf16.msra.mxu0 0
      %9865 = vmatprep.mubr.bf16.mxu0 %v9822
      %9866 = vmatmul.mubr.bf16.gmra.mrb[0].mxu0 %v9813
      %v9867 = vpop.f32.mrb[0].mxu0
      %v9868 = vadd.f32 0.0, %v9867
      %v9869 = vpop.f32.mrb[0].mxu0
      %v9870 = vpop.f32.mrb[0].mxu0
      %v9871 = vadd.f32 0.0, %v9870
      %v9872 = vpop.f32.mrb[0].mxu0
      %9873 = vmatprep.mubr.bf16.mxu0 %v9825
      %9874 = vmatmul.mubr.bf16.gmra.mrb[0].mxu0 %v9815
      %v9875 = vpop.f32.mrb[0].mxu0
      %v9876 = vadd.f32 0.0, %v9875
      %v9877 = vpop.f32.mrb[0].mxu0
      %v9878 = vpop.f32.mrb[0].mxu0
      %v9879 = vadd.f32 0.0, %v9878
      %v9880 = vpop.f32.mrb[0].mxu0
      %9881 = vmatprep.mubr.bf16.mxu0 %v9828
      %9882 = vmatmul.mubr.bf16.gmra.mrb[0].mxu0 %v9817
      %v9883 = vpop.f32.mrb[0].mxu0
      %v9884 = vadd.f32 0.0, %v9883
      %v9885 = vpop.f32.mrb[0].mxu0
      %v9886 = vpop.f32.mrb[0].mxu0
      %v9887 = vadd.f32 0.0, %v9886
      %v9888 = vpop.f32.mrb[0].mxu0
      %9889 = vmatprep.mubr.bf16.mxu0 %v9831
      %9890 = vmatmul.mubr.bf16.gmra.mrb[0].mxu0 %v9819
      %v9891 = vpop.f32.mrb[0].mxu0
      %v9892 = vadd.f32 0.0, %v9891
      %v9893 = vpop.f32.mrb[0].mxu0
      %v9894 = vpop.f32.mrb[0].mxu0
      %v9895 = vpop.f32.mrb[0].mxu0
      %9896 = vdwg.mxu0
      %v9897 = vadd.f32 %v9868, 3.0
      %v9898 = vadd.f32 %v9871, 3.0
      %v9899 = vadd.f32 %v9876, 3.0
      %v9900 = vadd.f32 %v9879, 3.0
      %v9901 = vadd.f32 %v9884, 3.0
      %v9902 = vadd.f32 %v9887, 3.0
      %v9903 = vadd.f32 %v9892, 3.0
      %v9904 = vmax.f32 %v9897, 0.0
      %v9905 = vmax.f32 %v9898, 0.0
      %v9906 = vmax.f32 %v9899, 0.0
      %v9907 = vmax.f32 %v9900, 0.0
      %v9908 = vmax.f32 %v9901, 0.0
      %v9909 = vmax.f32 %v9902, 0.0
      %v9910 = vmax.f32 %v9903, 0.0
      %v9911 = vmin.f32 %v9904, 6.0
      %v9912 = vmin.f32 %v9905, 6.0
      %v9913 = vmin.f32 %v9906, 6.0
      %v9914 = vmin.f32 %v9907, 6.0
      %v9915 = vmin.f32 %v9908, 6.0
      %v9916 = vmin.f32 %v9909, 6.0
      %v9917 = vmin.f32 %v9910, 6.0
      %v9918 = vmul.f32 %v9868, %v9911
      %v9919 = vmul.f32 %v9871, %v9912
      %v9920 = vmul.f32 %v9876, %v9913
      %v9921 = vmul.f32 %v9879, %v9914
      %v9922 = vmul.f32 %v9884, %v9915
      %v9923 = vmul.f32 %v9887, %v9916
      %v9924 = vmul.f32 %v9892, %v9917
      %v9925 = vmul.f32 %v9918, 0.16666667
      %v9926 = vmul.f32 %v9919, 0.16666667
      %v9927 = vmul.f32 %v9920, 0.16666667
      %v9928 = vmul.f32 %v9921, 0.16666667
      %v9929 = vmul.f32 %v9922, 0.16666667
      %v9930 = vmul.f32 %v9923, 0.16666667
      %v9931 = vmul.f32 %v9924, 0.16666667
      %v9932 = vpack.c.bf16 %v9926, %v9925
      %v9933 = vpack.c.bf16 %v9928, %v9927
      %v9934 = vpack.c.bf16 %v9930, %v9929
      %v9935 = vpack.c.bf16 %v9931, %v9931
      %s9936 = scalar_lea.vmem %s7, 448
      %v9937 = vld [vmem:[%s9936] sm:$0xf]
      %v9938 = vld [vmem:[%s9936 + $0x4] sm:$0xf]
      %v9939 = vld [vmem:[%s9936 + $0x8] sm:$0xf]
      %v9940 = vld [vmem:[%s9936 + $0xc] sm:$0xf]
      %v9941 = vld [vmem:[%s9936 + $0x10] sm:$0xf]
      %v9942 = vld [vmem:[%s9936 + $0x14] sm:$0xf]
      %v9943 = vld [vmem:[%s9936 + $0x18] sm:$0xf]
      %v9944 = vld [vmem:[%s9936 + $0x1c] sm:$0xf]
      %v9953 = vunpack.c.l.b16 %v9937
      %v9954 = vunpack.c.l.b16 %v9938
      %v9955 = vunpack.c.l.b16 %v9939
      %v9956 = vunpack.c.l.b16 %v9940
      %v9957 = vunpack.c.l.b16 %v9941
      %v9958 = vunpack.c.l.b16 %v9942
      %v9959 = vunpack.c.l.b16 %v9943
      %v9960 = vunpack.c.l.b16 %v9944
      %v9961 = vpack.c.b16 %v9954, %v9953
      %v9962 = vpack.c.b16 %v9956, %v9955
      %v9963 = vpack.c.b16 %v9958, %v9957
      %v9964 = vpack.c.b16 %v9960, %v9959
      %v9970 = vsel %vm1825, %v9932, 0
      %v9973 = vsel %vm1825, %v9933, 0
      %v9976 = vsel %vm1825, %v9934, 0
      %v9979 = vsel %vm1825, %v9935, 0
      %9981 = vmatprep.subr.bf16.mxu0 0
      %9982 = vmatpush1.bf16.msra.mxu0 %v9961
      %9983 = vmatprep.subr.bf16.mxu0 0
      %9984 = vmatpush1.bf16.msra.mxu0 %v9962
      %9985 = vmatprep.subr.bf16.mxu0 0
      %9986 = vmatpush1.bf16.msra.mxu0 %v9963
      %9987 = vmatprep.subr.bf16.mxu0 0
      %9988 = vmatpush1.bf16.msra.mxu0 %v9964
      %9989 = vmatprep.subr.bf16.mxu0 0
      %9990 = vmatpush1.bf16.msra.mxu0 0
      %9991 = vmatprep.subr.bf16.mxu0 0
      %9992 = vmatpush1.bf16.msra.mxu0 0
      %9993 = vmatprep.subr.bf16.mxu0 0
      %9994 = vmatpush1.bf16.msra.mxu0 0
      %9995 = vmatprep.subr.bf16.mxu0 0
      %9996 = vmatpush1.bf16.msra.mxu0 0
      %9997 = vmatprep.subr.bf16.mxu0 0
      %9998 = vmatpush1.bf16.msra.mxu0 0
      %9999 = vmatprep.subr.bf16.mxu0 0
      %10000 = vmatpush1.bf16.msra.mxu0 0
      %10001 = vmatprep.subr.bf16.mxu0 0
      %10002 = vmatpush1.bf16.msra.mxu0 0
      %10003 = vmatprep.subr.bf16.mxu0 0
      %10004 = vmatpush1.bf16.msra.mxu0 0
      %10005 = vmatprep.subr.bf16.mxu0 0
      %10006 = vmatpush1.bf16.msra.mxu0 0
      %10007 = vmatprep.subr.bf16.mxu0 0
      %10008 = vmatpush1.bf16.msra.mxu0 0
      %10009 = vmatprep.subr.bf16.mxu0 0
      %10010 = vmatpush1.bf16.msra.mxu0 0
      %10011 = vmatprep.subr.bf16.mxu0 0
      %10012 = vmatpush1.bf16.msra.mxu0 0
      %10013 = vmatprep.mubr.bf16.mxu0 0
      %10014 = vmatmul.mubr.bf16.gmra.mrb[0].mxu0 %v9970
      %v10015 = vpop.f32.mrb[0].mxu0
      %v10016 = vadd.f32 0.0, %v10015
      %v10017 = vpop.f32.mrb[0].mxu0
      %v10018 = vpop.f32.mrb[0].mxu0
      %v10019 = vadd.f32 0.0, %v10018
      %v10020 = vpop.f32.mrb[0].mxu0
      %10021 = vmatprep.mubr.bf16.mxu0 0
      %10022 = vmatmul.mubr.bf16.gmra.mrb[0].mxu0 %v9973
      %v10023 = vpop.f32.mrb[0].mxu0
      %v10024 = vadd.f32 0.0, %v10023
      %v10025 = vpop.f32.mrb[0].mxu0
      %v10026 = vpop.f32.mrb[0].mxu0
      %v10027 = vadd.f32 0.0, %v10026
      %v10028 = vpop.f32.mrb[0].mxu0
      %10029 = vmatprep.mubr.bf16.mxu0 0
      %10030 = vmatmul.mubr.bf16.gmra.mrb[0].mxu0 %v9976
      %v10031 = vpop.f32.mrb[0].mxu0
      %v10032 = vadd.f32 0.0, %v10031
      %v10033 = vpop.f32.mrb[0].mxu0
      %v10034 = vpop.f32.mrb[0].mxu0
      %v10035 = vadd.f32 0.0, %v10034
      %v10036 = vpop.f32.mrb[0].mxu0
      %10037 = vmatprep.mubr.bf16.mxu0 0
      %10038 = vmatmul.mubr.bf16.gmra.mrb[0].mxu0 %v9979
      %v10039 = vpop.f32.mrb[0].mxu0
      %v10040 = vadd.f32 0.0, %v10039
      %v10041 = vpop.f32.mrb[0].mxu0
      %v10042 = vpop.f32.mrb[0].mxu0
      %v10043 = vpop.f32.mrb[0].mxu0
      %10044 = vdwg.mxu0
      %v10045 = vadd.f32 %v9563, %v10016
      %v10046 = vadd.f32 %v9564, %v10019
      %v10047 = vadd.f32 %v9565, %v10024
      %v10048 = vadd.f32 %v9566, %v10027
      %v10049 = vadd.f32 %v9567, %v10032
      %v10050 = vadd.f32 %v9568, %v10035
      %v10051 = vadd.f32 %v9569, %v10040
      %10056 = vrot.lane.b32.xlu0 %v8535, 64
      %v10057 = vpop.permute.xlu0 %10056
      %10058 = vrot.lane.b32.xlu0 %v8537, 64
      %v10059 = vpop.permute.xlu0 %10058
      %10060 = vrot.lane.b32.xlu0 %v8539, 64
      %v10061 = vpop.permute.xlu0 %10060
      %10062 = vrot.lane.b32.xlu0 %v8541, 64
      %v10063 = vpop.permute.xlu0 %10062
      %10077 = vrot.lane.b32.xlu0 %v1525, 64
      %v10078 = vpop.permute.xlu0 %10077
      %10079 = vrot.lane.b32.xlu0 %v1527, 64
      %v10080 = vpop.permute.xlu0 %10079
      %10081 = vrot.lane.b32.xlu0 %v1529, 64
      %v10082 = vpop.permute.xlu0 %10081
      %10083 = vrot.lane.b32.xlu0 %v1531, 64
      %v10084 = vpop.permute.xlu0 %10083
      %10085 = vrot.lane.b32.xlu0 %v1533, 64
      %v10086 = vpop.permute.xlu0 %10085
      %10087 = vrot.lane.b32.xlu0 %v1535, 64
      %v10088 = vpop.permute.xlu0 %10087
      %10089 = vrot.lane.b32.xlu0 %v1537, 64
      %v10090 = vpop.permute.xlu0 %10089
      %10091 = vrot.lane.b32.xlu0 %v1539, 64
      %v10092 = vpop.permute.xlu0 %10091
      %10093 = vrot.lane.b32.xlu0 %v1541, 64
      %v10094 = vpop.permute.xlu0 %10093
      %10095 = vrot.lane.b32.xlu0 %v1543, 64
      %v10096 = vpop.permute.xlu0 %10095
      %10097 = vrot.lane.b32.xlu0 %v1545, 64
      %v10098 = vpop.permute.xlu0 %10097
      %10099 = vrot.lane.b32.xlu0 %v1547, 64
      %v10100 = vpop.permute.xlu0 %10099
      %10101 = vrot.lane.b32.xlu0 %v1549, 64
      %v10102 = vpop.permute.xlu0 %10101
      %v10104 = vsel %vm1825, %v10057, 0
      %v10107 = vsel %vm1825, %v10059, 0
      %v10110 = vsel %vm1825, %v10061, 0
      %v10113 = vsel %vm1825, %v10063, 0
      %v10116 = vsel %vm1825, %v10078, 0
      %v10119 = vsel %vm1825, %v10080, 0
      %v10122 = vsel %vm1825, %v10082, 0
      %v10125 = vsel %vm1825, %v10084, 0
      %v10128 = vsel %vm1825, %v10086, 0
      %v10131 = vsel %vm1825, %v10088, 0
      %v10134 = vsel %vm1825, %v10090, 0
      %v10137 = vsel %vm1825, %v10092, 0
      %v10140 = vsel %vm1825, %v10094, 0
      %v10143 = vsel %vm1825, %v10096, 0
      %v10146 = vsel %vm1825, %v10098, 0
      %v10149 = vsel %vm1825, %v10100, 0
      %v10152 = vsel %vm1825, %v10102, 0
      %10154 = vmatprep.subr.bf16.mxu0 0
      %10155 = vmatpush1.bf16.xpose.msra.mxu0 %v10116
      %10156 = vmatprep.subr.bf16.mxu0 0
      %10157 = vmatpush1.bf16.xpose.msra.mxu0 %v10119
      %10158 = vmatprep.subr.bf16.mxu0 0
      %10159 = vmatpush1.bf16.xpose.msra.mxu0 %v10122
      %10160 = vmatprep.subr.bf16.mxu0 0
      %10161 = vmatpush1.bf16.xpose.msra.mxu0 %v10125
      %10162 = vmatprep.subr.bf16.mxu0 0
      %10163 = vmatpush1.bf16.xpose.msra.mxu0 %v10128
      %10164 = vmatprep.subr.bf16.mxu0 0
      %10165 = vmatpush1.bf16.xpose.msra.mxu0 %v10131
      %10166 = vmatprep.subr.bf16.mxu0 0
      %10167 = vmatpush1.bf16.xpose.msra.mxu0 %v10134
      %10168 = vmatprep.subr.bf16.mxu0 0
      %10169 = vmatpush1.bf16.xpose.msra.mxu0 %v10137
      %10170 = vmatprep.subr.bf16.mxu0 0
      %10171 = vmatpush1.bf16.xpose.msra.mxu0 %v10140
      %10172 = vmatprep.subr.bf16.mxu0 0
      %10173 = vmatpush1.bf16.xpose.msra.mxu0 %v10143
      %10174 = vmatprep.subr.bf16.mxu0 0
      %10175 = vmatpush1.bf16.xpose.msra.mxu0 %v10146
      %10176 = vmatprep.subr.bf16.mxu0 0
      %10177 = vmatpush1.bf16.xpose.msra.mxu0 %v10149
      %10178 = vmatprep.subr.bf16.mxu0 0
      %10179 = vmatpush1.bf16.xpose.msra.mxu0 %v10152
      %10180 = vmatprep.subr.bf16.mxu0 0
      %10181 = vmatpush1.bf16.xpose.msra.mxu0 0
      %10182 = vmatprep.subr.bf16.mxu0 0
      %10183 = vmatpush1.bf16.xpose.msra.mxu0 0
      %10184 = vmatprep.subr.bf16.mxu0 0
      %10185 = vmatpush1.bf16.xpose.msra.mxu0 0
      %10186 = vmatprep.mubr.bf16.mxu0 0
      %10187 = vmatmul.mubr.bf16.gmra.mrb[0].mxu0 %v10104
      %v10188 = vpop.f32.mrb[0].mxu0
      %v10189 = vadd.f32 %v3354, %v10188
      %v10190 = vpop.f32.mrb[0].mxu0
      %v10191 = vadd.f32 %v3355, %v10190
      %v10192 = vpop.f32.mrb[0].mxu0
      %v10193 = vadd.f32 %v3356, %v10192
      %v10194 = vpop.f32.mrb[0].mxu0
      %v10195 = vadd.f32 %v3357, %v10194
      %10196 = vmatprep.mubr.bf16.mxu0 0
      %10197 = vmatmul.mubr.bf16.gmra.mrb[0].mxu0 %v10107
      %v10198 = vpop.f32.mrb[0].mxu0
      %v10199 = vadd.f32 %v3358, %v10198
      %v10200 = vpop.f32.mrb[0].mxu0
      %v10201 = vadd.f32 %v3359, %v10200
      %v10202 = vpop.f32.mrb[0].mxu0
      %v10203 = vadd.f32 %v3360, %v10202
      %v10204 = vpop.f32.mrb[0].mxu0
      %v10205 = vadd.f32 %v3361, %v10204
      %10206 = vmatprep.mubr.bf16.mxu0 0
      %10207 = vmatmul.mubr.bf16.gmra.mrb[0].mxu0 %v10110
      %v10208 = vpop.f32.mrb[0].mxu0
      %v10209 = vadd.f32 %v3362, %v10208
      %v10210 = vpop.f32.mrb[0].mxu0
      %v10211 = vadd.f32 %v3363, %v10210
      %v10212 = vpop.f32.mrb[0].mxu0
      %v10213 = vadd.f32 %v3364, %v10212
      %v10214 = vpop.f32.mrb[0].mxu0
      %v10215 = vadd.f32 %v3365, %v10214
      %10216 = vmatprep.mubr.bf16.mxu0 0
      %10217 = vmatmul.mubr.bf16.gmra.mrb[0].mxu0 %v10113
      %v10218 = vpop.f32.mrb[0].mxu0
      %v10219 = vadd.f32 %v3366, %v10218
      %v10220 = vpop.f32.mrb[0].mxu0
      %v10221 = vadd.f32 %v3367, %v10220
      %v10222 = vpop.f32.mrb[0].mxu0
      %v10223 = vpop.f32.mrb[0].mxu0
      %10224 = vdwg.mxu0
      %v10225 = vsel %vm1608, %v10191, -inf
      %v10226 = vmax.f32 %v10189, %v10225
      %10227 = vmax.xlane.f32.xlu0 %v10226
      %v10228 = vpop.xlane.xlu0 %10227
      %v10229 = vsel %vm1608, %v10195, -inf
      %v10230 = vmax.f32 %v10193, %v10229
      %10231 = vmax.xlane.f32.xlu0 %v10230
      %v10232 = vpop.xlane.xlu0 %10231
      %v10233 = vsel %vm1608, %v10201, -inf
      %v10234 = vmax.f32 %v10199, %v10233
      %10235 = vmax.xlane.f32.xlu0 %v10234
      %v10236 = vpop.xlane.xlu0 %10235
      %v10237 = vsel %vm1608, %v10205, -inf
      %v10238 = vmax.f32 %v10203, %v10237
      %10239 = vmax.xlane.f32.xlu0 %v10238
      %v10240 = vpop.xlane.xlu0 %10239
      %v10241 = vsel %vm1608, %v10211, -inf
      %v10242 = vmax.f32 %v10209, %v10241
      %10243 = vmax.xlane.f32.xlu0 %v10242
      %v10244 = vpop.xlane.xlu0 %10243
      %v10245 = vsel %vm1608, %v10215, -inf
      %v10246 = vmax.f32 %v10213, %v10245
      %10247 = vmax.xlane.f32.xlu0 %v10246
      %v10248 = vpop.xlane.xlu0 %10247
      %v10249 = vsel %vm1972, %v10219, -inf
      %v10250 = vsel %vm1974, %v10221, -inf
      %v10251 = vmax.f32 %v10249, %v10250
      %10252 = vmax.xlane.f32.xlu0 %v10251
      %v10253 = vpop.xlane.xlu0 %10252
      %v10254 = vsub.f32 %v10189, %v10228
      %v10255 = vsub.f32 %v10191, %v10228
      %v10256 = vsub.f32 %v10193, %v10232
      %v10257 = vsub.f32 %v10195, %v10232
      %v10258 = vsub.f32 %v10199, %v10236
      %v10259 = vsub.f32 %v10201, %v10236
      %v10260 = vsub.f32 %v10203, %v10240
      %v10261 = vsub.f32 %v10205, %v10240
      %v10262 = vsub.f32 %v10209, %v10244
      %v10263 = vsub.f32 %v10211, %v10244
      %v10264 = vsub.f32 %v10213, %v10248
      %v10265 = vsub.f32 %v10215, %v10248
      %v10266 = vsub.f32 %v10219, %v10253
      %v10267 = vsub.f32 %v10221, %v10253
      %v10268 = vmul.f32 %v10254, 1.442695
      %v10269 = vpow.pop %v10268
      %v10270 = vmul.f32 %v10255, 1.442695
      %v10271 = vpow.pop %v10270
      %v10272 = vmul.f32 %v10256, 1.442695
      %v10273 = vpow.pop %v10272
      %v10274 = vmul.f32 %v10257, 1.442695
      %v10275 = vpow.pop %v10274
      %v10276 = vmul.f32 %v10258, 1.442695
      %v10277 = vpow.pop %v10276
      %v10278 = vmul.f32 %v10259, 1.442695
      %v10279 = vpow.pop %v10278
      %v10280 = vmul.f32 %v10260, 1.442695
      %v10281 = vpow.pop %v10280
      %v10282 = vmul.f32 %v10261, 1.442695
      %v10283 = vpow.pop %v10282
      %v10284 = vmul.f32 %v10262, 1.442695
      %v10285 = vpow.pop %v10284
      %v10286 = vmul.f32 %v10263, 1.442695
      %v10287 = vpow.pop %v10286
      %v10288 = vmul.f32 %v10264, 1.442695
      %v10289 = vpow.pop %v10288
      %v10290 = vmul.f32 %v10265, 1.442695
      %v10291 = vpow.pop %v10290
      %v10292 = vmul.f32 %v10266, 1.442695
      %v10293 = vpow.pop %v10292
      %v10294 = vmul.f32 %v10267, 1.442695
      %v10295 = vpow.pop %v10294
      %v10296 = vsel %vm1608, %v10271, 0.0
      %v10297 = vadd.f32 %v10269, %v10296
      %10298 = vadd.xlane.f32.xlu0 %v10297
      %v10299 = vpop.xlane.xlu0 %10298
      %v10300 = vsel %vm1608, %v10275, 0.0
      %v10301 = vadd.f32 %v10273, %v10300
      %10302 = vadd.xlane.f32.xlu0 %v10301
      %v10303 = vpop.xlane.xlu0 %10302
      %v10304 = vsel %vm1608, %v10279, 0.0
      %v10305 = vadd.f32 %v10277, %v10304
      %10306 = vadd.xlane.f32.xlu0 %v10305
      %v10307 = vpop.xlane.xlu0 %10306
      %v10308 = vsel %vm1608, %v10283, 0.0
      %v10309 = vadd.f32 %v10281, %v10308
      %10310 = vadd.xlane.f32.xlu0 %v10309
      %v10311 = vpop.xlane.xlu0 %10310
      %v10312 = vsel %vm1608, %v10287, 0.0
      %v10313 = vadd.f32 %v10285, %v10312
      %10314 = vadd.xlane.f32.xlu0 %v10313
      %v10315 = vpop.xlane.xlu0 %10314
      %v10316 = vsel %vm1608, %v10291, 0.0
      %v10317 = vadd.f32 %v10289, %v10316
      %10318 = vadd.xlane.f32.xlu0 %v10317
      %v10319 = vpop.xlane.xlu0 %10318
      %v10320 = vsel %vm1972, %v10293, 0.0
      %v10321 = vsel %vm1974, %v10295, 0.0
      %v10322 = vadd.f32 %v10320, %v10321
      %10323 = vadd.xlane.f32.xlu0 %v10322
      %v10324 = vpop.xlane.xlu0 %10323
      %v10325 = vrcp.pop %v10299
      %v10326 = vrcp.pop %v10303
      %v10327 = vrcp.pop %v10307
      %v10328 = vrcp.pop %v10311
      %v10329 = vrcp.pop %v10315
      %v10330 = vrcp.pop %v10319
      %v10331 = vrcp.pop %v10324
      %v10332 = vmul.f32 %v10269, %v10325
      %v10333 = vmul.f32 %v10271, %v10325
      %v10334 = vmul.f32 %v10273, %v10326
      %v10335 = vmul.f32 %v10275, %v10326
      %v10336 = vmul.f32 %v10277, %v10327
      %v10337 = vmul.f32 %v10279, %v10327
      %v10338 = vmul.f32 %v10281, %v10328
      %v10339 = vmul.f32 %v10283, %v10328
      %v10340 = vmul.f32 %v10285, %v10329
      %v10341 = vmul.f32 %v10287, %v10329
      %v10342 = vmul.f32 %v10289, %v10330
      %v10343 = vmul.f32 %v10291, %v10330
      %v10344 = vmul.f32 %v10293, %v10331
      %v10345 = vmul.f32 %v10295, %v10331
      %v10346 = vpack.c.bf16 %v10334, %v10332
      %v10347 = vpack.c.bf16 %v10335, %v10333
      %v10348 = vpack.c.bf16 %v10338, %v10336
      %v10349 = vpack.c.bf16 %v10339, %v10337
      %v10350 = vpack.c.bf16 %v10342, %v10340
      %v10351 = vpack.c.bf16 %v10343, %v10341
      %v10352 = vpack.c.bf16 %v10344, %v10344
      %v10353 = vpack.c.bf16 %v10345, %v10345
      %v10368 = vsel %vm1608, %v10347, 0
      %v10371 = vsel %vm1608, %v10349, 0
      %v10374 = vsel %vm1608, %v10351, 0
      %v10377 = vsel %vm1608, %v10353, 0
      %10379 = vmatprep.subr.bf16.mxu0 0
      %10380 = vmatpush1.bf16.msra.mxu0 %v10078
      %10381 = vmatprep.subr.bf16.mxu0 0
      %10382 = vmatpush1.bf16.msra.mxu0 %v10080
      %10383 = vmatprep.subr.bf16.mxu0 0
      %10384 = vmatpush1.bf16.msra.mxu0 %v10082
      %10385 = vmatprep.subr.bf16.mxu0 0
      %10386 = vmatpush1.bf16.msra.mxu0 %v10084
      %10387 = vmatprep.subr.bf16.mxu0 0
      %10388 = vmatpush1.bf16.msra.mxu0 %v10086
      %10389 = vmatprep.subr.bf16.mxu0 0
      %10390 = vmatpush1.bf16.msra.mxu0 %v10088
      %10391 = vmatprep.subr.bf16.mxu0 0
      %10392 = vmatpush1.bf16.msra.mxu0 %v10090
      %10393 = vmatprep.subr.bf16.mxu0 0
      %10394 = vmatpush1.bf16.msra.mxu0 %v10092
      %10395 = vmatprep.subr.bf16.mxu0 0
      %10396 = vmatpush1.bf16.msra.mxu0 %v10094
      %10397 = vmatprep.subr.bf16.mxu0 0
      %10398 = vmatpush1.bf16.msra.mxu0 %v10096
      %10399 = vmatprep.subr.bf16.mxu0 0
      %10400 = vmatpush1.bf16.msra.mxu0 %v10098
      %10401 = vmatprep.subr.bf16.mxu0 0
      %10402 = vmatpush1.bf16.msra.mxu0 %v10100
      %10403 = vmatprep.subr.bf16.mxu0 0
      %10404 = vmatpush1.bf16.msra.mxu0 %v10102
      %10405 = vmatprep.subr.bf16.mxu0 0
      %10406 = vmatpush1.bf16.msra.mxu0 0
      %10407 = vmatprep.subr.bf16.mxu0 0
      %10408 = vmatpush1.bf16.msra.mxu0 0
      %10409 = vmatprep.subr.bf16.mxu0 0
      %10410 = vmatpush1.bf16.msra.mxu0 0
      %10411 = vmatprep.mubr.bf16.mxu0 %v10368
      %10412 = vmatmul.mubr.bf16.gmra.mrb[0].mxu0 %v10346
      %v10413 = vpop.f32.mrb[0].mxu0
      %v10414 = vadd.f32 0.0, %v10413
      %v10415 = vpop.f32.mrb[0].mxu0
      %v10416 = vpop.f32.mrb[0].mxu0
      %v10417 = vadd.f32 0.0, %v10416
      %v10418 = vpop.f32.mrb[0].mxu0
      %10419 = vmatprep.mubr.bf16.mxu0 %v10371
      %10420 = vmatmul.mubr.bf16.gmra.mrb[0].mxu0 %v10348
      %v10421 = vpop.f32.mrb[0].mxu0
      %v10422 = vadd.f32 0.0, %v10421
      %v10423 = vpop.f32.mrb[0].mxu0
      %v10424 = vpop.f32.mrb[0].mxu0
      %v10425 = vadd.f32 0.0, %v10424
      %v10426 = vpop.f32.mrb[0].mxu0
      %10427 = vmatprep.mubr.bf16.mxu0 %v10374
      %10428 = vmatmul.mubr.bf16.gmra.mrb[0].mxu0 %v10350
      %v10429 = vpop.f32.mrb[0].mxu0
      %v10430 = vadd.f32 0.0, %v10429
      %v10431 = vpop.f32.mrb[0].mxu0
      %v10432 = vpop.f32.mrb[0].mxu0
      %v10433 = vadd.f32 0.0, %v10432
      %v10434 = vpop.f32.mrb[0].mxu0
      %10435 = vmatprep.mubr.bf16.mxu0 %v10377
      %10436 = vmatmul.mubr.bf16.gmra.mrb[0].mxu0 %v10352
      %v10437 = vpop.f32.mrb[0].mxu0
      %v10438 = vadd.f32 0.0, %v10437
      %v10439 = vpop.f32.mrb[0].mxu0
      %v10440 = vpop.f32.mrb[0].mxu0
      %v10441 = vpop.f32.mrb[0].mxu0
      %10442 = vdwg.mxu0
      %v10443 = vadd.f32 %v10414, 3.0
      %v10444 = vadd.f32 %v10417, 3.0
      %v10445 = vadd.f32 %v10422, 3.0
      %v10446 = vadd.f32 %v10425, 3.0
      %v10447 = vadd.f32 %v10430, 3.0
      %v10448 = vadd.f32 %v10433, 3.0
      %v10449 = vadd.f32 %v10438, 3.0
      %v10450 = vmax.f32 %v10443, 0.0
      %v10451 = vmax.f32 %v10444, 0.0
      %v10452 = vmax.f32 %v10445, 0.0
      %v10453 = vmax.f32 %v10446, 0.0
      %v10454 = vmax.f32 %v10447, 0.0
      %v10455 = vmax.f32 %v10448, 0.0
      %v10456 = vmax.f32 %v10449, 0.0
      %v10457 = vmin.f32 %v10450, 6.0
      %v10458 = vmin.f32 %v10451, 6.0
      %v10459 = vmin.f32 %v10452, 6.0
      %v10460 = vmin.f32 %v10453, 6.0
      %v10461 = vmin.f32 %v10454, 6.0
      %v10462 = vmin.f32 %v10455, 6.0
      %v10463 = vmin.f32 %v10456, 6.0
      %v10464 = vmul.f32 %v10414, %v10457
      %v10465 = vmul.f32 %v10417, %v10458
      %v10466 = vmul.f32 %v10422, %v10459
      %v10467 = vmul.f32 %v10425, %v10460
      %v10468 = vmul.f32 %v10430, %v10461
      %v10469 = vmul.f32 %v10433, %v10462
      %v10470 = vmul.f32 %v10438, %v10463
      %v10471 = vmul.f32 %v10464, 0.16666667
      %v10472 = vmul.f32 %v10465, 0.16666667
      %v10473 = vmul.f32 %v10466, 0.16666667
      %v10474 = vmul.f32 %v10467, 0.16666667
      %v10475 = vmul.f32 %v10468, 0.16666667
      %v10476 = vmul.f32 %v10469, 0.16666667
      %v10477 = vmul.f32 %v10470, 0.16666667
      %v10478 = vpack.c.bf16 %v10472, %v10471
      %v10479 = vpack.c.bf16 %v10474, %v10473
      %v10480 = vpack.c.bf16 %v10476, %v10475
      %v10481 = vpack.c.bf16 %v10477, %v10477
      %s10482 = scalar_lea.vmem %s7, 480
      %v10483 = vld [vmem:[%s10482] sm:$0xf]
      %v10484 = vld [vmem:[%s10482 + $0x4] sm:$0xf]
      %v10485 = vld [vmem:[%s10482 + $0x8] sm:$0xf]
      %v10486 = vld [vmem:[%s10482 + $0xc] sm:$0xf]
      %v10487 = vld [vmem:[%s10482 + $0x10] sm:$0xf]
      %v10488 = vld [vmem:[%s10482 + $0x14] sm:$0xf]
      %v10489 = vld [vmem:[%s10482 + $0x18] sm:$0xf]
      %v10490 = vld [vmem:[%s10482 + $0x1c] sm:$0xf]
      %v10499 = vunpack.c.l.b16 %v10483
      %v10500 = vunpack.c.l.b16 %v10484
      %v10501 = vunpack.c.l.b16 %v10485
      %v10502 = vunpack.c.l.b16 %v10486
      %v10503 = vunpack.c.l.b16 %v10487
      %v10504 = vunpack.c.l.b16 %v10488
      %v10505 = vunpack.c.l.b16 %v10489
      %v10506 = vunpack.c.l.b16 %v10490
      %v10507 = vpack.c.b16 %v10500, %v10499
      %v10508 = vpack.c.b16 %v10502, %v10501
      %v10509 = vpack.c.b16 %v10504, %v10503
      %v10510 = vpack.c.b16 %v10506, %v10505
      %v10516 = vsel %vm1825, %v10478, 0
      %v10519 = vsel %vm1825, %v10479, 0
      %v10522 = vsel %vm1825, %v10480, 0
      %v10525 = vsel %vm1825, %v10481, 0
      %10527 = vmatprep.subr.bf16.mxu0 0
      %10528 = vmatpush1.bf16.msra.mxu0 %v10507
      %10529 = vmatprep.subr.bf16.mxu0 0
      %10530 = vmatpush1.bf16.msra.mxu0 %v10508
      %10531 = vmatprep.subr.bf16.mxu0 0
      %10532 = vmatpush1.bf16.msra.mxu0 %v10509
      %10533 = vmatprep.subr.bf16.mxu0 0
      %10534 = vmatpush1.bf16.msra.mxu0 %v10510
      %10535 = vmatprep.subr.bf16.mxu0 0
      %10536 = vmatpush1.bf16.msra.mxu0 0
      %10537 = vmatprep.subr.bf16.mxu0 0
      %10538 = vmatpush1.bf16.msra.mxu0 0
      %10539 = vmatprep.subr.bf16.mxu0 0
      %10540 = vmatpush1.bf16.msra.mxu0 0
      %10541 = vmatprep.subr.bf16.mxu0 0
      %10542 = vmatpush1.bf16.msra.mxu0 0
      %10543 = vmatprep.subr.bf16.mxu0 0
      %10544 = vmatpush1.bf16.msra.mxu0 0
      %10545 = vmatprep.subr.bf16.mxu0 0
      %10546 = vmatpush1.bf16.msra.mxu0 0
      %10547 = vmatprep.subr.bf16.mxu0 0
      %10548 = vmatpush1.bf16.msra.mxu0 0
      %10549 = vmatprep.subr.bf16.mxu0 0
      %10550 = vmatpush1.bf16.msra.mxu0 0
      %10551 = vmatprep.subr.bf16.mxu0 0
      %10552 = vmatpush1.bf16.msra.mxu0 0
      %10553 = vmatprep.subr.bf16.mxu0 0
      %10554 = vmatpush1.bf16.msra.mxu0 0
      %10555 = vmatprep.subr.bf16.mxu0 0
      %10556 = vmatpush1.bf16.msra.mxu0 0
      %10557 = vmatprep.subr.bf16.mxu0 0
      %10558 = vmatpush1.bf16.msra.mxu0 0
      %10559 = vmatprep.mubr.bf16.mxu0 0
      %10560 = vmatmul.mubr.bf16.gmra.mrb[0].mxu0 %v10516
      %v10561 = vpop.f32.mrb[0].mxu0
      %v10562 = vadd.f32 0.0, %v10561
      %v10563 = vpop.f32.mrb[0].mxu0
      %v10564 = vpop.f32.mrb[0].mxu0
      %v10565 = vadd.f32 0.0, %v10564
      %v10566 = vpop.f32.mrb[0].mxu0
      %10567 = vmatprep.mubr.bf16.mxu0 0
      %10568 = vmatmul.mubr.bf16.gmra.mrb[0].mxu0 %v10519
      %v10569 = vpop.f32.mrb[0].mxu0
      %v10570 = vadd.f32 0.0, %v10569
      %v10571 = vpop.f32.mrb[0].mxu0
      %v10572 = vpop.f32.mrb[0].mxu0
      %v10573 = vadd.f32 0.0, %v10572
      %v10574 = vpop.f32.mrb[0].mxu0
      %10575 = vmatprep.mubr.bf16.mxu0 0
      %10576 = vmatmul.mubr.bf16.gmra.mrb[0].mxu0 %v10522
      %v10577 = vpop.f32.mrb[0].mxu0
      %v10578 = vadd.f32 0.0, %v10577
      %v10579 = vpop.f32.mrb[0].mxu0
      %v10580 = vpop.f32.mrb[0].mxu0
      %v10581 = vadd.f32 0.0, %v10580
      %v10582 = vpop.f32.mrb[0].mxu0
      %10583 = vmatprep.mubr.bf16.mxu0 0
      %10584 = vmatmul.mubr.bf16.gmra.mrb[0].mxu0 %v10525
      %v10585 = vpop.f32.mrb[0].mxu0
      %v10586 = vadd.f32 0.0, %v10585
      %v10587 = vpop.f32.mrb[0].mxu0
      %v10588 = vpop.f32.mrb[0].mxu0
      %v10589 = vpop.f32.mrb[0].mxu0
      %10590 = vdwg.mxu0
      %v10591 = vadd.f32 %v10045, %v10562
      %v10592 = vadd.f32 %v10046, %v10565
      %v10593 = vadd.f32 %v10047, %v10570
      %v10594 = vadd.f32 %v10048, %v10573
      %v10595 = vadd.f32 %v10049, %v10578
      %v10596 = vadd.f32 %v10050, %v10581
      %v10597 = vadd.f32 %v10051, %v10586
      %v10598 = vld [vmem:[%s8] sm:$0x1]
      %v10600 = vlaneseq
      %v10601 = vshrl.u32 %v10600, 7
      %v10602 = vsub.s32 0, %v10601
      %v10603 = vrot.slane %v10598, %v10602
      %v10605 = vadd.f32 %v10591, %v10603
      %v10606 = vadd.f32 %v10592, %v10603
      %v10607 = vadd.f32 %v10593, %v10603
      %v10608 = vadd.f32 %v10594, %v10603
      %v10609 = vadd.f32 %v10595, %v10603
      %v10610 = vadd.f32 %v10596, %v10603
      %v10611 = vadd.f32 %v10597, %v10603
      %10612 = vst [vmem:[%s334] sm:$0xff] %v10605
      %10613 = vst [vmem:[%s334 + $0x8] sm:$0xff] %v10606
      %10614 = vst [vmem:[%s334 + $0x10] sm:$0xff] %v10607
      %10615 = vst [vmem:[%s334 + $0x18] sm:$0xff] %v10608
      %10616 = vst [vmem:[%s334 + $0x20] sm:$0xff] %v10609
      %10617 = vst [vmem:[%s334 + $0x28] sm:$0xff] %v10610
      %10618 = vst [vmem:[%s334 + $0x30] sm:$0x1] %v10611
      %p10619 = scmp.lt.s32.totalorder %s20, 1
      %s10620 = scalar_select %p10619, %s20, 1
      %s10621 = smul.addr %s10620, 7
      %s10622 = smul.addr %s10621, 8
      %s10623 = scalar_lea.vmem %s9, %s10622
      // Predicated region
      $region57: #{tpu_custom_call.1} parent=55 // pred_check
        %p10624 = pneg %p232
      $region58: #{tpu_custom_call.1} parent=55 // pred_check_branch
        %10626 = sbr.rel (%p10624) target = $region60
      $region59: #{tpu_custom_call.1} parent=55 // pred_region
        _
      $region60: #{tpu_custom_call.1} parent=55 // pred_fallthru
        _
    $region56: #{tpu_custom_call.1} parent=5 // pred_fallthru
      _
    %p10627 = scmp.le.s32.totalorder 2, %s15
    // Predicated region
    $region61: #{tpu_custom_call.1} parent=5 // pred_check
      %p10628 = pneg %p10627
    $region62: #{tpu_custom_call.1} parent=5 // pred_check_branch
      %10630 = sbr.rel (%p10628) target = $region64
    $region63: #{tpu_custom_call.1} parent=5 // pred_region
      %s10631 = ssub.s32 %s15, 2
      // Predicated region
      $region65: #{tpu_custom_call.1} parent=63 // pred_check
        %p10632 = pneg %p238
      $region66: #{tpu_custom_call.1} parent=63 // pred_check_branch
        %10634 = sbr.rel (%p10632) target = $region68
      $region67: #{tpu_custom_call.1} parent=63 // pred_region
        %p10635 = scmp.lt.s32.totalorder %s21, 1
        %s10636 = scalar_select %p10635, %s21, 1
        %s10637 = smul.addr %s10636, 7
        %s10638 = smul.addr %s10637, 8
        %s10639 = scalar_lea.vmem %s9, %s10638
      $region68: #{tpu_custom_call.1} parent=63 // pred_fallthru
        _
    $region64: #{tpu_custom_call.1} parent=5 // pred_fallthru
      _
  $region6: #{tpu_custom_call.1} parent=0 // loop_footer
    %s19 = sadd.s32 1, %s15
  $region7: #{tpu_custom_call.1} parent=0 // loop_footer_branch
    %14 = sbr.rel target = $region3
  $region8: #{tpu_custom_call.1} parent=0 // loop_exit
    _

</llo_original>
